<compile_context>
chip_gen: v5e
topology: v5e:2x2
jax: 0.10.0
libtpu: 0.0.40
codegen_flags: <defaults>
</compile_context>

<pallas_src>
import numpy as np
import jax
import jax.numpy as jnp
from jax import lax
from jax.experimental import pallas as pl
from jax.experimental.pallas import tpu as pltpu


def _conv_masks_9(W, H, D):
    """Validity masks for the 9 (dh, dd) tap combinations of a 3x3x3, padding=1 conv.

    The dw (+-H*D) component of every tap offset is handled by the lane zero-pad of
    the activation buffer, so no mask is needed for it.
    """
    N = W * H * D
    n = np.arange(N)
    hi, di = (n // D) % H, n % D
    masks = []
    for kh in range(3):
        for kd in range(3):
            dh, dd = kh - 1, kd - 1
            valid = ((hi + dh >= 0) & (hi + dh < H) &
                     (di + dd >= 0) & (di + dd < D))
            masks.append(valid.astype(np.float32))
    return np.stack(masks)                       # (9, N)


def gblock_pallas(x, y, p, eps=1e-5):
    """GBlock forward.  x: (B, Cin, W, H, D) f32, y: (B, ydim) f32."""
    B, Cin, W, H, D = x.shape
    Cout = p['conv1_w'].shape[0]
    N = W * H * D
    Cmax = max(Cin, Cout)
    PAD = 128                                    # lane-aligned, >= max |tap offset|
    assert PAD >= H * D + D + 1

    # ---- ccbn3d (inference path): fold running stats + conditional gain/bias into
    # a per-(batch, channel) affine, so bn(x, y) == x * scale + shift.
    def fold_bn(gain_w, gain_b, bias_w, bias_b, mean, var):
        gain = 1.0 + y @ gain_w.T + gain_b       # (B, C)
        bias = y @ bias_w.T + bias_b             # (B, C)
        inv = 1.0 / jnp.sqrt(var + eps)          # (C,)
        scale = gain * inv
        shift = bias - mean * scale
        return scale, shift                      # (B, C)

    s1, t1 = fold_bn(p['bn1_gain_w'], p['bn1_gain_b'], p['bn1_bias_w'],
                     p['bn1_bias_b'], p['bn1_mean'], p['bn1_var'])
    s2, t2 = fold_bn(p['bn2_gain_w'], p['bn2_gain_b'], p['bn2_bias_w'],
                     p['bn2_bias_b'], p['bn2_mean'], p['bn2_var'])
    # Pack the four affine vectors into ONE operand: rows [s1 | t1 | s2 | t2].
    bn_pack = jnp.concatenate([s1, t1, s2, t2], axis=1)[:, :, None]  # (B, 2*(Cin+Cout), 1)
    R1, R2 = Cin, 2 * Cin
    R3, R4 = 2 * Cin + Cout, 2 * (Cin + Cout)

    # ---- conv weights as bf16 matmul operands (im2col: tap-major, channel-minor).
    w1m = p['conv1_w'].transpose(0, 2, 3, 4, 1).reshape(Cout, 27 * Cin).astype(jnp.bfloat16)
    w2m = p['conv2_w'].transpose(0, 2, 3, 4, 1).reshape(Cout, 27 * Cout).astype(jnp.bfloat16)
    wsc = p['convsc_w'].reshape(Cout, Cin).astype(jnp.bfloat16)
    b1c = p['conv1_b'].reshape(Cout, 1)
    b2c = p['conv2_b'].reshape(Cout, 1)
    bsc = p['convsc_b'].reshape(Cout, 1)

    masks = jnp.asarray(_conv_masks_9(W, H, D))  # (9, N) f32

    x2 = x.reshape(B, Cin, N)

    def kernel(x_ref, bn_ref, w1_ref, b1_ref, w2_ref, b2_ref,
               wsc_ref, bsc_ref, m_ref, out_ref, hp_ref, panel_ref):
        # Zero only the two lane-pad regions of the persistent activation buffer.
        # Done every step (32 KB of stores — negligible next to the ~1 MB panel):
        # scratch is per-core, so a pl.program_id(0)==0 gate would never run on the
        # second TensorCore when the "parallel" batch grid is sharded on v7x.
        hp_ref[:, 0:PAD] = jnp.zeros((Cmax, PAD), jnp.float32)
        hp_ref[:, PAD + N:PAD + N + PAD] = jnp.zeros((Cmax, PAD), jnp.float32)

        xb = x_ref[...]                          # (Cin, N) f32
        bn = bn_ref[...]                         # (2*(Cin+Cout), 1) f32
        m = m_ref[...]                           # (9, N) f32, resident in vregs

        def conv3x3x3(C, w_ref, b_ref):
            # hp_ref[0:C, PAD:PAD+N] holds the activation.  Each masked shifted
            # slab is written straight into the bf16 panel scratch (no concatenate,
            # no second copy); the matmul then reads exactly the 27*C rows written.
            for kw in range(3):
                for kh in range(3):
                    for kd in range(3):
                        k = (kw * 3 + kh) * 3 + kd
                        off = (kw - 1) * H * D + (kh - 1) * D + (kd - 1)
                        sl = hp_ref[0:C, PAD + off:PAD + off + N]     # (C, N) f32
                        if kh == 1 and kd == 1:
                            v = sl               # dh = dd = 0: mask is all-ones
                        else:
                            j = kh * 3 + kd
                            v = sl * m[j:j + 1, :]
                        panel_ref[k * C:(k + 1) * C, :] = v.astype(jnp.bfloat16)
            return (jnp.dot(w_ref[...], panel_ref[0:27 * C, :],
                            preferred_element_type=jnp.float32) + b_ref[...])

        # bn1 (folded affine) + ReLU -> padded activation buffer
        h1 = jnp.maximum(xb * bn[0:R1] + bn[R1:R2], 0.0)
        hp_ref[0:Cin, PAD:PAD + N] = h1
        h = conv3x3x3(Cin, w1_ref, b1_ref)       # (Cout, N) f32

        # bn2 (folded affine) + ReLU -> padded activation buffer
        h2 = jnp.maximum(h * bn[R2:R3] + bn[R3:R4], 0.0)
        hp_ref[0:Cout, PAD:PAD + N] = h2
        h = conv3x3x3(Cout, w2_ref, b2_ref)      # (Cout, N) f32

        # learnable shortcut: 1x1x1 conv on the original input (channel matmul)
        xs = (jnp.dot(wsc_ref[...], xb.astype(jnp.bfloat16),
                      preferred_element_type=jnp.float32) + bsc_ref[...])
        out_ref[...] = (h + xs).astype(out_ref.dtype)

    full = lambda a: pl.BlockSpec(a.shape, lambda b: (0,) * a.ndim)

    flops = int(B * (2 * Cout * 27 * Cin * N + 2 * Cout * 27 * Cout * N
                     + 2 * Cout * Cin * N + 8 * (Cin + Cout) * N))
    bytes_accessed = int(4 * (x2.size + B * Cout * N + bn_pack.size
                              + b1c.size + b2c.size + bsc.size + masks.size)
                         + 2 * (w1m.size + w2m.size + wsc.size))

    out2 = pl.pallas_call(
        kernel,
        out_shape=jax.ShapeDtypeStruct((B, Cout, N), x.dtype),
        grid=(B,),
        in_specs=[
            pl.BlockSpec((None, Cin, N), lambda b: (b, 0, 0)),               # x (lane-dense)
            pl.BlockSpec((None, 2 * (Cin + Cout), 1), lambda b: (b, 0, 0)),  # packed BN affine
            full(w1m), full(b1c),
            full(w2m), full(b2c),
            full(wsc), full(bsc),
            full(masks),
        ],
        out_specs=pl.BlockSpec((None, Cout, N), lambda b: (b, 0, 0)),
        scratch_shapes=[
            pltpu.VMEM((Cmax, N + 2 * PAD), jnp.float32),   # persistent padded activation
            pltpu.VMEM((27 * Cmax, N), jnp.bfloat16),       # im2col panel, written in place
        ],
        compiler_params=pltpu.CompilerParams(
            dimension_semantics=("parallel",),
            vmem_limit_bytes=8 * 1024 * 1024),
        cost_estimate=pl.CostEstimate(flops=flops, transcendentals=0,
                                      bytes_accessed=bytes_accessed),
    )(x2, bn_pack, w1m, b1c, w2m, b2c, wsc, bsc, masks)

    return out2.reshape(B, Cout, W, H, D)


def gblock_ref(x, y, p, eps=1e-5):
    """Pure-JAX reference mirroring the PyTorch GBlock forward (inference BN)."""
    Cout = p['conv1_w'].shape[0]
    Cin = x.shape[1]

    def ccbn(h, gw, gb, bw, bb, mean, var):
        gain = 1.0 + y @ gw.T + gb
        bias = y @ bw.T + bb
        inv = 1.0 / jnp.sqrt(var + eps)
        hn = (h - mean[None, :, None, None, None]) * inv[None, :, None, None, None]
        return hn * gain[:, :, None, None, None] + bias[:, :, None, None, None]

    dn = ('NCDHW', 'OIDHW', 'NCDHW')
    h = jax.nn.relu(ccbn(x, p['bn1_gain_w'], p['bn1_gain_b'],
                         p['bn1_bias_w'], p['bn1_bias_b'],
                         p['bn1_mean'], p['bn1_var']))
    h = lax.conv_general_dilated(h, p['conv1_w'], (1, 1, 1), 'SAME',
                                 dimension_numbers=dn) \
        + p['conv1_b'][None, :, None, None, None]
    h = jax.nn.relu(ccbn(h, p['bn2_gain_w'], p['bn2_gain_b'],
                         p['bn2_bias_w'], p['bn2_bias_b'],
                         p['bn2_mean'], p['bn2_var']))
    h = lax.conv_general_dilated(h, p['conv2_w'], (1, 1, 1), 'SAME',
                                 dimension_numbers=dn) \
        + p['conv2_b'][None, :, None, None, None]
    xs = jnp.einsum('oc,bcwhd->bowhd', p['convsc_w'].reshape(Cout, Cin), x) \
        + p['convsc_b'][None, :, None, None, None]
    return h + xs


if __name__ == "__main__":
    key = jax.random.PRNGKey(0)
    B, Cin, Cout, ydim = 2, 16, 32, 32
    W = H = D = 8                               # N = 512 lanes (multiple of 128)

    ks = jax.random.split(key, 16)
    x = jax.random.normal(ks[0], (B, Cin, W, H, D), dtype=jnp.float32)
    y = jax.random.normal(ks[1], (B, ydim), dtype=jnp.float32)
    r = lambda k, s: 0.05 * jax.random.normal(k, s, dtype=jnp.float32)
    p = dict(
        bn1_gain_w=r(ks[2], (Cin, ydim)),  bn1_gain_b=r(ks[3], (Cin,)),
        bn1_bias_w=r(ks[4], (Cin, ydim)),  bn1_bias_b=r(ks[5], (Cin,)),
        bn1_mean=jnp.zeros((Cin,), jnp.float32),
        bn1_var=jnp.ones((Cin,), jnp.float32),
        bn2_gain_w=r(ks[6], (Cout, ydim)), bn2_gain_b=r(ks[7], (Cout,)),
        bn2_bias_w=r(ks[8], (Cout, ydim)), bn2_bias_b=r(ks[9], (Cout,)),
        bn2_mean=jnp.zeros((Cout,), jnp.float32),
        bn2_var=jnp.ones((Cout,), jnp.float32),
        conv1_w=r(ks[10], (Cout, Cin, 3, 3, 3)),  conv1_b=r(ks[11], (Cout,)),
        conv2_w=r(ks[12], (Cout, Cout, 3, 3, 3)), conv2_b=r(ks[13], (Cout,)),
        convsc_w=r(ks[14], (Cout, Cin, 1, 1, 1)), convsc_b=r(ks[15], (Cout,)),
    )

    out = gblock_pallas(x, y, p)
    out = jax.block_until_ready(out)

    ref = gblock_ref(x, y, p)
    assert out.shape == (B, Cout, W, H, D)
    # bf16 panels/weights with f32 accumulation: tolerance loosened per review.
    assert jnp.allclose(out, ref, atol=2e-2, rtol=2e-2), "mismatch vs reference"
    print("KERNEL_OK")
</pallas_src>

<mosaic_0001>
module attributes {stable_mosaic.version = 11 : i64} {
  func.func @kernel(%arg0: i32, %arg1: memref<1x16x512xf32, #tpu.memory_space<vmem>>, %arg2: memref<1x96x1xf32, #tpu.memory_space<vmem>>, %arg3: memref<32x432xbf16, #tpu.memory_space<vmem>>, %arg4: memref<32x1xf32, #tpu.memory_space<vmem>>, %arg5: memref<32x864xbf16, #tpu.memory_space<vmem>>, %arg6: memref<32x1xf32, #tpu.memory_space<vmem>>, %arg7: memref<32x16xbf16, #tpu.memory_space<vmem>>, %arg8: memref<32x1xf32, #tpu.memory_space<vmem>>, %arg9: memref<9x512xf32, #tpu.memory_space<vmem>>, %arg10: memref<1x32x512xf32, #tpu.memory_space<vmem>>, %arg11: memref<32x768xf32, #tpu.memory_space<vmem>>, %arg12: memref<864x512xbf16, #tpu.memory_space<vmem>>) attributes {dimension_semantics = [#tpu.dimension_semantics<parallel>], iteration_bounds = array<i64: 2>, scalar_prefetch = 0 : i64, scratch_operands = 2 : i64, tpu.core_type = #tpu.core_type<tc>, window_params = [{transform_indices = @transform_0, window_bounds = array<i64: 1, 16, 512>}, {transform_indices = @transform_1, window_bounds = array<i64: 1, 96, 1>}, {pipeline_mode = #tpu.pipeline_mode<synchronous>, transform_indices = @transform_2, window_bounds = array<i64: 32, 432>}, {pipeline_mode = #tpu.pipeline_mode<synchronous>, transform_indices = @transform_3, window_bounds = array<i64: 32, 1>}, {pipeline_mode = #tpu.pipeline_mode<synchronous>, transform_indices = @transform_4, window_bounds = array<i64: 32, 864>}, {pipeline_mode = #tpu.pipeline_mode<synchronous>, transform_indices = @transform_5, window_bounds = array<i64: 32, 1>}, {pipeline_mode = #tpu.pipeline_mode<synchronous>, transform_indices = @transform_6, window_bounds = array<i64: 32, 16>}, {pipeline_mode = #tpu.pipeline_mode<synchronous>, transform_indices = @transform_7, window_bounds = array<i64: 32, 1>}, {pipeline_mode = #tpu.pipeline_mode<synchronous>, transform_indices = @transform_8, window_bounds = array<i64: 9, 512>}, {transform_indices = @transform_9, window_bounds = array<i64: 1, 32, 512>}]} {
    %cst = arith.constant 0.000000e+00 : f32
    %0 = vector.broadcast %cst : f32 to vector<32x128xf32>
    %c0 = arith.constant 0 : index
    %c0_0 = arith.constant 0 : index
    %1 = vector.load %arg11[%c0, %c0_0] : memref<32x768xf32, #tpu.memory_space<vmem>>, vector<32x128xf32>
    tpu.vector_store %arg11[%c0, %c0_0], %0 {strides = array<i32>} : memref<32x768xf32, #tpu.memory_space<vmem>>, vector<32x128xf32>,
    %cst_1 = arith.constant 0.000000e+00 : f32
    %2 = vector.broadcast %cst_1 : f32 to vector<32x128xf32>
    %c0_2 = arith.constant 0 : index
    %c640 = arith.constant 640 : index
    %3 = vector.load %arg11[%c0_2, %c640] : memref<32x768xf32, #tpu.memory_space<vmem>>, vector<32x128xf32>
    tpu.vector_store %arg11[%c0_2, %c640], %2 {strides = array<i32>} : memref<32x768xf32, #tpu.memory_space<vmem>>, vector<32x128xf32>,
    %c0_3 = arith.constant 0 : index
    %c0_4 = arith.constant 0 : index
    %c0_5 = arith.constant 0 : index
    %4 = vector.load %arg1[%c0_3, %c0_4, %c0_5] : memref<1x16x512xf32, #tpu.memory_space<vmem>>, vector<1x16x512xf32>
    %5 = vector.shape_cast %4 : vector<1x16x512xf32> to vector<16x512xf32>
    %c0_6 = arith.constant 0 : index
    %c0_7 = arith.constant 0 : index
    %c0_8 = arith.constant 0 : index
    %6 = vector.load %arg2[%c0_6, %c0_7, %c0_8] : memref<1x96x1xf32, #tpu.memory_space<vmem>>, vector<1x96x1xf32>
    %7 = vector.shape_cast %6 : vector<1x96x1xf32> to vector<96x1xf32>
    %c0_9 = arith.constant 0 : index
    %c0_10 = arith.constant 0 : index
    %8 = vector.load %arg9[%c0_9, %c0_10] : memref<9x512xf32, #tpu.memory_space<vmem>>, vector<9x512xf32>
    %9 = vector.extract_strided_slice %7 {offsets = [0, 0], sizes = [16, 1], strides = [1, 1]} : vector<96x1xf32> to vector<16x1xf32>
    %10 = vector.broadcast %9 : vector<16x1xf32> to vector<16x512xf32>
    %11 = arith.mulf %5, %10 : vector<16x512xf32>
    %12 = vector.extract_strided_slice %7 {offsets = [16, 0], sizes = [16, 1], strides = [1, 1]} : vector<96x1xf32> to vector<16x1xf32>
    %13 = vector.broadcast %12 : vector<16x1xf32> to vector<16x512xf32>
    %14 = arith.addf %11, %13 : vector<16x512xf32>
    %cst_11 = arith.constant 0.000000e+00 : f32
    %15 = vector.broadcast %cst_11 : f32 to vector<16x512xf32>
    %16 = arith.maximumf %14, %15 : vector<16x512xf32>
    %c0_12 = arith.constant 0 : index
    %c128 = arith.constant 128 : index
    %17 = vector.load %arg11[%c0_12, %c128] : memref<32x768xf32, #tpu.memory_space<vmem>>, vector<16x512xf32>
    tpu.vector_store %arg11[%c0_12, %c128], %16 {strides = array<i32>} : memref<32x768xf32, #tpu.memory_space<vmem>>, vector<16x512xf32>,
    %c0_13 = arith.constant 0 : index
    %c55 = arith.constant 55 : index
    %18 = vector.load %arg11[%c0_13, %c55] : memref<32x768xf32, #tpu.memory_space<vmem>>, vector<16x512xf32>
    %19 = vector.extract_strided_slice %8 {offsets = [0, 0], sizes = [1, 512], strides = [1, 1]} : vector<9x512xf32> to vector<1x512xf32>
    %20 = vector.broadcast %19 : vector<1x512xf32> to vector<16x512xf32>
    %21 = arith.mulf %18, %20 : vector<16x512xf32>
    %22 = arith.truncf %21 : vector<16x512xf32> to vector<16x512xbf16>
    %c0_14 = arith.constant 0 : index
    %c0_15 = arith.constant 0 : index
    %23 = vector.load %arg12[%c0_14, %c0_15] : memref<864x512xbf16, #tpu.memory_space<vmem>>, vector<16x512xbf16>
    tpu.vector_store %arg12[%c0_14, %c0_15], %22 {strides = array<i32>} : memref<864x512xbf16, #tpu.memory_space<vmem>>, vector<16x512xbf16>,
    %c0_16 = arith.constant 0 : index
    %c56 = arith.constant 56 : index
    %24 = vector.load %arg11[%c0_16, %c56] : memref<32x768xf32, #tpu.memory_space<vmem>>, vector<16x512xf32>
    %25 = vector.extract_strided_slice %8 {offsets = [1, 0], sizes = [1, 512], strides = [1, 1]} : vector<9x512xf32> to vector<1x512xf32>
    %26 = vector.broadcast %25 : vector<1x512xf32> to vector<16x512xf32>
    %27 = arith.mulf %24, %26 : vector<16x512xf32>
    %28 = arith.truncf %27 : vector<16x512xf32> to vector<16x512xbf16>
    %c16 = arith.constant 16 : index
    %c0_17 = arith.constant 0 : index
    %29 = vector.load %arg12[%c16, %c0_17] : memref<864x512xbf16, #tpu.memory_space<vmem>>, vector<16x512xbf16>
    tpu.vector_store %arg12[%c16, %c0_17], %28 {strides = array<i32>} : memref<864x512xbf16, #tpu.memory_space<vmem>>, vector<16x512xbf16>,
    %c0_18 = arith.constant 0 : index
    %c57 = arith.constant 57 : index
    %30 = vector.load %arg11[%c0_18, %c57] : memref<32x768xf32, #tpu.memory_space<vmem>>, vector<16x512xf32>
    %31 = vector.extract_strided_slice %8 {offsets = [2, 0], sizes = [1, 512], strides = [1, 1]} : vector<9x512xf32> to vector<1x512xf32>
    %32 = vector.broadcast %31 : vector<1x512xf32> to vector<16x512xf32>
    %33 = arith.mulf %30, %32 : vector<16x512xf32>
    %34 = arith.truncf %33 : vector<16x512xf32> to vector<16x512xbf16>
    %c32 = arith.constant 32 : index
    %c0_19 = arith.constant 0 : index
    %35 = vector.load %arg12[%c32, %c0_19] : memref<864x512xbf16, #tpu.memory_space<vmem>>, vector<16x512xbf16>
    tpu.vector_store %arg12[%c32, %c0_19], %34 {strides = array<i32>} : memref<864x512xbf16, #tpu.memory_space<vmem>>, vector<16x512xbf16>,
    %c0_20 = arith.constant 0 : index
    %c63 = arith.constant 63 : index
    %36 = vector.load %arg11[%c0_20, %c63] : memref<32x768xf32, #tpu.memory_space<vmem>>, vector<16x512xf32>
    %37 = vector.extract_strided_slice %8 {offsets = [3, 0], sizes = [1, 512], strides = [1, 1]} : vector<9x512xf32> to vector<1x512xf32>
    %38 = vector.broadcast %37 : vector<1x512xf32> to vector<16x512xf32>
    %39 = arith.mulf %36, %38 : vector<16x512xf32>
    %40 = arith.truncf %39 : vector<16x512xf32> to vector<16x512xbf16>
    %c48 = arith.constant 48 : index
    %c0_21 = arith.constant 0 : index
    %41 = vector.load %arg12[%c48, %c0_21] : memref<864x512xbf16, #tpu.memory_space<vmem>>, vector<16x512xbf16>
    tpu.vector_store %arg12[%c48, %c0_21], %40 {strides = array<i32>} : memref<864x512xbf16, #tpu.memory_space<vmem>>, vector<16x512xbf16>,
    %c0_22 = arith.constant 0 : index
    %c64 = arith.constant 64 : index
    %42 = vector.load %arg11[%c0_22, %c64] : memref<32x768xf32, #tpu.memory_space<vmem>>, vector<16x512xf32>
    %43 = arith.truncf %42 : vector<16x512xf32> to vector<16x512xbf16>
    %c64_23 = arith.constant 64 : index
    %c0_24 = arith.constant 0 : index
    %44 = vector.load %arg12[%c64_23, %c0_24] : memref<864x512xbf16, #tpu.memory_space<vmem>>, vector<16x512xbf16>
    tpu.vector_store %arg12[%c64_23, %c0_24], %43 {strides = array<i32>} : memref<864x512xbf16, #tpu.memory_space<vmem>>, vector<16x512xbf16>,
    %c0_25 = arith.constant 0 : index
    %c65 = arith.constant 65 : index
    %45 = vector.load %arg11[%c0_25, %c65] : memref<32x768xf32, #tpu.memory_space<vmem>>, vector<16x512xf32>
    %46 = vector.extract_strided_slice %8 {offsets = [5, 0], sizes = [1, 512], strides = [1, 1]} : vector<9x512xf32> to vector<1x512xf32>
    %47 = vector.broadcast %46 : vector<1x512xf32> to vector<16x512xf32>
    %48 = arith.mulf %45, %47 : vector<16x512xf32>
    %49 = arith.truncf %48 : vector<16x512xf32> to vector<16x512xbf16>
    %c80 = arith.constant 80 : index
    %c0_26 = arith.constant 0 : index
    %50 = vector.load %arg12[%c80, %c0_26] : memref<864x512xbf16, #tpu.memory_space<vmem>>, vector<16x512xbf16>
    tpu.vector_store %arg12[%c80, %c0_26], %49 {strides = array<i32>} : memref<864x512xbf16, #tpu.memory_space<vmem>>, vector<16x512xbf16>,
    %c0_27 = arith.constant 0 : index
    %c71 = arith.constant 71 : index
    %51 = vector.load %arg11[%c0_27, %c71] : memref<32x768xf32, #tpu.memory_space<vmem>>, vector<16x512xf32>
    %52 = vector.extract_strided_slice %8 {offsets = [6, 0], sizes = [1, 512], strides = [1, 1]} : vector<9x512xf32> to vector<1x512xf32>
    %53 = vector.broadcast %52 : vector<1x512xf32> to vector<16x512xf32>
    %54 = arith.mulf %51, %53 : vector<16x512xf32>
    %55 = arith.truncf %54 : vector<16x512xf32> to vector<16x512xbf16>
    %c96 = arith.constant 96 : index
    %c0_28 = arith.constant 0 : index
    %56 = vector.load %arg12[%c96, %c0_28] : memref<864x512xbf16, #tpu.memory_space<vmem>>, vector<16x512xbf16>
    tpu.vector_store %arg12[%c96, %c0_28], %55 {strides = array<i32>} : memref<864x512xbf16, #tpu.memory_space<vmem>>, vector<16x512xbf16>,
    %c0_29 = arith.constant 0 : index
    %c72 = arith.constant 72 : index
    %57 = vector.load %arg11[%c0_29, %c72] : memref<32x768xf32, #tpu.memory_space<vmem>>, vector<16x512xf32>
    %58 = vector.extract_strided_slice %8 {offsets = [7, 0], sizes = [1, 512], strides = [1, 1]} : vector<9x512xf32> to vector<1x512xf32>
    %59 = vector.broadcast %58 : vector<1x512xf32> to vector<16x512xf32>
    %60 = arith.mulf %57, %59 : vector<16x512xf32>
    %61 = arith.truncf %60 : vector<16x512xf32> to vector<16x512xbf16>
    %c112 = arith.constant 112 : index
    %c0_30 = arith.constant 0 : index
    %62 = vector.load %arg12[%c112, %c0_30] : memref<864x512xbf16, #tpu.memory_space<vmem>>, vector<16x512xbf16>
    tpu.vector_store %arg12[%c112, %c0_30], %61 {strides = array<i32>} : memref<864x512xbf16, #tpu.memory_space<vmem>>, vector<16x512xbf16>,
    %c0_31 = arith.constant 0 : index
    %c73 = arith.constant 73 : index
    %63 = vector.load %arg11[%c0_31, %c73] : memref<32x768xf32, #tpu.memory_space<vmem>>, vector<16x512xf32>
    %64 = vector.extract_strided_slice %8 {offsets = [8, 0], sizes = [1, 512], strides = [1, 1]} : vector<9x512xf32> to vector<1x512xf32>
    %65 = vector.broadcast %64 : vector<1x512xf32> to vector<16x512xf32>
    %66 = arith.mulf %63, %65 : vector<16x512xf32>
    %67 = arith.truncf %66 : vector<16x512xf32> to vector<16x512xbf16>
    %c128_32 = arith.constant 128 : index
    %c0_33 = arith.constant 0 : index
    %68 = vector.load %arg12[%c128_32, %c0_33] : memref<864x512xbf16, #tpu.memory_space<vmem>>, vector<16x512xbf16>
    tpu.vector_store %arg12[%c128_32, %c0_33], %67 {strides = array<i32>} : memref<864x512xbf16, #tpu.memory_space<vmem>>, vector<16x512xbf16>,
    %c0_34 = arith.constant 0 : index
    %c119 = arith.constant 119 : index
    %69 = vector.load %arg11[%c0_34, %c119] : memref<32x768xf32, #tpu.memory_space<vmem>>, vector<16x512xf32>
    %70 = vector.extract_strided_slice %8 {offsets = [0, 0], sizes = [1, 512], strides = [1, 1]} : vector<9x512xf32> to vector<1x512xf32>
    %71 = vector.broadcast %70 : vector<1x512xf32> to vector<16x512xf32>
    %72 = arith.mulf %69, %71 : vector<16x512xf32>
    %73 = arith.truncf %72 : vector<16x512xf32> to vector<16x512xbf16>
    %c144 = arith.constant 144 : index
    %c0_35 = arith.constant 0 : index
    %74 = vector.load %arg12[%c144, %c0_35] : memref<864x512xbf16, #tpu.memory_space<vmem>>, vector<16x512xbf16>
    tpu.vector_store %arg12[%c144, %c0_35], %73 {strides = array<i32>} : memref<864x512xbf16, #tpu.memory_space<vmem>>, vector<16x512xbf16>,
    %c0_36 = arith.constant 0 : index
    %c120 = arith.constant 120 : index
    %75 = vector.load %arg11[%c0_36, %c120] : memref<32x768xf32, #tpu.memory_space<vmem>>, vector<16x512xf32>
    %76 = vector.extract_strided_slice %8 {offsets = [1, 0], sizes = [1, 512], strides = [1, 1]} : vector<9x512xf32> to vector<1x512xf32>
    %77 = vector.broadcast %76 : vector<1x512xf32> to vector<16x512xf32>
    %78 = arith.mulf %75, %77 : vector<16x512xf32>
    %79 = arith.truncf %78 : vector<16x512xf32> to vector<16x512xbf16>
    %c160 = arith.constant 160 : index
    %c0_37 = arith.constant 0 : index
    %80 = vector.load %arg12[%c160, %c0_37] : memref<864x512xbf16, #tpu.memory_space<vmem>>, vector<16x512xbf16>
    tpu.vector_store %arg12[%c160, %c0_37], %79 {strides = array<i32>} : memref<864x512xbf16, #tpu.memory_space<vmem>>, vector<16x512xbf16>,
    %c0_38 = arith.constant 0 : index
    %c121 = arith.constant 121 : index
    %81 = vector.load %arg11[%c0_38, %c121] : memref<32x768xf32, #tpu.memory_space<vmem>>, vector<16x512xf32>
    %82 = vector.extract_strided_slice %8 {offsets = [2, 0], sizes = [1, 512], strides = [1, 1]} : vector<9x512xf32> to vector<1x512xf32>
    %83 = vector.broadcast %82 : vector<1x512xf32> to vector<16x512xf32>
    %84 = arith.mulf %81, %83 : vector<16x512xf32>
    %85 = arith.truncf %84 : vector<16x512xf32> to vector<16x512xbf16>
    %c176 = arith.constant 176 : index
    %c0_39 = arith.constant 0 : index
    %86 = vector.load %arg12[%c176, %c0_39] : memref<864x512xbf16, #tpu.memory_space<vmem>>, vector<16x512xbf16>
    tpu.vector_store %arg12[%c176, %c0_39], %85 {strides = array<i32>} : memref<864x512xbf16, #tpu.memory_space<vmem>>, vector<16x512xbf16>,
    %c0_40 = arith.constant 0 : index
    %c127 = arith.constant 127 : index
    %87 = vector.load %arg11[%c0_40, %c127] : memref<32x768xf32, #tpu.memory_space<vmem>>, vector<16x512xf32>
    %88 = vector.extract_strided_slice %8 {offsets = [3, 0], sizes = [1, 512], strides = [1, 1]} : vector<9x512xf32> to vector<1x512xf32>
    %89 = vector.broadcast %88 : vector<1x512xf32> to vector<16x512xf32>
    %90 = arith.mulf %87, %89 : vector<16x512xf32>
    %91 = arith.truncf %90 : vector<16x512xf32> to vector<16x512xbf16>
    %c192 = arith.constant 192 : index
    %c0_41 = arith.constant 0 : index
    %92 = vector.load %arg12[%c192, %c0_41] : memref<864x512xbf16, #tpu.memory_space<vmem>>, vector<16x512xbf16>
    tpu.vector_store %arg12[%c192, %c0_41], %91 {strides = array<i32>} : memref<864x512xbf16, #tpu.memory_space<vmem>>, vector<16x512xbf16>,
    %c0_42 = arith.constant 0 : index
    %c128_43 = arith.constant 128 : index
    %93 = vector.load %arg11[%c0_42, %c128_43] : memref<32x768xf32, #tpu.memory_space<vmem>>, vector<16x512xf32>
    %94 = arith.truncf %93 : vector<16x512xf32> to vector<16x512xbf16>
    %c208 = arith.constant 208 : index
    %c0_44 = arith.constant 0 : index
    %95 = vector.load %arg12[%c208, %c0_44] : memref<864x512xbf16, #tpu.memory_space<vmem>>, vector<16x512xbf16>
    tpu.vector_store %arg12[%c208, %c0_44], %94 {strides = array<i32>} : memref<864x512xbf16, #tpu.memory_space<vmem>>, vector<16x512xbf16>,
    %c0_45 = arith.constant 0 : index
    %c129 = arith.constant 129 : index
    %96 = vector.load %arg11[%c0_45, %c129] : memref<32x768xf32, #tpu.memory_space<vmem>>, vector<16x512xf32>
    %97 = vector.extract_strided_slice %8 {offsets = [5, 0], sizes = [1, 512], strides = [1, 1]} : vector<9x512xf32> to vector<1x512xf32>
    %98 = vector.broadcast %97 : vector<1x512xf32> to vector<16x512xf32>
    %99 = arith.mulf %96, %98 : vector<16x512xf32>
    %100 = arith.truncf %99 : vector<16x512xf32> to vector<16x512xbf16>
    %c224 = arith.constant 224 : index
    %c0_46 = arith.constant 0 : index
    %101 = vector.load %arg12[%c224, %c0_46] : memref<864x512xbf16, #tpu.memory_space<vmem>>, vector<16x512xbf16>
    tpu.vector_store %arg12[%c224, %c0_46], %100 {strides = array<i32>} : memref<864x512xbf16, #tpu.memory_space<vmem>>, vector<16x512xbf16>,
    %c0_47 = arith.constant 0 : index
    %c135 = arith.constant 135 : index
    %102 = vector.load %arg11[%c0_47, %c135] : memref<32x768xf32, #tpu.memory_space<vmem>>, vector<16x512xf32>
    %103 = vector.extract_strided_slice %8 {offsets = [6, 0], sizes = [1, 512], strides = [1, 1]} : vector<9x512xf32> to vector<1x512xf32>
    %104 = vector.broadcast %103 : vector<1x512xf32> to vector<16x512xf32>
    %105 = arith.mulf %102, %104 : vector<16x512xf32>
    %106 = arith.truncf %105 : vector<16x512xf32> to vector<16x512xbf16>
    %c240 = arith.constant 240 : index
    %c0_48 = arith.constant 0 : index
    %107 = vector.load %arg12[%c240, %c0_48] : memref<864x512xbf16, #tpu.memory_space<vmem>>, vector<16x512xbf16>
    tpu.vector_store %arg12[%c240, %c0_48], %106 {strides = array<i32>} : memref<864x512xbf16, #tpu.memory_space<vmem>>, vector<16x512xbf16>,
    %c0_49 = arith.constant 0 : index
    %c136 = arith.constant 136 : index
    %108 = vector.load %arg11[%c0_49, %c136] : memref<32x768xf32, #tpu.memory_space<vmem>>, vector<16x512xf32>
    %109 = vector.extract_strided_slice %8 {offsets = [7, 0], sizes = [1, 512], strides = [1, 1]} : vector<9x512xf32> to vector<1x512xf32>
    %110 = vector.broadcast %109 : vector<1x512xf32> to vector<16x512xf32>
    %111 = arith.mulf %108, %110 : vector<16x512xf32>
    %112 = arith.truncf %111 : vector<16x512xf32> to vector<16x512xbf16>
    %c256 = arith.constant 256 : index
    %c0_50 = arith.constant 0 : index
    %113 = vector.load %arg12[%c256, %c0_50] : memref<864x512xbf16, #tpu.memory_space<vmem>>, vector<16x512xbf16>
    tpu.vector_store %arg12[%c256, %c0_50], %112 {strides = array<i32>} : memref<864x512xbf16, #tpu.memory_space<vmem>>, vector<16x512xbf16>,
    %c0_51 = arith.constant 0 : index
    %c137 = arith.constant 137 : index
    %114 = vector.load %arg11[%c0_51, %c137] : memref<32x768xf32, #tpu.memory_space<vmem>>, vector<16x512xf32>
    %115 = vector.extract_strided_slice %8 {offsets = [8, 0], sizes = [1, 512], strides = [1, 1]} : vector<9x512xf32> to vector<1x512xf32>
    %116 = vector.broadcast %115 : vector<1x512xf32> to vector<16x512xf32>
    %117 = arith.mulf %114, %116 : vector<16x512xf32>
    %118 = arith.truncf %117 : vector<16x512xf32> to vector<16x512xbf16>
    %c272 = arith.constant 272 : index
    %c0_52 = arith.constant 0 : index
    %119 = vector.load %arg12[%c272, %c0_52] : memref<864x512xbf16, #tpu.memory_space<vmem>>, vector<16x512xbf16>
    tpu.vector_store %arg12[%c272, %c0_52], %118 {strides = array<i32>} : memref<864x512xbf16, #tpu.memory_space<vmem>>, vector<16x512xbf16>,
    %c0_53 = arith.constant 0 : index
    %c183 = arith.constant 183 : index
    %120 = vector.load %arg11[%c0_53, %c183] : memref<32x768xf32, #tpu.memory_space<vmem>>, vector<16x512xf32>
    %121 = vector.extract_strided_slice %8 {offsets = [0, 0], sizes = [1, 512], strides = [1, 1]} : vector<9x512xf32> to vector<1x512xf32>
    %122 = vector.broadcast %121 : vector<1x512xf32> to vector<16x512xf32>
    %123 = arith.mulf %120, %122 : vector<16x512xf32>
    %124 = arith.truncf %123 : vector<16x512xf32> to vector<16x512xbf16>
    %c288 = arith.constant 288 : index
    %c0_54 = arith.constant 0 : index
    %125 = vector.load %arg12[%c288, %c0_54] : memref<864x512xbf16, #tpu.memory_space<vmem>>, vector<16x512xbf16>
    tpu.vector_store %arg12[%c288, %c0_54], %124 {strides = array<i32>} : memref<864x512xbf16, #tpu.memory_space<vmem>>, vector<16x512xbf16>,
    %c0_55 = arith.constant 0 : index
    %c184 = arith.constant 184 : index
    %126 = vector.load %arg11[%c0_55, %c184] : memref<32x768xf32, #tpu.memory_space<vmem>>, vector<16x512xf32>
    %127 = vector.extract_strided_slice %8 {offsets = [1, 0], sizes = [1, 512], strides = [1, 1]} : vector<9x512xf32> to vector<1x512xf32>
    %128 = vector.broadcast %127 : vector<1x512xf32> to vector<16x512xf32>
    %129 = arith.mulf %126, %128 : vector<16x512xf32>
    %130 = arith.truncf %129 : vector<16x512xf32> to vector<16x512xbf16>
    %c304 = arith.constant 304 : index
    %c0_56 = arith.constant 0 : index
    %131 = vector.load %arg12[%c304, %c0_56] : memref<864x512xbf16, #tpu.memory_space<vmem>>, vector<16x512xbf16>
    tpu.vector_store %arg12[%c304, %c0_56], %130 {strides = array<i32>} : memref<864x512xbf16, #tpu.memory_space<vmem>>, vector<16x512xbf16>,
    %c0_57 = arith.constant 0 : index
    %c185 = arith.constant 185 : index
    %132 = vector.load %arg11[%c0_57, %c185] : memref<32x768xf32, #tpu.memory_space<vmem>>, vector<16x512xf32>
    %133 = vector.extract_strided_slice %8 {offsets = [2, 0], sizes = [1, 512], strides = [1, 1]} : vector<9x512xf32> to vector<1x512xf32>
    %134 = vector.broadcast %133 : vector<1x512xf32> to vector<16x512xf32>
    %135 = arith.mulf %132, %134 : vector<16x512xf32>
    %136 = arith.truncf %135 : vector<16x512xf32> to vector<16x512xbf16>
    %c320 = arith.constant 320 : index
    %c0_58 = arith.constant 0 : index
    %137 = vector.load %arg12[%c320, %c0_58] : memref<864x512xbf16, #tpu.memory_space<vmem>>, vector<16x512xbf16>
    tpu.vector_store %arg12[%c320, %c0_58], %136 {strides = array<i32>} : memref<864x512xbf16, #tpu.memory_space<vmem>>, vector<16x512xbf16>,
    %c0_59 = arith.constant 0 : index
    %c191 = arith.constant 191 : index
    %138 = vector.load %arg11[%c0_59, %c191] : memref<32x768xf32, #tpu.memory_space<vmem>>, vector<16x512xf32>
    %139 = vector.extract_strided_slice %8 {offsets = [3, 0], sizes = [1, 512], strides = [1, 1]} : vector<9x512xf32> to vector<1x512xf32>
    %140 = vector.broadcast %139 : vector<1x512xf32> to vector<16x512xf32>
    %141 = arith.mulf %138, %140 : vector<16x512xf32>
    %142 = arith.truncf %141 : vector<16x512xf32> to vector<16x512xbf16>
    %c336 = arith.constant 336 : index
    %c0_60 = arith.constant 0 : index
    %143 = vector.load %arg12[%c336, %c0_60] : memref<864x512xbf16, #tpu.memory_space<vmem>>, vector<16x512xbf16>
    tpu.vector_store %arg12[%c336, %c0_60], %142 {strides = array<i32>} : memref<864x512xbf16, #tpu.memory_space<vmem>>, vector<16x512xbf16>,
    %c0_61 = arith.constant 0 : index
    %c192_62 = arith.constant 192 : index
    %144 = vector.load %arg11[%c0_61, %c192_62] : memref<32x768xf32, #tpu.memory_space<vmem>>, vector<16x512xf32>
    %145 = arith.truncf %144 : vector<16x512xf32> to vector<16x512xbf16>
    %c352 = arith.constant 352 : index
    %c0_63 = arith.constant 0 : index
    %146 = vector.load %arg12[%c352, %c0_63] : memref<864x512xbf16, #tpu.memory_space<vmem>>, vector<16x512xbf16>
    tpu.vector_store %arg12[%c352, %c0_63], %145 {strides = array<i32>} : memref<864x512xbf16, #tpu.memory_space<vmem>>, vector<16x512xbf16>,
    %c0_64 = arith.constant 0 : index
    %c193 = arith.constant 193 : index
    %147 = vector.load %arg11[%c0_64, %c193] : memref<32x768xf32, #tpu.memory_space<vmem>>, vector<16x512xf32>
    %148 = vector.extract_strided_slice %8 {offsets = [5, 0], sizes = [1, 512], strides = [1, 1]} : vector<9x512xf32> to vector<1x512xf32>
    %149 = vector.broadcast %148 : vector<1x512xf32> to vector<16x512xf32>
    %150 = arith.mulf %147, %149 : vector<16x512xf32>
    %151 = arith.truncf %150 : vector<16x512xf32> to vector<16x512xbf16>
    %c368 = arith.constant 368 : index
    %c0_65 = arith.constant 0 : index
    %152 = vector.load %arg12[%c368, %c0_65] : memref<864x512xbf16, #tpu.memory_space<vmem>>, vector<16x512xbf16>
    tpu.vector_store %arg12[%c368, %c0_65], %151 {strides = array<i32>} : memref<864x512xbf16, #tpu.memory_space<vmem>>, vector<16x512xbf16>,
    %c0_66 = arith.constant 0 : index
    %c199 = arith.constant 199 : index
    %153 = vector.load %arg11[%c0_66, %c199] : memref<32x768xf32, #tpu.memory_space<vmem>>, vector<16x512xf32>
    %154 = vector.extract_strided_slice %8 {offsets = [6, 0], sizes = [1, 512], strides = [1, 1]} : vector<9x512xf32> to vector<1x512xf32>
    %155 = vector.broadcast %154 : vector<1x512xf32> to vector<16x512xf32>
    %156 = arith.mulf %153, %155 : vector<16x512xf32>
    %157 = arith.truncf %156 : vector<16x512xf32> to vector<16x512xbf16>
    %c384 = arith.constant 384 : index
    %c0_67 = arith.constant 0 : index
    %158 = vector.load %arg12[%c384, %c0_67] : memref<864x512xbf16, #tpu.memory_space<vmem>>, vector<16x512xbf16>
    tpu.vector_store %arg12[%c384, %c0_67], %157 {strides = array<i32>} : memref<864x512xbf16, #tpu.memory_space<vmem>>, vector<16x512xbf16>,
    %c0_68 = arith.constant 0 : index
    %c200 = arith.constant 200 : index
    %159 = vector.load %arg11[%c0_68, %c200] : memref<32x768xf32, #tpu.memory_space<vmem>>, vector<16x512xf32>
    %160 = vector.extract_strided_slice %8 {offsets = [7, 0], sizes = [1, 512], strides = [1, 1]} : vector<9x512xf32> to vector<1x512xf32>
    %161 = vector.broadcast %160 : vector<1x512xf32> to vector<16x512xf32>
    %162 = arith.mulf %159, %161 : vector<16x512xf32>
    %163 = arith.truncf %162 : vector<16x512xf32> to vector<16x512xbf16>
    %c400 = arith.constant 400 : index
    %c0_69 = arith.constant 0 : index
    %164 = vector.load %arg12[%c400, %c0_69] : memref<864x512xbf16, #tpu.memory_space<vmem>>, vector<16x512xbf16>
    tpu.vector_store %arg12[%c400, %c0_69], %163 {strides = array<i32>} : memref<864x512xbf16, #tpu.memory_space<vmem>>, vector<16x512xbf16>,
    %c0_70 = arith.constant 0 : index
    %c201 = arith.constant 201 : index
    %165 = vector.load %arg11[%c0_70, %c201] : memref<32x768xf32, #tpu.memory_space<vmem>>, vector<16x512xf32>
    %166 = vector.extract_strided_slice %8 {offsets = [8, 0], sizes = [1, 512], strides = [1, 1]} : vector<9x512xf32> to vector<1x512xf32>
    %167 = vector.broadcast %166 : vector<1x512xf32> to vector<16x512xf32>
    %168 = arith.mulf %165, %167 : vector<16x512xf32>
    %169 = arith.truncf %168 : vector<16x512xf32> to vector<16x512xbf16>
    %c416 = arith.constant 416 : index
    %c0_71 = arith.constant 0 : index
    %170 = vector.load %arg12[%c416, %c0_71] : memref<864x512xbf16, #tpu.memory_space<vmem>>, vector<16x512xbf16>
    tpu.vector_store %arg12[%c416, %c0_71], %169 {strides = array<i32>} : memref<864x512xbf16, #tpu.memory_space<vmem>>, vector<16x512xbf16>,
    %c0_72 = arith.constant 0 : index
    %c0_73 = arith.constant 0 : index
    %171 = vector.load %arg3[%c0_72, %c0_73] : memref<32x432xbf16, #tpu.memory_space<vmem>>, vector<32x432xbf16>
    %c0_74 = arith.constant 0 : index
    %c0_75 = arith.constant 0 : index
    %172 = vector.load %arg12[%c0_74, %c0_75] : memref<864x512xbf16, #tpu.memory_space<vmem>>, vector<432x512xbf16>
    %cst_76 = arith.constant dense<0.000000e+00> : vector<32x512xf32>
    %173 = tpu.matmul %171, %172, %cst_76 {dimension_numbers = #tpu.dot_dimension_numbers<[1], [0], [0], [1], [0, 0, 1, 1], [], []>} : vector<32x432xbf16>, vector<432x512xbf16>, vector<32x512xf32> -> vector<32x512xf32>
    %c0_77 = arith.constant 0 : index
    %c0_78 = arith.constant 0 : index
    %174 = vector.load %arg4[%c0_77, %c0_78] : memref<32x1xf32, #tpu.memory_space<vmem>>, vector<32x1xf32>
    %175 = vector.broadcast %174 : vector<32x1xf32> to vector<32x512xf32>
    %176 = arith.addf %173, %175 : vector<32x512xf32>
    %177 = vector.extract_strided_slice %7 {offsets = [32, 0], sizes = [32, 1], strides = [1, 1]} : vector<96x1xf32> to vector<32x1xf32>
    %178 = vector.broadcast %177 : vector<32x1xf32> to vector<32x512xf32>
    %179 = arith.mulf %176, %178 : vector<32x512xf32>
    %180 = vector.extract_strided_slice %7 {offsets = [64, 0], sizes = [32, 1], strides = [1, 1]} : vector<96x1xf32> to vector<32x1xf32>
    %181 = vector.broadcast %180 : vector<32x1xf32> to vector<32x512xf32>
    %182 = arith.addf %179, %181 : vector<32x512xf32>
    %cst_79 = arith.constant 0.000000e+00 : f32
    %183 = vector.broadcast %cst_79 : f32 to vector<32x512xf32>
    %184 = arith.maximumf %182, %183 : vector<32x512xf32>
    %c0_80 = arith.constant 0 : index
    %c128_81 = arith.constant 128 : index
    %185 = vector.load %arg11[%c0_80, %c128_81] : memref<32x768xf32, #tpu.memory_space<vmem>>, vector<32x512xf32>
    tpu.vector_store %arg11[%c0_80, %c128_81], %184 {strides = array<i32>} : memref<32x768xf32, #tpu.memory_space<vmem>>, vector<32x512xf32>,
    %c0_82 = arith.constant 0 : index
    %c55_83 = arith.constant 55 : index
    %186 = vector.load %arg11[%c0_82, %c55_83] : memref<32x768xf32, #tpu.memory_space<vmem>>, vector<32x512xf32>
    %187 = vector.extract_strided_slice %8 {offsets = [0, 0], sizes = [1, 512], strides = [1, 1]} : vector<9x512xf32> to vector<1x512xf32>
    %188 = vector.broadcast %187 : vector<1x512xf32> to vector<32x512xf32>
    %189 = arith.mulf %186, %188 : vector<32x512xf32>
    %190 = arith.truncf %189 : vector<32x512xf32> to vector<32x512xbf16>
    %c0_84 = arith.constant 0 : index
    %c0_85 = arith.constant 0 : index
    %191 = vector.load %arg12[%c0_84, %c0_85] : memref<864x512xbf16, #tpu.memory_space<vmem>>, vector<32x512xbf16>
    tpu.vector_store %arg12[%c0_84, %c0_85], %190 {strides = array<i32>} : memref<864x512xbf16, #tpu.memory_space<vmem>>, vector<32x512xbf16>,
    %c0_86 = arith.constant 0 : index
    %c56_87 = arith.constant 56 : index
    %192 = vector.load %arg11[%c0_86, %c56_87] : memref<32x768xf32, #tpu.memory_space<vmem>>, vector<32x512xf32>
    %193 = vector.extract_strided_slice %8 {offsets = [1, 0], sizes = [1, 512], strides = [1, 1]} : vector<9x512xf32> to vector<1x512xf32>
    %194 = vector.broadcast %193 : vector<1x512xf32> to vector<32x512xf32>
    %195 = arith.mulf %192, %194 : vector<32x512xf32>
    %196 = arith.truncf %195 : vector<32x512xf32> to vector<32x512xbf16>
    %c32_88 = arith.constant 32 : index
    %c0_89 = arith.constant 0 : index
    %197 = vector.load %arg12[%c32_88, %c0_89] : memref<864x512xbf16, #tpu.memory_space<vmem>>, vector<32x512xbf16>
    tpu.vector_store %arg12[%c32_88, %c0_89], %196 {strides = array<i32>} : memref<864x512xbf16, #tpu.memory_space<vmem>>, vector<32x512xbf16>,
    %c0_90 = arith.constant 0 : index
    %c57_91 = arith.constant 57 : index
    %198 = vector.load %arg11[%c0_90, %c57_91] : memref<32x768xf32, #tpu.memory_space<vmem>>, vector<32x512xf32>
    %199 = vector.extract_strided_slice %8 {offsets = [2, 0], sizes = [1, 512], strides = [1, 1]} : vector<9x512xf32> to vector<1x512xf32>
    %200 = vector.broadcast %199 : vector<1x512xf32> to vector<32x512xf32>
    %201 = arith.mulf %198, %200 : vector<32x512xf32>
    %202 = arith.truncf %201 : vector<32x512xf32> to vector<32x512xbf16>
    %c64_92 = arith.constant 64 : index
    %c0_93 = arith.constant 0 : index
    %203 = vector.load %arg12[%c64_92, %c0_93] : memref<864x512xbf16, #tpu.memory_space<vmem>>, vector<32x512xbf16>
    tpu.vector_store %arg12[%c64_92, %c0_93], %202 {strides = array<i32>} : memref<864x512xbf16, #tpu.memory_space<vmem>>, vector<32x512xbf16>,
    %c0_94 = arith.constant 0 : index
    %c63_95 = arith.constant 63 : index
    %204 = vector.load %arg11[%c0_94, %c63_95] : memref<32x768xf32, #tpu.memory_space<vmem>>, vector<32x512xf32>
    %205 = vector.extract_strided_slice %8 {offsets = [3, 0], sizes = [1, 512], strides = [1, 1]} : vector<9x512xf32> to vector<1x512xf32>
    %206 = vector.broadcast %205 : vector<1x512xf32> to vector<32x512xf32>
    %207 = arith.mulf %204, %206 : vector<32x512xf32>
    %208 = arith.truncf %207 : vector<32x512xf32> to vector<32x512xbf16>
    %c96_96 = arith.constant 96 : index
    %c0_97 = arith.constant 0 : index
    %209 = vector.load %arg12[%c96_96, %c0_97] : memref<864x512xbf16, #tpu.memory_space<vmem>>, vector<32x512xbf16>
    tpu.vector_store %arg12[%c96_96, %c0_97], %208 {strides = array<i32>} : memref<864x512xbf16, #tpu.memory_space<vmem>>, vector<32x512xbf16>,
    %c0_98 = arith.constant 0 : index
    %c64_99 = arith.constant 64 : index
    %210 = vector.load %arg11[%c0_98, %c64_99] : memref<32x768xf32, #tpu.memory_space<vmem>>, vector<32x512xf32>
    %211 = arith.truncf %210 : vector<32x512xf32> to vector<32x512xbf16>
    %c128_100 = arith.constant 128 : index
    %c0_101 = arith.constant 0 : index
    %212 = vector.load %arg12[%c128_100, %c0_101] : memref<864x512xbf16, #tpu.memory_space<vmem>>, vector<32x512xbf16>
    tpu.vector_store %arg12[%c128_100, %c0_101], %211 {strides = array<i32>} : memref<864x512xbf16, #tpu.memory_space<vmem>>, vector<32x512xbf16>,
    %c0_102 = arith.constant 0 : index
    %c65_103 = arith.constant 65 : index
    %213 = vector.load %arg11[%c0_102, %c65_103] : memref<32x768xf32, #tpu.memory_space<vmem>>, vector<32x512xf32>
    %214 = vector.extract_strided_slice %8 {offsets = [5, 0], sizes = [1, 512], strides = [1, 1]} : vector<9x512xf32> to vector<1x512xf32>
    %215 = vector.broadcast %214 : vector<1x512xf32> to vector<32x512xf32>
    %216 = arith.mulf %213, %215 : vector<32x512xf32>
    %217 = arith.truncf %216 : vector<32x512xf32> to vector<32x512xbf16>
    %c160_104 = arith.constant 160 : index
    %c0_105 = arith.constant 0 : index
    %218 = vector.load %arg12[%c160_104, %c0_105] : memref<864x512xbf16, #tpu.memory_space<vmem>>, vector<32x512xbf16>
    tpu.vector_store %arg12[%c160_104, %c0_105], %217 {strides = array<i32>} : memref<864x512xbf16, #tpu.memory_space<vmem>>, vector<32x512xbf16>,
    %c0_106 = arith.constant 0 : index
    %c71_107 = arith.constant 71 : index
    %219 = vector.load %arg11[%c0_106, %c71_107] : memref<32x768xf32, #tpu.memory_space<vmem>>, vector<32x512xf32>
    %220 = vector.extract_strided_slice %8 {offsets = [6, 0], sizes = [1, 512], strides = [1, 1]} : vector<9x512xf32> to vector<1x512xf32>
    %221 = vector.broadcast %220 : vector<1x512xf32> to vector<32x512xf32>
    %222 = arith.mulf %219, %221 : vector<32x512xf32>
    %223 = arith.truncf %222 : vector<32x512xf32> to vector<32x512xbf16>
    %c192_108 = arith.constant 192 : index
    %c0_109 = arith.constant 0 : index
    %224 = vector.load %arg12[%c192_108, %c0_109] : memref<864x512xbf16, #tpu.memory_space<vmem>>, vector<32x512xbf16>
    tpu.vector_store %arg12[%c192_108, %c0_109], %223 {strides = array<i32>} : memref<864x512xbf16, #tpu.memory_space<vmem>>, vector<32x512xbf16>,
    %c0_110 = arith.constant 0 : index
    %c72_111 = arith.constant 72 : index
    %225 = vector.load %arg11[%c0_110, %c72_111] : memref<32x768xf32, #tpu.memory_space<vmem>>, vector<32x512xf32>
    %226 = vector.extract_strided_slice %8 {offsets = [7, 0], sizes = [1, 512], strides = [1, 1]} : vector<9x512xf32> to vector<1x512xf32>
    %227 = vector.broadcast %226 : vector<1x512xf32> to vector<32x512xf32>
    %228 = arith.mulf %225, %227 : vector<32x512xf32>
    %229 = arith.truncf %228 : vector<32x512xf32> to vector<32x512xbf16>
    %c224_112 = arith.constant 224 : index
    %c0_113 = arith.constant 0 : index
    %230 = vector.load %arg12[%c224_112, %c0_113] : memref<864x512xbf16, #tpu.memory_space<vmem>>, vector<32x512xbf16>
    tpu.vector_store %arg12[%c224_112, %c0_113], %229 {strides = array<i32>} : memref<864x512xbf16, #tpu.memory_space<vmem>>, vector<32x512xbf16>,
    %c0_114 = arith.constant 0 : index
    %c73_115 = arith.constant 73 : index
    %231 = vector.load %arg11[%c0_114, %c73_115] : memref<32x768xf32, #tpu.memory_space<vmem>>, vector<32x512xf32>
    %232 = vector.extract_strided_slice %8 {offsets = [8, 0], sizes = [1, 512], strides = [1, 1]} : vector<9x512xf32> to vector<1x512xf32>
    %233 = vector.broadcast %232 : vector<1x512xf32> to vector<32x512xf32>
    %234 = arith.mulf %231, %233 : vector<32x512xf32>
    %235 = arith.truncf %234 : vector<32x512xf32> to vector<32x512xbf16>
    %c256_116 = arith.constant 256 : index
    %c0_117 = arith.constant 0 : index
    %236 = vector.load %arg12[%c256_116, %c0_117] : memref<864x512xbf16, #tpu.memory_space<vmem>>, vector<32x512xbf16>
    tpu.vector_store %arg12[%c256_116, %c0_117], %235 {strides = array<i32>} : memref<864x512xbf16, #tpu.memory_space<vmem>>, vector<32x512xbf16>,
    %c0_118 = arith.constant 0 : index
    %c119_119 = arith.constant 119 : index
    %237 = vector.load %arg11[%c0_118, %c119_119] : memref<32x768xf32, #tpu.memory_space<vmem>>, vector<32x512xf32>
    %238 = vector.extract_strided_slice %8 {offsets = [0, 0], sizes = [1, 512], strides = [1, 1]} : vector<9x512xf32> to vector<1x512xf32>
    %239 = vector.broadcast %238 : vector<1x512xf32> to vector<32x512xf32>
    %240 = arith.mulf %237, %239 : vector<32x512xf32>
    %241 = arith.truncf %240 : vector<32x512xf32> to vector<32x512xbf16>
    %c288_120 = arith.constant 288 : index
    %c0_121 = arith.constant 0 : index
    %242 = vector.load %arg12[%c288_120, %c0_121] : memref<864x512xbf16, #tpu.memory_space<vmem>>, vector<32x512xbf16>
    tpu.vector_store %arg12[%c288_120, %c0_121], %241 {strides = array<i32>} : memref<864x512xbf16, #tpu.memory_space<vmem>>, vector<32x512xbf16>,
    %c0_122 = arith.constant 0 : index
    %c120_123 = arith.constant 120 : index
    %243 = vector.load %arg11[%c0_122, %c120_123] : memref<32x768xf32, #tpu.memory_space<vmem>>, vector<32x512xf32>
    %244 = vector.extract_strided_slice %8 {offsets = [1, 0], sizes = [1, 512], strides = [1, 1]} : vector<9x512xf32> to vector<1x512xf32>
    %245 = vector.broadcast %244 : vector<1x512xf32> to vector<32x512xf32>
    %246 = arith.mulf %243, %245 : vector<32x512xf32>
    %247 = arith.truncf %246 : vector<32x512xf32> to vector<32x512xbf16>
    %c320_124 = arith.constant 320 : index
    %c0_125 = arith.constant 0 : index
    %248 = vector.load %arg12[%c320_124, %c0_125] : memref<864x512xbf16, #tpu.memory_space<vmem>>, vector<32x512xbf16>
    tpu.vector_store %arg12[%c320_124, %c0_125], %247 {strides = array<i32>} : memref<864x512xbf16, #tpu.memory_space<vmem>>, vector<32x512xbf16>,
    %c0_126 = arith.constant 0 : index
    %c121_127 = arith.constant 121 : index
    %249 = vector.load %arg11[%c0_126, %c121_127] : memref<32x768xf32, #tpu.memory_space<vmem>>, vector<32x512xf32>
    %250 = vector.extract_strided_slice %8 {offsets = [2, 0], sizes = [1, 512], strides = [1, 1]} : vector<9x512xf32> to vector<1x512xf32>
    %251 = vector.broadcast %250 : vector<1x512xf32> to vector<32x512xf32>
    %252 = arith.mulf %249, %251 : vector<32x512xf32>
    %253 = arith.truncf %252 : vector<32x512xf32> to vector<32x512xbf16>
    %c352_128 = arith.constant 352 : index
    %c0_129 = arith.constant 0 : index
    %254 = vector.load %arg12[%c352_128, %c0_129] : memref<864x512xbf16, #tpu.memory_space<vmem>>, vector<32x512xbf16>
    tpu.vector_store %arg12[%c352_128, %c0_129], %253 {strides = array<i32>} : memref<864x512xbf16, #tpu.memory_space<vmem>>, vector<32x512xbf16>,
    %c0_130 = arith.constant 0 : index
    %c127_131 = arith.constant 127 : index
    %255 = vector.load %arg11[%c0_130, %c127_131] : memref<32x768xf32, #tpu.memory_space<vmem>>, vector<32x512xf32>
    %256 = vector.extract_strided_slice %8 {offsets = [3, 0], sizes = [1, 512], strides = [1, 1]} : vector<9x512xf32> to vector<1x512xf32>
    %257 = vector.broadcast %256 : vector<1x512xf32> to vector<32x512xf32>
    %258 = arith.mulf %255, %257 : vector<32x512xf32>
    %259 = arith.truncf %258 : vector<32x512xf32> to vector<32x512xbf16>
    %c384_132 = arith.constant 384 : index
    %c0_133 = arith.constant 0 : index
    %260 = vector.load %arg12[%c384_132, %c0_133] : memref<864x512xbf16, #tpu.memory_space<vmem>>, vector<32x512xbf16>
    tpu.vector_store %arg12[%c384_132, %c0_133], %259 {strides = array<i32>} : memref<864x512xbf16, #tpu.memory_space<vmem>>, vector<32x512xbf16>,
    %c0_134 = arith.constant 0 : index
    %c128_135 = arith.constant 128 : index
    %261 = vector.load %arg11[%c0_134, %c128_135] : memref<32x768xf32, #tpu.memory_space<vmem>>, vector<32x512xf32>
    %262 = arith.truncf %261 : vector<32x512xf32> to vector<32x512xbf16>
    %c416_136 = arith.constant 416 : index
    %c0_137 = arith.constant 0 : index
    %263 = vector.load %arg12[%c416_136, %c0_137] : memref<864x512xbf16, #tpu.memory_space<vmem>>, vector<32x512xbf16>
    tpu.vector_store %arg12[%c416_136, %c0_137], %262 {strides = array<i32>} : memref<864x512xbf16, #tpu.memory_space<vmem>>, vector<32x512xbf16>,
    %c0_138 = arith.constant 0 : index
    %c129_139 = arith.constant 129 : index
    %264 = vector.load %arg11[%c0_138, %c129_139] : memref<32x768xf32, #tpu.memory_space<vmem>>, vector<32x512xf32>
    %265 = vector.extract_strided_slice %8 {offsets = [5, 0], sizes = [1, 512], strides = [1, 1]} : vector<9x512xf32> to vector<1x512xf32>
    %266 = vector.broadcast %265 : vector<1x512xf32> to vector<32x512xf32>
    %267 = arith.mulf %264, %266 : vector<32x512xf32>
    %268 = arith.truncf %267 : vector<32x512xf32> to vector<32x512xbf16>
    %c448 = arith.constant 448 : index
    %c0_140 = arith.constant 0 : index
    %269 = vector.load %arg12[%c448, %c0_140] : memref<864x512xbf16, #tpu.memory_space<vmem>>, vector<32x512xbf16>
    tpu.vector_store %arg12[%c448, %c0_140], %268 {strides = array<i32>} : memref<864x512xbf16, #tpu.memory_space<vmem>>, vector<32x512xbf16>,
    %c0_141 = arith.constant 0 : index
    %c135_142 = arith.constant 135 : index
    %270 = vector.load %arg11[%c0_141, %c135_142] : memref<32x768xf32, #tpu.memory_space<vmem>>, vector<32x512xf32>
    %271 = vector.extract_strided_slice %8 {offsets = [6, 0], sizes = [1, 512], strides = [1, 1]} : vector<9x512xf32> to vector<1x512xf32>
    %272 = vector.broadcast %271 : vector<1x512xf32> to vector<32x512xf32>
    %273 = arith.mulf %270, %272 : vector<32x512xf32>
    %274 = arith.truncf %273 : vector<32x512xf32> to vector<32x512xbf16>
    %c480 = arith.constant 480 : index
    %c0_143 = arith.constant 0 : index
    %275 = vector.load %arg12[%c480, %c0_143] : memref<864x512xbf16, #tpu.memory_space<vmem>>, vector<32x512xbf16>
    tpu.vector_store %arg12[%c480, %c0_143], %274 {strides = array<i32>} : memref<864x512xbf16, #tpu.memory_space<vmem>>, vector<32x512xbf16>,
    %c0_144 = arith.constant 0 : index
    %c136_145 = arith.constant 136 : index
    %276 = vector.load %arg11[%c0_144, %c136_145] : memref<32x768xf32, #tpu.memory_space<vmem>>, vector<32x512xf32>
    %277 = vector.extract_strided_slice %8 {offsets = [7, 0], sizes = [1, 512], strides = [1, 1]} : vector<9x512xf32> to vector<1x512xf32>
    %278 = vector.broadcast %277 : vector<1x512xf32> to vector<32x512xf32>
    %279 = arith.mulf %276, %278 : vector<32x512xf32>
    %280 = arith.truncf %279 : vector<32x512xf32> to vector<32x512xbf16>
    %c512 = arith.constant 512 : index
    %c0_146 = arith.constant 0 : index
    %281 = vector.load %arg12[%c512, %c0_146] : memref<864x512xbf16, #tpu.memory_space<vmem>>, vector<32x512xbf16>
    tpu.vector_store %arg12[%c512, %c0_146], %280 {strides = array<i32>} : memref<864x512xbf16, #tpu.memory_space<vmem>>, vector<32x512xbf16>,
    %c0_147 = arith.constant 0 : index
    %c137_148 = arith.constant 137 : index
    %282 = vector.load %arg11[%c0_147, %c137_148] : memref<32x768xf32, #tpu.memory_space<vmem>>, vector<32x512xf32>
    %283 = vector.extract_strided_slice %8 {offsets = [8, 0], sizes = [1, 512], strides = [1, 1]} : vector<9x512xf32> to vector<1x512xf32>
    %284 = vector.broadcast %283 : vector<1x512xf32> to vector<32x512xf32>
    %285 = arith.mulf %282, %284 : vector<32x512xf32>
    %286 = arith.truncf %285 : vector<32x512xf32> to vector<32x512xbf16>
    %c544 = arith.constant 544 : index
    %c0_149 = arith.constant 0 : index
    %287 = vector.load %arg12[%c544, %c0_149] : memref<864x512xbf16, #tpu.memory_space<vmem>>, vector<32x512xbf16>
    tpu.vector_store %arg12[%c544, %c0_149], %286 {strides = array<i32>} : memref<864x512xbf16, #tpu.memory_space<vmem>>, vector<32x512xbf16>,
    %c0_150 = arith.constant 0 : index
    %c183_151 = arith.constant 183 : index
    %288 = vector.load %arg11[%c0_150, %c183_151] : memref<32x768xf32, #tpu.memory_space<vmem>>, vector<32x512xf32>
    %289 = vector.extract_strided_slice %8 {offsets = [0, 0], sizes = [1, 512], strides = [1, 1]} : vector<9x512xf32> to vector<1x512xf32>
    %290 = vector.broadcast %289 : vector<1x512xf32> to vector<32x512xf32>
    %291 = arith.mulf %288, %290 : vector<32x512xf32>
    %292 = arith.truncf %291 : vector<32x512xf32> to vector<32x512xbf16>
    %c576 = arith.constant 576 : index
    %c0_152 = arith.constant 0 : index
    %293 = vector.load %arg12[%c576, %c0_152] : memref<864x512xbf16, #tpu.memory_space<vmem>>, vector<32x512xbf16>
    tpu.vector_store %arg12[%c576, %c0_152], %292 {strides = array<i32>} : memref<864x512xbf16, #tpu.memory_space<vmem>>, vector<32x512xbf16>,
    %c0_153 = arith.constant 0 : index
    %c184_154 = arith.constant 184 : index
    %294 = vector.load %arg11[%c0_153, %c184_154] : memref<32x768xf32, #tpu.memory_space<vmem>>, vector<32x512xf32>
    %295 = vector.extract_strided_slice %8 {offsets = [1, 0], sizes = [1, 512], strides = [1, 1]} : vector<9x512xf32> to vector<1x512xf32>
    %296 = vector.broadcast %295 : vector<1x512xf32> to vector<32x512xf32>
    %297 = arith.mulf %294, %296 : vector<32x512xf32>
    %298 = arith.truncf %297 : vector<32x512xf32> to vector<32x512xbf16>
    %c608 = arith.constant 608 : index
    %c0_155 = arith.constant 0 : index
    %299 = vector.load %arg12[%c608, %c0_155] : memref<864x512xbf16, #tpu.memory_space<vmem>>, vector<32x512xbf16>
    tpu.vector_store %arg12[%c608, %c0_155], %298 {strides = array<i32>} : memref<864x512xbf16, #tpu.memory_space<vmem>>, vector<32x512xbf16>,
    %c0_156 = arith.constant 0 : index
    %c185_157 = arith.constant 185 : index
    %300 = vector.load %arg11[%c0_156, %c185_157] : memref<32x768xf32, #tpu.memory_space<vmem>>, vector<32x512xf32>
    %301 = vector.extract_strided_slice %8 {offsets = [2, 0], sizes = [1, 512], strides = [1, 1]} : vector<9x512xf32> to vector<1x512xf32>
    %302 = vector.broadcast %301 : vector<1x512xf32> to vector<32x512xf32>
    %303 = arith.mulf %300, %302 : vector<32x512xf32>
    %304 = arith.truncf %303 : vector<32x512xf32> to vector<32x512xbf16>
    %c640_158 = arith.constant 640 : index
    %c0_159 = arith.constant 0 : index
    %305 = vector.load %arg12[%c640_158, %c0_159] : memref<864x512xbf16, #tpu.memory_space<vmem>>, vector<32x512xbf16>
    tpu.vector_store %arg12[%c640_158, %c0_159], %304 {strides = array<i32>} : memref<864x512xbf16, #tpu.memory_space<vmem>>, vector<32x512xbf16>,
    %c0_160 = arith.constant 0 : index
    %c191_161 = arith.constant 191 : index
    %306 = vector.load %arg11[%c0_160, %c191_161] : memref<32x768xf32, #tpu.memory_space<vmem>>, vector<32x512xf32>
    %307 = vector.extract_strided_slice %8 {offsets = [3, 0], sizes = [1, 512], strides = [1, 1]} : vector<9x512xf32> to vector<1x512xf32>
    %308 = vector.broadcast %307 : vector<1x512xf32> to vector<32x512xf32>
    %309 = arith.mulf %306, %308 : vector<32x512xf32>
    %310 = arith.truncf %309 : vector<32x512xf32> to vector<32x512xbf16>
    %c672 = arith.constant 672 : index
    %c0_162 = arith.constant 0 : index
    %311 = vector.load %arg12[%c672, %c0_162] : memref<864x512xbf16, #tpu.memory_space<vmem>>, vector<32x512xbf16>
    tpu.vector_store %arg12[%c672, %c0_162], %310 {strides = array<i32>} : memref<864x512xbf16, #tpu.memory_space<vmem>>, vector<32x512xbf16>,
    %c0_163 = arith.constant 0 : index
    %c192_164 = arith.constant 192 : index
    %312 = vector.load %arg11[%c0_163, %c192_164] : memref<32x768xf32, #tpu.memory_space<vmem>>, vector<32x512xf32>
    %313 = arith.truncf %312 : vector<32x512xf32> to vector<32x512xbf16>
    %c704 = arith.constant 704 : index
    %c0_165 = arith.constant 0 : index
    %314 = vector.load %arg12[%c704, %c0_165] : memref<864x512xbf16, #tpu.memory_space<vmem>>, vector<32x512xbf16>
    tpu.vector_store %arg12[%c704, %c0_165], %313 {strides = array<i32>} : memref<864x512xbf16, #tpu.memory_space<vmem>>, vector<32x512xbf16>,
    %c0_166 = arith.constant 0 : index
    %c193_167 = arith.constant 193 : index
    %315 = vector.load %arg11[%c0_166, %c193_167] : memref<32x768xf32, #tpu.memory_space<vmem>>, vector<32x512xf32>
    %316 = vector.extract_strided_slice %8 {offsets = [5, 0], sizes = [1, 512], strides = [1, 1]} : vector<9x512xf32> to vector<1x512xf32>
    %317 = vector.broadcast %316 : vector<1x512xf32> to vector<32x512xf32>
    %318 = arith.mulf %315, %317 : vector<32x512xf32>
    %319 = arith.truncf %318 : vector<32x512xf32> to vector<32x512xbf16>
    %c736 = arith.constant 736 : index
    %c0_168 = arith.constant 0 : index
    %320 = vector.load %arg12[%c736, %c0_168] : memref<864x512xbf16, #tpu.memory_space<vmem>>, vector<32x512xbf16>
    tpu.vector_store %arg12[%c736, %c0_168], %319 {strides = array<i32>} : memref<864x512xbf16, #tpu.memory_space<vmem>>, vector<32x512xbf16>,
    %c0_169 = arith.constant 0 : index
    %c199_170 = arith.constant 199 : index
    %321 = vector.load %arg11[%c0_169, %c199_170] : memref<32x768xf32, #tpu.memory_space<vmem>>, vector<32x512xf32>
    %322 = vector.extract_strided_slice %8 {offsets = [6, 0], sizes = [1, 512], strides = [1, 1]} : vector<9x512xf32> to vector<1x512xf32>
    %323 = vector.broadcast %322 : vector<1x512xf32> to vector<32x512xf32>
    %324 = arith.mulf %321, %323 : vector<32x512xf32>
    %325 = arith.truncf %324 : vector<32x512xf32> to vector<32x512xbf16>
    %c768 = arith.constant 768 : index
    %c0_171 = arith.constant 0 : index
    %326 = vector.load %arg12[%c768, %c0_171] : memref<864x512xbf16, #tpu.memory_space<vmem>>, vector<32x512xbf16>
    tpu.vector_store %arg12[%c768, %c0_171], %325 {strides = array<i32>} : memref<864x512xbf16, #tpu.memory_space<vmem>>, vector<32x512xbf16>,
    %c0_172 = arith.constant 0 : index
    %c200_173 = arith.constant 200 : index
    %327 = vector.load %arg11[%c0_172, %c200_173] : memref<32x768xf32, #tpu.memory_space<vmem>>, vector<32x512xf32>
    %328 = vector.extract_strided_slice %8 {offsets = [7, 0], sizes = [1, 512], strides = [1, 1]} : vector<9x512xf32> to vector<1x512xf32>
    %329 = vector.broadcast %328 : vector<1x512xf32> to vector<32x512xf32>
    %330 = arith.mulf %327, %329 : vector<32x512xf32>
    %331 = arith.truncf %330 : vector<32x512xf32> to vector<32x512xbf16>
    %c800 = arith.constant 800 : index
    %c0_174 = arith.constant 0 : index
    %332 = vector.load %arg12[%c800, %c0_174] : memref<864x512xbf16, #tpu.memory_space<vmem>>, vector<32x512xbf16>
    tpu.vector_store %arg12[%c800, %c0_174], %331 {strides = array<i32>} : memref<864x512xbf16, #tpu.memory_space<vmem>>, vector<32x512xbf16>,
    %c0_175 = arith.constant 0 : index
    %c201_176 = arith.constant 201 : index
    %333 = vector.load %arg11[%c0_175, %c201_176] : memref<32x768xf32, #tpu.memory_space<vmem>>, vector<32x512xf32>
    %334 = vector.extract_strided_slice %8 {offsets = [8, 0], sizes = [1, 512], strides = [1, 1]} : vector<9x512xf32> to vector<1x512xf32>
    %335 = vector.broadcast %334 : vector<1x512xf32> to vector<32x512xf32>
    %336 = arith.mulf %333, %335 : vector<32x512xf32>
    %337 = arith.truncf %336 : vector<32x512xf32> to vector<32x512xbf16>
    %c832 = arith.constant 832 : index
    %c0_177 = arith.constant 0 : index
    %338 = vector.load %arg12[%c832, %c0_177] : memref<864x512xbf16, #tpu.memory_space<vmem>>, vector<32x512xbf16>
    tpu.vector_store %arg12[%c832, %c0_177], %337 {strides = array<i32>} : memref<864x512xbf16, #tpu.memory_space<vmem>>, vector<32x512xbf16>,
    %c0_178 = arith.constant 0 : index
    %c0_179 = arith.constant 0 : index
    %339 = vector.load %arg5[%c0_178, %c0_179] : memref<32x864xbf16, #tpu.memory_space<vmem>>, vector<32x864xbf16>
    %c0_180 = arith.constant 0 : index
    %c0_181 = arith.constant 0 : index
    %340 = vector.load %arg12[%c0_180, %c0_181] : memref<864x512xbf16, #tpu.memory_space<vmem>>, vector<864x512xbf16>
    %cst_182 = arith.constant dense<0.000000e+00> : vector<32x512xf32>
    %341 = tpu.matmul %339, %340, %cst_182 {dimension_numbers = #tpu.dot_dimension_numbers<[1], [0], [0], [1], [0, 0, 1, 1], [], []>} : vector<32x864xbf16>, vector<864x512xbf16>, vector<32x512xf32> -> vector<32x512xf32>
    %c0_183 = arith.constant 0 : index
    %c0_184 = arith.constant 0 : index
    %342 = vector.load %arg6[%c0_183, %c0_184] : memref<32x1xf32, #tpu.memory_space<vmem>>, vector<32x1xf32>
    %343 = vector.broadcast %342 : vector<32x1xf32> to vector<32x512xf32>
    %344 = arith.addf %341, %343 : vector<32x512xf32>
    %c0_185 = arith.constant 0 : index
    %c0_186 = arith.constant 0 : index
    %345 = vector.load %arg7[%c0_185, %c0_186] : memref<32x16xbf16, #tpu.memory_space<vmem>>, vector<32x16xbf16>
    %346 = arith.truncf %5 : vector<16x512xf32> to vector<16x512xbf16>
    %cst_187 = arith.constant dense<0.000000e+00> : vector<32x512xf32>
    %347 = tpu.matmul %345, %346, %cst_187 {dimension_numbers = #tpu.dot_dimension_numbers<[1], [0], [0], [1], [0, 0, 1, 1], [], []>} : vector<32x16xbf16>, vector<16x512xbf16>, vector<32x512xf32> -> vector<32x512xf32>
    %c0_188 = arith.constant 0 : index
    %c0_189 = arith.constant 0 : index
    %348 = vector.load %arg8[%c0_188, %c0_189] : memref<32x1xf32, #tpu.memory_space<vmem>>, vector<32x1xf32>
    %349 = vector.broadcast %348 : vector<32x1xf32> to vector<32x512xf32>
    %350 = arith.addf %347, %349 : vector<32x512xf32>
    %351 = arith.addf %344, %350 : vector<32x512xf32>
    %c0_190 = arith.constant 0 : index
    %c0_191 = arith.constant 0 : index
    %c0_192 = arith.constant 0 : index
    %352 = vector.load %arg10[%c0_190, %c0_191, %c0_192] : memref<1x32x512xf32, #tpu.memory_space<vmem>>, vector<1x32x512xf32>
    %353 = vector.shape_cast %352 : vector<1x32x512xf32> to vector<32x512xf32>
    %354 = vector.shape_cast %351 : vector<32x512xf32> to vector<1x32x512xf32>
    tpu.vector_store %arg10[%c0_190, %c0_191, %c0_192], %354 {strides = array<i32>} : memref<1x32x512xf32, #tpu.memory_space<vmem>>, vector<1x32x512xf32>,
    return
  }
  func.func @transform_0(%arg0: i32) -> (i32, i32, i32) {
    %c0_i32 = arith.constant 0 : i32
    %c0_i32_0 = arith.constant 0 : i32
    %c0_i32_1 = arith.constant 0 : i32
    return %arg0, %c0_i32, %c0_i32_0 : i32, i32, i32
  }
  func.func @transform_1(%arg0: i32) -> (i32, i32, i32) {
    %c0_i32 = arith.constant 0 : i32
    %c0_i32_0 = arith.constant 0 : i32
    %c0_i32_1 = arith.constant 0 : i32
    return %arg0, %c0_i32, %c0_i32_0 : i32, i32, i32
  }
  func.func @transform_2(%arg0: i32) -> (i32, i32) {
    %c0_i32 = arith.constant 0 : i32
    %c0_i32_0 = arith.constant 0 : i32
    %c0_i32_1 = arith.constant 0 : i32
    return %c0_i32, %c0_i32_0 : i32, i32
  }
  func.func @transform_3(%arg0: i32) -> (i32, i32) {
    %c0_i32 = arith.constant 0 : i32
    %c0_i32_0 = arith.constant 0 : i32
    %c0_i32_1 = arith.constant 0 : i32
    return %c0_i32, %c0_i32_0 : i32, i32
  }
  func.func @transform_4(%arg0: i32) -> (i32, i32) {
    %c0_i32 = arith.constant 0 : i32
    %c0_i32_0 = arith.constant 0 : i32
    %c0_i32_1 = arith.constant 0 : i32
    return %c0_i32, %c0_i32_0 : i32, i32
  }
  func.func @transform_5(%arg0: i32) -> (i32, i32) {
    %c0_i32 = arith.constant 0 : i32
    %c0_i32_0 = arith.constant 0 : i32
    %c0_i32_1 = arith.constant 0 : i32
    return %c0_i32, %c0_i32_0 : i32, i32
  }
  func.func @transform_6(%arg0: i32) -> (i32, i32) {
    %c0_i32 = arith.constant 0 : i32
    %c0_i32_0 = arith.constant 0 : i32
    %c0_i32_1 = arith.constant 0 : i32
    return %c0_i32, %c0_i32_0 : i32, i32
  }
  func.func @transform_7(%arg0: i32) -> (i32, i32) {
    %c0_i32 = arith.constant 0 : i32
    %c0_i32_0 = arith.constant 0 : i32
    %c0_i32_1 = arith.constant 0 : i32
    return %c0_i32, %c0_i32_0 : i32, i32
  }
  func.func @transform_8(%arg0: i32) -> (i32, i32) {
    %c0_i32 = arith.constant 0 : i32
    %c0_i32_0 = arith.constant 0 : i32
    %c0_i32_1 = arith.constant 0 : i32
    return %c0_i32, %c0_i32_0 : i32, i32
  }
  func.func @transform_9(%arg0: i32) -> (i32, i32, i32) {
    %c0_i32 = arith.constant 0 : i32
    %c0_i32_0 = arith.constant 0 : i32
    %c0_i32_1 = arith.constant 0 : i32
    return %arg0, %c0_i32, %c0_i32_0 : i32, i32, i32
  }
}

</mosaic_0001>

<llo_original>
// kernel: tpu_custom_call.1
$region0: #{tpu_custom_call.1}
  #allocation0 [shape = 'u32[]', space=smem, size = 0x4, offset = 0x4, fixed_abs, tag = 'smem constant byte address 0x4 - core index']
  #allocation1 [shape = 'u32[72,128]{1,0:T(1,128)}', space=vmem, size = 0x9000, scoped, tag = 'internal scratch']
  #allocation2 [shape = 'f32[32,768]{1,0:T(8,128)}', space=vmem, size = 0x18000, scoped, tag = 'scratch operand']
  #allocation3 [shape = 'bf16[864,512]{1,0:T(8,128)(2,1)}', space=vmem, size = 0xd8000, scoped, tag = 'scratch operand']
  %s0 = inlined_call_operand.vmem [shape: f32[2,16,512], index: 0, kind: input, shape index: {}]
  %s1 = inlined_call_operand.vmem [shape: f32[2,96,1], index: 1, kind: input, shape index: {}]
  %s2 = inlined_call_operand.vmem [shape: bf16[32,432], index: 2, kind: input, shape index: {}]
  %s3 = inlined_call_operand.vmem [shape: f32[32,1], index: 3, kind: input, shape index: {}]
  %s4 = inlined_call_operand.hbm [shape: bf16[32,864], index: 4, kind: input, shape index: {}]
  %s5 = inlined_call_operand.vmem [shape: f32[32,1], index: 5, kind: input, shape index: {}]
  %s6 = inlined_call_operand.vmem [shape: bf16[32,16], index: 6, kind: input, shape index: {}]
  %s7 = inlined_call_operand.vmem [shape: f32[32,1], index: 7, kind: input, shape index: {}]
  %s8 = inlined_call_operand.vmem [shape: f32[9,512], index: 8, kind: input, shape index: {}]
  %s9 = inlined_call_operand.hbm [shape: f32[2,32,512], index: 9, kind: output, shape index: {}]
  %s10 = sld [smem:[#allocation0]]
  $region73: #{tpu_custom_call.1} parent=0
    _
  %s12 = ssub.s32 1, %s10
  %s13 = scalar_select 0, %s12, %s10
  $region1: #{tpu_custom_call.1} parent=0
    #allocation4 [shape = 'u8[57344]{0}', space=vmem, size = 0xe000, scoped, tag = 'input window, operand 4, single buffered']
    #allocation5 [shape = 's32[2]{0}', space=sflag, size = 0x8, scoped, tag = 'scoped memory for tpu_custom_call.1']
    #allocation6 [shape = 's32[2]{0}', space=sflag, size = 0x8, scoped, tag = 'scoped memory for tpu_custom_call.1']
    #allocation7 [shape = 'u8[131072]{0}', space=vmem, size = 0x20000, scoped, tag = 'output window, operand 0']
    %14 = vsyncpa [#allocation5], 0
    %15 = vsyncpa [#allocation6], 0
    %s16 = scalar_lea.sflag [#allocation6], 1
    %17 = vsyncpa %s16, 0
    loop: start=0, step=1, limit=4
    $region2: #{tpu_custom_call.1} parent=1 // loop_pre_header
      _
    $region3: #{tpu_custom_call.1} parent=1 // loop_header
      %s19 = sphi 0, %s23
      %p20 = scmp.ge.s32.totalorder %s19, 4
      %s29 = sphi 0, %s31
      %s32 = sphi 0, %s29
      %s33 = sphi 0, %s32
      %s49 = sphi 0, %s33
      %s55 = sphi 0, %s57
      %s58 = sphi 0, %s55
      %s59 = sphi 0, %s58
      %s75 = sphi 0, %s59
      %s79 = sphi 0, %s79
      %s81 = sphi 0, %s79
      %s82 = sphi 0, %s81
      %s96 = sphi 0, %s82
      %s100 = sphi 0, %s100
      %s102 = sphi 0, %s100
      %s103 = sphi 0, %s102
      %s117 = sphi 0, %s103
      %s121 = sphi 0, %s121
      %s123 = sphi 0, %s121
      %s124 = sphi 0, %s123
      %s138 = sphi 0, %s124
      %s142 = sphi 0, %s142
      %s144 = sphi 0, %s142
      %s145 = sphi 0, %s144
      %s159 = sphi 0, %s145
      %s163 = sphi 0, %s163
      %s165 = sphi 0, %s163
      %s166 = sphi 0, %s165
      %s180 = sphi 0, %s166
      %s184 = sphi 0, %s184
      %s186 = sphi 0, %s184
      %s187 = sphi 0, %s186
      %s201 = sphi 0, %s187
      %s205 = sphi 0, %s205
      %s207 = sphi 0, %s205
      %s208 = sphi 0, %s207
      %s222 = sphi 0, %s208
      %s228 = sphi 0, %s230
      %s231 = sphi 0, %s228
      %s232 = sphi 0, %s231
      %s248 = sphi 0, %s232
    $region4: #{tpu_custom_call.1} parent=1 // loop_header_branch
      %22 = sbr.rel (%p20) target = $region8
    $region5: #{tpu_custom_call.1} parent=1 // loop_body
      %s24 = ssub.s32 %s19, 1
      %s25 = ssub.s32 %s19, 2
      %s26 = sadd.s32 %s19, 1
      %s27 = ssub.s32 %s19, %s26
      %p28 = scmp.eq.s32.totalorder %s27, 0
      %s30 = sadd.s32 %s29, 1
      %s31 = scalar_select %p28, %s29, %s30
      %p34 = pneg %p28
      %p35 = scmp.eq.s32.totalorder %s19, 1
      %p36 = por %p34, %p35
      %p37 = scmp.ne.s32.totalorder %s29, %s32
      %p38 = scmp.eq.s32.totalorder %s19, 0
      %p39 = por %p37, %p38
      %p40 = scmp.ne.s32.totalorder %s29, %s32
      %p41 = scmp.eq.s32.totalorder %s24, 1
      %p42 = por %p40, %p41
      %p43 = scmp.ne.s32.totalorder %s32, %s33
      %p44 = scmp.eq.s32.totalorder %s24, 0
      %p45 = por %p43, %p44
      %p46 = scmp.ne.s32.totalorder %s32, %s33
      %p47 = scmp.eq.s32.totalorder %s25, 1
      %p48 = por %p46, %p47
      %p50 = scmp.ne.s32.totalorder %s33, %s49
      %p51 = scmp.eq.s32.totalorder %s25, 0
      %p52 = por %p50, %p51
      %s53 = ssub.s32 %s19, %s26
      %p54 = scmp.eq.s32.totalorder %s53, 0
      %s56 = sadd.s32 %s55, 1
      %s57 = scalar_select %p54, %s55, %s56
      %p60 = pneg %p54
      %p61 = scmp.eq.s32.totalorder %s19, 1
      %p62 = por %p60, %p61
      %p63 = scmp.ne.s32.totalorder %s55, %s58
      %p64 = scmp.eq.s32.totalorder %s19, 0
      %p65 = por %p63, %p64
      %p66 = scmp.ne.s32.totalorder %s55, %s58
      %p67 = scmp.eq.s32.totalorder %s24, 1
      %p68 = por %p66, %p67
      %p69 = scmp.ne.s32.totalorder %s58, %s59
      %p70 = scmp.eq.s32.totalorder %s24, 0
      %p71 = por %p69, %p70
      %p72 = scmp.ne.s32.totalorder %s58, %s59
      %p73 = scmp.eq.s32.totalorder %s25, 1
      %p74 = por %p72, %p73
      %p76 = scmp.ne.s32.totalorder %s59, %s75
      %p77 = scmp.eq.s32.totalorder %s25, 0
      %p78 = por %p76, %p77
      %s80 = sadd.s32 %s79, 1
      %p83 = scmp.eq.s32.totalorder %s19, 1
      %p84 = scmp.ne.s32.totalorder %s79, %s81
      %p85 = scmp.eq.s32.totalorder %s19, 0
      %p86 = por %p84, %p85
      %p87 = scmp.ne.s32.totalorder %s79, %s81
      %p88 = scmp.eq.s32.totalorder %s24, 1
      %p89 = por %p87, %p88
      %p90 = scmp.ne.s32.totalorder %s81, %s82
      %p91 = scmp.eq.s32.totalorder %s24, 0
      %p92 = por %p90, %p91
      %p93 = scmp.ne.s32.totalorder %s81, %s82
      %p94 = scmp.eq.s32.totalorder %s25, 1
      %p95 = por %p93, %p94
      %p97 = scmp.ne.s32.totalorder %s82, %s96
      %p98 = scmp.eq.s32.totalorder %s25, 0
      %p99 = por %p97, %p98
      %s101 = sadd.s32 %s100, 1
      %p104 = scmp.eq.s32.totalorder %s19, 1
      %p105 = scmp.ne.s32.totalorder %s100, %s102
      %p106 = scmp.eq.s32.totalorder %s19, 0
      %p107 = por %p105, %p106
      %p108 = scmp.ne.s32.totalorder %s100, %s102
      %p109 = scmp.eq.s32.totalorder %s24, 1
      %p110 = por %p108, %p109
      %p111 = scmp.ne.s32.totalorder %s102, %s103
      %p112 = scmp.eq.s32.totalorder %s24, 0
      %p113 = por %p111, %p112
      %p114 = scmp.ne.s32.totalorder %s102, %s103
      %p115 = scmp.eq.s32.totalorder %s25, 1
      %p116 = por %p114, %p115
      %p118 = scmp.ne.s32.totalorder %s103, %s117
      %p119 = scmp.eq.s32.totalorder %s25, 0
      %p120 = por %p118, %p119
      %s122 = sadd.s32 %s121, 1
      %p125 = scmp.eq.s32.totalorder %s19, 1
      %p126 = scmp.ne.s32.totalorder %s121, %s123
      %p127 = scmp.eq.s32.totalorder %s19, 0
      %p128 = por %p126, %p127
      %p129 = scmp.ne.s32.totalorder %s121, %s123
      %p130 = scmp.eq.s32.totalorder %s24, 1
      %p131 = por %p129, %p130
      %p132 = scmp.ne.s32.totalorder %s123, %s124
      %p133 = scmp.eq.s32.totalorder %s24, 0
      %p134 = por %p132, %p133
      %p135 = scmp.ne.s32.totalorder %s123, %s124
      %p136 = scmp.eq.s32.totalorder %s25, 1
      %p137 = por %p135, %p136
      %p139 = scmp.ne.s32.totalorder %s124, %s138
      %p140 = scmp.eq.s32.totalorder %s25, 0
      %p141 = por %p139, %p140
      %s143 = sadd.s32 %s142, 1
      %p146 = scmp.eq.s32.totalorder %s19, 1
      %p147 = scmp.ne.s32.totalorder %s142, %s144
      %p148 = scmp.eq.s32.totalorder %s19, 0
      %p149 = por %p147, %p148
      %p150 = scmp.ne.s32.totalorder %s142, %s144
      %p151 = scmp.eq.s32.totalorder %s24, 1
      %p152 = por %p150, %p151
      %p153 = scmp.ne.s32.totalorder %s144, %s145
      %p154 = scmp.eq.s32.totalorder %s24, 0
      %p155 = por %p153, %p154
      %p156 = scmp.ne.s32.totalorder %s144, %s145
      %p157 = scmp.eq.s32.totalorder %s25, 1
      %p158 = por %p156, %p157
      %p160 = scmp.ne.s32.totalorder %s145, %s159
      %p161 = scmp.eq.s32.totalorder %s25, 0
      %p162 = por %p160, %p161
      %s164 = sadd.s32 %s163, 1
      %p167 = scmp.eq.s32.totalorder %s19, 1
      %p168 = scmp.ne.s32.totalorder %s163, %s165
      %p169 = scmp.eq.s32.totalorder %s19, 0
      %p170 = por %p168, %p169
      %p171 = scmp.ne.s32.totalorder %s163, %s165
      %p172 = scmp.eq.s32.totalorder %s24, 1
      %p173 = por %p171, %p172
      %p174 = scmp.ne.s32.totalorder %s165, %s166
      %p175 = scmp.eq.s32.totalorder %s24, 0
      %p176 = por %p174, %p175
      %p177 = scmp.ne.s32.totalorder %s165, %s166
      %p178 = scmp.eq.s32.totalorder %s25, 1
      %p179 = por %p177, %p178
      %p181 = scmp.ne.s32.totalorder %s166, %s180
      %p182 = scmp.eq.s32.totalorder %s25, 0
      %p183 = por %p181, %p182
      %s185 = sadd.s32 %s184, 1
      %p188 = scmp.eq.s32.totalorder %s19, 1
      %p189 = scmp.ne.s32.totalorder %s184, %s186
      %p190 = scmp.eq.s32.totalorder %s19, 0
      %p191 = por %p189, %p190
      %p192 = scmp.ne.s32.totalorder %s184, %s186
      %p193 = scmp.eq.s32.totalorder %s24, 1
      %p194 = por %p192, %p193
      %p195 = scmp.ne.s32.totalorder %s186, %s187
      %p196 = scmp.eq.s32.totalorder %s24, 0
      %p197 = por %p195, %p196
      %p198 = scmp.ne.s32.totalorder %s186, %s187
      %p199 = scmp.eq.s32.totalorder %s25, 1
      %p200 = por %p198, %p199
      %p202 = scmp.ne.s32.totalorder %s187, %s201
      %p203 = scmp.eq.s32.totalorder %s25, 0
      %p204 = por %p202, %p203
      %s206 = sadd.s32 %s205, 1
      %p209 = scmp.eq.s32.totalorder %s19, 1
      %p210 = scmp.ne.s32.totalorder %s205, %s207
      %p211 = scmp.eq.s32.totalorder %s19, 0
      %p212 = por %p210, %p211
      %p213 = scmp.ne.s32.totalorder %s205, %s207
      %p214 = scmp.eq.s32.totalorder %s24, 1
      %p215 = por %p213, %p214
      %p216 = scmp.ne.s32.totalorder %s207, %s208
      %p217 = scmp.eq.s32.totalorder %s24, 0
      %p218 = por %p216, %p217
      %p219 = scmp.ne.s32.totalorder %s207, %s208
      %p220 = scmp.eq.s32.totalorder %s25, 1
      %p221 = por %p219, %p220
      %p223 = scmp.ne.s32.totalorder %s208, %s222
      %p224 = scmp.eq.s32.totalorder %s25, 0
      %p225 = por %p223, %p224
      %s226 = ssub.s32 %s19, %s26
      %p227 = scmp.eq.s32.totalorder %s226, 0
      %s229 = sadd.s32 %s228, 1
      %s230 = scalar_select %p227, %s228, %s229
      %p233 = pneg %p227
      %p234 = scmp.eq.s32.totalorder %s19, 1
      %p235 = por %p233, %p234
      %p236 = scmp.ne.s32.totalorder %s228, %s231
      %p237 = scmp.eq.s32.totalorder %s19, 0
      %p238 = por %p236, %p237
      %p239 = scmp.ne.s32.totalorder %s228, %s231
      %p240 = scmp.eq.s32.totalorder %s24, 1
      %p241 = por %p239, %p240
      %p242 = scmp.ne.s32.totalorder %s231, %s232
      %p243 = scmp.eq.s32.totalorder %s24, 0
      %p244 = por %p242, %p243
      %p245 = scmp.ne.s32.totalorder %s231, %s232
      %p246 = scmp.eq.s32.totalorder %s25, 1
      %p247 = por %p245, %p246
      %p249 = scmp.ne.s32.totalorder %s232, %s248
      %p250 = scmp.eq.s32.totalorder %s25, 0
      %p251 = por %p249, %p250
      %p252 = scmp.le.s32.totalorder 1, %s19
      %p253 = scmp.lt.s32.totalorder %s19, 3
      %p254 = pnand %p252, %p253
      %p255 = pneg %p254
      // Predicated region
      $region9: #{tpu_custom_call.1} parent=5 // pred_check
        _
      $region10: #{tpu_custom_call.1} parent=5 // pred_check_branch
        %257 = sbr.rel (%p254) target = $region12
      $region11: #{tpu_custom_call.1} parent=5 // pred_region
        %s258 = ssub.s32 %s19, 1
        // Predicated region
        $region13: #{tpu_custom_call.1} parent=11 // pred_check
          %p259 = pneg %p92
        $region14: #{tpu_custom_call.1} parent=11 // pred_check_branch
          %261 = sbr.rel (%p259) target = $region16
        $region15: #{tpu_custom_call.1} parent=11 // pred_region
          _
        $region16: #{tpu_custom_call.1} parent=11 // pred_fallthru
          _
        // Predicated region
        $region17: #{tpu_custom_call.1} parent=11 // pred_check
          %p262 = pneg %p113
        $region18: #{tpu_custom_call.1} parent=11 // pred_check_branch
          %264 = sbr.rel (%p262) target = $region20
        $region19: #{tpu_custom_call.1} parent=11 // pred_region
          _
        $region20: #{tpu_custom_call.1} parent=11 // pred_fallthru
          _
        // Predicated region
        $region21: #{tpu_custom_call.1} parent=11 // pred_check
          %p265 = pneg %p134
        $region22: #{tpu_custom_call.1} parent=11 // pred_check_branch
          %267 = sbr.rel (%p265) target = $region24
        $region23: #{tpu_custom_call.1} parent=11 // pred_region
          %269 = vsyncadd [#allocation5], 0
          %s270 = sshll.u32 %s4, 4
          %s271 = int_to_ptr.hbm [resolvable:$true] %s270
          %s272 = sshll.u32 [#allocation4], 4
          %s273 = int_to_ptr.vmem [resolvable:$true] %s272
          %278 = dma.hbm_to_vmem [thread:$0]  %s271, 1792, %s273, [#allocation5], 448, 448, 28
        $region24: #{tpu_custom_call.1} parent=11 // pred_fallthru
          _
        // Predicated region
        $region25: #{tpu_custom_call.1} parent=11 // pred_check
          %p279 = pneg %p155
        $region26: #{tpu_custom_call.1} parent=11 // pred_check_branch
          %281 = sbr.rel (%p279) target = $region28
        $region27: #{tpu_custom_call.1} parent=11 // pred_region
          _
        $region28: #{tpu_custom_call.1} parent=11 // pred_fallthru
          _
        // Predicated region
        $region29: #{tpu_custom_call.1} parent=11 // pred_check
          %p282 = pneg %p176
        $region30: #{tpu_custom_call.1} parent=11 // pred_check_branch
          %284 = sbr.rel (%p282) target = $region32
        $region31: #{tpu_custom_call.1} parent=11 // pred_region
          _
        $region32: #{tpu_custom_call.1} parent=11 // pred_fallthru
          _
        // Predicated region
        $region33: #{tpu_custom_call.1} parent=11 // pred_check
          %p285 = pneg %p197
        $region34: #{tpu_custom_call.1} parent=11 // pred_check_branch
          %287 = sbr.rel (%p285) target = $region36
        $region35: #{tpu_custom_call.1} parent=11 // pred_region
          _
        $region36: #{tpu_custom_call.1} parent=11 // pred_fallthru
          _
        // Predicated region
        $region37: #{tpu_custom_call.1} parent=11 // pred_check
          %p288 = pneg %p218
        $region38: #{tpu_custom_call.1} parent=11 // pred_check_branch
          %290 = sbr.rel (%p288) target = $region40
        $region39: #{tpu_custom_call.1} parent=11 // pred_region
          _
        $region40: #{tpu_custom_call.1} parent=11 // pred_fallthru
          _
      $region12: #{tpu_custom_call.1} parent=5 // pred_fallthru
        _
      %p291 = scmp.lt.s32.totalorder %s19, 2
      // Predicated region
      $region41: #{tpu_custom_call.1} parent=5 // pred_check
        %p292 = pneg %p291
      $region42: #{tpu_custom_call.1} parent=5 // pred_check_branch
        %294 = sbr.rel (%p292) target = $region44
      $region43: #{tpu_custom_call.1} parent=5 // pred_region
        // Predicated region
        $region45: #{tpu_custom_call.1} parent=43 // pred_check
          %p295 = pneg %p39
        $region46: #{tpu_custom_call.1} parent=43 // pred_check_branch
          %297 = sbr.rel (%p295) target = $region48
        $region47: #{tpu_custom_call.1} parent=43 // pred_region
          %p298 = scmp.lt.s32.totalorder %s19, 1
          %s299 = scalar_select %p298, %s19, 1
          %s300 = smul.addr %s299, 8
          %s301 = smul.addr %s300, 8
          %s302 = scalar_lea.vmem %s0, %s301
        $region48: #{tpu_custom_call.1} parent=43 // pred_fallthru
          _
        // Predicated region
        $region49: #{tpu_custom_call.1} parent=43 // pred_check
          %p303 = pneg %p65
        $region50: #{tpu_custom_call.1} parent=43 // pred_check_branch
          %305 = sbr.rel (%p303) target = $region52
        $region51: #{tpu_custom_call.1} parent=43 // pred_region
          %p306 = scmp.lt.s32.totalorder %s19, 1
          %s307 = scalar_select %p306, %s19, 1
          %s308 = smul.addr %s307, 12
          %s309 = smul.addr %s308, 8
          %s310 = scalar_lea.vmem %s1, %s309
        $region52: #{tpu_custom_call.1} parent=43 // pred_fallthru
          _
      $region44: #{tpu_custom_call.1} parent=5 // pred_fallthru
        _
      %p311 = scmp.le.s32.totalorder 1, %s19
      %p312 = scmp.lt.s32.totalorder %s19, 3
      %p313 = pnand %p311, %p312
      %p314 = pneg %p313
      // Predicated region
      $region53: #{tpu_custom_call.1} parent=5 // pred_check
        _
      $region54: #{tpu_custom_call.1} parent=5 // pred_check_branch
        %316 = sbr.rel (%p313) target = $region56
      $region55: #{tpu_custom_call.1} parent=5 // pred_region
        %s317 = ssub.s32 %s19, 1
        // Predicated region
        $region57: #{tpu_custom_call.1} parent=55 // pred_check
          %p318 = pneg %p134
        $region58: #{tpu_custom_call.1} parent=55 // pred_check_branch
          %320 = sbr.rel (%p318) target = $region60
        $region59: #{tpu_custom_call.1} parent=55 // pred_region
          %322 = dma.done [#allocation5], 1792
        $region60: #{tpu_custom_call.1} parent=55 // pred_fallthru
          _
        %p323 = scmp.lt.s32.totalorder %s24, 1
        %s324 = scalar_select %p323, %s24, 1
        %s325 = smul.addr %s324, 8
        %s326 = smul.addr %s325, 8
        %s327 = scalar_lea.vmem %s0, %s326
        %p328 = pneg %p45
        %p329 = pneg %p42
        %p330 = scmp.lt.s32.totalorder %s24, 1
        %s331 = scalar_select %p330, %s24, 1
        %s332 = smul.addr %s331, 12
        %s333 = smul.addr %s332, 8
        %s334 = scalar_lea.vmem %s1, %s333
        %p335 = pneg %p71
        %p336 = pneg %p68
        %p337 = pneg %p92
        %p338 = pneg %p89
        %p339 = pneg %p113
        %p340 = pneg %p110
        %p341 = pneg %p134
        %p342 = pneg %p131
        %p343 = pneg %p155
        %p344 = pneg %p152
        %p345 = pneg %p176
        %p346 = pneg %p173
        %p347 = pneg %p197
        %p348 = pneg %p194
        %p349 = pneg %p218
        %p350 = pneg %p215
        %p351 = pneg %p244
        %p352 = pneg %p241
        %s353 = sand.u32 %s231, 1
        %s354 = scalar_lea.sflag [#allocation6], %s353
        %s355 = sand.u32 %s231, 1
        %s356 = smul.addr %s355, 128
        %s357 = scalar_lea.vmem [#allocation7], %s356
        %p358 = scmp.lt.s32.totalorder %s24, 1
        %s359 = scalar_select %p358, %s24, 1
        %s360 = smul.addr %s359, 8
        %s361 = smul.addr %s360, 8
        %s362 = scalar_lea.vmem %s0, %s361
        %p363 = scmp.lt.s32.totalorder %s24, 1
        %s364 = scalar_select %p363, %s24, 1
        %s365 = smul.addr %s364, 12
        %s366 = smul.addr %s365, 8
        %s367 = scalar_lea.vmem %s1, %s366
        %369 = vst [vmem:[#allocation2] sm:$0xff] 0.0
        %370 = vst [vmem:[#allocation2 + $0x30] sm:$0xff] 0.0
        %371 = vst [vmem:[#allocation2 + $0x60] sm:$0xff] 0.0
        %372 = vst [vmem:[#allocation2 + $0x90] sm:$0xff] 0.0
        %373 = vst [vmem:[#allocation2 + $0x28] sm:$0xff] 0.0
        %374 = vst [vmem:[#allocation2 + $0x58] sm:$0xff] 0.0
        %375 = vst [vmem:[#allocation2 + $0x88] sm:$0xff] 0.0
        %376 = vst [vmem:[#allocation2 + $0xb8] sm:$0xff] 0.0
        %v377 = vld [vmem:[%s362] sm:$0xff]
        %v378 = vld [vmem:[%s362 + $0x8] sm:$0xff]
        %v379 = vld [vmem:[%s362 + $0x10] sm:$0xff]
        %v380 = vld [vmem:[%s362 + $0x18] sm:$0xff]
        %v381 = vld [vmem:[%s362 + $0x20] sm:$0xff]
        %v382 = vld [vmem:[%s362 + $0x28] sm:$0xff]
        %v383 = vld [vmem:[%s362 + $0x30] sm:$0xff]
        %v384 = vld [vmem:[%s362 + $0x38] sm:$0xff]
        %v385 = vld [vmem:[%s367] sm:$0xff]
        %v386 = vld [vmem:[%s367 + $0x8] sm:$0xff]
        %v387 = vld [vmem:[%s367 + $0x10] sm:$0xff]
        %v388 = vld [vmem:[%s367 + $0x18] sm:$0xff]
        %v389 = vld [vmem:[%s367 + $0x20] sm:$0xff]
        %v390 = vld [vmem:[%s367 + $0x28] sm:$0xff]
        %v391 = vld [vmem:[%s367 + $0x30] sm:$0xff]
        %v392 = vld [vmem:[%s367 + $0x38] sm:$0xff]
        %v393 = vld [vmem:[%s367 + $0x40] sm:$0xff]
        %v394 = vld [vmem:[%s367 + $0x48] sm:$0xff]
        %v395 = vld [vmem:[%s367 + $0x50] sm:$0xff]
        %v396 = vld [vmem:[%s367 + $0x58] sm:$0xff]
        %v397 = vld [vmem:[%s8] sm:$0xff]
        %v398 = vld [vmem:[%s8 + $0x8] sm:$0xff]
        %v399 = vld [vmem:[%s8 + $0x10] sm:$0xff]
        %v400 = vld [vmem:[%s8 + $0x18] sm:$0xff]
        %v401 = vld [vmem:[%s8 + $0x20] sm:$0x1]
        %v402 = vld [vmem:[%s8 + $0x28] sm:$0x1]
        %v403 = vld [vmem:[%s8 + $0x30] sm:$0x1]
        %v404 = vld [vmem:[%s8 + $0x38] sm:$0x1]
        %406 = vset.pattern.permute.xlu0 0
        %407 = vperm.xlu0 %406, %v385
        %v408 = vpop.permute.xlu0 %407
        %411 = vset.pattern.permute.xlu0 0
        %412 = vperm.xlu0 %411, %v386
        %v413 = vpop.permute.xlu0 %412
        %v415 = vmul.f32 %v377, %v408
        %v416 = vmul.f32 %v378, %v408
        %v417 = vmul.f32 %v379, %v408
        %v418 = vmul.f32 %v380, %v408
        %v419 = vmul.f32 %v381, %v413
        %v420 = vmul.f32 %v382, %v413
        %v421 = vmul.f32 %v383, %v413
        %v422 = vmul.f32 %v384, %v413
        %424 = vset.pattern.permute.xlu0 0
        %425 = vperm.xlu0 %424, %v387
        %v426 = vpop.permute.xlu0 %425
        %429 = vset.pattern.permute.xlu0 0
        %430 = vperm.xlu0 %429, %v388
        %v431 = vpop.permute.xlu0 %430
        %v433 = vadd.f32 %v415, %v426
        %v434 = vadd.f32 %v416, %v426
        %v435 = vadd.f32 %v417, %v426
        %v436 = vadd.f32 %v418, %v426
        %v437 = vadd.f32 %v419, %v431
        %v438 = vadd.f32 %v420, %v431
        %v439 = vadd.f32 %v421, %v431
        %v440 = vadd.f32 %v422, %v431
        %v441 = vmax.f32 %v433, 0.0
        %v442 = vmax.f32 %v434, 0.0
        %v443 = vmax.f32 %v435, 0.0
        %v444 = vmax.f32 %v436, 0.0
        %v445 = vmax.f32 %v437, 0.0
        %v446 = vmax.f32 %v438, 0.0
        %v447 = vmax.f32 %v439, 0.0
        %v448 = vmax.f32 %v440, 0.0
        %449 = vst [vmem:[#allocation2 + $0x8] sm:$0xff] %v441
        %450 = vst [vmem:[#allocation2 + $0x10] sm:$0xff] %v442
        %451 = vst [vmem:[#allocation2 + $0x18] sm:$0xff] %v443
        %452 = vst [vmem:[#allocation2 + $0x20] sm:$0xff] %v444
        %453 = vst [vmem:[#allocation2 + $0x38] sm:$0xff] %v445
        %454 = vst [vmem:[#allocation2 + $0x40] sm:$0xff] %v446
        %455 = vst [vmem:[#allocation2 + $0x48] sm:$0xff] %v447
        %456 = vst [vmem:[#allocation2 + $0x50] sm:$0xff] %v448
        %v457 = vld [vmem:[#allocation2] sm:$0xff]
        %v458 = vld [vmem:[#allocation2 + $0x8] sm:$0xff]
        %v459 = vld [vmem:[#allocation2 + $0x10] sm:$0xff]
        %v460 = vld [vmem:[#allocation2 + $0x18] sm:$0xff]
        %v461 = vld [vmem:[#allocation2 + $0x20] sm:$0xff]
        %v462 = vld [vmem:[#allocation2 + $0x30] sm:$0xff]
        %v463 = vld [vmem:[#allocation2 + $0x38] sm:$0xff]
        %v464 = vld [vmem:[#allocation2 + $0x40] sm:$0xff]
        %v465 = vld [vmem:[#allocation2 + $0x48] sm:$0xff]
        %v466 = vld [vmem:[#allocation2 + $0x50] sm:$0xff]
        %v467 = vperm.slane %v397, 0
        %v468 = vperm.slane %v398, 0
        %v469 = vperm.slane %v399, 0
        %v470 = vperm.slane %v400, 0
        %475 = vrot.lane.b32.xlu0 %v467, 55
        %v476 = vpop.permute.xlu0 %475
        %477 = vrot.lane.b32.xlu0 %v468, 55
        %v478 = vpop.permute.xlu0 %477
        %479 = vrot.lane.b32.xlu0 %v469, 55
        %v480 = vpop.permute.xlu0 %479
        %481 = vrot.lane.b32.xlu0 %v470, 55
        %v482 = vpop.permute.xlu0 %481
        %vm483 = vcmask 449536
        %v484 = vsel %vm483, %v476, %v478
        %v485 = vsel %vm483, %v478, %v480
        %v486 = vsel %vm483, %v480, %v482
        %v492 = vmul.f32 %v457, %v476
        %v493 = vmul.f32 %v458, %v484
        %v494 = vmul.f32 %v459, %v485
        %v495 = vmul.f32 %v460, %v486
        %v496 = vmul.f32 %v461, %v482
        %v497 = vmul.f32 %v462, %v476
        %v498 = vmul.f32 %v463, %v484
        %v499 = vmul.f32 %v464, %v485
        %v500 = vmul.f32 %v465, %v486
        %v501 = vmul.f32 %v466, %v482
        %v502 = vpack.c.bf16 %v493, %v492
        %v503 = vpack.c.bf16 %v495, %v494
        %v504 = vpack.c.bf16 %v496, %v496
        %v505 = vpack.c.bf16 %v498, %v497
        %v506 = vpack.c.bf16 %v500, %v499
        %v507 = vpack.c.bf16 %v501, %v501
        %514 = vrot.lane.b32.xlu0 %v502, 73
        %v515 = vpop.permute.xlu0 %514
        %516 = vrot.lane.b32.xlu0 %v503, 73
        %v517 = vpop.permute.xlu0 %516
        %518 = vrot.lane.b32.xlu0 %v504, 73
        %v519 = vpop.permute.xlu0 %518
        %520 = vrot.lane.b32.xlu0 %v505, 73
        %v521 = vpop.permute.xlu0 %520
        %522 = vrot.lane.b32.xlu0 %v506, 73
        %v523 = vpop.permute.xlu0 %522
        %524 = vrot.lane.b32.xlu0 %v507, 73
        %v525 = vpop.permute.xlu0 %524
        %v526 = vrot.slane %v515, 4
        %v527 = vrot.slane %v517, 4
        %v528 = vrot.slane %v519, 4
        %v529 = vrot.slane %v521, 4
        %v530 = vrot.slane %v523, 4
        %v531 = vrot.slane %v525, 4
        %vm532 = vcmask 1043456
        %v533 = vsel %vm532, %v526, %v527
        %vm534 = vcmask 596992
        %v535 = vsel %vm534, %v515, %v533
        %v536 = vsel %vm532, %v527, %v528
        %v537 = vsel %vm534, %v517, %v536
        %v538 = vsel %vm532, %v529, %v530
        %v539 = vsel %vm534, %v521, %v538
        %v540 = vsel %vm532, %v530, %v531
        %v541 = vsel %vm534, %v523, %v540
        %546 = vst [vmem:[#allocation3] sm:$0xff] %v535
        %547 = vst [vmem:[#allocation3 + $0x8] sm:$0xff] %v537
        %548 = vst [vmem:[#allocation3 + $0x10] sm:$0xff] %v539
        %549 = vst [vmem:[#allocation3 + $0x18] sm:$0xff] %v541
        %v550 = vld [vmem:[#allocation2] sm:$0xff]
        %v551 = vld [vmem:[#allocation2 + $0x8] sm:$0xff]
        %v552 = vld [vmem:[#allocation2 + $0x10] sm:$0xff]
        %v553 = vld [vmem:[#allocation2 + $0x18] sm:$0xff]
        %v554 = vld [vmem:[#allocation2 + $0x20] sm:$0xff]
        %v555 = vld [vmem:[#allocation2 + $0x30] sm:$0xff]
        %v556 = vld [vmem:[#allocation2 + $0x38] sm:$0xff]
        %v557 = vld [vmem:[#allocation2 + $0x40] sm:$0xff]
        %v558 = vld [vmem:[#allocation2 + $0x48] sm:$0xff]
        %v559 = vld [vmem:[#allocation2 + $0x50] sm:$0xff]
        %v560 = vperm.slane %v397, 1
        %v561 = vperm.slane %v398, 1
        %v562 = vperm.slane %v399, 1
        %v563 = vperm.slane %v400, 1
        %568 = vrot.lane.b32.xlu0 %v560, 56
        %v569 = vpop.permute.xlu0 %568
        %570 = vrot.lane.b32.xlu0 %v561, 56
        %v571 = vpop.permute.xlu0 %570
        %572 = vrot.lane.b32.xlu0 %v562, 56
        %v573 = vpop.permute.xlu0 %572
        %574 = vrot.lane.b32.xlu0 %v563, 56
        %v575 = vpop.permute.xlu0 %574
        %vm576 = vcmask 457728
        %v577 = vsel %vm576, %v569, %v571
        %v578 = vsel %vm576, %v571, %v573
        %v579 = vsel %vm576, %v573, %v575
        %v585 = vmul.f32 %v550, %v569
        %v586 = vmul.f32 %v551, %v577
        %v587 = vmul.f32 %v552, %v578
        %v588 = vmul.f32 %v553, %v579
        %v589 = vmul.f32 %v554, %v575
        %v590 = vmul.f32 %v555, %v569
        %v591 = vmul.f32 %v556, %v577
        %v592 = vmul.f32 %v557, %v578
        %v593 = vmul.f32 %v558, %v579
        %v594 = vmul.f32 %v559, %v575
        %v595 = vpack.c.bf16 %v586, %v585
        %v596 = vpack.c.bf16 %v588, %v587
        %v597 = vpack.c.bf16 %v589, %v589
        %v598 = vpack.c.bf16 %v591, %v590
        %v599 = vpack.c.bf16 %v593, %v592
        %v600 = vpack.c.bf16 %v594, %v594
        %607 = vrot.lane.b32.xlu0 %v595, 72
        %v608 = vpop.permute.xlu0 %607
        %609 = vrot.lane.b32.xlu0 %v596, 72
        %v610 = vpop.permute.xlu0 %609
        %611 = vrot.lane.b32.xlu0 %v597, 72
        %v612 = vpop.permute.xlu0 %611
        %613 = vrot.lane.b32.xlu0 %v598, 72
        %v614 = vpop.permute.xlu0 %613
        %615 = vrot.lane.b32.xlu0 %v599, 72
        %v616 = vpop.permute.xlu0 %615
        %617 = vrot.lane.b32.xlu0 %v600, 72
        %v618 = vpop.permute.xlu0 %617
        %v619 = vrot.slane %v608, 4
        %v620 = vrot.slane %v610, 4
        %v621 = vrot.slane %v612, 4
        %v622 = vrot.slane %v614, 4
        %v623 = vrot.slane %v616, 4
        %v624 = vrot.slane %v618, 4
        %v625 = vsel %vm532, %v619, %v620
        %vm626 = vcmask 588800
        %v627 = vsel %vm626, %v608, %v625
        %v628 = vsel %vm532, %v620, %v621
        %v629 = vsel %vm626, %v610, %v628
        %v630 = vsel %vm532, %v622, %v623
        %v631 = vsel %vm626, %v614, %v630
        %v632 = vsel %vm532, %v623, %v624
        %v633 = vsel %vm626, %v616, %v632
        %638 = vst [vmem:[#allocation3 + $0x20] sm:$0xff] %v627
        %639 = vst [vmem:[#allocation3 + $0x28] sm:$0xff] %v629
        %640 = vst [vmem:[#allocation3 + $0x30] sm:$0xff] %v631
        %641 = vst [vmem:[#allocation3 + $0x38] sm:$0xff] %v633
        %v642 = vld [vmem:[#allocation2] sm:$0xff]
        %v643 = vld [vmem:[#allocation2 + $0x8] sm:$0xff]
        %v644 = vld [vmem:[#allocation2 + $0x10] sm:$0xff]
        %v645 = vld [vmem:[#allocation2 + $0x18] sm:$0xff]
        %v646 = vld [vmem:[#allocation2 + $0x20] sm:$0xff]
        %v647 = vld [vmem:[#allocation2 + $0x30] sm:$0xff]
        %v648 = vld [vmem:[#allocation2 + $0x38] sm:$0xff]
        %v649 = vld [vmem:[#allocation2 + $0x40] sm:$0xff]
        %v650 = vld [vmem:[#allocation2 + $0x48] sm:$0xff]
        %v651 = vld [vmem:[#allocation2 + $0x50] sm:$0xff]
        %v652 = vperm.slane %v397, 2
        %v653 = vperm.slane %v398, 2
        %v654 = vperm.slane %v399, 2
        %v655 = vperm.slane %v400, 2
        %660 = vrot.lane.b32.xlu0 %v652, 57
        %v661 = vpop.permute.xlu0 %660
        %662 = vrot.lane.b32.xlu0 %v653, 57
        %v663 = vpop.permute.xlu0 %662
        %664 = vrot.lane.b32.xlu0 %v654, 57
        %v665 = vpop.permute.xlu0 %664
        %666 = vrot.lane.b32.xlu0 %v655, 57
        %v667 = vpop.permute.xlu0 %666
        %vm668 = vcmask 465920
        %v669 = vsel %vm668, %v661, %v663
        %v670 = vsel %vm668, %v663, %v665
        %v671 = vsel %vm668, %v665, %v667
        %v677 = vmul.f32 %v642, %v661
        %v678 = vmul.f32 %v643, %v669
        %v679 = vmul.f32 %v644, %v670
        %v680 = vmul.f32 %v645, %v671
        %v681 = vmul.f32 %v646, %v667
        %v682 = vmul.f32 %v647, %v661
        %v683 = vmul.f32 %v648, %v669
        %v684 = vmul.f32 %v649, %v670
        %v685 = vmul.f32 %v650, %v671
        %v686 = vmul.f32 %v651, %v667
        %v687 = vpack.c.bf16 %v678, %v677
        %v688 = vpack.c.bf16 %v680, %v679
        %v689 = vpack.c.bf16 %v681, %v681
        %v690 = vpack.c.bf16 %v683, %v682
        %v691 = vpack.c.bf16 %v685, %v684
        %v692 = vpack.c.bf16 %v686, %v686
        %699 = vrot.lane.b32.xlu0 %v687, 71
        %v700 = vpop.permute.xlu0 %699
        %701 = vrot.lane.b32.xlu0 %v688, 71
        %v702 = vpop.permute.xlu0 %701
        %703 = vrot.lane.b32.xlu0 %v689, 71
        %v704 = vpop.permute.xlu0 %703
        %705 = vrot.lane.b32.xlu0 %v690, 71
        %v706 = vpop.permute.xlu0 %705
        %707 = vrot.lane.b32.xlu0 %v691, 71
        %v708 = vpop.permute.xlu0 %707
        %709 = vrot.lane.b32.xlu0 %v692, 71
        %v710 = vpop.permute.xlu0 %709
        %v711 = vrot.slane %v700, 4
        %v712 = vrot.slane %v702, 4
        %v713 = vrot.slane %v704, 4
        %v714 = vrot.slane %v706, 4
        %v715 = vrot.slane %v708, 4
        %v716 = vrot.slane %v710, 4
        %v717 = vsel %vm532, %v711, %v712
        %vm718 = vcmask 580608
        %v719 = vsel %vm718, %v700, %v717
        %v720 = vsel %vm532, %v712, %v713
        %v721 = vsel %vm718, %v702, %v720
        %v722 = vsel %vm532, %v714, %v715
        %v723 = vsel %vm718, %v706, %v722
        %v724 = vsel %vm532, %v715, %v716
        %v725 = vsel %vm718, %v708, %v724
        %730 = vst [vmem:[#allocation3 + $0x40] sm:$0xff] %v719
        %731 = vst [vmem:[#allocation3 + $0x48] sm:$0xff] %v721
        %732 = vst [vmem:[#allocation3 + $0x50] sm:$0xff] %v723
        %733 = vst [vmem:[#allocation3 + $0x58] sm:$0xff] %v725
        %v734 = vld [vmem:[#allocation2] sm:$0xff]
        %v735 = vld [vmem:[#allocation2 + $0x8] sm:$0xff]
        %v736 = vld [vmem:[#allocation2 + $0x10] sm:$0xff]
        %v737 = vld [vmem:[#allocation2 + $0x18] sm:$0xff]
        %v738 = vld [vmem:[#allocation2 + $0x20] sm:$0xff]
        %v739 = vld [vmem:[#allocation2 + $0x30] sm:$0xff]
        %v740 = vld [vmem:[#allocation2 + $0x38] sm:$0xff]
        %v741 = vld [vmem:[#allocation2 + $0x40] sm:$0xff]
        %v742 = vld [vmem:[#allocation2 + $0x48] sm:$0xff]
        %v743 = vld [vmem:[#allocation2 + $0x50] sm:$0xff]
        %v744 = vperm.slane %v397, 3
        %v745 = vperm.slane %v398, 3
        %v746 = vperm.slane %v399, 3
        %v747 = vperm.slane %v400, 3
        %752 = vrot.lane.b32.xlu0 %v744, 63
        %v753 = vpop.permute.xlu0 %752
        %754 = vrot.lane.b32.xlu0 %v745, 63
        %v755 = vpop.permute.xlu0 %754
        %756 = vrot.lane.b32.xlu0 %v746, 63
        %v757 = vpop.permute.xlu0 %756
        %758 = vrot.lane.b32.xlu0 %v747, 63
        %v759 = vpop.permute.xlu0 %758
        %vm760 = vcmask 515072
        %v761 = vsel %vm760, %v753, %v755
        %v762 = vsel %vm760, %v755, %v757
        %v763 = vsel %vm760, %v757, %v759
        %v769 = vmul.f32 %v734, %v753
        %v770 = vmul.f32 %v735, %v761
        %v771 = vmul.f32 %v736, %v762
        %v772 = vmul.f32 %v737, %v763
        %v773 = vmul.f32 %v738, %v759
        %v774 = vmul.f32 %v739, %v753
        %v775 = vmul.f32 %v740, %v761
        %v776 = vmul.f32 %v741, %v762
        %v777 = vmul.f32 %v742, %v763
        %v778 = vmul.f32 %v743, %v759
        %v779 = vpack.c.bf16 %v770, %v769
        %v780 = vpack.c.bf16 %v772, %v771
        %v781 = vpack.c.bf16 %v773, %v773
        %v782 = vpack.c.bf16 %v775, %v774
        %v783 = vpack.c.bf16 %v777, %v776
        %v784 = vpack.c.bf16 %v778, %v778
        %791 = vrot.lane.b32.xlu0 %v779, 65
        %v792 = vpop.permute.xlu0 %791
        %793 = vrot.lane.b32.xlu0 %v780, 65
        %v794 = vpop.permute.xlu0 %793
        %795 = vrot.lane.b32.xlu0 %v781, 65
        %v796 = vpop.permute.xlu0 %795
        %797 = vrot.lane.b32.xlu0 %v782, 65
        %v798 = vpop.permute.xlu0 %797
        %799 = vrot.lane.b32.xlu0 %v783, 65
        %v800 = vpop.permute.xlu0 %799
        %801 = vrot.lane.b32.xlu0 %v784, 65
        %v802 = vpop.permute.xlu0 %801
        %v803 = vrot.slane %v792, 4
        %v804 = vrot.slane %v794, 4
        %v805 = vrot.slane %v796, 4
        %v806 = vrot.slane %v798, 4
        %v807 = vrot.slane %v800, 4
        %v808 = vrot.slane %v802, 4
        %v809 = vsel %vm532, %v803, %v804
        %vm810 = vcmask 531456
        %v811 = vsel %vm810, %v792, %v809
        %v812 = vsel %vm532, %v804, %v805
        %v813 = vsel %vm810, %v794, %v812
        %v814 = vsel %vm532, %v806, %v807
        %v815 = vsel %vm810, %v798, %v814
        %v816 = vsel %vm532, %v807, %v808
        %v817 = vsel %vm810, %v800, %v816
        %822 = vst [vmem:[#allocation3 + $0x60] sm:$0xff] %v811
        %823 = vst [vmem:[#allocation3 + $0x68] sm:$0xff] %v813
        %824 = vst [vmem:[#allocation3 + $0x70] sm:$0xff] %v815
        %825 = vst [vmem:[#allocation3 + $0x78] sm:$0xff] %v817
        %v826 = vld [vmem:[#allocation2] sm:$0xff]
        %v827 = vld [vmem:[#allocation2 + $0x8] sm:$0xff]
        %v828 = vld [vmem:[#allocation2 + $0x10] sm:$0xff]
        %v829 = vld [vmem:[#allocation2 + $0x18] sm:$0xff]
        %v830 = vld [vmem:[#allocation2 + $0x20] sm:$0xff]
        %v831 = vld [vmem:[#allocation2 + $0x30] sm:$0xff]
        %v832 = vld [vmem:[#allocation2 + $0x38] sm:$0xff]
        %v833 = vld [vmem:[#allocation2 + $0x40] sm:$0xff]
        %v834 = vld [vmem:[#allocation2 + $0x48] sm:$0xff]
        %v835 = vld [vmem:[#allocation2 + $0x50] sm:$0xff]
        %v836 = vpack.c.bf16 %v827, %v826
        %v837 = vpack.c.bf16 %v829, %v828
        %v838 = vpack.c.bf16 %v830, %v830
        %v839 = vpack.c.bf16 %v832, %v831
        %v840 = vpack.c.bf16 %v834, %v833
        %v841 = vpack.c.bf16 %v835, %v835
        %848 = vrot.lane.b32.xlu0 %v836, 64
        %v849 = vpop.permute.xlu0 %848
        %850 = vrot.lane.b32.xlu0 %v837, 64
        %v851 = vpop.permute.xlu0 %850
        %852 = vrot.lane.b32.xlu0 %v838, 64
        %v853 = vpop.permute.xlu0 %852
        %854 = vrot.lane.b32.xlu0 %v839, 64
        %v855 = vpop.permute.xlu0 %854
        %856 = vrot.lane.b32.xlu0 %v840, 64
        %v857 = vpop.permute.xlu0 %856
        %858 = vrot.lane.b32.xlu0 %v841, 64
        %v859 = vpop.permute.xlu0 %858
        %v860 = vrot.slane %v849, 4
        %v861 = vrot.slane %v851, 4
        %v862 = vrot.slane %v853, 4
        %v863 = vrot.slane %v855, 4
        %v864 = vrot.slane %v857, 4
        %v865 = vrot.slane %v859, 4
        %v866 = vsel %vm532, %v860, %v861
        %vm867 = vcmask 523264
        %v868 = vsel %vm867, %v849, %v866
        %v869 = vsel %vm532, %v861, %v862
        %v870 = vsel %vm867, %v851, %v869
        %v871 = vsel %vm532, %v863, %v864
        %v872 = vsel %vm867, %v855, %v871
        %v873 = vsel %vm532, %v864, %v865
        %v874 = vsel %vm867, %v857, %v873
        %879 = vst [vmem:[#allocation3 + $0x80] sm:$0xff] %v868
        %880 = vst [vmem:[#allocation3 + $0x88] sm:$0xff] %v870
        %881 = vst [vmem:[#allocation3 + $0x90] sm:$0xff] %v872
        %882 = vst [vmem:[#allocation3 + $0x98] sm:$0xff] %v874
        %v883 = vld [vmem:[#allocation2] sm:$0xff]
        %v884 = vld [vmem:[#allocation2 + $0x8] sm:$0xff]
        %v885 = vld [vmem:[#allocation2 + $0x10] sm:$0xff]
        %v886 = vld [vmem:[#allocation2 + $0x18] sm:$0xff]
        %v887 = vld [vmem:[#allocation2 + $0x20] sm:$0xff]
        %v888 = vld [vmem:[#allocation2 + $0x30] sm:$0xff]
        %v889 = vld [vmem:[#allocation2 + $0x38] sm:$0xff]
        %v890 = vld [vmem:[#allocation2 + $0x40] sm:$0xff]
        %v891 = vld [vmem:[#allocation2 + $0x48] sm:$0xff]
        %v892 = vld [vmem:[#allocation2 + $0x50] sm:$0xff]
        %v893 = vperm.slane %v397, 5
        %v894 = vperm.slane %v398, 5
        %v895 = vperm.slane %v399, 5
        %v896 = vperm.slane %v400, 5
        %901 = vrot.lane.b32.xlu0 %v893, 65
        %v902 = vpop.permute.xlu0 %901
        %903 = vrot.lane.b32.xlu0 %v894, 65
        %v904 = vpop.permute.xlu0 %903
        %905 = vrot.lane.b32.xlu0 %v895, 65
        %v906 = vpop.permute.xlu0 %905
        %907 = vrot.lane.b32.xlu0 %v896, 65
        %v908 = vpop.permute.xlu0 %907
        %vm909 = vcmask 531456
        %v910 = vsel %vm909, %v902, %v904
        %v911 = vsel %vm909, %v904, %v906
        %v912 = vsel %vm909, %v906, %v908
        %v918 = vmul.f32 %v883, %v902
        %v919 = vmul.f32 %v884, %v910
        %v920 = vmul.f32 %v885, %v911
        %v921 = vmul.f32 %v886, %v912
        %v922 = vmul.f32 %v887, %v908
        %v923 = vmul.f32 %v888, %v902
        %v924 = vmul.f32 %v889, %v910
        %v925 = vmul.f32 %v890, %v911
        %v926 = vmul.f32 %v891, %v912
        %v927 = vmul.f32 %v892, %v908
        %v928 = vpack.c.bf16 %v919, %v918
        %v929 = vpack.c.bf16 %v921, %v920
        %v930 = vpack.c.bf16 %v922, %v922
        %v931 = vpack.c.bf16 %v924, %v923
        %v932 = vpack.c.bf16 %v926, %v925
        %v933 = vpack.c.bf16 %v927, %v927
        %940 = vrot.lane.b32.xlu0 %v928, 63
        %v941 = vpop.permute.xlu0 %940
        %942 = vrot.lane.b32.xlu0 %v929, 63
        %v943 = vpop.permute.xlu0 %942
        %944 = vrot.lane.b32.xlu0 %v930, 63
        %v945 = vpop.permute.xlu0 %944
        %946 = vrot.lane.b32.xlu0 %v931, 63
        %v947 = vpop.permute.xlu0 %946
        %948 = vrot.lane.b32.xlu0 %v932, 63
        %v949 = vpop.permute.xlu0 %948
        %950 = vrot.lane.b32.xlu0 %v933, 63
        %v951 = vpop.permute.xlu0 %950
        %v952 = vrot.slane %v941, 4
        %v953 = vrot.slane %v943, 4
        %v954 = vrot.slane %v945, 4
        %v955 = vrot.slane %v947, 4
        %v956 = vrot.slane %v949, 4
        %v957 = vrot.slane %v951, 4
        %v958 = vsel %vm532, %v952, %v953
        %vm959 = vcmask 515072
        %v960 = vsel %vm959, %v941, %v958
        %v961 = vsel %vm532, %v953, %v954
        %v962 = vsel %vm959, %v943, %v961
        %v963 = vsel %vm532, %v955, %v956
        %v964 = vsel %vm959, %v947, %v963
        %v965 = vsel %vm532, %v956, %v957
        %v966 = vsel %vm959, %v949, %v965
        %971 = vst [vmem:[#allocation3 + $0xa0] sm:$0xff] %v960
        %972 = vst [vmem:[#allocation3 + $0xa8] sm:$0xff] %v962
        %973 = vst [vmem:[#allocation3 + $0xb0] sm:$0xff] %v964
        %974 = vst [vmem:[#allocation3 + $0xb8] sm:$0xff] %v966
        %v975 = vld [vmem:[#allocation2] sm:$0xff]
        %v976 = vld [vmem:[#allocation2 + $0x8] sm:$0xff]
        %v977 = vld [vmem:[#allocation2 + $0x10] sm:$0xff]
        %v978 = vld [vmem:[#allocation2 + $0x18] sm:$0xff]
        %v979 = vld [vmem:[#allocation2 + $0x20] sm:$0xff]
        %v980 = vld [vmem:[#allocation2 + $0x30] sm:$0xff]
        %v981 = vld [vmem:[#allocation2 + $0x38] sm:$0xff]
        %v982 = vld [vmem:[#allocation2 + $0x40] sm:$0xff]
        %v983 = vld [vmem:[#allocation2 + $0x48] sm:$0xff]
        %v984 = vld [vmem:[#allocation2 + $0x50] sm:$0xff]
        %v985 = vperm.slane %v397, 6
        %v986 = vperm.slane %v398, 6
        %v987 = vperm.slane %v399, 6
        %v988 = vperm.slane %v400, 6
        %993 = vrot.lane.b32.xlu0 %v985, 71
        %v994 = vpop.permute.xlu0 %993
        %995 = vrot.lane.b32.xlu0 %v986, 71
        %v996 = vpop.permute.xlu0 %995
        %997 = vrot.lane.b32.xlu0 %v987, 71
        %v998 = vpop.permute.xlu0 %997
        %999 = vrot.lane.b32.xlu0 %v988, 71
        %v1000 = vpop.permute.xlu0 %999
        %vm1001 = vcmask 580608
        %v1002 = vsel %vm1001, %v994, %v996
        %v1003 = vsel %vm1001, %v996, %v998
        %v1004 = vsel %vm1001, %v998, %v1000
        %v1010 = vmul.f32 %v975, %v994
        %v1011 = vmul.f32 %v976, %v1002
        %v1012 = vmul.f32 %v977, %v1003
        %v1013 = vmul.f32 %v978, %v1004
        %v1014 = vmul.f32 %v979, %v1000
        %v1015 = vmul.f32 %v980, %v994
        %v1016 = vmul.f32 %v981, %v1002
        %v1017 = vmul.f32 %v982, %v1003
        %v1018 = vmul.f32 %v983, %v1004
        %v1019 = vmul.f32 %v984, %v1000
        %v1020 = vpack.c.bf16 %v1011, %v1010
        %v1021 = vpack.c.bf16 %v1013, %v1012
        %v1022 = vpack.c.bf16 %v1014, %v1014
        %v1023 = vpack.c.bf16 %v1016, %v1015
        %v1024 = vpack.c.bf16 %v1018, %v1017
        %v1025 = vpack.c.bf16 %v1019, %v1019
        %1032 = vrot.lane.b32.xlu0 %v1020, 57
        %v1033 = vpop.permute.xlu0 %1032
        %1034 = vrot.lane.b32.xlu0 %v1021, 57
        %v1035 = vpop.permute.xlu0 %1034
        %1036 = vrot.lane.b32.xlu0 %v1022, 57
        %v1037 = vpop.permute.xlu0 %1036
        %1038 = vrot.lane.b32.xlu0 %v1023, 57
        %v1039 = vpop.permute.xlu0 %1038
        %1040 = vrot.lane.b32.xlu0 %v1024, 57
        %v1041 = vpop.permute.xlu0 %1040
        %1042 = vrot.lane.b32.xlu0 %v1025, 57
        %v1043 = vpop.permute.xlu0 %1042
        %v1044 = vrot.slane %v1033, 4
        %v1045 = vrot.slane %v1035, 4
        %v1046 = vrot.slane %v1037, 4
        %v1047 = vrot.slane %v1039, 4
        %v1048 = vrot.slane %v1041, 4
        %v1049 = vrot.slane %v1043, 4
        %v1050 = vsel %vm532, %v1044, %v1045
        %vm1051 = vcmask 465920
        %v1052 = vsel %vm1051, %v1033, %v1050
        %v1053 = vsel %vm532, %v1045, %v1046
        %v1054 = vsel %vm1051, %v1035, %v1053
        %v1055 = vsel %vm532, %v1047, %v1048
        %v1056 = vsel %vm1051, %v1039, %v1055
        %v1057 = vsel %vm532, %v1048, %v1049
        %v1058 = vsel %vm1051, %v1041, %v1057
        %1063 = vst [vmem:[#allocation3 + $0xc0] sm:$0xff] %v1052
        %1064 = vst [vmem:[#allocation3 + $0xc8] sm:$0xff] %v1054
        %1065 = vst [vmem:[#allocation3 + $0xd0] sm:$0xff] %v1056
        %1066 = vst [vmem:[#allocation3 + $0xd8] sm:$0xff] %v1058
        %v1067 = vld [vmem:[#allocation2] sm:$0xff]
        %v1068 = vld [vmem:[#allocation2 + $0x8] sm:$0xff]
        %v1069 = vld [vmem:[#allocation2 + $0x10] sm:$0xff]
        %v1070 = vld [vmem:[#allocation2 + $0x18] sm:$0xff]
        %v1071 = vld [vmem:[#allocation2 + $0x20] sm:$0xff]
        %v1072 = vld [vmem:[#allocation2 + $0x30] sm:$0xff]
        %v1073 = vld [vmem:[#allocation2 + $0x38] sm:$0xff]
        %v1074 = vld [vmem:[#allocation2 + $0x40] sm:$0xff]
        %v1075 = vld [vmem:[#allocation2 + $0x48] sm:$0xff]
        %v1076 = vld [vmem:[#allocation2 + $0x50] sm:$0xff]
        %v1077 = vperm.slane %v397, 7
        %v1078 = vperm.slane %v398, 7
        %v1079 = vperm.slane %v399, 7
        %v1080 = vperm.slane %v400, 7
        %1085 = vrot.lane.b32.xlu0 %v1077, 72
        %v1086 = vpop.permute.xlu0 %1085
        %1087 = vrot.lane.b32.xlu0 %v1078, 72
        %v1088 = vpop.permute.xlu0 %1087
        %1089 = vrot.lane.b32.xlu0 %v1079, 72
        %v1090 = vpop.permute.xlu0 %1089
        %1091 = vrot.lane.b32.xlu0 %v1080, 72
        %v1092 = vpop.permute.xlu0 %1091
        %vm1093 = vcmask 588800
        %v1094 = vsel %vm1093, %v1086, %v1088
        %v1095 = vsel %vm1093, %v1088, %v1090
        %v1096 = vsel %vm1093, %v1090, %v1092
        %v1102 = vmul.f32 %v1067, %v1086
        %v1103 = vmul.f32 %v1068, %v1094
        %v1104 = vmul.f32 %v1069, %v1095
        %v1105 = vmul.f32 %v1070, %v1096
        %v1106 = vmul.f32 %v1071, %v1092
        %v1107 = vmul.f32 %v1072, %v1086
        %v1108 = vmul.f32 %v1073, %v1094
        %v1109 = vmul.f32 %v1074, %v1095
        %v1110 = vmul.f32 %v1075, %v1096
        %v1111 = vmul.f32 %v1076, %v1092
        %v1112 = vpack.c.bf16 %v1103, %v1102
        %v1113 = vpack.c.bf16 %v1105, %v1104
        %v1114 = vpack.c.bf16 %v1106, %v1106
        %v1115 = vpack.c.bf16 %v1108, %v1107
        %v1116 = vpack.c.bf16 %v1110, %v1109
        %v1117 = vpack.c.bf16 %v1111, %v1111
        %1124 = vrot.lane.b32.xlu0 %v1112, 56
        %v1125 = vpop.permute.xlu0 %1124
        %1126 = vrot.lane.b32.xlu0 %v1113, 56
        %v1127 = vpop.permute.xlu0 %1126
        %1128 = vrot.lane.b32.xlu0 %v1114, 56
        %v1129 = vpop.permute.xlu0 %1128
        %1130 = vrot.lane.b32.xlu0 %v1115, 56
        %v1131 = vpop.permute.xlu0 %1130
        %1132 = vrot.lane.b32.xlu0 %v1116, 56
        %v1133 = vpop.permute.xlu0 %1132
        %1134 = vrot.lane.b32.xlu0 %v1117, 56
        %v1135 = vpop.permute.xlu0 %1134
        %v1136 = vrot.slane %v1125, 4
        %v1137 = vrot.slane %v1127, 4
        %v1138 = vrot.slane %v1129, 4
        %v1139 = vrot.slane %v1131, 4
        %v1140 = vrot.slane %v1133, 4
        %v1141 = vrot.slane %v1135, 4
        %v1142 = vsel %vm532, %v1136, %v1137
        %vm1143 = vcmask 457728
        %v1144 = vsel %vm1143, %v1125, %v1142
        %v1145 = vsel %vm532, %v1137, %v1138
        %v1146 = vsel %vm1143, %v1127, %v1145
        %v1147 = vsel %vm532, %v1139, %v1140
        %v1148 = vsel %vm1143, %v1131, %v1147
        %v1149 = vsel %vm532, %v1140, %v1141
        %v1150 = vsel %vm1143, %v1133, %v1149
        %1155 = vst [vmem:[#allocation3 + $0xe0] sm:$0xff] %v1144
        %1156 = vst [vmem:[#allocation3 + $0xe8] sm:$0xff] %v1146
        %1157 = vst [vmem:[#allocation3 + $0xf0] sm:$0xff] %v1148
        %1158 = vst [vmem:[#allocation3 + $0xf8] sm:$0xff] %v1150
        %v1159 = vld [vmem:[#allocation2] sm:$0xff]
        %v1160 = vld [vmem:[#allocation2 + $0x8] sm:$0xff]
        %v1161 = vld [vmem:[#allocation2 + $0x10] sm:$0xff]
        %v1162 = vld [vmem:[#allocation2 + $0x18] sm:$0xff]
        %v1163 = vld [vmem:[#allocation2 + $0x20] sm:$0xff]
        %v1164 = vld [vmem:[#allocation2 + $0x30] sm:$0xff]
        %v1165 = vld [vmem:[#allocation2 + $0x38] sm:$0xff]
        %v1166 = vld [vmem:[#allocation2 + $0x40] sm:$0xff]
        %v1167 = vld [vmem:[#allocation2 + $0x48] sm:$0xff]
        %v1168 = vld [vmem:[#allocation2 + $0x50] sm:$0xff]
        %v1169 = vperm.slane %v401, 0
        %v1170 = vperm.slane %v402, 0
        %v1171 = vperm.slane %v403, 0
        %v1172 = vperm.slane %v404, 0
        %1177 = vrot.lane.b32.xlu0 %v1169, 73
        %v1178 = vpop.permute.xlu0 %1177
        %1179 = vrot.lane.b32.xlu0 %v1170, 73
        %v1180 = vpop.permute.xlu0 %1179
        %1181 = vrot.lane.b32.xlu0 %v1171, 73
        %v1182 = vpop.permute.xlu0 %1181
        %1183 = vrot.lane.b32.xlu0 %v1172, 73
        %v1184 = vpop.permute.xlu0 %1183
        %vm1185 = vcmask 596992
        %v1186 = vsel %vm1185, %v1178, %v1180
        %v1187 = vsel %vm1185, %v1180, %v1182
        %v1188 = vsel %vm1185, %v1182, %v1184
        %v1194 = vmul.f32 %v1159, %v1178
        %v1195 = vmul.f32 %v1160, %v1186
        %v1196 = vmul.f32 %v1161, %v1187
        %v1197 = vmul.f32 %v1162, %v1188
        %v1198 = vmul.f32 %v1163, %v1184
        %v1199 = vmul.f32 %v1164, %v1178
        %v1200 = vmul.f32 %v1165, %v1186
        %v1201 = vmul.f32 %v1166, %v1187
        %v1202 = vmul.f32 %v1167, %v1188
        %v1203 = vmul.f32 %v1168, %v1184
        %v1204 = vpack.c.bf16 %v1195, %v1194
        %v1205 = vpack.c.bf16 %v1197, %v1196
        %v1206 = vpack.c.bf16 %v1198, %v1198
        %v1207 = vpack.c.bf16 %v1200, %v1199
        %v1208 = vpack.c.bf16 %v1202, %v1201
        %v1209 = vpack.c.bf16 %v1203, %v1203
        %1216 = vrot.lane.b32.xlu0 %v1204, 55
        %v1217 = vpop.permute.xlu0 %1216
        %1218 = vrot.lane.b32.xlu0 %v1205, 55
        %v1219 = vpop.permute.xlu0 %1218
        %1220 = vrot.lane.b32.xlu0 %v1206, 55
        %v1221 = vpop.permute.xlu0 %1220
        %1222 = vrot.lane.b32.xlu0 %v1207, 55
        %v1223 = vpop.permute.xlu0 %1222
        %1224 = vrot.lane.b32.xlu0 %v1208, 55
        %v1225 = vpop.permute.xlu0 %1224
        %1226 = vrot.lane.b32.xlu0 %v1209, 55
        %v1227 = vpop.permute.xlu0 %1226
        %v1228 = vrot.slane %v1217, 4
        %v1229 = vrot.slane %v1219, 4
        %v1230 = vrot.slane %v1221, 4
        %v1231 = vrot.slane %v1223, 4
        %v1232 = vrot.slane %v1225, 4
        %v1233 = vrot.slane %v1227, 4
        %v1234 = vsel %vm532, %v1228, %v1229
        %vm1235 = vcmask 449536
        %v1236 = vsel %vm1235, %v1217, %v1234
        %v1237 = vsel %vm532, %v1229, %v1230
        %v1238 = vsel %vm1235, %v1219, %v1237
        %v1239 = vsel %vm532, %v1231, %v1232
        %v1240 = vsel %vm1235, %v1223, %v1239
        %v1241 = vsel %vm532, %v1232, %v1233
        %v1242 = vsel %vm1235, %v1225, %v1241
        %1247 = vst [vmem:[#allocation3 + $0x100] sm:$0xff] %v1236
        %1248 = vst [vmem:[#allocation3 + $0x108] sm:$0xff] %v1238
        %1249 = vst [vmem:[#allocation3 + $0x110] sm:$0xff] %v1240
        %1250 = vst [vmem:[#allocation3 + $0x118] sm:$0xff] %v1242
        %v1251 = vld [vmem:[#allocation2] sm:$0xff]
        %v1252 = vld [vmem:[#allocation2 + $0x8] sm:$0xff]
        %v1253 = vld [vmem:[#allocation2 + $0x10] sm:$0xff]
        %v1254 = vld [vmem:[#allocation2 + $0x18] sm:$0xff]
        %v1255 = vld [vmem:[#allocation2 + $0x20] sm:$0xff]
        %v1256 = vld [vmem:[#allocation2 + $0x30] sm:$0xff]
        %v1257 = vld [vmem:[#allocation2 + $0x38] sm:$0xff]
        %v1258 = vld [vmem:[#allocation2 + $0x40] sm:$0xff]
        %v1259 = vld [vmem:[#allocation2 + $0x48] sm:$0xff]
        %v1260 = vld [vmem:[#allocation2 + $0x50] sm:$0xff]
        %1261 = vrot.lane.b32.xlu0 %v467, 119
        %v1262 = vpop.permute.xlu0 %1261
        %1263 = vrot.lane.b32.xlu0 %v468, 119
        %v1264 = vpop.permute.xlu0 %1263
        %1265 = vrot.lane.b32.xlu0 %v469, 119
        %v1266 = vpop.permute.xlu0 %1265
        %1267 = vrot.lane.b32.xlu0 %v470, 119
        %v1268 = vpop.permute.xlu0 %1267
        %vm1269 = vcmask 973824
        %v1270 = vsel %vm1269, %v1262, %v1264
        %v1271 = vsel %vm1269, %v1264, %v1266
        %v1272 = vsel %vm1269, %v1266, %v1268
        %v1278 = vmul.f32 %v1251, %v1262
        %v1279 = vmul.f32 %v1252, %v1270
        %v1280 = vmul.f32 %v1253, %v1271
        %v1281 = vmul.f32 %v1254, %v1272
        %v1282 = vmul.f32 %v1255, %v1268
        %v1283 = vmul.f32 %v1256, %v1262
        %v1284 = vmul.f32 %v1257, %v1270
        %v1285 = vmul.f32 %v1258, %v1271
        %v1286 = vmul.f32 %v1259, %v1272
        %v1287 = vmul.f32 %v1260, %v1268
        %v1288 = vpack.c.bf16 %v1279, %v1278
        %v1289 = vpack.c.bf16 %v1281, %v1280
        %v1290 = vpack.c.bf16 %v1282, %v1282
        %v1291 = vpack.c.bf16 %v1284, %v1283
        %v1292 = vpack.c.bf16 %v1286, %v1285
        %v1293 = vpack.c.bf16 %v1287, %v1287
        %1300 = vrot.lane.b32.xlu0 %v1288, 9
        %v1301 = vpop.permute.xlu0 %1300
        %1302 = vrot.lane.b32.xlu0 %v1289, 9
        %v1303 = vpop.permute.xlu0 %1302
        %1304 = vrot.lane.b32.xlu0 %v1290, 9
        %v1305 = vpop.permute.xlu0 %1304
        %1306 = vrot.lane.b32.xlu0 %v1291, 9
        %v1307 = vpop.permute.xlu0 %1306
        %1308 = vrot.lane.b32.xlu0 %v1292, 9
        %v1309 = vpop.permute.xlu0 %1308
        %1310 = vrot.lane.b32.xlu0 %v1293, 9
        %v1311 = vpop.permute.xlu0 %1310
        %v1312 = vrot.slane %v1301, 4
        %v1313 = vrot.slane %v1303, 4
        %v1314 = vrot.slane %v1305, 4
        %v1315 = vrot.slane %v1307, 4
        %v1316 = vrot.slane %v1309, 4
        %v1317 = vrot.slane %v1311, 4
        %v1318 = vsel %vm532, %v1312, %v1313
        %vm1319 = vcmask 72704
        %v1320 = vsel %vm1319, %v1301, %v1318
        %v1321 = vsel %vm532, %v1313, %v1314
        %v1322 = vsel %vm1319, %v1303, %v1321
        %v1323 = vsel %vm532, %v1315, %v1316
        %v1324 = vsel %vm1319, %v1307, %v1323
        %v1325 = vsel %vm532, %v1316, %v1317
        %v1326 = vsel %vm1319, %v1309, %v1325
        %1331 = vst [vmem:[#allocation3 + $0x120] sm:$0xff] %v1320
        %1332 = vst [vmem:[#allocation3 + $0x128] sm:$0xff] %v1322
        %1333 = vst [vmem:[#allocation3 + $0x130] sm:$0xff] %v1324
        %1334 = vst [vmem:[#allocation3 + $0x138] sm:$0xff] %v1326
        %v1335 = vld [vmem:[#allocation2] sm:$0xff]
        %v1336 = vld [vmem:[#allocation2 + $0x8] sm:$0xff]
        %v1337 = vld [vmem:[#allocation2 + $0x10] sm:$0xff]
        %v1338 = vld [vmem:[#allocation2 + $0x18] sm:$0xff]
        %v1339 = vld [vmem:[#allocation2 + $0x20] sm:$0xff]
        %v1340 = vld [vmem:[#allocation2 + $0x30] sm:$0xff]
        %v1341 = vld [vmem:[#allocation2 + $0x38] sm:$0xff]
        %v1342 = vld [vmem:[#allocation2 + $0x40] sm:$0xff]
        %v1343 = vld [vmem:[#allocation2 + $0x48] sm:$0xff]
        %v1344 = vld [vmem:[#allocation2 + $0x50] sm:$0xff]
        %1345 = vrot.lane.b32.xlu0 %v560, 120
        %v1346 = vpop.permute.xlu0 %1345
        %1347 = vrot.lane.b32.xlu0 %v561, 120
        %v1348 = vpop.permute.xlu0 %1347
        %1349 = vrot.lane.b32.xlu0 %v562, 120
        %v1350 = vpop.permute.xlu0 %1349
        %1351 = vrot.lane.b32.xlu0 %v563, 120
        %v1352 = vpop.permute.xlu0 %1351
        %vm1353 = vcmask 982016
        %v1354 = vsel %vm1353, %v1346, %v1348
        %v1355 = vsel %vm1353, %v1348, %v1350
        %v1356 = vsel %vm1353, %v1350, %v1352
        %v1362 = vmul.f32 %v1335, %v1346
        %v1363 = vmul.f32 %v1336, %v1354
        %v1364 = vmul.f32 %v1337, %v1355
        %v1365 = vmul.f32 %v1338, %v1356
        %v1366 = vmul.f32 %v1339, %v1352
        %v1367 = vmul.f32 %v1340, %v1346
        %v1368 = vmul.f32 %v1341, %v1354
        %v1369 = vmul.f32 %v1342, %v1355
        %v1370 = vmul.f32 %v1343, %v1356
        %v1371 = vmul.f32 %v1344, %v1352
        %v1372 = vpack.c.bf16 %v1363, %v1362
        %v1373 = vpack.c.bf16 %v1365, %v1364
        %v1374 = vpack.c.bf16 %v1366, %v1366
        %v1375 = vpack.c.bf16 %v1368, %v1367
        %v1376 = vpack.c.bf16 %v1370, %v1369
        %v1377 = vpack.c.bf16 %v1371, %v1371
        %1384 = vrot.lane.b32.xlu0 %v1372, 8
        %v1385 = vpop.permute.xlu0 %1384
        %1386 = vrot.lane.b32.xlu0 %v1373, 8
        %v1387 = vpop.permute.xlu0 %1386
        %1388 = vrot.lane.b32.xlu0 %v1374, 8
        %v1389 = vpop.permute.xlu0 %1388
        %1390 = vrot.lane.b32.xlu0 %v1375, 8
        %v1391 = vpop.permute.xlu0 %1390
        %1392 = vrot.lane.b32.xlu0 %v1376, 8
        %v1393 = vpop.permute.xlu0 %1392
        %1394 = vrot.lane.b32.xlu0 %v1377, 8
        %v1395 = vpop.permute.xlu0 %1394
        %v1396 = vrot.slane %v1385, 4
        %v1397 = vrot.slane %v1387, 4
        %v1398 = vrot.slane %v1389, 4
        %v1399 = vrot.slane %v1391, 4
        %v1400 = vrot.slane %v1393, 4
        %v1401 = vrot.slane %v1395, 4
        %v1402 = vsel %vm532, %v1396, %v1397
        %vm1403 = vcmask 64512
        %v1404 = vsel %vm1403, %v1385, %v1402
        %v1405 = vsel %vm532, %v1397, %v1398
        %v1406 = vsel %vm1403, %v1387, %v1405
        %v1407 = vsel %vm532, %v1399, %v1400
        %v1408 = vsel %vm1403, %v1391, %v1407
        %v1409 = vsel %vm532, %v1400, %v1401
        %v1410 = vsel %vm1403, %v1393, %v1409
        %1415 = vst [vmem:[#allocation3 + $0x140] sm:$0xff] %v1404
        %1416 = vst [vmem:[#allocation3 + $0x148] sm:$0xff] %v1406
        %1417 = vst [vmem:[#allocation3 + $0x150] sm:$0xff] %v1408
        %1418 = vst [vmem:[#allocation3 + $0x158] sm:$0xff] %v1410
        %v1419 = vld [vmem:[#allocation2] sm:$0xff]
        %v1420 = vld [vmem:[#allocation2 + $0x8] sm:$0xff]
        %v1421 = vld [vmem:[#allocation2 + $0x10] sm:$0xff]
        %v1422 = vld [vmem:[#allocation2 + $0x18] sm:$0xff]
        %v1423 = vld [vmem:[#allocation2 + $0x20] sm:$0xff]
        %v1424 = vld [vmem:[#allocation2 + $0x30] sm:$0xff]
        %v1425 = vld [vmem:[#allocation2 + $0x38] sm:$0xff]
        %v1426 = vld [vmem:[#allocation2 + $0x40] sm:$0xff]
        %v1427 = vld [vmem:[#allocation2 + $0x48] sm:$0xff]
        %v1428 = vld [vmem:[#allocation2 + $0x50] sm:$0xff]
        %1429 = vrot.lane.b32.xlu0 %v652, 121
        %v1430 = vpop.permute.xlu0 %1429
        %1431 = vrot.lane.b32.xlu0 %v653, 121
        %v1432 = vpop.permute.xlu0 %1431
        %1433 = vrot.lane.b32.xlu0 %v654, 121
        %v1434 = vpop.permute.xlu0 %1433
        %1435 = vrot.lane.b32.xlu0 %v655, 121
        %v1436 = vpop.permute.xlu0 %1435
        %vm1437 = vcmask 990208
        %v1438 = vsel %vm1437, %v1430, %v1432
        %v1439 = vsel %vm1437, %v1432, %v1434
        %v1440 = vsel %vm1437, %v1434, %v1436
        %v1446 = vmul.f32 %v1419, %v1430
        %v1447 = vmul.f32 %v1420, %v1438
        %v1448 = vmul.f32 %v1421, %v1439
        %v1449 = vmul.f32 %v1422, %v1440
        %v1450 = vmul.f32 %v1423, %v1436
        %v1451 = vmul.f32 %v1424, %v1430
        %v1452 = vmul.f32 %v1425, %v1438
        %v1453 = vmul.f32 %v1426, %v1439
        %v1454 = vmul.f32 %v1427, %v1440
        %v1455 = vmul.f32 %v1428, %v1436
        %v1456 = vpack.c.bf16 %v1447, %v1446
        %v1457 = vpack.c.bf16 %v1449, %v1448
        %v1458 = vpack.c.bf16 %v1450, %v1450
        %v1459 = vpack.c.bf16 %v1452, %v1451
        %v1460 = vpack.c.bf16 %v1454, %v1453
        %v1461 = vpack.c.bf16 %v1455, %v1455
        %1468 = vrot.lane.b32.xlu0 %v1456, 7
        %v1469 = vpop.permute.xlu0 %1468
        %1470 = vrot.lane.b32.xlu0 %v1457, 7
        %v1471 = vpop.permute.xlu0 %1470
        %1472 = vrot.lane.b32.xlu0 %v1458, 7
        %v1473 = vpop.permute.xlu0 %1472
        %1474 = vrot.lane.b32.xlu0 %v1459, 7
        %v1475 = vpop.permute.xlu0 %1474
        %1476 = vrot.lane.b32.xlu0 %v1460, 7
        %v1477 = vpop.permute.xlu0 %1476
        %1478 = vrot.lane.b32.xlu0 %v1461, 7
        %v1479 = vpop.permute.xlu0 %1478
        %v1480 = vrot.slane %v1469, 4
        %v1481 = vrot.slane %v1471, 4
        %v1482 = vrot.slane %v1473, 4
        %v1483 = vrot.slane %v1475, 4
        %v1484 = vrot.slane %v1477, 4
        %v1485 = vrot.slane %v1479, 4
        %v1486 = vsel %vm532, %v1480, %v1481
        %vm1487 = vcmask 56320
        %v1488 = vsel %vm1487, %v1469, %v1486
        %v1489 = vsel %vm532, %v1481, %v1482
        %v1490 = vsel %vm1487, %v1471, %v1489
        %v1491 = vsel %vm532, %v1483, %v1484
        %v1492 = vsel %vm1487, %v1475, %v1491
        %v1493 = vsel %vm532, %v1484, %v1485
        %v1494 = vsel %vm1487, %v1477, %v1493
        %1499 = vst [vmem:[#allocation3 + $0x160] sm:$0xff] %v1488
        %1500 = vst [vmem:[#allocation3 + $0x168] sm:$0xff] %v1490
        %1501 = vst [vmem:[#allocation3 + $0x170] sm:$0xff] %v1492
        %1502 = vst [vmem:[#allocation3 + $0x178] sm:$0xff] %v1494
        %v1503 = vld [vmem:[#allocation2] sm:$0xff]
        %v1504 = vld [vmem:[#allocation2 + $0x8] sm:$0xff]
        %v1505 = vld [vmem:[#allocation2 + $0x10] sm:$0xff]
        %v1506 = vld [vmem:[#allocation2 + $0x18] sm:$0xff]
        %v1507 = vld [vmem:[#allocation2 + $0x20] sm:$0xff]
        %v1508 = vld [vmem:[#allocation2 + $0x30] sm:$0xff]
        %v1509 = vld [vmem:[#allocation2 + $0x38] sm:$0xff]
        %v1510 = vld [vmem:[#allocation2 + $0x40] sm:$0xff]
        %v1511 = vld [vmem:[#allocation2 + $0x48] sm:$0xff]
        %v1512 = vld [vmem:[#allocation2 + $0x50] sm:$0xff]
        %1513 = vrot.lane.b32.xlu0 %v744, 127
        %v1514 = vpop.permute.xlu0 %1513
        %1515 = vrot.lane.b32.xlu0 %v745, 127
        %v1516 = vpop.permute.xlu0 %1515
        %1517 = vrot.lane.b32.xlu0 %v746, 127
        %v1518 = vpop.permute.xlu0 %1517
        %1519 = vrot.lane.b32.xlu0 %v747, 127
        %v1520 = vpop.permute.xlu0 %1519
        %vm1521 = vcmask 1039360
        %v1522 = vsel %vm1521, %v1514, %v1516
        %v1523 = vsel %vm1521, %v1516, %v1518
        %v1524 = vsel %vm1521, %v1518, %v1520
        %v1530 = vmul.f32 %v1503, %v1514
        %v1531 = vmul.f32 %v1504, %v1522
        %v1532 = vmul.f32 %v1505, %v1523
        %v1533 = vmul.f32 %v1506, %v1524
        %v1534 = vmul.f32 %v1507, %v1520
        %v1535 = vmul.f32 %v1508, %v1514
        %v1536 = vmul.f32 %v1509, %v1522
        %v1537 = vmul.f32 %v1510, %v1523
        %v1538 = vmul.f32 %v1511, %v1524
        %v1539 = vmul.f32 %v1512, %v1520
        %v1540 = vpack.c.bf16 %v1531, %v1530
        %v1541 = vpack.c.bf16 %v1533, %v1532
        %v1542 = vpack.c.bf16 %v1534, %v1534
        %v1543 = vpack.c.bf16 %v1536, %v1535
        %v1544 = vpack.c.bf16 %v1538, %v1537
        %v1545 = vpack.c.bf16 %v1539, %v1539
        %1552 = vrot.lane.b32.xlu0 %v1540, 1
        %v1553 = vpop.permute.xlu0 %1552
        %1554 = vrot.lane.b32.xlu0 %v1541, 1
        %v1555 = vpop.permute.xlu0 %1554
        %1556 = vrot.lane.b32.xlu0 %v1542, 1
        %v1557 = vpop.permute.xlu0 %1556
        %1558 = vrot.lane.b32.xlu0 %v1543, 1
        %v1559 = vpop.permute.xlu0 %1558
        %1560 = vrot.lane.b32.xlu0 %v1544, 1
        %v1561 = vpop.permute.xlu0 %1560
        %1562 = vrot.lane.b32.xlu0 %v1545, 1
        %v1563 = vpop.permute.xlu0 %1562
        %v1564 = vrot.slane %v1553, 4
        %v1565 = vrot.slane %v1555, 4
        %v1566 = vrot.slane %v1557, 4
        %v1567 = vrot.slane %v1559, 4
        %v1568 = vrot.slane %v1561, 4
        %v1569 = vrot.slane %v1563, 4
        %v1570 = vsel %vm532, %v1564, %v1565
        %vm1571 = vcmask 7168
        %v1572 = vsel %vm1571, %v1553, %v1570
        %v1573 = vsel %vm532, %v1565, %v1566
        %v1574 = vsel %vm1571, %v1555, %v1573
        %v1575 = vsel %vm532, %v1567, %v1568
        %v1576 = vsel %vm1571, %v1559, %v1575
        %v1577 = vsel %vm532, %v1568, %v1569
        %v1578 = vsel %vm1571, %v1561, %v1577
        %1583 = vst [vmem:[#allocation3 + $0x180] sm:$0xff] %v1572
        %1584 = vst [vmem:[#allocation3 + $0x188] sm:$0xff] %v1574
        %1585 = vst [vmem:[#allocation3 + $0x190] sm:$0xff] %v1576
        %1586 = vst [vmem:[#allocation3 + $0x198] sm:$0xff] %v1578
        %v1587 = vld [vmem:[#allocation2 + $0x8] sm:$0xff]
        %v1588 = vld [vmem:[#allocation2 + $0x10] sm:$0xff]
        %v1589 = vld [vmem:[#allocation2 + $0x18] sm:$0xff]
        %v1590 = vld [vmem:[#allocation2 + $0x20] sm:$0xff]
        %v1591 = vld [vmem:[#allocation2 + $0x38] sm:$0xff]
        %v1592 = vld [vmem:[#allocation2 + $0x40] sm:$0xff]
        %v1593 = vld [vmem:[#allocation2 + $0x48] sm:$0xff]
        %v1594 = vld [vmem:[#allocation2 + $0x50] sm:$0xff]
        %v1595 = vpack.c.bf16 %v1588, %v1587
        %v1596 = vpack.c.bf16 %v1590, %v1589
        %v1597 = vpack.c.bf16 %v1592, %v1591
        %v1598 = vpack.c.bf16 %v1594, %v1593
        %1599 = vst [vmem:[#allocation3 + $0x1a0] sm:$0xff] %v1595
        %1600 = vst [vmem:[#allocation3 + $0x1a8] sm:$0xff] %v1596
        %1601 = vst [vmem:[#allocation3 + $0x1b0] sm:$0xff] %v1597
        %1602 = vst [vmem:[#allocation3 + $0x1b8] sm:$0xff] %v1598
        %v1603 = vld [vmem:[#allocation2 + $0x8] sm:$0xff]
        %v1604 = vld [vmem:[#allocation2 + $0x10] sm:$0xff]
        %v1605 = vld [vmem:[#allocation2 + $0x18] sm:$0xff]
        %v1606 = vld [vmem:[#allocation2 + $0x20] sm:$0xff]
        %v1607 = vld [vmem:[#allocation2 + $0x28] sm:$0xff]
        %v1608 = vld [vmem:[#allocation2 + $0x38] sm:$0xff]
        %v1609 = vld [vmem:[#allocation2 + $0x40] sm:$0xff]
        %v1610 = vld [vmem:[#allocation2 + $0x48] sm:$0xff]
        %v1611 = vld [vmem:[#allocation2 + $0x50] sm:$0xff]
        %v1612 = vld [vmem:[#allocation2 + $0x58] sm:$0xff]
        %1613 = vrot.lane.b32.xlu0 %v893, 1
        %v1614 = vpop.permute.xlu0 %1613
        %1615 = vrot.lane.b32.xlu0 %v894, 1
        %v1616 = vpop.permute.xlu0 %1615
        %1617 = vrot.lane.b32.xlu0 %v895, 1
        %v1618 = vpop.permute.xlu0 %1617
        %1619 = vrot.lane.b32.xlu0 %v896, 1
        %v1620 = vpop.permute.xlu0 %1619
        %vm1621 = vcmask 7168
        %v1622 = vsel %vm1621, %v1614, %v1616
        %v1623 = vsel %vm1621, %v1616, %v1618
        %v1624 = vsel %vm1621, %v1618, %v1620
        %v1630 = vmul.f32 %v1603, %v1614
        %v1631 = vmul.f32 %v1604, %v1622
        %v1632 = vmul.f32 %v1605, %v1623
        %v1633 = vmul.f32 %v1606, %v1624
        %v1634 = vmul.f32 %v1607, %v1620
        %v1635 = vmul.f32 %v1608, %v1614
        %v1636 = vmul.f32 %v1609, %v1622
        %v1637 = vmul.f32 %v1610, %v1623
        %v1638 = vmul.f32 %v1611, %v1624
        %v1639 = vmul.f32 %v1612, %v1620
        %v1640 = vpack.c.bf16 %v1631, %v1630
        %v1641 = vpack.c.bf16 %v1633, %v1632
        %v1642 = vpack.c.bf16 %v1634, %v1634
        %v1643 = vpack.c.bf16 %v1636, %v1635
        %v1644 = vpack.c.bf16 %v1638, %v1637
        %v1645 = vpack.c.bf16 %v1639, %v1639
        %1652 = vrot.lane.b32.xlu0 %v1640, 127
        %v1653 = vpop.permute.xlu0 %1652
        %1654 = vrot.lane.b32.xlu0 %v1641, 127
        %v1655 = vpop.permute.xlu0 %1654
        %1656 = vrot.lane.b32.xlu0 %v1642, 127
        %v1657 = vpop.permute.xlu0 %1656
        %1658 = vrot.lane.b32.xlu0 %v1643, 127
        %v1659 = vpop.permute.xlu0 %1658
        %1660 = vrot.lane.b32.xlu0 %v1644, 127
        %v1661 = vpop.permute.xlu0 %1660
        %1662 = vrot.lane.b32.xlu0 %v1645, 127
        %v1663 = vpop.permute.xlu0 %1662
        %v1664 = vrot.slane %v1653, 4
        %v1665 = vrot.slane %v1655, 4
        %v1666 = vrot.slane %v1657, 4
        %v1667 = vrot.slane %v1659, 4
        %v1668 = vrot.slane %v1661, 4
        %v1669 = vrot.slane %v1663, 4
        %v1670 = vsel %vm532, %v1664, %v1665
        %vm1671 = vcmask 1039360
        %v1672 = vsel %vm1671, %v1653, %v1670
        %v1673 = vsel %vm532, %v1665, %v1666
        %v1674 = vsel %vm1671, %v1655, %v1673
        %v1675 = vsel %vm532, %v1667, %v1668
        %v1676 = vsel %vm1671, %v1659, %v1675
        %v1677 = vsel %vm532, %v1668, %v1669
        %v1678 = vsel %vm1671, %v1661, %v1677
        %1683 = vst [vmem:[#allocation3 + $0x1c0] sm:$0xff] %v1672
        %1684 = vst [vmem:[#allocation3 + $0x1c8] sm:$0xff] %v1674
        %1685 = vst [vmem:[#allocation3 + $0x1d0] sm:$0xff] %v1676
        %1686 = vst [vmem:[#allocation3 + $0x1d8] sm:$0xff] %v1678
        %v1687 = vld [vmem:[#allocation2 + $0x8] sm:$0xff]
        %v1688 = vld [vmem:[#allocation2 + $0x10] sm:$0xff]
        %v1689 = vld [vmem:[#allocation2 + $0x18] sm:$0xff]
        %v1690 = vld [vmem:[#allocation2 + $0x20] sm:$0xff]
        %v1691 = vld [vmem:[#allocation2 + $0x28] sm:$0xff]
        %v1692 = vld [vmem:[#allocation2 + $0x38] sm:$0xff]
        %v1693 = vld [vmem:[#allocation2 + $0x40] sm:$0xff]
        %v1694 = vld [vmem:[#allocation2 + $0x48] sm:$0xff]
        %v1695 = vld [vmem:[#allocation2 + $0x50] sm:$0xff]
        %v1696 = vld [vmem:[#allocation2 + $0x58] sm:$0xff]
        %1697 = vrot.lane.b32.xlu0 %v985, 7
        %v1698 = vpop.permute.xlu0 %1697
        %1699 = vrot.lane.b32.xlu0 %v986, 7
        %v1700 = vpop.permute.xlu0 %1699
        %1701 = vrot.lane.b32.xlu0 %v987, 7
        %v1702 = vpop.permute.xlu0 %1701
        %1703 = vrot.lane.b32.xlu0 %v988, 7
        %v1704 = vpop.permute.xlu0 %1703
        %vm1705 = vcmask 56320
        %v1706 = vsel %vm1705, %v1698, %v1700
        %v1707 = vsel %vm1705, %v1700, %v1702
        %v1708 = vsel %vm1705, %v1702, %v1704
        %v1714 = vmul.f32 %v1687, %v1698
        %v1715 = vmul.f32 %v1688, %v1706
        %v1716 = vmul.f32 %v1689, %v1707
        %v1717 = vmul.f32 %v1690, %v1708
        %v1718 = vmul.f32 %v1691, %v1704
        %v1719 = vmul.f32 %v1692, %v1698
        %v1720 = vmul.f32 %v1693, %v1706
        %v1721 = vmul.f32 %v1694, %v1707
        %v1722 = vmul.f32 %v1695, %v1708
        %v1723 = vmul.f32 %v1696, %v1704
        %v1724 = vpack.c.bf16 %v1715, %v1714
        %v1725 = vpack.c.bf16 %v1717, %v1716
        %v1726 = vpack.c.bf16 %v1718, %v1718
        %v1727 = vpack.c.bf16 %v1720, %v1719
        %v1728 = vpack.c.bf16 %v1722, %v1721
        %v1729 = vpack.c.bf16 %v1723, %v1723
        %1736 = vrot.lane.b32.xlu0 %v1724, 121
        %v1737 = vpop.permute.xlu0 %1736
        %1738 = vrot.lane.b32.xlu0 %v1725, 121
        %v1739 = vpop.permute.xlu0 %1738
        %1740 = vrot.lane.b32.xlu0 %v1726, 121
        %v1741 = vpop.permute.xlu0 %1740
        %1742 = vrot.lane.b32.xlu0 %v1727, 121
        %v1743 = vpop.permute.xlu0 %1742
        %1744 = vrot.lane.b32.xlu0 %v1728, 121
        %v1745 = vpop.permute.xlu0 %1744
        %1746 = vrot.lane.b32.xlu0 %v1729, 121
        %v1747 = vpop.permute.xlu0 %1746
        %v1748 = vrot.slane %v1737, 4
        %v1749 = vrot.slane %v1739, 4
        %v1750 = vrot.slane %v1741, 4
        %v1751 = vrot.slane %v1743, 4
        %v1752 = vrot.slane %v1745, 4
        %v1753 = vrot.slane %v1747, 4
        %v1754 = vsel %vm532, %v1748, %v1749
        %vm1755 = vcmask 990208
        %v1756 = vsel %vm1755, %v1737, %v1754
        %v1757 = vsel %vm532, %v1749, %v1750
        %v1758 = vsel %vm1755, %v1739, %v1757
        %v1759 = vsel %vm532, %v1751, %v1752
        %v1760 = vsel %vm1755, %v1743, %v1759
        %v1761 = vsel %vm532, %v1752, %v1753
        %v1762 = vsel %vm1755, %v1745, %v1761
        %1767 = vst [vmem:[#allocation3 + $0x1e0] sm:$0xff] %v1756
        %1768 = vst [vmem:[#allocation3 + $0x1e8] sm:$0xff] %v1758
        %1769 = vst [vmem:[#allocation3 + $0x1f0] sm:$0xff] %v1760
        %1770 = vst [vmem:[#allocation3 + $0x1f8] sm:$0xff] %v1762
        %v1771 = vld [vmem:[#allocation2 + $0x8] sm:$0xff]
        %v1772 = vld [vmem:[#allocation2 + $0x10] sm:$0xff]
        %v1773 = vld [vmem:[#allocation2 + $0x18] sm:$0xff]
        %v1774 = vld [vmem:[#allocation2 + $0x20] sm:$0xff]
        %v1775 = vld [vmem:[#allocation2 + $0x28] sm:$0xff]
        %v1776 = vld [vmem:[#allocation2 + $0x38] sm:$0xff]
        %v1777 = vld [vmem:[#allocation2 + $0x40] sm:$0xff]
        %v1778 = vld [vmem:[#allocation2 + $0x48] sm:$0xff]
        %v1779 = vld [vmem:[#allocation2 + $0x50] sm:$0xff]
        %v1780 = vld [vmem:[#allocation2 + $0x58] sm:$0xff]
        %1781 = vrot.lane.b32.xlu0 %v1077, 8
        %v1782 = vpop.permute.xlu0 %1781
        %1783 = vrot.lane.b32.xlu0 %v1078, 8
        %v1784 = vpop.permute.xlu0 %1783
        %1785 = vrot.lane.b32.xlu0 %v1079, 8
        %v1786 = vpop.permute.xlu0 %1785
        %1787 = vrot.lane.b32.xlu0 %v1080, 8
        %v1788 = vpop.permute.xlu0 %1787
        %vm1789 = vcmask 64512
        %v1790 = vsel %vm1789, %v1782, %v1784
        %v1791 = vsel %vm1789, %v1784, %v1786
        %v1792 = vsel %vm1789, %v1786, %v1788
        %v1798 = vmul.f32 %v1771, %v1782
        %v1799 = vmul.f32 %v1772, %v1790
        %v1800 = vmul.f32 %v1773, %v1791
        %v1801 = vmul.f32 %v1774, %v1792
        %v1802 = vmul.f32 %v1775, %v1788
        %v1803 = vmul.f32 %v1776, %v1782
        %v1804 = vmul.f32 %v1777, %v1790
        %v1805 = vmul.f32 %v1778, %v1791
        %v1806 = vmul.f32 %v1779, %v1792
        %v1807 = vmul.f32 %v1780, %v1788
        %v1808 = vpack.c.bf16 %v1799, %v1798
        %v1809 = vpack.c.bf16 %v1801, %v1800
        %v1810 = vpack.c.bf16 %v1802, %v1802
        %v1811 = vpack.c.bf16 %v1804, %v1803
        %v1812 = vpack.c.bf16 %v1806, %v1805
        %v1813 = vpack.c.bf16 %v1807, %v1807
        %1820 = vrot.lane.b32.xlu0 %v1808, 120
        %v1821 = vpop.permute.xlu0 %1820
        %1822 = vrot.lane.b32.xlu0 %v1809, 120
        %v1823 = vpop.permute.xlu0 %1822
        %1824 = vrot.lane.b32.xlu0 %v1810, 120
        %v1825 = vpop.permute.xlu0 %1824
        %1826 = vrot.lane.b32.xlu0 %v1811, 120
        %v1827 = vpop.permute.xlu0 %1826
        %1828 = vrot.lane.b32.xlu0 %v1812, 120
        %v1829 = vpop.permute.xlu0 %1828
        %1830 = vrot.lane.b32.xlu0 %v1813, 120
        %v1831 = vpop.permute.xlu0 %1830
        %v1832 = vrot.slane %v1821, 4
        %v1833 = vrot.slane %v1823, 4
        %v1834 = vrot.slane %v1825, 4
        %v1835 = vrot.slane %v1827, 4
        %v1836 = vrot.slane %v1829, 4
        %v1837 = vrot.slane %v1831, 4
        %v1838 = vsel %vm532, %v1832, %v1833
        %vm1839 = vcmask 982016
        %v1840 = vsel %vm1839, %v1821, %v1838
        %v1841 = vsel %vm532, %v1833, %v1834
        %v1842 = vsel %vm1839, %v1823, %v1841
        %v1843 = vsel %vm532, %v1835, %v1836
        %v1844 = vsel %vm1839, %v1827, %v1843
        %v1845 = vsel %vm532, %v1836, %v1837
        %v1846 = vsel %vm1839, %v1829, %v1845
        %1851 = vst [vmem:[#allocation3 + $0x200] sm:$0xff] %v1840
        %1852 = vst [vmem:[#allocation3 + $0x208] sm:$0xff] %v1842
        %1853 = vst [vmem:[#allocation3 + $0x210] sm:$0xff] %v1844
        %1854 = vst [vmem:[#allocation3 + $0x218] sm:$0xff] %v1846
        %v1855 = vld [vmem:[#allocation2 + $0x8] sm:$0xff]
        %v1856 = vld [vmem:[#allocation2 + $0x10] sm:$0xff]
        %v1857 = vld [vmem:[#allocation2 + $0x18] sm:$0xff]
        %v1858 = vld [vmem:[#allocation2 + $0x20] sm:$0xff]
        %v1859 = vld [vmem:[#allocation2 + $0x28] sm:$0xff]
        %v1860 = vld [vmem:[#allocation2 + $0x38] sm:$0xff]
        %v1861 = vld [vmem:[#allocation2 + $0x40] sm:$0xff]
        %v1862 = vld [vmem:[#allocation2 + $0x48] sm:$0xff]
        %v1863 = vld [vmem:[#allocation2 + $0x50] sm:$0xff]
        %v1864 = vld [vmem:[#allocation2 + $0x58] sm:$0xff]
        %1865 = vrot.lane.b32.xlu0 %v1169, 9
        %v1866 = vpop.permute.xlu0 %1865
        %1867 = vrot.lane.b32.xlu0 %v1170, 9
        %v1868 = vpop.permute.xlu0 %1867
        %1869 = vrot.lane.b32.xlu0 %v1171, 9
        %v1870 = vpop.permute.xlu0 %1869
        %1871 = vrot.lane.b32.xlu0 %v1172, 9
        %v1872 = vpop.permute.xlu0 %1871
        %vm1873 = vcmask 72704
        %v1874 = vsel %vm1873, %v1866, %v1868
        %v1875 = vsel %vm1873, %v1868, %v1870
        %v1876 = vsel %vm1873, %v1870, %v1872
        %v1882 = vmul.f32 %v1855, %v1866
        %v1883 = vmul.f32 %v1856, %v1874
        %v1884 = vmul.f32 %v1857, %v1875
        %v1885 = vmul.f32 %v1858, %v1876
        %v1886 = vmul.f32 %v1859, %v1872
        %v1887 = vmul.f32 %v1860, %v1866
        %v1888 = vmul.f32 %v1861, %v1874
        %v1889 = vmul.f32 %v1862, %v1875
        %v1890 = vmul.f32 %v1863, %v1876
        %v1891 = vmul.f32 %v1864, %v1872
        %v1892 = vpack.c.bf16 %v1883, %v1882
        %v1893 = vpack.c.bf16 %v1885, %v1884
        %v1894 = vpack.c.bf16 %v1886, %v1886
        %v1895 = vpack.c.bf16 %v1888, %v1887
        %v1896 = vpack.c.bf16 %v1890, %v1889
        %v1897 = vpack.c.bf16 %v1891, %v1891
        %1904 = vrot.lane.b32.xlu0 %v1892, 119
        %v1905 = vpop.permute.xlu0 %1904
        %1906 = vrot.lane.b32.xlu0 %v1893, 119
        %v1907 = vpop.permute.xlu0 %1906
        %1908 = vrot.lane.b32.xlu0 %v1894, 119
        %v1909 = vpop.permute.xlu0 %1908
        %1910 = vrot.lane.b32.xlu0 %v1895, 119
        %v1911 = vpop.permute.xlu0 %1910
        %1912 = vrot.lane.b32.xlu0 %v1896, 119
        %v1913 = vpop.permute.xlu0 %1912
        %1914 = vrot.lane.b32.xlu0 %v1897, 119
        %v1915 = vpop.permute.xlu0 %1914
        %v1916 = vrot.slane %v1905, 4
        %v1917 = vrot.slane %v1907, 4
        %v1918 = vrot.slane %v1909, 4
        %v1919 = vrot.slane %v1911, 4
        %v1920 = vrot.slane %v1913, 4
        %v1921 = vrot.slane %v1915, 4
        %v1922 = vsel %vm532, %v1916, %v1917
        %vm1923 = vcmask 973824
        %v1924 = vsel %vm1923, %v1905, %v1922
        %v1925 = vsel %vm532, %v1917, %v1918
        %v1926 = vsel %vm1923, %v1907, %v1925
        %v1927 = vsel %vm532, %v1919, %v1920
        %v1928 = vsel %vm1923, %v1911, %v1927
        %v1929 = vsel %vm532, %v1920, %v1921
        %v1930 = vsel %vm1923, %v1913, %v1929
        %1935 = vst [vmem:[#allocation3 + $0x220] sm:$0xff] %v1924
        %1936 = vst [vmem:[#allocation3 + $0x228] sm:$0xff] %v1926
        %1937 = vst [vmem:[#allocation3 + $0x230] sm:$0xff] %v1928
        %1938 = vst [vmem:[#allocation3 + $0x238] sm:$0xff] %v1930
        %v1939 = vld [vmem:[#allocation2 + $0x8] sm:$0xff]
        %v1940 = vld [vmem:[#allocation2 + $0x10] sm:$0xff]
        %v1941 = vld [vmem:[#allocation2 + $0x18] sm:$0xff]
        %v1942 = vld [vmem:[#allocation2 + $0x20] sm:$0xff]
        %v1943 = vld [vmem:[#allocation2 + $0x28] sm:$0xff]
        %v1944 = vld [vmem:[#allocation2 + $0x38] sm:$0xff]
        %v1945 = vld [vmem:[#allocation2 + $0x40] sm:$0xff]
        %v1946 = vld [vmem:[#allocation2 + $0x48] sm:$0xff]
        %v1947 = vld [vmem:[#allocation2 + $0x50] sm:$0xff]
        %v1948 = vld [vmem:[#allocation2 + $0x58] sm:$0xff]
        %v1949 = vmul.f32 %v1939, %v476
        %v1950 = vmul.f32 %v1940, %v484
        %v1951 = vmul.f32 %v1941, %v485
        %v1952 = vmul.f32 %v1942, %v486
        %v1953 = vmul.f32 %v1943, %v482
        %v1954 = vmul.f32 %v1944, %v476
        %v1955 = vmul.f32 %v1945, %v484
        %v1956 = vmul.f32 %v1946, %v485
        %v1957 = vmul.f32 %v1947, %v486
        %v1958 = vmul.f32 %v1948, %v482
        %v1959 = vpack.c.bf16 %v1950, %v1949
        %v1960 = vpack.c.bf16 %v1952, %v1951
        %v1961 = vpack.c.bf16 %v1953, %v1953
        %v1962 = vpack.c.bf16 %v1955, %v1954
        %v1963 = vpack.c.bf16 %v1957, %v1956
        %v1964 = vpack.c.bf16 %v1958, %v1958
        %1971 = vrot.lane.b32.xlu0 %v1959, 73
        %v1972 = vpop.permute.xlu0 %1971
        %1973 = vrot.lane.b32.xlu0 %v1960, 73
        %v1974 = vpop.permute.xlu0 %1973
        %1975 = vrot.lane.b32.xlu0 %v1961, 73
        %v1976 = vpop.permute.xlu0 %1975
        %1977 = vrot.lane.b32.xlu0 %v1962, 73
        %v1978 = vpop.permute.xlu0 %1977
        %1979 = vrot.lane.b32.xlu0 %v1963, 73
        %v1980 = vpop.permute.xlu0 %1979
        %1981 = vrot.lane.b32.xlu0 %v1964, 73
        %v1982 = vpop.permute.xlu0 %1981
        %v1983 = vrot.slane %v1972, 4
        %v1984 = vrot.slane %v1974, 4
        %v1985 = vrot.slane %v1976, 4
        %v1986 = vrot.slane %v1978, 4
        %v1987 = vrot.slane %v1980, 4
        %v1988 = vrot.slane %v1982, 4
        %v1989 = vsel %vm532, %v1983, %v1984
        %v1990 = vsel %vm534, %v1972, %v1989
        %v1991 = vsel %vm532, %v1984, %v1985
        %v1992 = vsel %vm534, %v1974, %v1991
        %v1993 = vsel %vm532, %v1986, %v1987
        %v1994 = vsel %vm534, %v1978, %v1993
        %v1995 = vsel %vm532, %v1987, %v1988
        %v1996 = vsel %vm534, %v1980, %v1995
        %2001 = vst [vmem:[#allocation3 + $0x240] sm:$0xff] %v1990
        %2002 = vst [vmem:[#allocation3 + $0x248] sm:$0xff] %v1992
        %2003 = vst [vmem:[#allocation3 + $0x250] sm:$0xff] %v1994
        %2004 = vst [vmem:[#allocation3 + $0x258] sm:$0xff] %v1996
        %v2005 = vld [vmem:[#allocation2 + $0x8] sm:$0xff]
        %v2006 = vld [vmem:[#allocation2 + $0x10] sm:$0xff]
        %v2007 = vld [vmem:[#allocation2 + $0x18] sm:$0xff]
        %v2008 = vld [vmem:[#allocation2 + $0x20] sm:$0xff]
        %v2009 = vld [vmem:[#allocation2 + $0x28] sm:$0xff]
        %v2010 = vld [vmem:[#allocation2 + $0x38] sm:$0xff]
        %v2011 = vld [vmem:[#allocation2 + $0x40] sm:$0xff]
        %v2012 = vld [vmem:[#allocation2 + $0x48] sm:$0xff]
        %v2013 = vld [vmem:[#allocation2 + $0x50] sm:$0xff]
        %v2014 = vld [vmem:[#allocation2 + $0x58] sm:$0xff]
        %v2015 = vmul.f32 %v2005, %v569
        %v2016 = vmul.f32 %v2006, %v577
        %v2017 = vmul.f32 %v2007, %v578
        %v2018 = vmul.f32 %v2008, %v579
        %v2019 = vmul.f32 %v2009, %v575
        %v2020 = vmul.f32 %v2010, %v569
        %v2021 = vmul.f32 %v2011, %v577
        %v2022 = vmul.f32 %v2012, %v578
        %v2023 = vmul.f32 %v2013, %v579
        %v2024 = vmul.f32 %v2014, %v575
        %v2025 = vpack.c.bf16 %v2016, %v2015
        %v2026 = vpack.c.bf16 %v2018, %v2017
        %v2027 = vpack.c.bf16 %v2019, %v2019
        %v2028 = vpack.c.bf16 %v2021, %v2020
        %v2029 = vpack.c.bf16 %v2023, %v2022
        %v2030 = vpack.c.bf16 %v2024, %v2024
        %2037 = vrot.lane.b32.xlu0 %v2025, 72
        %v2038 = vpop.permute.xlu0 %2037
        %2039 = vrot.lane.b32.xlu0 %v2026, 72
        %v2040 = vpop.permute.xlu0 %2039
        %2041 = vrot.lane.b32.xlu0 %v2027, 72
        %v2042 = vpop.permute.xlu0 %2041
        %2043 = vrot.lane.b32.xlu0 %v2028, 72
        %v2044 = vpop.permute.xlu0 %2043
        %2045 = vrot.lane.b32.xlu0 %v2029, 72
        %v2046 = vpop.permute.xlu0 %2045
        %2047 = vrot.lane.b32.xlu0 %v2030, 72
        %v2048 = vpop.permute.xlu0 %2047
        %v2049 = vrot.slane %v2038, 4
        %v2050 = vrot.slane %v2040, 4
        %v2051 = vrot.slane %v2042, 4
        %v2052 = vrot.slane %v2044, 4
        %v2053 = vrot.slane %v2046, 4
        %v2054 = vrot.slane %v2048, 4
        %v2055 = vsel %vm532, %v2049, %v2050
        %v2056 = vsel %vm626, %v2038, %v2055
        %v2057 = vsel %vm532, %v2050, %v2051
        %v2058 = vsel %vm626, %v2040, %v2057
        %v2059 = vsel %vm532, %v2052, %v2053
        %v2060 = vsel %vm626, %v2044, %v2059
        %v2061 = vsel %vm532, %v2053, %v2054
        %v2062 = vsel %vm626, %v2046, %v2061
        %2067 = vst [vmem:[#allocation3 + $0x260] sm:$0xff] %v2056
        %2068 = vst [vmem:[#allocation3 + $0x268] sm:$0xff] %v2058
        %2069 = vst [vmem:[#allocation3 + $0x270] sm:$0xff] %v2060
        %2070 = vst [vmem:[#allocation3 + $0x278] sm:$0xff] %v2062
        %v2071 = vld [vmem:[#allocation2 + $0x8] sm:$0xff]
        %v2072 = vld [vmem:[#allocation2 + $0x10] sm:$0xff]
        %v2073 = vld [vmem:[#allocation2 + $0x18] sm:$0xff]
        %v2074 = vld [vmem:[#allocation2 + $0x20] sm:$0xff]
        %v2075 = vld [vmem:[#allocation2 + $0x28] sm:$0xff]
        %v2076 = vld [vmem:[#allocation2 + $0x38] sm:$0xff]
        %v2077 = vld [vmem:[#allocation2 + $0x40] sm:$0xff]
        %v2078 = vld [vmem:[#allocation2 + $0x48] sm:$0xff]
        %v2079 = vld [vmem:[#allocation2 + $0x50] sm:$0xff]
        %v2080 = vld [vmem:[#allocation2 + $0x58] sm:$0xff]
        %v2081 = vmul.f32 %v2071, %v661
        %v2082 = vmul.f32 %v2072, %v669
        %v2083 = vmul.f32 %v2073, %v670
        %v2084 = vmul.f32 %v2074, %v671
        %v2085 = vmul.f32 %v2075, %v667
        %v2086 = vmul.f32 %v2076, %v661
        %v2087 = vmul.f32 %v2077, %v669
        %v2088 = vmul.f32 %v2078, %v670
        %v2089 = vmul.f32 %v2079, %v671
        %v2090 = vmul.f32 %v2080, %v667
        %v2091 = vpack.c.bf16 %v2082, %v2081
        %v2092 = vpack.c.bf16 %v2084, %v2083
        %v2093 = vpack.c.bf16 %v2085, %v2085
        %v2094 = vpack.c.bf16 %v2087, %v2086
        %v2095 = vpack.c.bf16 %v2089, %v2088
        %v2096 = vpack.c.bf16 %v2090, %v2090
        %2103 = vrot.lane.b32.xlu0 %v2091, 71
        %v2104 = vpop.permute.xlu0 %2103
        %2105 = vrot.lane.b32.xlu0 %v2092, 71
        %v2106 = vpop.permute.xlu0 %2105
        %2107 = vrot.lane.b32.xlu0 %v2093, 71
        %v2108 = vpop.permute.xlu0 %2107
        %2109 = vrot.lane.b32.xlu0 %v2094, 71
        %v2110 = vpop.permute.xlu0 %2109
        %2111 = vrot.lane.b32.xlu0 %v2095, 71
        %v2112 = vpop.permute.xlu0 %2111
        %2113 = vrot.lane.b32.xlu0 %v2096, 71
        %v2114 = vpop.permute.xlu0 %2113
        %v2115 = vrot.slane %v2104, 4
        %v2116 = vrot.slane %v2106, 4
        %v2117 = vrot.slane %v2108, 4
        %v2118 = vrot.slane %v2110, 4
        %v2119 = vrot.slane %v2112, 4
        %v2120 = vrot.slane %v2114, 4
        %v2121 = vsel %vm532, %v2115, %v2116
        %v2122 = vsel %vm718, %v2104, %v2121
        %v2123 = vsel %vm532, %v2116, %v2117
        %v2124 = vsel %vm718, %v2106, %v2123
        %v2125 = vsel %vm532, %v2118, %v2119
        %v2126 = vsel %vm718, %v2110, %v2125
        %v2127 = vsel %vm532, %v2119, %v2120
        %v2128 = vsel %vm718, %v2112, %v2127
        %2133 = vst [vmem:[#allocation3 + $0x280] sm:$0xff] %v2122
        %2134 = vst [vmem:[#allocation3 + $0x288] sm:$0xff] %v2124
        %2135 = vst [vmem:[#allocation3 + $0x290] sm:$0xff] %v2126
        %2136 = vst [vmem:[#allocation3 + $0x298] sm:$0xff] %v2128
        %v2137 = vld [vmem:[#allocation2 + $0x8] sm:$0xff]
        %v2138 = vld [vmem:[#allocation2 + $0x10] sm:$0xff]
        %v2139 = vld [vmem:[#allocation2 + $0x18] sm:$0xff]
        %v2140 = vld [vmem:[#allocation2 + $0x20] sm:$0xff]
        %v2141 = vld [vmem:[#allocation2 + $0x28] sm:$0xff]
        %v2142 = vld [vmem:[#allocation2 + $0x38] sm:$0xff]
        %v2143 = vld [vmem:[#allocation2 + $0x40] sm:$0xff]
        %v2144 = vld [vmem:[#allocation2 + $0x48] sm:$0xff]
        %v2145 = vld [vmem:[#allocation2 + $0x50] sm:$0xff]
        %v2146 = vld [vmem:[#allocation2 + $0x58] sm:$0xff]
        %v2147 = vmul.f32 %v2137, %v753
        %v2148 = vmul.f32 %v2138, %v761
        %v2149 = vmul.f32 %v2139, %v762
        %v2150 = vmul.f32 %v2140, %v763
        %v2151 = vmul.f32 %v2141, %v759
        %v2152 = vmul.f32 %v2142, %v753
        %v2153 = vmul.f32 %v2143, %v761
        %v2154 = vmul.f32 %v2144, %v762
        %v2155 = vmul.f32 %v2145, %v763
        %v2156 = vmul.f32 %v2146, %v759
        %v2157 = vpack.c.bf16 %v2148, %v2147
        %v2158 = vpack.c.bf16 %v2150, %v2149
        %v2159 = vpack.c.bf16 %v2151, %v2151
        %v2160 = vpack.c.bf16 %v2153, %v2152
        %v2161 = vpack.c.bf16 %v2155, %v2154
        %v2162 = vpack.c.bf16 %v2156, %v2156
        %2169 = vrot.lane.b32.xlu0 %v2157, 65
        %v2170 = vpop.permute.xlu0 %2169
        %2171 = vrot.lane.b32.xlu0 %v2158, 65
        %v2172 = vpop.permute.xlu0 %2171
        %2173 = vrot.lane.b32.xlu0 %v2159, 65
        %v2174 = vpop.permute.xlu0 %2173
        %2175 = vrot.lane.b32.xlu0 %v2160, 65
        %v2176 = vpop.permute.xlu0 %2175
        %2177 = vrot.lane.b32.xlu0 %v2161, 65
        %v2178 = vpop.permute.xlu0 %2177
        %2179 = vrot.lane.b32.xlu0 %v2162, 65
        %v2180 = vpop.permute.xlu0 %2179
        %v2181 = vrot.slane %v2170, 4
        %v2182 = vrot.slane %v2172, 4
        %v2183 = vrot.slane %v2174, 4
        %v2184 = vrot.slane %v2176, 4
        %v2185 = vrot.slane %v2178, 4
        %v2186 = vrot.slane %v2180, 4
        %v2187 = vsel %vm532, %v2181, %v2182
        %v2188 = vsel %vm810, %v2170, %v2187
        %v2189 = vsel %vm532, %v2182, %v2183
        %v2190 = vsel %vm810, %v2172, %v2189
        %v2191 = vsel %vm532, %v2184, %v2185
        %v2192 = vsel %vm810, %v2176, %v2191
        %v2193 = vsel %vm532, %v2185, %v2186
        %v2194 = vsel %vm810, %v2178, %v2193
        %2199 = vst [vmem:[#allocation3 + $0x2a0] sm:$0xff] %v2188
        %2200 = vst [vmem:[#allocation3 + $0x2a8] sm:$0xff] %v2190
        %2201 = vst [vmem:[#allocation3 + $0x2b0] sm:$0xff] %v2192
        %2202 = vst [vmem:[#allocation3 + $0x2b8] sm:$0xff] %v2194
        %v2203 = vld [vmem:[#allocation2 + $0x8] sm:$0xff]
        %v2204 = vld [vmem:[#allocation2 + $0x10] sm:$0xff]
        %v2205 = vld [vmem:[#allocation2 + $0x18] sm:$0xff]
        %v2206 = vld [vmem:[#allocation2 + $0x20] sm:$0xff]
        %v2207 = vld [vmem:[#allocation2 + $0x28] sm:$0xff]
        %v2208 = vld [vmem:[#allocation2 + $0x38] sm:$0xff]
        %v2209 = vld [vmem:[#allocation2 + $0x40] sm:$0xff]
        %v2210 = vld [vmem:[#allocation2 + $0x48] sm:$0xff]
        %v2211 = vld [vmem:[#allocation2 + $0x50] sm:$0xff]
        %v2212 = vld [vmem:[#allocation2 + $0x58] sm:$0xff]
        %v2213 = vpack.c.bf16 %v2204, %v2203
        %v2214 = vpack.c.bf16 %v2206, %v2205
        %v2215 = vpack.c.bf16 %v2207, %v2207
        %v2216 = vpack.c.bf16 %v2209, %v2208
        %v2217 = vpack.c.bf16 %v2211, %v2210
        %v2218 = vpack.c.bf16 %v2212, %v2212
        %2225 = vrot.lane.b32.xlu0 %v2213, 64
        %v2226 = vpop.permute.xlu0 %2225
        %2227 = vrot.lane.b32.xlu0 %v2214, 64
        %v2228 = vpop.permute.xlu0 %2227
        %2229 = vrot.lane.b32.xlu0 %v2215, 64
        %v2230 = vpop.permute.xlu0 %2229
        %2231 = vrot.lane.b32.xlu0 %v2216, 64
        %v2232 = vpop.permute.xlu0 %2231
        %2233 = vrot.lane.b32.xlu0 %v2217, 64
        %v2234 = vpop.permute.xlu0 %2233
        %2235 = vrot.lane.b32.xlu0 %v2218, 64
        %v2236 = vpop.permute.xlu0 %2235
        %v2237 = vrot.slane %v2226, 4
        %v2238 = vrot.slane %v2228, 4
        %v2239 = vrot.slane %v2230, 4
        %v2240 = vrot.slane %v2232, 4
        %v2241 = vrot.slane %v2234, 4
        %v2242 = vrot.slane %v2236, 4
        %v2243 = vsel %vm532, %v2237, %v2238
        %v2244 = vsel %vm867, %v2226, %v2243
        %v2245 = vsel %vm532, %v2238, %v2239
        %v2246 = vsel %vm867, %v2228, %v2245
        %v2247 = vsel %vm532, %v2240, %v2241
        %v2248 = vsel %vm867, %v2232, %v2247
        %v2249 = vsel %vm532, %v2241, %v2242
        %v2250 = vsel %vm867, %v2234, %v2249
        %2255 = vst [vmem:[#allocation3 + $0x2c0] sm:$0xff] %v2244
        %2256 = vst [vmem:[#allocation3 + $0x2c8] sm:$0xff] %v2246
        %2257 = vst [vmem:[#allocation3 + $0x2d0] sm:$0xff] %v2248
        %2258 = vst [vmem:[#allocation3 + $0x2d8] sm:$0xff] %v2250
        %v2259 = vld [vmem:[#allocation2 + $0x8] sm:$0xff]
        %v2260 = vld [vmem:[#allocation2 + $0x10] sm:$0xff]
        %v2261 = vld [vmem:[#allocation2 + $0x18] sm:$0xff]
        %v2262 = vld [vmem:[#allocation2 + $0x20] sm:$0xff]
        %v2263 = vld [vmem:[#allocation2 + $0x28] sm:$0xff]
        %v2264 = vld [vmem:[#allocation2 + $0x38] sm:$0xff]
        %v2265 = vld [vmem:[#allocation2 + $0x40] sm:$0xff]
        %v2266 = vld [vmem:[#allocation2 + $0x48] sm:$0xff]
        %v2267 = vld [vmem:[#allocation2 + $0x50] sm:$0xff]
        %v2268 = vld [vmem:[#allocation2 + $0x58] sm:$0xff]
        %v2269 = vmul.f32 %v2259, %v902
        %v2270 = vmul.f32 %v2260, %v910
        %v2271 = vmul.f32 %v2261, %v911
        %v2272 = vmul.f32 %v2262, %v912
        %v2273 = vmul.f32 %v2263, %v908
        %v2274 = vmul.f32 %v2264, %v902
        %v2275 = vmul.f32 %v2265, %v910
        %v2276 = vmul.f32 %v2266, %v911
        %v2277 = vmul.f32 %v2267, %v912
        %v2278 = vmul.f32 %v2268, %v908
        %v2279 = vpack.c.bf16 %v2270, %v2269
        %v2280 = vpack.c.bf16 %v2272, %v2271
        %v2281 = vpack.c.bf16 %v2273, %v2273
        %v2282 = vpack.c.bf16 %v2275, %v2274
        %v2283 = vpack.c.bf16 %v2277, %v2276
        %v2284 = vpack.c.bf16 %v2278, %v2278
        %2291 = vrot.lane.b32.xlu0 %v2279, 63
        %v2292 = vpop.permute.xlu0 %2291
        %2293 = vrot.lane.b32.xlu0 %v2280, 63
        %v2294 = vpop.permute.xlu0 %2293
        %2295 = vrot.lane.b32.xlu0 %v2281, 63
        %v2296 = vpop.permute.xlu0 %2295
        %2297 = vrot.lane.b32.xlu0 %v2282, 63
        %v2298 = vpop.permute.xlu0 %2297
        %2299 = vrot.lane.b32.xlu0 %v2283, 63
        %v2300 = vpop.permute.xlu0 %2299
        %2301 = vrot.lane.b32.xlu0 %v2284, 63
        %v2302 = vpop.permute.xlu0 %2301
        %v2303 = vrot.slane %v2292, 4
        %v2304 = vrot.slane %v2294, 4
        %v2305 = vrot.slane %v2296, 4
        %v2306 = vrot.slane %v2298, 4
        %v2307 = vrot.slane %v2300, 4
        %v2308 = vrot.slane %v2302, 4
        %v2309 = vsel %vm532, %v2303, %v2304
        %v2310 = vsel %vm959, %v2292, %v2309
        %v2311 = vsel %vm532, %v2304, %v2305
        %v2312 = vsel %vm959, %v2294, %v2311
        %v2313 = vsel %vm532, %v2306, %v2307
        %v2314 = vsel %vm959, %v2298, %v2313
        %v2315 = vsel %vm532, %v2307, %v2308
        %v2316 = vsel %vm959, %v2300, %v2315
        %2321 = vst [vmem:[#allocation3 + $0x2e0] sm:$0xff] %v2310
        %2322 = vst [vmem:[#allocation3 + $0x2e8] sm:$0xff] %v2312
        %2323 = vst [vmem:[#allocation3 + $0x2f0] sm:$0xff] %v2314
        %2324 = vst [vmem:[#allocation3 + $0x2f8] sm:$0xff] %v2316
        %v2325 = vld [vmem:[#allocation2 + $0x8] sm:$0xff]
        %v2326 = vld [vmem:[#allocation2 + $0x10] sm:$0xff]
        %v2327 = vld [vmem:[#allocation2 + $0x18] sm:$0xff]
        %v2328 = vld [vmem:[#allocation2 + $0x20] sm:$0xff]
        %v2329 = vld [vmem:[#allocation2 + $0x28] sm:$0xff]
        %v2330 = vld [vmem:[#allocation2 + $0x38] sm:$0xff]
        %v2331 = vld [vmem:[#allocation2 + $0x40] sm:$0xff]
        %v2332 = vld [vmem:[#allocation2 + $0x48] sm:$0xff]
        %v2333 = vld [vmem:[#allocation2 + $0x50] sm:$0xff]
        %v2334 = vld [vmem:[#allocation2 + $0x58] sm:$0xff]
        %v2335 = vmul.f32 %v2325, %v994
        %v2336 = vmul.f32 %v2326, %v1002
        %v2337 = vmul.f32 %v2327, %v1003
        %v2338 = vmul.f32 %v2328, %v1004
        %v2339 = vmul.f32 %v2329, %v1000
        %v2340 = vmul.f32 %v2330, %v994
        %v2341 = vmul.f32 %v2331, %v1002
        %v2342 = vmul.f32 %v2332, %v1003
        %v2343 = vmul.f32 %v2333, %v1004
        %v2344 = vmul.f32 %v2334, %v1000
        %v2345 = vpack.c.bf16 %v2336, %v2335
        %v2346 = vpack.c.bf16 %v2338, %v2337
        %v2347 = vpack.c.bf16 %v2339, %v2339
        %v2348 = vpack.c.bf16 %v2341, %v2340
        %v2349 = vpack.c.bf16 %v2343, %v2342
        %v2350 = vpack.c.bf16 %v2344, %v2344
        %2357 = vrot.lane.b32.xlu0 %v2345, 57
        %v2358 = vpop.permute.xlu0 %2357
        %2359 = vrot.lane.b32.xlu0 %v2346, 57
        %v2360 = vpop.permute.xlu0 %2359
        %2361 = vrot.lane.b32.xlu0 %v2347, 57
        %v2362 = vpop.permute.xlu0 %2361
        %2363 = vrot.lane.b32.xlu0 %v2348, 57
        %v2364 = vpop.permute.xlu0 %2363
        %2365 = vrot.lane.b32.xlu0 %v2349, 57
        %v2366 = vpop.permute.xlu0 %2365
        %2367 = vrot.lane.b32.xlu0 %v2350, 57
        %v2368 = vpop.permute.xlu0 %2367
        %v2369 = vrot.slane %v2358, 4
        %v2370 = vrot.slane %v2360, 4
        %v2371 = vrot.slane %v2362, 4
        %v2372 = vrot.slane %v2364, 4
        %v2373 = vrot.slane %v2366, 4
        %v2374 = vrot.slane %v2368, 4
        %v2375 = vsel %vm532, %v2369, %v2370
        %v2376 = vsel %vm1051, %v2358, %v2375
        %v2377 = vsel %vm532, %v2370, %v2371
        %v2378 = vsel %vm1051, %v2360, %v2377
        %v2379 = vsel %vm532, %v2372, %v2373
        %v2380 = vsel %vm1051, %v2364, %v2379
        %v2381 = vsel %vm532, %v2373, %v2374
        %v2382 = vsel %vm1051, %v2366, %v2381
        %2387 = vst [vmem:[#allocation3 + $0x300] sm:$0xff] %v2376
        %2388 = vst [vmem:[#allocation3 + $0x308] sm:$0xff] %v2378
        %2389 = vst [vmem:[#allocation3 + $0x310] sm:$0xff] %v2380
        %2390 = vst [vmem:[#allocation3 + $0x318] sm:$0xff] %v2382
        %v2391 = vld [vmem:[#allocation2 + $0x8] sm:$0xff]
        %v2392 = vld [vmem:[#allocation2 + $0x10] sm:$0xff]
        %v2393 = vld [vmem:[#allocation2 + $0x18] sm:$0xff]
        %v2394 = vld [vmem:[#allocation2 + $0x20] sm:$0xff]
        %v2395 = vld [vmem:[#allocation2 + $0x28] sm:$0xff]
        %v2396 = vld [vmem:[#allocation2 + $0x38] sm:$0xff]
        %v2397 = vld [vmem:[#allocation2 + $0x40] sm:$0xff]
        %v2398 = vld [vmem:[#allocation2 + $0x48] sm:$0xff]
        %v2399 = vld [vmem:[#allocation2 + $0x50] sm:$0xff]
        %v2400 = vld [vmem:[#allocation2 + $0x58] sm:$0xff]
        %v2401 = vmul.f32 %v2391, %v1086
        %v2402 = vmul.f32 %v2392, %v1094
        %v2403 = vmul.f32 %v2393, %v1095
        %v2404 = vmul.f32 %v2394, %v1096
        %v2405 = vmul.f32 %v2395, %v1092
        %v2406 = vmul.f32 %v2396, %v1086
        %v2407 = vmul.f32 %v2397, %v1094
        %v2408 = vmul.f32 %v2398, %v1095
        %v2409 = vmul.f32 %v2399, %v1096
        %v2410 = vmul.f32 %v2400, %v1092
        %v2411 = vpack.c.bf16 %v2402, %v2401
        %v2412 = vpack.c.bf16 %v2404, %v2403
        %v2413 = vpack.c.bf16 %v2405, %v2405
        %v2414 = vpack.c.bf16 %v2407, %v2406
        %v2415 = vpack.c.bf16 %v2409, %v2408
        %v2416 = vpack.c.bf16 %v2410, %v2410
        %2423 = vrot.lane.b32.xlu0 %v2411, 56
        %v2424 = vpop.permute.xlu0 %2423
        %2425 = vrot.lane.b32.xlu0 %v2412, 56
        %v2426 = vpop.permute.xlu0 %2425
        %2427 = vrot.lane.b32.xlu0 %v2413, 56
        %v2428 = vpop.permute.xlu0 %2427
        %2429 = vrot.lane.b32.xlu0 %v2414, 56
        %v2430 = vpop.permute.xlu0 %2429
        %2431 = vrot.lane.b32.xlu0 %v2415, 56
        %v2432 = vpop.permute.xlu0 %2431
        %2433 = vrot.lane.b32.xlu0 %v2416, 56
        %v2434 = vpop.permute.xlu0 %2433
        %v2435 = vrot.slane %v2424, 4
        %v2436 = vrot.slane %v2426, 4
        %v2437 = vrot.slane %v2428, 4
        %v2438 = vrot.slane %v2430, 4
        %v2439 = vrot.slane %v2432, 4
        %v2440 = vrot.slane %v2434, 4
        %v2441 = vsel %vm532, %v2435, %v2436
        %v2442 = vsel %vm1143, %v2424, %v2441
        %v2443 = vsel %vm532, %v2436, %v2437
        %v2444 = vsel %vm1143, %v2426, %v2443
        %v2445 = vsel %vm532, %v2438, %v2439
        %v2446 = vsel %vm1143, %v2430, %v2445
        %v2447 = vsel %vm532, %v2439, %v2440
        %v2448 = vsel %vm1143, %v2432, %v2447
        %2453 = vst [vmem:[#allocation3 + $0x320] sm:$0xff] %v2442
        %2454 = vst [vmem:[#allocation3 + $0x328] sm:$0xff] %v2444
        %2455 = vst [vmem:[#allocation3 + $0x330] sm:$0xff] %v2446
        %2456 = vst [vmem:[#allocation3 + $0x338] sm:$0xff] %v2448
        %v2457 = vld [vmem:[#allocation2 + $0x8] sm:$0xff]
        %v2458 = vld [vmem:[#allocation2 + $0x10] sm:$0xff]
        %v2459 = vld [vmem:[#allocation2 + $0x18] sm:$0xff]
        %v2460 = vld [vmem:[#allocation2 + $0x20] sm:$0xff]
        %v2461 = vld [vmem:[#allocation2 + $0x28] sm:$0xff]
        %v2462 = vld [vmem:[#allocation2 + $0x38] sm:$0xff]
        %v2463 = vld [vmem:[#allocation2 + $0x40] sm:$0xff]
        %v2464 = vld [vmem:[#allocation2 + $0x48] sm:$0xff]
        %v2465 = vld [vmem:[#allocation2 + $0x50] sm:$0xff]
        %v2466 = vld [vmem:[#allocation2 + $0x58] sm:$0xff]
        %v2467 = vmul.f32 %v2457, %v1178
        %v2468 = vmul.f32 %v2458, %v1186
        %v2469 = vmul.f32 %v2459, %v1187
        %v2470 = vmul.f32 %v2460, %v1188
        %v2471 = vmul.f32 %v2461, %v1184
        %v2472 = vmul.f32 %v2462, %v1178
        %v2473 = vmul.f32 %v2463, %v1186
        %v2474 = vmul.f32 %v2464, %v1187
        %v2475 = vmul.f32 %v2465, %v1188
        %v2476 = vmul.f32 %v2466, %v1184
        %v2477 = vpack.c.bf16 %v2468, %v2467
        %v2478 = vpack.c.bf16 %v2470, %v2469
        %v2479 = vpack.c.bf16 %v2471, %v2471
        %v2480 = vpack.c.bf16 %v2473, %v2472
        %v2481 = vpack.c.bf16 %v2475, %v2474
        %v2482 = vpack.c.bf16 %v2476, %v2476
        %2489 = vrot.lane.b32.xlu0 %v2477, 55
        %v2490 = vpop.permute.xlu0 %2489
        %2491 = vrot.lane.b32.xlu0 %v2478, 55
        %v2492 = vpop.permute.xlu0 %2491
        %2493 = vrot.lane.b32.xlu0 %v2479, 55
        %v2494 = vpop.permute.xlu0 %2493
        %2495 = vrot.lane.b32.xlu0 %v2480, 55
        %v2496 = vpop.permute.xlu0 %2495
        %2497 = vrot.lane.b32.xlu0 %v2481, 55
        %v2498 = vpop.permute.xlu0 %2497
        %2499 = vrot.lane.b32.xlu0 %v2482, 55
        %v2500 = vpop.permute.xlu0 %2499
        %v2501 = vrot.slane %v2490, 4
        %v2502 = vrot.slane %v2492, 4
        %v2503 = vrot.slane %v2494, 4
        %v2504 = vrot.slane %v2496, 4
        %v2505 = vrot.slane %v2498, 4
        %v2506 = vrot.slane %v2500, 4
        %v2507 = vsel %vm532, %v2501, %v2502
        %v2508 = vsel %vm1235, %v2490, %v2507
        %v2509 = vsel %vm532, %v2502, %v2503
        %v2510 = vsel %vm1235, %v2492, %v2509
        %v2511 = vsel %vm532, %v2504, %v2505
        %v2512 = vsel %vm1235, %v2496, %v2511
        %v2513 = vsel %vm532, %v2505, %v2506
        %v2514 = vsel %vm1235, %v2498, %v2513
        %2519 = vst [vmem:[#allocation3 + $0x340] sm:$0xff] %v2508
        %2520 = vst [vmem:[#allocation3 + $0x348] sm:$0xff] %v2510
        %2521 = vst [vmem:[#allocation3 + $0x350] sm:$0xff] %v2512
        %2522 = vst [vmem:[#allocation3 + $0x358] sm:$0xff] %v2514
        %v2523 = vld [vmem:[%s2] sm:$0xff]
        %v2524 = vld [vmem:[%s2 + $0x8] sm:$0xff]
        %v2525 = vld [vmem:[%s2 + $0x10] sm:$0xff]
        %v2526 = vld [vmem:[%s2 + $0x18] sm:$0xff]
        %v2527 = vld [vmem:[%s2 + $0x20] sm:$0xff]
        %v2528 = vld [vmem:[%s2 + $0x28] sm:$0xff]
        %v2529 = vld [vmem:[%s2 + $0x30] sm:$0xff]
        %v2530 = vld [vmem:[%s2 + $0x38] sm:$0xff]
        %v2531 = vld [vmem:[#allocation3] sm:$0xff]
        %v2532 = vld [vmem:[#allocation3 + $0x8] sm:$0xff]
        %v2533 = vld [vmem:[#allocation3 + $0x10] sm:$0xff]
        %v2534 = vld [vmem:[#allocation3 + $0x18] sm:$0xff]
        %v2535 = vld [vmem:[#allocation3 + $0x20] sm:$0xff]
        %v2536 = vld [vmem:[#allocation3 + $0x28] sm:$0xff]
        %v2537 = vld [vmem:[#allocation3 + $0x30] sm:$0xff]
        %v2538 = vld [vmem:[#allocation3 + $0x38] sm:$0xff]
        %v2539 = vld [vmem:[#allocation3 + $0x40] sm:$0xff]
        %v2540 = vld [vmem:[#allocation3 + $0x48] sm:$0xff]
        %v2541 = vld [vmem:[#allocation3 + $0x50] sm:$0xff]
        %v2542 = vld [vmem:[#allocation3 + $0x58] sm:$0xff]
        %v2543 = vld [vmem:[#allocation3 + $0x60] sm:$0xff]
        %v2544 = vld [vmem:[#allocation3 + $0x68] sm:$0xff]
        %v2545 = vld [vmem:[#allocation3 + $0x70] sm:$0xff]
        %v2546 = vld [vmem:[#allocation3 + $0x78] sm:$0xff]
        %v2547 = vld [vmem:[#allocation3 + $0x80] sm:$0xff]
        %v2548 = vld [vmem:[#allocation3 + $0x88] sm:$0xff]
        %v2549 = vld [vmem:[#allocation3 + $0x90] sm:$0xff]
        %v2550 = vld [vmem:[#allocation3 + $0x98] sm:$0xff]
        %v2551 = vld [vmem:[#allocation3 + $0xa0] sm:$0xff]
        %v2552 = vld [vmem:[#allocation3 + $0xa8] sm:$0xff]
        %v2553 = vld [vmem:[#allocation3 + $0xb0] sm:$0xff]
        %v2554 = vld [vmem:[#allocation3 + $0xb8] sm:$0xff]
        %v2555 = vld [vmem:[#allocation3 + $0xc0] sm:$0xff]
        %v2556 = vld [vmem:[#allocation3 + $0xc8] sm:$0xff]
        %v2557 = vld [vmem:[#allocation3 + $0xd0] sm:$0xff]
        %v2558 = vld [vmem:[#allocation3 + $0xd8] sm:$0xff]
        %v2559 = vld [vmem:[#allocation3 + $0xe0] sm:$0xff]
        %v2560 = vld [vmem:[#allocation3 + $0xe8] sm:$0xff]
        %v2561 = vld [vmem:[#allocation3 + $0xf0] sm:$0xff]
        %v2562 = vld [vmem:[#allocation3 + $0xf8] sm:$0xff]
        %v2563 = vld [vmem:[#allocation3 + $0x100] sm:$0xff]
        %v2564 = vld [vmem:[#allocation3 + $0x108] sm:$0xff]
        %v2565 = vld [vmem:[#allocation3 + $0x110] sm:$0xff]
        %v2566 = vld [vmem:[#allocation3 + $0x118] sm:$0xff]
        %v2567 = vld [vmem:[#allocation3 + $0x120] sm:$0xff]
        %v2568 = vld [vmem:[#allocation3 + $0x128] sm:$0xff]
        %v2569 = vld [vmem:[#allocation3 + $0x130] sm:$0xff]
        %v2570 = vld [vmem:[#allocation3 + $0x138] sm:$0xff]
        %v2571 = vld [vmem:[#allocation3 + $0x140] sm:$0xff]
        %v2572 = vld [vmem:[#allocation3 + $0x148] sm:$0xff]
        %v2573 = vld [vmem:[#allocation3 + $0x150] sm:$0xff]
        %v2574 = vld [vmem:[#allocation3 + $0x158] sm:$0xff]
        %v2575 = vld [vmem:[#allocation3 + $0x160] sm:$0xff]
        %v2576 = vld [vmem:[#allocation3 + $0x168] sm:$0xff]
        %v2577 = vld [vmem:[#allocation3 + $0x170] sm:$0xff]
        %v2578 = vld [vmem:[#allocation3 + $0x178] sm:$0xff]
        %v2579 = vld [vmem:[#allocation3 + $0x180] sm:$0xff]
        %v2580 = vld [vmem:[#allocation3 + $0x188] sm:$0xff]
        %v2581 = vld [vmem:[#allocation3 + $0x190] sm:$0xff]
        %v2582 = vld [vmem:[#allocation3 + $0x198] sm:$0xff]
        %v2583 = vld [vmem:[#allocation3 + $0x1a0] sm:$0xff]
        %v2584 = vld [vmem:[#allocation3 + $0x1a8] sm:$0xff]
        %v2585 = vld [vmem:[#allocation3 + $0x1b0] sm:$0xff]
        %v2586 = vld [vmem:[#allocation3 + $0x1b8] sm:$0xff]
        %v2587 = vld [vmem:[#allocation3 + $0x1c0] sm:$0xff]
        %v2588 = vld [vmem:[#allocation3 + $0x1c8] sm:$0xff]
        %v2589 = vld [vmem:[#allocation3 + $0x1d0] sm:$0xff]
        %v2590 = vld [vmem:[#allocation3 + $0x1d8] sm:$0xff]
        %v2591 = vld [vmem:[#allocation3 + $0x1e0] sm:$0xff]
        %v2592 = vld [vmem:[#allocation3 + $0x1e8] sm:$0xff]
        %v2593 = vld [vmem:[#allocation3 + $0x1f0] sm:$0xff]
        %v2594 = vld [vmem:[#allocation3 + $0x1f8] sm:$0xff]
        %v2595 = vld [vmem:[#allocation3 + $0x200] sm:$0xff]
        %v2596 = vld [vmem:[#allocation3 + $0x208] sm:$0xff]
        %v2597 = vld [vmem:[#allocation3 + $0x210] sm:$0xff]
        %v2598 = vld [vmem:[#allocation3 + $0x218] sm:$0xff]
        %v2599 = vld [vmem:[#allocation3 + $0x220] sm:$0xff]
        %v2600 = vld [vmem:[#allocation3 + $0x228] sm:$0xff]
        %v2601 = vld [vmem:[#allocation3 + $0x230] sm:$0xff]
        %v2602 = vld [vmem:[#allocation3 + $0x238] sm:$0xff]
        %v2603 = vld [vmem:[#allocation3 + $0x240] sm:$0xff]
        %v2604 = vld [vmem:[#allocation3 + $0x248] sm:$0xff]
        %v2605 = vld [vmem:[#allocation3 + $0x250] sm:$0xff]
        %v2606 = vld [vmem:[#allocation3 + $0x258] sm:$0xff]
        %v2607 = vld [vmem:[#allocation3 + $0x260] sm:$0xff]
        %v2608 = vld [vmem:[#allocation3 + $0x268] sm:$0xff]
        %v2609 = vld [vmem:[#allocation3 + $0x270] sm:$0xff]
        %v2610 = vld [vmem:[#allocation3 + $0x278] sm:$0xff]
        %v2611 = vld [vmem:[#allocation3 + $0x280] sm:$0xff]
        %v2612 = vld [vmem:[#allocation3 + $0x288] sm:$0xff]
        %v2613 = vld [vmem:[#allocation3 + $0x290] sm:$0xff]
        %v2614 = vld [vmem:[#allocation3 + $0x298] sm:$0xff]
        %v2615 = vld [vmem:[#allocation3 + $0x2a0] sm:$0xff]
        %v2616 = vld [vmem:[#allocation3 + $0x2a8] sm:$0xff]
        %v2617 = vld [vmem:[#allocation3 + $0x2b0] sm:$0xff]
        %v2618 = vld [vmem:[#allocation3 + $0x2b8] sm:$0xff]
        %v2619 = vld [vmem:[#allocation3 + $0x2c0] sm:$0xff]
        %v2620 = vld [vmem:[#allocation3 + $0x2c8] sm:$0xff]
        %v2621 = vld [vmem:[#allocation3 + $0x2d0] sm:$0xff]
        %v2622 = vld [vmem:[#allocation3 + $0x2d8] sm:$0xff]
        %v2623 = vld [vmem:[#allocation3 + $0x2e0] sm:$0xff]
        %v2624 = vld [vmem:[#allocation3 + $0x2e8] sm:$0xff]
        %v2625 = vld [vmem:[#allocation3 + $0x2f0] sm:$0xff]
        %v2626 = vld [vmem:[#allocation3 + $0x2f8] sm:$0xff]
        %v2627 = vld [vmem:[#allocation3 + $0x300] sm:$0xff]
        %v2628 = vld [vmem:[#allocation3 + $0x308] sm:$0xff]
        %v2629 = vld [vmem:[#allocation3 + $0x310] sm:$0xff]
        %v2630 = vld [vmem:[#allocation3 + $0x318] sm:$0xff]
        %v2631 = vld [vmem:[#allocation3 + $0x320] sm:$0xff]
        %v2632 = vld [vmem:[#allocation3 + $0x328] sm:$0xff]
        %v2633 = vld [vmem:[#allocation3 + $0x330] sm:$0xff]
        %v2634 = vld [vmem:[#allocation3 + $0x338] sm:$0xff]
        %v2635 = vld [vmem:[#allocation3 + $0x340] sm:$0xff]
        %v2636 = vld [vmem:[#allocation3 + $0x348] sm:$0xff]
        %v2637 = vld [vmem:[#allocation3 + $0x350] sm:$0xff]
        %v2638 = vld [vmem:[#allocation3 + $0x358] sm:$0xff]
        %v2639 = vld [vmem:[%s3] sm:$0xff]
        %v2640 = vld [vmem:[%s3 + $0x8] sm:$0xff]
        %v2641 = vld [vmem:[%s3 + $0x10] sm:$0xff]
        %v2642 = vld [vmem:[%s3 + $0x18] sm:$0xff]
        %2644 = vset.pattern.permute.xlu0 0
        %2645 = vperm.xlu0 %2644, %v2639
        %v2646 = vpop.permute.xlu0 %2645
        %2649 = vset.pattern.permute.xlu0 0
        %2650 = vperm.xlu0 %2649, %v2640
        %v2651 = vpop.permute.xlu0 %2650
        %2654 = vset.pattern.permute.xlu0 0
        %2655 = vperm.xlu0 %2654, %v2641
        %v2656 = vpop.permute.xlu0 %2655
        %2659 = vset.pattern.permute.xlu0 0
        %2660 = vperm.xlu0 %2659, %v2642
        %v2661 = vpop.permute.xlu0 %2660
        %v2671 = vunpack.c.l.b16 %v2523
        %v2672 = vunpack.c.h.b16 %v2523
        %v2673 = vunpack.c.l.b16 %v2524
        %v2674 = vunpack.c.h.b16 %v2524
        %v2675 = vunpack.c.l.b16 %v2525
        %v2676 = vunpack.c.h.b16 %v2525
        %v2677 = vunpack.c.l.b16 %v2526
        %v2678 = vunpack.c.h.b16 %v2526
        %v2679 = vunpack.c.l.b16 %v2527
        %v2680 = vunpack.c.h.b16 %v2527
        %v2681 = vunpack.c.l.b16 %v2528
        %v2682 = vunpack.c.h.b16 %v2528
        %v2683 = vunpack.c.l.b16 %v2529
        %v2684 = vunpack.c.h.b16 %v2529
        %v2685 = vunpack.c.l.b16 %v2530
        %v2686 = vunpack.c.h.b16 %v2530
        %v2687 = vpack.c.b16 %v2675, %v2671
        %v2688 = vpack.c.b16 %v2676, %v2672
        %v2689 = vpack.c.b16 %v2677, %v2673
        %v2690 = vpack.c.b16 %v2678, %v2674
        %v2691 = vpack.c.b16 %v2683, %v2679
        %v2692 = vpack.c.b16 %v2684, %v2680
        %v2693 = vpack.c.b16 %v2685, %v2681
        %v2694 = vpack.c.b16 %v2686, %v2682
        %v2809 = vunpack.c.l.b16 %v2531
        %v2810 = vunpack.c.h.b16 %v2531
        %v2811 = vunpack.c.l.b16 %v2532
        %v2812 = vunpack.c.h.b16 %v2532
        %v2813 = vunpack.c.l.b16 %v2533
        %v2814 = vunpack.c.h.b16 %v2533
        %v2815 = vunpack.c.l.b16 %v2534
        %v2816 = vunpack.c.h.b16 %v2534
        %v2817 = vunpack.c.l.b16 %v2535
        %v2818 = vunpack.c.h.b16 %v2535
        %v2819 = vunpack.c.l.b16 %v2536
        %v2820 = vunpack.c.h.b16 %v2536
        %v2821 = vunpack.c.l.b16 %v2537
        %v2822 = vunpack.c.h.b16 %v2537
        %v2823 = vunpack.c.l.b16 %v2538
        %v2824 = vunpack.c.h.b16 %v2538
        %v2825 = vunpack.c.l.b16 %v2539
        %v2826 = vunpack.c.h.b16 %v2539
        %v2827 = vunpack.c.l.b16 %v2540
        %v2828 = vunpack.c.h.b16 %v2540
        %v2829 = vunpack.c.l.b16 %v2541
        %v2830 = vunpack.c.h.b16 %v2541
        %v2831 = vunpack.c.l.b16 %v2542
        %v2832 = vunpack.c.h.b16 %v2542
        %v2833 = vunpack.c.l.b16 %v2543
        %v2834 = vunpack.c.h.b16 %v2543
        %v2835 = vunpack.c.l.b16 %v2544
        %v2836 = vunpack.c.h.b16 %v2544
        %v2837 = vunpack.c.l.b16 %v2545
        %v2838 = vunpack.c.h.b16 %v2545
        %v2839 = vunpack.c.l.b16 %v2546
        %v2840 = vunpack.c.h.b16 %v2546
        %v2841 = vunpack.c.l.b16 %v2547
        %v2842 = vunpack.c.h.b16 %v2547
        %v2843 = vunpack.c.l.b16 %v2548
        %v2844 = vunpack.c.h.b16 %v2548
        %v2845 = vunpack.c.l.b16 %v2549
        %v2846 = vunpack.c.h.b16 %v2549
        %v2847 = vunpack.c.l.b16 %v2550
        %v2848 = vunpack.c.h.b16 %v2550
        %v2849 = vunpack.c.l.b16 %v2551
        %v2850 = vunpack.c.h.b16 %v2551
        %v2851 = vunpack.c.l.b16 %v2552
        %v2852 = vunpack.c.h.b16 %v2552
        %v2853 = vunpack.c.l.b16 %v2553
        %v2854 = vunpack.c.h.b16 %v2553
        %v2855 = vunpack.c.l.b16 %v2554
        %v2856 = vunpack.c.h.b16 %v2554
        %v2857 = vunpack.c.l.b16 %v2555
        %v2858 = vunpack.c.h.b16 %v2555
        %v2859 = vunpack.c.l.b16 %v2556
        %v2860 = vunpack.c.h.b16 %v2556
        %v2861 = vunpack.c.l.b16 %v2557
        %v2862 = vunpack.c.h.b16 %v2557
        %v2863 = vunpack.c.l.b16 %v2558
        %v2864 = vunpack.c.h.b16 %v2558
        %v2865 = vunpack.c.l.b16 %v2559
        %v2866 = vunpack.c.h.b16 %v2559
        %v2867 = vunpack.c.l.b16 %v2560
        %v2868 = vunpack.c.h.b16 %v2560
        %v2869 = vunpack.c.l.b16 %v2561
        %v2870 = vunpack.c.h.b16 %v2561
        %v2871 = vunpack.c.l.b16 %v2562
        %v2872 = vunpack.c.h.b16 %v2562
        %v2873 = vunpack.c.l.b16 %v2563
        %v2874 = vunpack.c.h.b16 %v2563
        %v2875 = vunpack.c.l.b16 %v2564
        %v2876 = vunpack.c.h.b16 %v2564
        %v2877 = vunpack.c.l.b16 %v2565
        %v2878 = vunpack.c.h.b16 %v2565
        %v2879 = vunpack.c.l.b16 %v2566
        %v2880 = vunpack.c.h.b16 %v2566
        %v2881 = vunpack.c.l.b16 %v2567
        %v2882 = vunpack.c.h.b16 %v2567
        %v2883 = vunpack.c.l.b16 %v2568
        %v2884 = vunpack.c.h.b16 %v2568
        %v2885 = vunpack.c.l.b16 %v2569
        %v2886 = vunpack.c.h.b16 %v2569
        %v2887 = vunpack.c.l.b16 %v2570
        %v2888 = vunpack.c.h.b16 %v2570
        %v2889 = vunpack.c.l.b16 %v2571
        %v2890 = vunpack.c.h.b16 %v2571
        %v2891 = vunpack.c.l.b16 %v2572
        %v2892 = vunpack.c.h.b16 %v2572
        %v2893 = vunpack.c.l.b16 %v2573
        %v2894 = vunpack.c.h.b16 %v2573
        %v2895 = vunpack.c.l.b16 %v2574
        %v2896 = vunpack.c.h.b16 %v2574
        %v2897 = vunpack.c.l.b16 %v2575
        %v2898 = vunpack.c.h.b16 %v2575
        %v2899 = vunpack.c.l.b16 %v2576
        %v2900 = vunpack.c.h.b16 %v2576
        %v2901 = vunpack.c.l.b16 %v2577
        %v2902 = vunpack.c.h.b16 %v2577
        %v2903 = vunpack.c.l.b16 %v2578
        %v2904 = vunpack.c.h.b16 %v2578
        %v2905 = vunpack.c.l.b16 %v2579
        %v2906 = vunpack.c.h.b16 %v2579
        %v2907 = vunpack.c.l.b16 %v2580
        %v2908 = vunpack.c.h.b16 %v2580
        %v2909 = vunpack.c.l.b16 %v2581
        %v2910 = vunpack.c.h.b16 %v2581
        %v2911 = vunpack.c.l.b16 %v2582
        %v2912 = vunpack.c.h.b16 %v2582
        %v2913 = vunpack.c.l.b16 %v2583
        %v2914 = vunpack.c.h.b16 %v2583
        %v2915 = vunpack.c.l.b16 %v2584
        %v2916 = vunpack.c.h.b16 %v2584
        %v2917 = vunpack.c.l.b16 %v2585
        %v2918 = vunpack.c.h.b16 %v2585
        %v2919 = vunpack.c.l.b16 %v2586
        %v2920 = vunpack.c.h.b16 %v2586
        %v2921 = vunpack.c.l.b16 %v2587
        %v2922 = vunpack.c.h.b16 %v2587
        %v2923 = vunpack.c.l.b16 %v2588
        %v2924 = vunpack.c.h.b16 %v2588
        %v2925 = vunpack.c.l.b16 %v2589
        %v2926 = vunpack.c.h.b16 %v2589
        %v2927 = vunpack.c.l.b16 %v2590
        %v2928 = vunpack.c.h.b16 %v2590
        %v2929 = vunpack.c.l.b16 %v2591
        %v2930 = vunpack.c.h.b16 %v2591
        %v2931 = vunpack.c.l.b16 %v2592
        %v2932 = vunpack.c.h.b16 %v2592
        %v2933 = vunpack.c.l.b16 %v2593
        %v2934 = vunpack.c.h.b16 %v2593
        %v2935 = vunpack.c.l.b16 %v2594
        %v2936 = vunpack.c.h.b16 %v2594
        %v2937 = vunpack.c.l.b16 %v2595
        %v2938 = vunpack.c.h.b16 %v2595
        %v2939 = vunpack.c.l.b16 %v2596
        %v2940 = vunpack.c.h.b16 %v2596
        %v2941 = vunpack.c.l.b16 %v2597
        %v2942 = vunpack.c.h.b16 %v2597
        %v2943 = vunpack.c.l.b16 %v2598
        %v2944 = vunpack.c.h.b16 %v2598
        %v2945 = vunpack.c.l.b16 %v2599
        %v2946 = vunpack.c.h.b16 %v2599
        %v2947 = vunpack.c.l.b16 %v2600
        %v2948 = vunpack.c.h.b16 %v2600
        %v2949 = vunpack.c.l.b16 %v2601
        %v2950 = vunpack.c.h.b16 %v2601
        %v2951 = vunpack.c.l.b16 %v2602
        %v2952 = vunpack.c.h.b16 %v2602
        %v2953 = vunpack.c.l.b16 %v2603
        %v2954 = vunpack.c.h.b16 %v2603
        %v2955 = vunpack.c.l.b16 %v2604
        %v2956 = vunpack.c.h.b16 %v2604
        %v2957 = vunpack.c.l.b16 %v2605
        %v2958 = vunpack.c.h.b16 %v2605
        %v2959 = vunpack.c.l.b16 %v2606
        %v2960 = vunpack.c.h.b16 %v2606
        %v2961 = vunpack.c.l.b16 %v2607
        %v2962 = vunpack.c.h.b16 %v2607
        %v2963 = vunpack.c.l.b16 %v2608
        %v2964 = vunpack.c.h.b16 %v2608
        %v2965 = vunpack.c.l.b16 %v2609
        %v2966 = vunpack.c.h.b16 %v2609
        %v2967 = vunpack.c.l.b16 %v2610
        %v2968 = vunpack.c.h.b16 %v2610
        %v2969 = vunpack.c.l.b16 %v2611
        %v2970 = vunpack.c.h.b16 %v2611
        %v2971 = vunpack.c.l.b16 %v2612
        %v2972 = vunpack.c.h.b16 %v2612
        %v2973 = vunpack.c.l.b16 %v2613
        %v2974 = vunpack.c.h.b16 %v2613
        %v2975 = vunpack.c.l.b16 %v2614
        %v2976 = vunpack.c.h.b16 %v2614
        %v2977 = vunpack.c.l.b16 %v2615
        %v2978 = vunpack.c.h.b16 %v2615
        %v2979 = vunpack.c.l.b16 %v2616
        %v2980 = vunpack.c.h.b16 %v2616
        %v2981 = vunpack.c.l.b16 %v2617
        %v2982 = vunpack.c.h.b16 %v2617
        %v2983 = vunpack.c.l.b16 %v2618
        %v2984 = vunpack.c.h.b16 %v2618
        %v2985 = vunpack.c.l.b16 %v2619
        %v2986 = vunpack.c.h.b16 %v2619
        %v2987 = vunpack.c.l.b16 %v2620
        %v2988 = vunpack.c.h.b16 %v2620
        %v2989 = vunpack.c.l.b16 %v2621
        %v2990 = vunpack.c.h.b16 %v2621
        %v2991 = vunpack.c.l.b16 %v2622
        %v2992 = vunpack.c.h.b16 %v2622
        %v2993 = vunpack.c.l.b16 %v2623
        %v2994 = vunpack.c.h.b16 %v2623
        %v2995 = vunpack.c.l.b16 %v2624
        %v2996 = vunpack.c.h.b16 %v2624
        %v2997 = vunpack.c.l.b16 %v2625
        %v2998 = vunpack.c.h.b16 %v2625
        %v2999 = vunpack.c.l.b16 %v2626
        %v3000 = vunpack.c.h.b16 %v2626
        %v3001 = vunpack.c.l.b16 %v2627
        %v3002 = vunpack.c.h.b16 %v2627
        %v3003 = vunpack.c.l.b16 %v2628
        %v3004 = vunpack.c.h.b16 %v2628
        %v3005 = vunpack.c.l.b16 %v2629
        %v3006 = vunpack.c.h.b16 %v2629
        %v3007 = vunpack.c.l.b16 %v2630
        %v3008 = vunpack.c.h.b16 %v2630
        %v3009 = vunpack.c.l.b16 %v2631
        %v3010 = vunpack.c.h.b16 %v2631
        %v3011 = vunpack.c.l.b16 %v2632
        %v3012 = vunpack.c.h.b16 %v2632
        %v3013 = vunpack.c.l.b16 %v2633
        %v3014 = vunpack.c.h.b16 %v2633
        %v3015 = vunpack.c.l.b16 %v2634
        %v3016 = vunpack.c.h.b16 %v2634
        %v3017 = vunpack.c.l.b16 %v2635
        %v3018 = vunpack.c.h.b16 %v2635
        %v3019 = vunpack.c.l.b16 %v2636
        %v3020 = vunpack.c.h.b16 %v2636
        %v3021 = vunpack.c.l.b16 %v2637
        %v3022 = vunpack.c.h.b16 %v2637
        %v3023 = vunpack.c.l.b16 %v2638
        %v3024 = vunpack.c.h.b16 %v2638
        %v3025 = vpack.c.b16 %v2813, %v2809
        %v3026 = vpack.c.b16 %v2814, %v2810
        %v3027 = vpack.c.b16 %v2815, %v2811
        %v3028 = vpack.c.b16 %v2816, %v2812
        %v3029 = vpack.c.b16 %v2821, %v2817
        %v3030 = vpack.c.b16 %v2822, %v2818
        %v3031 = vpack.c.b16 %v2823, %v2819
        %v3032 = vpack.c.b16 %v2824, %v2820
        %v3033 = vpack.c.b16 %v2829, %v2825
        %v3034 = vpack.c.b16 %v2830, %v2826
        %v3035 = vpack.c.b16 %v2831, %v2827
        %v3036 = vpack.c.b16 %v2832, %v2828
        %v3037 = vpack.c.b16 %v2837, %v2833
        %v3038 = vpack.c.b16 %v2838, %v2834
        %v3039 = vpack.c.b16 %v2839, %v2835
        %v3040 = vpack.c.b16 %v2840, %v2836
        %v3041 = vpack.c.b16 %v2845, %v2841
        %v3042 = vpack.c.b16 %v2846, %v2842
        %v3043 = vpack.c.b16 %v2847, %v2843
        %v3044 = vpack.c.b16 %v2848, %v2844
        %v3045 = vpack.c.b16 %v2853, %v2849
        %v3046 = vpack.c.b16 %v2854, %v2850
        %v3047 = vpack.c.b16 %v2855, %v2851
        %v3048 = vpack.c.b16 %v2856, %v2852
        %v3049 = vpack.c.b16 %v2861, %v2857
        %v3050 = vpack.c.b16 %v2862, %v2858
        %v3051 = vpack.c.b16 %v2863, %v2859
        %v3052 = vpack.c.b16 %v2864, %v2860
        %v3053 = vpack.c.b16 %v2869, %v2865
        %v3054 = vpack.c.b16 %v2870, %v2866
        %v3055 = vpack.c.b16 %v2871, %v2867
        %v3056 = vpack.c.b16 %v2872, %v2868
        %v3057 = vpack.c.b16 %v2877, %v2873
        %v3058 = vpack.c.b16 %v2878, %v2874
        %v3059 = vpack.c.b16 %v2879, %v2875
        %v3060 = vpack.c.b16 %v2880, %v2876
        %v3061 = vpack.c.b16 %v2885, %v2881
        %v3062 = vpack.c.b16 %v2886, %v2882
        %v3063 = vpack.c.b16 %v2887, %v2883
        %v3064 = vpack.c.b16 %v2888, %v2884
        %v3065 = vpack.c.b16 %v2893, %v2889
        %v3066 = vpack.c.b16 %v2894, %v2890
        %v3067 = vpack.c.b16 %v2895, %v2891
        %v3068 = vpack.c.b16 %v2896, %v2892
        %v3069 = vpack.c.b16 %v2901, %v2897
        %v3070 = vpack.c.b16 %v2902, %v2898
        %v3071 = vpack.c.b16 %v2903, %v2899
        %v3072 = vpack.c.b16 %v2904, %v2900
        %v3073 = vpack.c.b16 %v2909, %v2905
        %v3074 = vpack.c.b16 %v2910, %v2906
        %v3075 = vpack.c.b16 %v2911, %v2907
        %v3076 = vpack.c.b16 %v2912, %v2908
        %v3077 = vpack.c.b16 %v2917, %v2913
        %v3078 = vpack.c.b16 %v2918, %v2914
        %v3079 = vpack.c.b16 %v2919, %v2915
        %v3080 = vpack.c.b16 %v2920, %v2916
        %v3081 = vpack.c.b16 %v2925, %v2921
        %v3082 = vpack.c.b16 %v2926, %v2922
        %v3083 = vpack.c.b16 %v2927, %v2923
        %v3084 = vpack.c.b16 %v2928, %v2924
        %v3085 = vpack.c.b16 %v2933, %v2929
        %v3086 = vpack.c.b16 %v2934, %v2930
        %v3087 = vpack.c.b16 %v2935, %v2931
        %v3088 = vpack.c.b16 %v2936, %v2932
        %v3089 = vpack.c.b16 %v2941, %v2937
        %v3090 = vpack.c.b16 %v2942, %v2938
        %v3091 = vpack.c.b16 %v2943, %v2939
        %v3092 = vpack.c.b16 %v2944, %v2940
        %v3093 = vpack.c.b16 %v2949, %v2945
        %v3094 = vpack.c.b16 %v2950, %v2946
        %v3095 = vpack.c.b16 %v2951, %v2947
        %v3096 = vpack.c.b16 %v2952, %v2948
        %v3097 = vpack.c.b16 %v2957, %v2953
        %v3098 = vpack.c.b16 %v2958, %v2954
        %v3099 = vpack.c.b16 %v2959, %v2955
        %v3100 = vpack.c.b16 %v2960, %v2956
        %v3101 = vpack.c.b16 %v2965, %v2961
        %v3102 = vpack.c.b16 %v2966, %v2962
        %v3103 = vpack.c.b16 %v2967, %v2963
        %v3104 = vpack.c.b16 %v2968, %v2964
        %v3105 = vpack.c.b16 %v2973, %v2969
        %v3106 = vpack.c.b16 %v2974, %v2970
        %v3107 = vpack.c.b16 %v2975, %v2971
        %v3108 = vpack.c.b16 %v2976, %v2972
        %v3109 = vpack.c.b16 %v2981, %v2977
        %v3110 = vpack.c.b16 %v2982, %v2978
        %v3111 = vpack.c.b16 %v2983, %v2979
        %v3112 = vpack.c.b16 %v2984, %v2980
        %v3113 = vpack.c.b16 %v2989, %v2985
        %v3114 = vpack.c.b16 %v2990, %v2986
        %v3115 = vpack.c.b16 %v2991, %v2987
        %v3116 = vpack.c.b16 %v2992, %v2988
        %v3117 = vpack.c.b16 %v2997, %v2993
        %v3118 = vpack.c.b16 %v2998, %v2994
        %v3119 = vpack.c.b16 %v2999, %v2995
        %v3120 = vpack.c.b16 %v3000, %v2996
        %v3121 = vpack.c.b16 %v3005, %v3001
        %v3122 = vpack.c.b16 %v3006, %v3002
        %v3123 = vpack.c.b16 %v3007, %v3003
        %v3124 = vpack.c.b16 %v3008, %v3004
        %v3125 = vpack.c.b16 %v3013, %v3009
        %v3126 = vpack.c.b16 %v3014, %v3010
        %v3127 = vpack.c.b16 %v3015, %v3011
        %v3128 = vpack.c.b16 %v3016, %v3012
        %v3129 = vpack.c.b16 %v3021, %v3017
        %v3130 = vpack.c.b16 %v3022, %v3018
        %v3131 = vpack.c.b16 %v3023, %v3019
        %v3132 = vpack.c.b16 %v3024, %v3020
        %vm3241 = vcmask 392192
        %v3243 = vsel %vm3241, %v2690, 0
        %v3246 = vsel %vm3241, %v2694, 0
        %3248 = vmatpush.bf16.msra.mxu0 %v3053
        %3249 = vmatpush.bf16.msra.mxu0 %v3049
        %3250 = vmatpush.bf16.msra.mxu0 %v3045
        %3251 = vmatpush.bf16.msra.mxu0 %v3041
        %3252 = vmatpush.bf16.msra.mxu0 %v3037
        %3253 = vmatpush.bf16.msra.mxu0 %v3033
        %3254 = vmatpush.bf16.msra.mxu0 %v3029
        %3255 = vmatpush.bf16.msra.mxu0 %v3025
        %3256 = vmatmul.bf16.gmra.mxu0 %v2687
        %v3257 = vpop.f32.mrf.mxu0
        %v3258 = vadd.f32 %v2646, %v3257
        %v3259 = vpop.f32.mrf.mxu0
        %v3260 = vadd.f32 %v2651, %v3259
        %3261 = vmatmul.bf16.gmra.mxu0 %v2691
        %v3262 = vpop.f32.mrf.mxu0
        %v3263 = vadd.f32 %v2656, %v3262
        %v3264 = vpop.f32.mrf.mxu0
        %v3265 = vadd.f32 %v2661, %v3264
        %3266 = vdwg.mxu0
        %3267 = vmatpush.bf16.msra.mxu0 %v3085
        %3268 = vmatpush.bf16.msra.mxu0 %v3081
        %3269 = vmatpush.bf16.msra.mxu0 %v3077
        %3270 = vmatpush.bf16.msra.mxu0 %v3073
        %3271 = vmatpush.bf16.msra.mxu0 %v3069
        %3272 = vmatpush.bf16.msra.mxu0 %v3065
        %3273 = vmatpush.bf16.msra.mxu0 %v3061
        %3274 = vmatpush.bf16.msra.mxu0 %v3057
        %3275 = vmatmul.bf16.gmra.mxu0 %v2688
        %v3276 = vpop.f32.mrf.mxu0
        %v3277 = vadd.f32 %v3258, %v3276
        %v3278 = vpop.f32.mrf.mxu0
        %v3279 = vadd.f32 %v3260, %v3278
        %3280 = vmatmul.bf16.gmra.mxu0 %v2692
        %v3281 = vpop.f32.mrf.mxu0
        %v3282 = vadd.f32 %v3263, %v3281
        %v3283 = vpop.f32.mrf.mxu0
        %v3284 = vadd.f32 %v3265, %v3283
        %3285 = vdwg.mxu0
        %3286 = vmatpush.bf16.msra.mxu0 %v3117
        %3287 = vmatpush.bf16.msra.mxu0 %v3113
        %3288 = vmatpush.bf16.msra.mxu0 %v3109
        %3289 = vmatpush.bf16.msra.mxu0 %v3105
        %3290 = vmatpush.bf16.msra.mxu0 %v3101
        %3291 = vmatpush.bf16.msra.mxu0 %v3097
        %3292 = vmatpush.bf16.msra.mxu0 %v3093
        %3293 = vmatpush.bf16.msra.mxu0 %v3089
        %3294 = vmatmul.bf16.gmra.mxu0 %v2689
        %v3295 = vpop.f32.mrf.mxu0
        %v3296 = vadd.f32 %v3277, %v3295
        %v3297 = vpop.f32.mrf.mxu0
        %v3298 = vadd.f32 %v3279, %v3297
        %3299 = vmatmul.bf16.gmra.mxu0 %v2693
        %v3300 = vpop.f32.mrf.mxu0
        %v3301 = vadd.f32 %v3282, %v3300
        %v3302 = vpop.f32.mrf.mxu0
        %v3303 = vadd.f32 %v3284, %v3302
        %3304 = vdwg.mxu0
        %3305 = vmatpush.bf16.msra.mxu0 0
        %3306 = vmatpush.bf16.msra.mxu0 0
        %3307 = vmatpush.bf16.msra.mxu0 0
        %3308 = vmatpush.bf16.msra.mxu0 0
        %3309 = vmatpush.bf16.msra.mxu0 0
        %3310 = vmatpush.bf16.msra.mxu0 %v3129
        %3311 = vmatpush.bf16.msra.mxu0 %v3125
        %3312 = vmatpush.bf16.msra.mxu0 %v3121
        %3313 = vmatmul.bf16.gmra.mxu0 %v3243
        %v3314 = vpop.f32.mrf.mxu0
        %v3315 = vadd.f32 %v3296, %v3314
        %v3316 = vpop.f32.mrf.mxu0
        %v3317 = vadd.f32 %v3298, %v3316
        %3318 = vmatmul.bf16.gmra.mxu0 %v3246
        %v3319 = vpop.f32.mrf.mxu0
        %v3320 = vadd.f32 %v3301, %v3319
        %v3321 = vpop.f32.mrf.mxu0
        %v3322 = vadd.f32 %v3303, %v3321
        %3323 = vdwg.mxu0
        %3324 = vmatpush.bf16.msra.mxu0 %v3054
        %3325 = vmatpush.bf16.msra.mxu0 %v3050
        %3326 = vmatpush.bf16.msra.mxu0 %v3046
        %3327 = vmatpush.bf16.msra.mxu0 %v3042
        %3328 = vmatpush.bf16.msra.mxu0 %v3038
        %3329 = vmatpush.bf16.msra.mxu0 %v3034
        %3330 = vmatpush.bf16.msra.mxu0 %v3030
        %3331 = vmatpush.bf16.msra.mxu0 %v3026
        %3332 = vmatmul.bf16.gmra.mxu0 %v2687
        %v3333 = vpop.f32.mrf.mxu0
        %v3334 = vadd.f32 %v2646, %v3333
        %v3335 = vpop.f32.mrf.mxu0
        %v3336 = vadd.f32 %v2651, %v3335
        %3337 = vmatmul.bf16.gmra.mxu0 %v2691
        %v3338 = vpop.f32.mrf.mxu0
        %v3339 = vadd.f32 %v2656, %v3338
        %v3340 = vpop.f32.mrf.mxu0
        %v3341 = vadd.f32 %v2661, %v3340
        %3342 = vdwg.mxu0
        %3343 = vmatpush.bf16.msra.mxu0 %v3086
        %3344 = vmatpush.bf16.msra.mxu0 %v3082
        %3345 = vmatpush.bf16.msra.mxu0 %v3078
        %3346 = vmatpush.bf16.msra.mxu0 %v3074
        %3347 = vmatpush.bf16.msra.mxu0 %v3070
        %3348 = vmatpush.bf16.msra.mxu0 %v3066
        %3349 = vmatpush.bf16.msra.mxu0 %v3062
        %3350 = vmatpush.bf16.msra.mxu0 %v3058
        %3351 = vmatmul.bf16.gmra.mxu0 %v2688
        %v3352 = vpop.f32.mrf.mxu0
        %v3353 = vadd.f32 %v3334, %v3352
        %v3354 = vpop.f32.mrf.mxu0
        %v3355 = vadd.f32 %v3336, %v3354
        %3356 = vmatmul.bf16.gmra.mxu0 %v2692
        %v3357 = vpop.f32.mrf.mxu0
        %v3358 = vadd.f32 %v3339, %v3357
        %v3359 = vpop.f32.mrf.mxu0
        %v3360 = vadd.f32 %v3341, %v3359
        %3361 = vdwg.mxu0
        %3362 = vmatpush.bf16.msra.mxu0 %v3118
        %3363 = vmatpush.bf16.msra.mxu0 %v3114
        %3364 = vmatpush.bf16.msra.mxu0 %v3110
        %3365 = vmatpush.bf16.msra.mxu0 %v3106
        %3366 = vmatpush.bf16.msra.mxu0 %v3102
        %3367 = vmatpush.bf16.msra.mxu0 %v3098
        %3368 = vmatpush.bf16.msra.mxu0 %v3094
        %3369 = vmatpush.bf16.msra.mxu0 %v3090
        %3370 = vmatmul.bf16.gmra.mxu0 %v2689
        %v3371 = vpop.f32.mrf.mxu0
        %v3372 = vadd.f32 %v3353, %v3371
        %v3373 = vpop.f32.mrf.mxu0
        %v3374 = vadd.f32 %v3355, %v3373
        %3375 = vmatmul.bf16.gmra.mxu0 %v2693
        %v3376 = vpop.f32.mrf.mxu0
        %v3377 = vadd.f32 %v3358, %v3376
        %v3378 = vpop.f32.mrf.mxu0
        %v3379 = vadd.f32 %v3360, %v3378
        %3380 = vdwg.mxu0
        %3381 = vmatpush.bf16.msra.mxu0 0
        %3382 = vmatpush.bf16.msra.mxu0 0
        %3383 = vmatpush.bf16.msra.mxu0 0
        %3384 = vmatpush.bf16.msra.mxu0 0
        %3385 = vmatpush.bf16.msra.mxu0 0
        %3386 = vmatpush.bf16.msra.mxu0 %v3130
        %3387 = vmatpush.bf16.msra.mxu0 %v3126
        %3388 = vmatpush.bf16.msra.mxu0 %v3122
        %3389 = vmatmul.bf16.gmra.mxu0 %v3243
        %v3390 = vpop.f32.mrf.mxu0
        %v3391 = vadd.f32 %v3372, %v3390
        %v3392 = vpop.f32.mrf.mxu0
        %v3393 = vadd.f32 %v3374, %v3392
        %3394 = vmatmul.bf16.gmra.mxu0 %v3246
        %v3395 = vpop.f32.mrf.mxu0
        %v3396 = vadd.f32 %v3377, %v3395
        %v3397 = vpop.f32.mrf.mxu0
        %v3398 = vadd.f32 %v3379, %v3397
        %3399 = vdwg.mxu0
        %3400 = vmatpush.bf16.msra.mxu0 %v3055
        %3401 = vmatpush.bf16.msra.mxu0 %v3051
        %3402 = vmatpush.bf16.msra.mxu0 %v3047
        %3403 = vmatpush.bf16.msra.mxu0 %v3043
        %3404 = vmatpush.bf16.msra.mxu0 %v3039
        %3405 = vmatpush.bf16.msra.mxu0 %v3035
        %3406 = vmatpush.bf16.msra.mxu0 %v3031
        %3407 = vmatpush.bf16.msra.mxu0 %v3027
        %3408 = vmatmul.bf16.gmra.mxu0 %v2687
        %v3409 = vpop.f32.mrf.mxu0
        %v3410 = vadd.f32 %v2646, %v3409
        %v3411 = vpop.f32.mrf.mxu0
        %v3412 = vadd.f32 %v2651, %v3411
        %3413 = vmatmul.bf16.gmra.mxu0 %v2691
        %v3414 = vpop.f32.mrf.mxu0
        %v3415 = vadd.f32 %v2656, %v3414
        %v3416 = vpop.f32.mrf.mxu0
        %v3417 = vadd.f32 %v2661, %v3416
        %3418 = vdwg.mxu0
        %3419 = vmatpush.bf16.msra.mxu0 %v3087
        %3420 = vmatpush.bf16.msra.mxu0 %v3083
        %3421 = vmatpush.bf16.msra.mxu0 %v3079
        %3422 = vmatpush.bf16.msra.mxu0 %v3075
        %3423 = vmatpush.bf16.msra.mxu0 %v3071
        %3424 = vmatpush.bf16.msra.mxu0 %v3067
        %3425 = vmatpush.bf16.msra.mxu0 %v3063
        %3426 = vmatpush.bf16.msra.mxu0 %v3059
        %3427 = vmatmul.bf16.gmra.mxu0 %v2688
        %v3428 = vpop.f32.mrf.mxu0
        %v3429 = vadd.f32 %v3410, %v3428
        %v3430 = vpop.f32.mrf.mxu0
        %v3431 = vadd.f32 %v3412, %v3430
        %3432 = vmatmul.bf16.gmra.mxu0 %v2692
        %v3433 = vpop.f32.mrf.mxu0
        %v3434 = vadd.f32 %v3415, %v3433
        %v3435 = vpop.f32.mrf.mxu0
        %v3436 = vadd.f32 %v3417, %v3435
        %3437 = vdwg.mxu0
        %3438 = vmatpush.bf16.msra.mxu0 %v3119
        %3439 = vmatpush.bf16.msra.mxu0 %v3115
        %3440 = vmatpush.bf16.msra.mxu0 %v3111
        %3441 = vmatpush.bf16.msra.mxu0 %v3107
        %3442 = vmatpush.bf16.msra.mxu0 %v3103
        %3443 = vmatpush.bf16.msra.mxu0 %v3099
        %3444 = vmatpush.bf16.msra.mxu0 %v3095
        %3445 = vmatpush.bf16.msra.mxu0 %v3091
        %3446 = vmatmul.bf16.gmra.mxu0 %v2689
        %v3447 = vpop.f32.mrf.mxu0
        %v3448 = vadd.f32 %v3429, %v3447
        %v3449 = vpop.f32.mrf.mxu0
        %v3450 = vadd.f32 %v3431, %v3449
        %3451 = vmatmul.bf16.gmra.mxu0 %v2693
        %v3452 = vpop.f32.mrf.mxu0
        %v3453 = vadd.f32 %v3434, %v3452
        %v3454 = vpop.f32.mrf.mxu0
        %v3455 = vadd.f32 %v3436, %v3454
        %3456 = vdwg.mxu0
        %3457 = vmatpush.bf16.msra.mxu0 0
        %3458 = vmatpush.bf16.msra.mxu0 0
        %3459 = vmatpush.bf16.msra.mxu0 0
        %3460 = vmatpush.bf16.msra.mxu0 0
        %3461 = vmatpush.bf16.msra.mxu0 0
        %3462 = vmatpush.bf16.msra.mxu0 %v3131
        %3463 = vmatpush.bf16.msra.mxu0 %v3127
        %3464 = vmatpush.bf16.msra.mxu0 %v3123
        %3465 = vmatmul.bf16.gmra.mxu0 %v3243
        %v3466 = vpop.f32.mrf.mxu0
        %v3467 = vadd.f32 %v3448, %v3466
        %v3468 = vpop.f32.mrf.mxu0
        %v3469 = vadd.f32 %v3450, %v3468
        %3470 = vmatmul.bf16.gmra.mxu0 %v3246
        %v3471 = vpop.f32.mrf.mxu0
        %v3472 = vadd.f32 %v3453, %v3471
        %v3473 = vpop.f32.mrf.mxu0
        %v3474 = vadd.f32 %v3455, %v3473
        %3475 = vdwg.mxu0
        %3476 = vmatpush.bf16.msra.mxu0 %v3056
        %3477 = vmatpush.bf16.msra.mxu0 %v3052
        %3478 = vmatpush.bf16.msra.mxu0 %v3048
        %3479 = vmatpush.bf16.msra.mxu0 %v3044
        %3480 = vmatpush.bf16.msra.mxu0 %v3040
        %3481 = vmatpush.bf16.msra.mxu0 %v3036
        %3482 = vmatpush.bf16.msra.mxu0 %v3032
        %3483 = vmatpush.bf16.msra.mxu0 %v3028
        %3484 = vmatmul.bf16.gmra.mxu0 %v2687
        %v3485 = vpop.f32.mrf.mxu0
        %v3486 = vadd.f32 %v2646, %v3485
        %v3487 = vpop.f32.mrf.mxu0
        %v3488 = vadd.f32 %v2651, %v3487
        %3489 = vmatmul.bf16.gmra.mxu0 %v2691
        %v3490 = vpop.f32.mrf.mxu0
        %v3491 = vadd.f32 %v2656, %v3490
        %v3492 = vpop.f32.mrf.mxu0
        %v3493 = vadd.f32 %v2661, %v3492
        %3494 = vdwg.mxu0
        %3495 = vmatpush.bf16.msra.mxu0 %v3088
        %3496 = vmatpush.bf16.msra.mxu0 %v3084
        %3497 = vmatpush.bf16.msra.mxu0 %v3080
        %3498 = vmatpush.bf16.msra.mxu0 %v3076
        %3499 = vmatpush.bf16.msra.mxu0 %v3072
        %3500 = vmatpush.bf16.msra.mxu0 %v3068
        %3501 = vmatpush.bf16.msra.mxu0 %v3064
        %3502 = vmatpush.bf16.msra.mxu0 %v3060
        %3503 = vmatmul.bf16.gmra.mxu0 %v2688
        %v3504 = vpop.f32.mrf.mxu0
        %v3505 = vadd.f32 %v3486, %v3504
        %v3506 = vpop.f32.mrf.mxu0
        %v3507 = vadd.f32 %v3488, %v3506
        %3508 = vmatmul.bf16.gmra.mxu0 %v2692
        %v3509 = vpop.f32.mrf.mxu0
        %v3510 = vadd.f32 %v3491, %v3509
        %v3511 = vpop.f32.mrf.mxu0
        %v3512 = vadd.f32 %v3493, %v3511
        %3513 = vdwg.mxu0
        %3514 = vmatpush.bf16.msra.mxu0 %v3120
        %3515 = vmatpush.bf16.msra.mxu0 %v3116
        %3516 = vmatpush.bf16.msra.mxu0 %v3112
        %3517 = vmatpush.bf16.msra.mxu0 %v3108
        %3518 = vmatpush.bf16.msra.mxu0 %v3104
        %3519 = vmatpush.bf16.msra.mxu0 %v3100
        %3520 = vmatpush.bf16.msra.mxu0 %v3096
        %3521 = vmatpush.bf16.msra.mxu0 %v3092
        %3522 = vmatmul.bf16.gmra.mxu0 %v2689
        %v3523 = vpop.f32.mrf.mxu0
        %v3524 = vadd.f32 %v3505, %v3523
        %v3525 = vpop.f32.mrf.mxu0
        %v3526 = vadd.f32 %v3507, %v3525
        %3527 = vmatmul.bf16.gmra.mxu0 %v2693
        %v3528 = vpop.f32.mrf.mxu0
        %v3529 = vadd.f32 %v3510, %v3528
        %v3530 = vpop.f32.mrf.mxu0
        %v3531 = vadd.f32 %v3512, %v3530
        %3532 = vdwg.mxu0
        %3533 = vmatpush.bf16.msra.mxu0 0
        %3534 = vmatpush.bf16.msra.mxu0 0
        %3535 = vmatpush.bf16.msra.mxu0 0
        %3536 = vmatpush.bf16.msra.mxu0 0
        %3537 = vmatpush.bf16.msra.mxu0 0
        %3538 = vmatpush.bf16.msra.mxu0 %v3132
        %3539 = vmatpush.bf16.msra.mxu0 %v3128
        %3540 = vmatpush.bf16.msra.mxu0 %v3124
        %3541 = vmatmul.bf16.gmra.mxu0 %v3243
        %v3542 = vpop.f32.mrf.mxu0
        %v3543 = vadd.f32 %v3524, %v3542
        %v3544 = vpop.f32.mrf.mxu0
        %v3545 = vadd.f32 %v3526, %v3544
        %3546 = vmatmul.bf16.gmra.mxu0 %v3246
        %v3547 = vpop.f32.mrf.mxu0
        %v3548 = vadd.f32 %v3529, %v3547
        %v3549 = vpop.f32.mrf.mxu0
        %v3550 = vadd.f32 %v3531, %v3549
        %3551 = vdwg.mxu0
        %3553 = vset.pattern.permute.xlu0 0
        %3554 = vperm.xlu0 %3553, %v389
        %v3555 = vpop.permute.xlu0 %3554
        %3558 = vset.pattern.permute.xlu0 0
        %3559 = vperm.xlu0 %3558, %v390
        %v3560 = vpop.permute.xlu0 %3559
        %3563 = vset.pattern.permute.xlu0 0
        %3564 = vperm.xlu0 %3563, %v391
        %v3565 = vpop.permute.xlu0 %3564
        %3568 = vset.pattern.permute.xlu0 0
        %3569 = vperm.xlu0 %3568, %v392
        %v3570 = vpop.permute.xlu0 %3569
        %v3572 = vmul.f32 %v3315, %v3555
        %v3573 = vmul.f32 %v3391, %v3555
        %v3574 = vmul.f32 %v3467, %v3555
        %v3575 = vmul.f32 %v3543, %v3555
        %v3576 = vmul.f32 %v3317, %v3560
        %v3577 = vmul.f32 %v3393, %v3560
        %v3578 = vmul.f32 %v3469, %v3560
        %v3579 = vmul.f32 %v3545, %v3560
        %v3580 = vmul.f32 %v3320, %v3565
        %v3581 = vmul.f32 %v3396, %v3565
        %v3582 = vmul.f32 %v3472, %v3565
        %v3583 = vmul.f32 %v3548, %v3565
        %v3584 = vmul.f32 %v3322, %v3570
        %v3585 = vmul.f32 %v3398, %v3570
        %v3586 = vmul.f32 %v3474, %v3570
        %v3587 = vmul.f32 %v3550, %v3570
        %3589 = vset.pattern.permute.xlu0 0
        %3590 = vperm.xlu0 %3589, %v393
        %v3591 = vpop.permute.xlu0 %3590
        %3594 = vset.pattern.permute.xlu0 0
        %3595 = vperm.xlu0 %3594, %v394
        %v3596 = vpop.permute.xlu0 %3595
        %3599 = vset.pattern.permute.xlu0 0
        %3600 = vperm.xlu0 %3599, %v395
        %v3601 = vpop.permute.xlu0 %3600
        %3604 = vset.pattern.permute.xlu0 0
        %3605 = vperm.xlu0 %3604, %v396
        %v3606 = vpop.permute.xlu0 %3605
        %v3608 = vadd.f32 %v3572, %v3591
        %v3609 = vadd.f32 %v3573, %v3591
        %v3610 = vadd.f32 %v3574, %v3591
        %v3611 = vadd.f32 %v3575, %v3591
        %v3612 = vadd.f32 %v3576, %v3596
        %v3613 = vadd.f32 %v3577, %v3596
        %v3614 = vadd.f32 %v3578, %v3596
        %v3615 = vadd.f32 %v3579, %v3596
        %v3616 = vadd.f32 %v3580, %v3601
        %v3617 = vadd.f32 %v3581, %v3601
        %v3618 = vadd.f32 %v3582, %v3601
        %v3619 = vadd.f32 %v3583, %v3601
        %v3620 = vadd.f32 %v3584, %v3606
        %v3621 = vadd.f32 %v3585, %v3606
        %v3622 = vadd.f32 %v3586, %v3606
        %v3623 = vadd.f32 %v3587, %v3606
        %v3624 = vmax.f32 %v3608, 0.0
        %v3625 = vmax.f32 %v3609, 0.0
        %v3626 = vmax.f32 %v3610, 0.0
        %v3627 = vmax.f32 %v3611, 0.0
        %v3628 = vmax.f32 %v3612, 0.0
        %v3629 = vmax.f32 %v3613, 0.0
        %v3630 = vmax.f32 %v3614, 0.0
        %v3631 = vmax.f32 %v3615, 0.0
        %v3632 = vmax.f32 %v3616, 0.0
        %v3633 = vmax.f32 %v3617, 0.0
        %v3634 = vmax.f32 %v3618, 0.0
        %v3635 = vmax.f32 %v3619, 0.0
        %v3636 = vmax.f32 %v3620, 0.0
        %v3637 = vmax.f32 %v3621, 0.0
        %v3638 = vmax.f32 %v3622, 0.0
        %v3639 = vmax.f32 %v3623, 0.0
        %3640 = vst [vmem:[#allocation2 + $0x8] sm:$0xff] %v3624
        %3641 = vst [vmem:[#allocation2 + $0x10] sm:$0xff] %v3625
        %3642 = vst [vmem:[#allocation2 + $0x18] sm:$0xff] %v3626
        %3643 = vst [vmem:[#allocation2 + $0x20] sm:$0xff] %v3627
        %3644 = vst [vmem:[#allocation2 + $0x38] sm:$0xff] %v3628
        %3645 = vst [vmem:[#allocation2 + $0x40] sm:$0xff] %v3629
        %3646 = vst [vmem:[#allocation2 + $0x48] sm:$0xff] %v3630
        %3647 = vst [vmem:[#allocation2 + $0x50] sm:$0xff] %v3631
        %3648 = vst [vmem:[#allocation2 + $0x68] sm:$0xff] %v3632
        %3649 = vst [vmem:[#allocation2 + $0x70] sm:$0xff] %v3633
        %3650 = vst [vmem:[#allocation2 + $0x78] sm:$0xff] %v3634
        %3651 = vst [vmem:[#allocation2 + $0x80] sm:$0xff] %v3635
        %3652 = vst [vmem:[#allocation2 + $0x98] sm:$0xff] %v3636
        %3653 = vst [vmem:[#allocation2 + $0xa0] sm:$0xff] %v3637
        %3654 = vst [vmem:[#allocation2 + $0xa8] sm:$0xff] %v3638
        %3655 = vst [vmem:[#allocation2 + $0xb0] sm:$0xff] %v3639
        %v3656 = vld [vmem:[#allocation2] sm:$0xff]
        %v3657 = vld [vmem:[#allocation2 + $0x8] sm:$0xff]
        %v3658 = vld [vmem:[#allocation2 + $0x10] sm:$0xff]
        %v3659 = vld [vmem:[#allocation2 + $0x18] sm:$0xff]
        %v3660 = vld [vmem:[#allocation2 + $0x20] sm:$0xff]
        %v3661 = vld [vmem:[#allocation2 + $0x30] sm:$0xff]
        %v3662 = vld [vmem:[#allocation2 + $0x38] sm:$0xff]
        %v3663 = vld [vmem:[#allocation2 + $0x40] sm:$0xff]
        %v3664 = vld [vmem:[#allocation2 + $0x48] sm:$0xff]
        %v3665 = vld [vmem:[#allocation2 + $0x50] sm:$0xff]
        %v3666 = vld [vmem:[#allocation2 + $0x60] sm:$0xff]
        %v3667 = vld [vmem:[#allocation2 + $0x68] sm:$0xff]
        %v3668 = vld [vmem:[#allocation2 + $0x70] sm:$0xff]
        %v3669 = vld [vmem:[#allocation2 + $0x78] sm:$0xff]
        %v3670 = vld [vmem:[#allocation2 + $0x80] sm:$0xff]
        %v3671 = vld [vmem:[#allocation2 + $0x90] sm:$0xff]
        %v3672 = vld [vmem:[#allocation2 + $0x98] sm:$0xff]
        %v3673 = vld [vmem:[#allocation2 + $0xa0] sm:$0xff]
        %v3674 = vld [vmem:[#allocation2 + $0xa8] sm:$0xff]
        %v3675 = vld [vmem:[#allocation2 + $0xb0] sm:$0xff]
        %v3676 = vmul.f32 %v3656, %v476
        %v3677 = vmul.f32 %v3657, %v484
        %v3678 = vmul.f32 %v3658, %v485
        %v3679 = vmul.f32 %v3659, %v486
        %v3680 = vmul.f32 %v3660, %v482
        %v3681 = vmul.f32 %v3661, %v476
        %v3682 = vmul.f32 %v3662, %v484
        %v3683 = vmul.f32 %v3663, %v485
        %v3684 = vmul.f32 %v3664, %v486
        %v3685 = vmul.f32 %v3665, %v482
        %v3686 = vmul.f32 %v3666, %v476
        %v3687 = vmul.f32 %v3667, %v484
        %v3688 = vmul.f32 %v3668, %v485
        %v3689 = vmul.f32 %v3669, %v486
        %v3690 = vmul.f32 %v3670, %v482
        %v3691 = vmul.f32 %v3671, %v476
        %v3692 = vmul.f32 %v3672, %v484
        %v3693 = vmul.f32 %v3673, %v485
        %v3694 = vmul.f32 %v3674, %v486
        %v3695 = vmul.f32 %v3675, %v482
        %v3696 = vpack.c.bf16 %v3677, %v3676
        %v3697 = vpack.c.bf16 %v3679, %v3678
        %v3698 = vpack.c.bf16 %v3680, %v3680
        %v3699 = vpack.c.bf16 %v3682, %v3681
        %v3700 = vpack.c.bf16 %v3684, %v3683
        %v3701 = vpack.c.bf16 %v3685, %v3685
        %v3702 = vpack.c.bf16 %v3687, %v3686
        %v3703 = vpack.c.bf16 %v3689, %v3688
        %v3704 = vpack.c.bf16 %v3690, %v3690
        %v3705 = vpack.c.bf16 %v3692, %v3691
        %v3706 = vpack.c.bf16 %v3694, %v3693
        %v3707 = vpack.c.bf16 %v3695, %v3695
        %3720 = vrot.lane.b32.xlu0 %v3696, 73
        %v3721 = vpop.permute.xlu0 %3720
        %3722 = vrot.lane.b32.xlu0 %v3697, 73
        %v3723 = vpop.permute.xlu0 %3722
        %3724 = vrot.lane.b32.xlu0 %v3698, 73
        %v3725 = vpop.permute.xlu0 %3724
        %3726 = vrot.lane.b32.xlu0 %v3699, 73
        %v3727 = vpop.permute.xlu0 %3726
        %3728 = vrot.lane.b32.xlu0 %v3700, 73
        %v3729 = vpop.permute.xlu0 %3728
        %3730 = vrot.lane.b32.xlu0 %v3701, 73
        %v3731 = vpop.permute.xlu0 %3730
        %3732 = vrot.lane.b32.xlu0 %v3702, 73
        %v3733 = vpop.permute.xlu0 %3732
        %3734 = vrot.lane.b32.xlu0 %v3703, 73
        %v3735 = vpop.permute.xlu0 %3734
        %3736 = vrot.lane.b32.xlu0 %v3704, 73
        %v3737 = vpop.permute.xlu0 %3736
        %3738 = vrot.lane.b32.xlu0 %v3705, 73
        %v3739 = vpop.permute.xlu0 %3738
        %3740 = vrot.lane.b32.xlu0 %v3706, 73
        %v3741 = vpop.permute.xlu0 %3740
        %3742 = vrot.lane.b32.xlu0 %v3707, 73
        %v3743 = vpop.permute.xlu0 %3742
        %v3744 = vrot.slane %v3721, 4
        %v3745 = vrot.slane %v3723, 4
        %v3746 = vrot.slane %v3725, 4
        %v3747 = vrot.slane %v3727, 4
        %v3748 = vrot.slane %v3729, 4
        %v3749 = vrot.slane %v3731, 4
        %v3750 = vrot.slane %v3733, 4
        %v3751 = vrot.slane %v3735, 4
        %v3752 = vrot.slane %v3737, 4
        %v3753 = vrot.slane %v3739, 4
        %v3754 = vrot.slane %v3741, 4
        %v3755 = vrot.slane %v3743, 4
        %v3756 = vsel %vm532, %v3744, %v3745
        %v3757 = vsel %vm534, %v3721, %v3756
        %v3758 = vsel %vm532, %v3745, %v3746
        %v3759 = vsel %vm534, %v3723, %v3758
        %v3760 = vsel %vm532, %v3747, %v3748
        %v3761 = vsel %vm534, %v3727, %v3760
        %v3762 = vsel %vm532, %v3748, %v3749
        %v3763 = vsel %vm534, %v3729, %v3762
        %v3764 = vsel %vm532, %v3750, %v3751
        %v3765 = vsel %vm534, %v3733, %v3764
        %v3766 = vsel %vm532, %v3751, %v3752
        %v3767 = vsel %vm534, %v3735, %v3766
        %v3768 = vsel %vm532, %v3753, %v3754
        %v3769 = vsel %vm534, %v3739, %v3768
        %v3770 = vsel %vm532, %v3754, %v3755
        %v3771 = vsel %vm534, %v3741, %v3770
        %3780 = vst [vmem:[#allocation3] sm:$0xff] %v3757
        %3781 = vst [vmem:[#allocation3 + $0x8] sm:$0xff] %v3759
        %3782 = vst [vmem:[#allocation3 + $0x10] sm:$0xff] %v3761
        %3783 = vst [vmem:[#allocation3 + $0x18] sm:$0xff] %v3763
        %3784 = vst [vmem:[#allocation3 + $0x20] sm:$0xff] %v3765
        %3785 = vst [vmem:[#allocation3 + $0x28] sm:$0xff] %v3767
        %3786 = vst [vmem:[#allocation3 + $0x30] sm:$0xff] %v3769
        %3787 = vst [vmem:[#allocation3 + $0x38] sm:$0xff] %v3771
        %v3788 = vld [vmem:[#allocation2] sm:$0xff]
        %v3789 = vld [vmem:[#allocation2 + $0x8] sm:$0xff]
        %v3790 = vld [vmem:[#allocation2 + $0x10] sm:$0xff]
        %v3791 = vld [vmem:[#allocation2 + $0x18] sm:$0xff]
        %v3792 = vld [vmem:[#allocation2 + $0x20] sm:$0xff]
        %v3793 = vld [vmem:[#allocation2 + $0x30] sm:$0xff]
        %v3794 = vld [vmem:[#allocation2 + $0x38] sm:$0xff]
        %v3795 = vld [vmem:[#allocation2 + $0x40] sm:$0xff]
        %v3796 = vld [vmem:[#allocation2 + $0x48] sm:$0xff]
        %v3797 = vld [vmem:[#allocation2 + $0x50] sm:$0xff]
        %v3798 = vld [vmem:[#allocation2 + $0x60] sm:$0xff]
        %v3799 = vld [vmem:[#allocation2 + $0x68] sm:$0xff]
        %v3800 = vld [vmem:[#allocation2 + $0x70] sm:$0xff]
        %v3801 = vld [vmem:[#allocation2 + $0x78] sm:$0xff]
        %v3802 = vld [vmem:[#allocation2 + $0x80] sm:$0xff]
        %v3803 = vld [vmem:[#allocation2 + $0x90] sm:$0xff]
        %v3804 = vld [vmem:[#allocation2 + $0x98] sm:$0xff]
        %v3805 = vld [vmem:[#allocation2 + $0xa0] sm:$0xff]
        %v3806 = vld [vmem:[#allocation2 + $0xa8] sm:$0xff]
        %v3807 = vld [vmem:[#allocation2 + $0xb0] sm:$0xff]
        %v3808 = vmul.f32 %v3788, %v569
        %v3809 = vmul.f32 %v3789, %v577
        %v3810 = vmul.f32 %v3790, %v578
        %v3811 = vmul.f32 %v3791, %v579
        %v3812 = vmul.f32 %v3792, %v575
        %v3813 = vmul.f32 %v3793, %v569
        %v3814 = vmul.f32 %v3794, %v577
        %v3815 = vmul.f32 %v3795, %v578
        %v3816 = vmul.f32 %v3796, %v579
        %v3817 = vmul.f32 %v3797, %v575
        %v3818 = vmul.f32 %v3798, %v569
        %v3819 = vmul.f32 %v3799, %v577
        %v3820 = vmul.f32 %v3800, %v578
        %v3821 = vmul.f32 %v3801, %v579
        %v3822 = vmul.f32 %v3802, %v575
        %v3823 = vmul.f32 %v3803, %v569
        %v3824 = vmul.f32 %v3804, %v577
        %v3825 = vmul.f32 %v3805, %v578
        %v3826 = vmul.f32 %v3806, %v579
        %v3827 = vmul.f32 %v3807, %v575
        %v3828 = vpack.c.bf16 %v3809, %v3808
        %v3829 = vpack.c.bf16 %v3811, %v3810
        %v3830 = vpack.c.bf16 %v3812, %v3812
        %v3831 = vpack.c.bf16 %v3814, %v3813
        %v3832 = vpack.c.bf16 %v3816, %v3815
        %v3833 = vpack.c.bf16 %v3817, %v3817
        %v3834 = vpack.c.bf16 %v3819, %v3818
        %v3835 = vpack.c.bf16 %v3821, %v3820
        %v3836 = vpack.c.bf16 %v3822, %v3822
        %v3837 = vpack.c.bf16 %v3824, %v3823
        %v3838 = vpack.c.bf16 %v3826, %v3825
        %v3839 = vpack.c.bf16 %v3827, %v3827
        %3852 = vrot.lane.b32.xlu0 %v3828, 72
        %v3853 = vpop.permute.xlu0 %3852
        %3854 = vrot.lane.b32.xlu0 %v3829, 72
        %v3855 = vpop.permute.xlu0 %3854
        %3856 = vrot.lane.b32.xlu0 %v3830, 72
        %v3857 = vpop.permute.xlu0 %3856
        %3858 = vrot.lane.b32.xlu0 %v3831, 72
        %v3859 = vpop.permute.xlu0 %3858
        %3860 = vrot.lane.b32.xlu0 %v3832, 72
        %v3861 = vpop.permute.xlu0 %3860
        %3862 = vrot.lane.b32.xlu0 %v3833, 72
        %v3863 = vpop.permute.xlu0 %3862
        %3864 = vrot.lane.b32.xlu0 %v3834, 72
        %v3865 = vpop.permute.xlu0 %3864
        %3866 = vrot.lane.b32.xlu0 %v3835, 72
        %v3867 = vpop.permute.xlu0 %3866
        %3868 = vrot.lane.b32.xlu0 %v3836, 72
        %v3869 = vpop.permute.xlu0 %3868
        %3870 = vrot.lane.b32.xlu0 %v3837, 72
        %v3871 = vpop.permute.xlu0 %3870
        %3872 = vrot.lane.b32.xlu0 %v3838, 72
        %v3873 = vpop.permute.xlu0 %3872
        %3874 = vrot.lane.b32.xlu0 %v3839, 72
        %v3875 = vpop.permute.xlu0 %3874
        %v3876 = vrot.slane %v3853, 4
        %v3877 = vrot.slane %v3855, 4
        %v3878 = vrot.slane %v3857, 4
        %v3879 = vrot.slane %v3859, 4
        %v3880 = vrot.slane %v3861, 4
        %v3881 = vrot.slane %v3863, 4
        %v3882 = vrot.slane %v3865, 4
        %v3883 = vrot.slane %v3867, 4
        %v3884 = vrot.slane %v3869, 4
        %v3885 = vrot.slane %v3871, 4
        %v3886 = vrot.slane %v3873, 4
        %v3887 = vrot.slane %v3875, 4
        %v3888 = vsel %vm532, %v3876, %v3877
        %v3889 = vsel %vm626, %v3853, %v3888
        %v3890 = vsel %vm532, %v3877, %v3878
        %v3891 = vsel %vm626, %v3855, %v3890
        %v3892 = vsel %vm532, %v3879, %v3880
        %v3893 = vsel %vm626, %v3859, %v3892
        %v3894 = vsel %vm532, %v3880, %v3881
        %v3895 = vsel %vm626, %v3861, %v3894
        %v3896 = vsel %vm532, %v3882, %v3883
        %v3897 = vsel %vm626, %v3865, %v3896
        %v3898 = vsel %vm532, %v3883, %v3884
        %v3899 = vsel %vm626, %v3867, %v3898
        %v3900 = vsel %vm532, %v3885, %v3886
        %v3901 = vsel %vm626, %v3871, %v3900
        %v3902 = vsel %vm532, %v3886, %v3887
        %v3903 = vsel %vm626, %v3873, %v3902
        %3912 = vst [vmem:[#allocation3 + $0x40] sm:$0xff] %v3889
        %3913 = vst [vmem:[#allocation3 + $0x48] sm:$0xff] %v3891
        %3914 = vst [vmem:[#allocation3 + $0x50] sm:$0xff] %v3893
        %3915 = vst [vmem:[#allocation3 + $0x58] sm:$0xff] %v3895
        %3916 = vst [vmem:[#allocation3 + $0x60] sm:$0xff] %v3897
        %3917 = vst [vmem:[#allocation3 + $0x68] sm:$0xff] %v3899
        %3918 = vst [vmem:[#allocation3 + $0x70] sm:$0xff] %v3901
        %3919 = vst [vmem:[#allocation3 + $0x78] sm:$0xff] %v3903
        %v3920 = vld [vmem:[#allocation2] sm:$0xff]
        %v3921 = vld [vmem:[#allocation2 + $0x8] sm:$0xff]
        %v3922 = vld [vmem:[#allocation2 + $0x10] sm:$0xff]
        %v3923 = vld [vmem:[#allocation2 + $0x18] sm:$0xff]
        %v3924 = vld [vmem:[#allocation2 + $0x20] sm:$0xff]
        %v3925 = vld [vmem:[#allocation2 + $0x30] sm:$0xff]
        %v3926 = vld [vmem:[#allocation2 + $0x38] sm:$0xff]
        %v3927 = vld [vmem:[#allocation2 + $0x40] sm:$0xff]
        %v3928 = vld [vmem:[#allocation2 + $0x48] sm:$0xff]
        %v3929 = vld [vmem:[#allocation2 + $0x50] sm:$0xff]
        %v3930 = vld [vmem:[#allocation2 + $0x60] sm:$0xff]
        %v3931 = vld [vmem:[#allocation2 + $0x68] sm:$0xff]
        %v3932 = vld [vmem:[#allocation2 + $0x70] sm:$0xff]
        %v3933 = vld [vmem:[#allocation2 + $0x78] sm:$0xff]
        %v3934 = vld [vmem:[#allocation2 + $0x80] sm:$0xff]
        %v3935 = vld [vmem:[#allocation2 + $0x90] sm:$0xff]
        %v3936 = vld [vmem:[#allocation2 + $0x98] sm:$0xff]
        %v3937 = vld [vmem:[#allocation2 + $0xa0] sm:$0xff]
        %v3938 = vld [vmem:[#allocation2 + $0xa8] sm:$0xff]
        %v3939 = vld [vmem:[#allocation2 + $0xb0] sm:$0xff]
        %v3940 = vmul.f32 %v3920, %v661
        %v3941 = vmul.f32 %v3921, %v669
        %v3942 = vmul.f32 %v3922, %v670
        %v3943 = vmul.f32 %v3923, %v671
        %v3944 = vmul.f32 %v3924, %v667
        %v3945 = vmul.f32 %v3925, %v661
        %v3946 = vmul.f32 %v3926, %v669
        %v3947 = vmul.f32 %v3927, %v670
        %v3948 = vmul.f32 %v3928, %v671
        %v3949 = vmul.f32 %v3929, %v667
        %v3950 = vmul.f32 %v3930, %v661
        %v3951 = vmul.f32 %v3931, %v669
        %v3952 = vmul.f32 %v3932, %v670
        %v3953 = vmul.f32 %v3933, %v671
        %v3954 = vmul.f32 %v3934, %v667
        %v3955 = vmul.f32 %v3935, %v661
        %v3956 = vmul.f32 %v3936, %v669
        %v3957 = vmul.f32 %v3937, %v670
        %v3958 = vmul.f32 %v3938, %v671
        %v3959 = vmul.f32 %v3939, %v667
        %v3960 = vpack.c.bf16 %v3941, %v3940
        %v3961 = vpack.c.bf16 %v3943, %v3942
        %v3962 = vpack.c.bf16 %v3944, %v3944
        %v3963 = vpack.c.bf16 %v3946, %v3945
        %v3964 = vpack.c.bf16 %v3948, %v3947
        %v3965 = vpack.c.bf16 %v3949, %v3949
        %v3966 = vpack.c.bf16 %v3951, %v3950
        %v3967 = vpack.c.bf16 %v3953, %v3952
        %v3968 = vpack.c.bf16 %v3954, %v3954
        %v3969 = vpack.c.bf16 %v3956, %v3955
        %v3970 = vpack.c.bf16 %v3958, %v3957
        %v3971 = vpack.c.bf16 %v3959, %v3959
        %3984 = vrot.lane.b32.xlu0 %v3960, 71
        %v3985 = vpop.permute.xlu0 %3984
        %3986 = vrot.lane.b32.xlu0 %v3961, 71
        %v3987 = vpop.permute.xlu0 %3986
        %3988 = vrot.lane.b32.xlu0 %v3962, 71
        %v3989 = vpop.permute.xlu0 %3988
        %3990 = vrot.lane.b32.xlu0 %v3963, 71
        %v3991 = vpop.permute.xlu0 %3990
        %3992 = vrot.lane.b32.xlu0 %v3964, 71
        %v3993 = vpop.permute.xlu0 %3992
        %3994 = vrot.lane.b32.xlu0 %v3965, 71
        %v3995 = vpop.permute.xlu0 %3994
        %3996 = vrot.lane.b32.xlu0 %v3966, 71
        %v3997 = vpop.permute.xlu0 %3996
        %3998 = vrot.lane.b32.xlu0 %v3967, 71
        %v3999 = vpop.permute.xlu0 %3998
        %4000 = vrot.lane.b32.xlu0 %v3968, 71
        %v4001 = vpop.permute.xlu0 %4000
        %4002 = vrot.lane.b32.xlu0 %v3969, 71
        %v4003 = vpop.permute.xlu0 %4002
        %4004 = vrot.lane.b32.xlu0 %v3970, 71
        %v4005 = vpop.permute.xlu0 %4004
        %4006 = vrot.lane.b32.xlu0 %v3971, 71
        %v4007 = vpop.permute.xlu0 %4006
        %v4008 = vrot.slane %v3985, 4
        %v4009 = vrot.slane %v3987, 4
        %v4010 = vrot.slane %v3989, 4
        %v4011 = vrot.slane %v3991, 4
        %v4012 = vrot.slane %v3993, 4
        %v4013 = vrot.slane %v3995, 4
        %v4014 = vrot.slane %v3997, 4
        %v4015 = vrot.slane %v3999, 4
        %v4016 = vrot.slane %v4001, 4
        %v4017 = vrot.slane %v4003, 4
        %v4018 = vrot.slane %v4005, 4
        %v4019 = vrot.slane %v4007, 4
        %v4020 = vsel %vm532, %v4008, %v4009
        %v4021 = vsel %vm718, %v3985, %v4020
        %v4022 = vsel %vm532, %v4009, %v4010
        %v4023 = vsel %vm718, %v3987, %v4022
        %v4024 = vsel %vm532, %v4011, %v4012
        %v4025 = vsel %vm718, %v3991, %v4024
        %v4026 = vsel %vm532, %v4012, %v4013
        %v4027 = vsel %vm718, %v3993, %v4026
        %v4028 = vsel %vm532, %v4014, %v4015
        %v4029 = vsel %vm718, %v3997, %v4028
        %v4030 = vsel %vm532, %v4015, %v4016
        %v4031 = vsel %vm718, %v3999, %v4030
        %v4032 = vsel %vm532, %v4017, %v4018
        %v4033 = vsel %vm718, %v4003, %v4032
        %v4034 = vsel %vm532, %v4018, %v4019
        %v4035 = vsel %vm718, %v4005, %v4034
        %4044 = vst [vmem:[#allocation3 + $0x80] sm:$0xff] %v4021
        %4045 = vst [vmem:[#allocation3 + $0x88] sm:$0xff] %v4023
        %4046 = vst [vmem:[#allocation3 + $0x90] sm:$0xff] %v4025
        %4047 = vst [vmem:[#allocation3 + $0x98] sm:$0xff] %v4027
        %4048 = vst [vmem:[#allocation3 + $0xa0] sm:$0xff] %v4029
        %4049 = vst [vmem:[#allocation3 + $0xa8] sm:$0xff] %v4031
        %4050 = vst [vmem:[#allocation3 + $0xb0] sm:$0xff] %v4033
        %4051 = vst [vmem:[#allocation3 + $0xb8] sm:$0xff] %v4035
        %v4052 = vld [vmem:[#allocation2] sm:$0xff]
        %v4053 = vld [vmem:[#allocation2 + $0x8] sm:$0xff]
        %v4054 = vld [vmem:[#allocation2 + $0x10] sm:$0xff]
        %v4055 = vld [vmem:[#allocation2 + $0x18] sm:$0xff]
        %v4056 = vld [vmem:[#allocation2 + $0x20] sm:$0xff]
        %v4057 = vld [vmem:[#allocation2 + $0x30] sm:$0xff]
        %v4058 = vld [vmem:[#allocation2 + $0x38] sm:$0xff]
        %v4059 = vld [vmem:[#allocation2 + $0x40] sm:$0xff]
        %v4060 = vld [vmem:[#allocation2 + $0x48] sm:$0xff]
        %v4061 = vld [vmem:[#allocation2 + $0x50] sm:$0xff]
        %v4062 = vld [vmem:[#allocation2 + $0x60] sm:$0xff]
        %v4063 = vld [vmem:[#allocation2 + $0x68] sm:$0xff]
        %v4064 = vld [vmem:[#allocation2 + $0x70] sm:$0xff]
        %v4065 = vld [vmem:[#allocation2 + $0x78] sm:$0xff]
        %v4066 = vld [vmem:[#allocation2 + $0x80] sm:$0xff]
        %v4067 = vld [vmem:[#allocation2 + $0x90] sm:$0xff]
        %v4068 = vld [vmem:[#allocation2 + $0x98] sm:$0xff]
        %v4069 = vld [vmem:[#allocation2 + $0xa0] sm:$0xff]
        %v4070 = vld [vmem:[#allocation2 + $0xa8] sm:$0xff]
        %v4071 = vld [vmem:[#allocation2 + $0xb0] sm:$0xff]
        %v4072 = vmul.f32 %v4052, %v753
        %v4073 = vmul.f32 %v4053, %v761
        %v4074 = vmul.f32 %v4054, %v762
        %v4075 = vmul.f32 %v4055, %v763
        %v4076 = vmul.f32 %v4056, %v759
        %v4077 = vmul.f32 %v4057, %v753
        %v4078 = vmul.f32 %v4058, %v761
        %v4079 = vmul.f32 %v4059, %v762
        %v4080 = vmul.f32 %v4060, %v763
        %v4081 = vmul.f32 %v4061, %v759
        %v4082 = vmul.f32 %v4062, %v753
        %v4083 = vmul.f32 %v4063, %v761
        %v4084 = vmul.f32 %v4064, %v762
        %v4085 = vmul.f32 %v4065, %v763
        %v4086 = vmul.f32 %v4066, %v759
        %v4087 = vmul.f32 %v4067, %v753
        %v4088 = vmul.f32 %v4068, %v761
        %v4089 = vmul.f32 %v4069, %v762
        %v4090 = vmul.f32 %v4070, %v763
        %v4091 = vmul.f32 %v4071, %v759
        %v4092 = vpack.c.bf16 %v4073, %v4072
        %v4093 = vpack.c.bf16 %v4075, %v4074
        %v4094 = vpack.c.bf16 %v4076, %v4076
        %v4095 = vpack.c.bf16 %v4078, %v4077
        %v4096 = vpack.c.bf16 %v4080, %v4079
        %v4097 = vpack.c.bf16 %v4081, %v4081
        %v4098 = vpack.c.bf16 %v4083, %v4082
        %v4099 = vpack.c.bf16 %v4085, %v4084
        %v4100 = vpack.c.bf16 %v4086, %v4086
        %v4101 = vpack.c.bf16 %v4088, %v4087
        %v4102 = vpack.c.bf16 %v4090, %v4089
        %v4103 = vpack.c.bf16 %v4091, %v4091
        %4116 = vrot.lane.b32.xlu0 %v4092, 65
        %v4117 = vpop.permute.xlu0 %4116
        %4118 = vrot.lane.b32.xlu0 %v4093, 65
        %v4119 = vpop.permute.xlu0 %4118
        %4120 = vrot.lane.b32.xlu0 %v4094, 65
        %v4121 = vpop.permute.xlu0 %4120
        %4122 = vrot.lane.b32.xlu0 %v4095, 65
        %v4123 = vpop.permute.xlu0 %4122
        %4124 = vrot.lane.b32.xlu0 %v4096, 65
        %v4125 = vpop.permute.xlu0 %4124
        %4126 = vrot.lane.b32.xlu0 %v4097, 65
        %v4127 = vpop.permute.xlu0 %4126
        %4128 = vrot.lane.b32.xlu0 %v4098, 65
        %v4129 = vpop.permute.xlu0 %4128
        %4130 = vrot.lane.b32.xlu0 %v4099, 65
        %v4131 = vpop.permute.xlu0 %4130
        %4132 = vrot.lane.b32.xlu0 %v4100, 65
        %v4133 = vpop.permute.xlu0 %4132
        %4134 = vrot.lane.b32.xlu0 %v4101, 65
        %v4135 = vpop.permute.xlu0 %4134
        %4136 = vrot.lane.b32.xlu0 %v4102, 65
        %v4137 = vpop.permute.xlu0 %4136
        %4138 = vrot.lane.b32.xlu0 %v4103, 65
        %v4139 = vpop.permute.xlu0 %4138
        %v4140 = vrot.slane %v4117, 4
        %v4141 = vrot.slane %v4119, 4
        %v4142 = vrot.slane %v4121, 4
        %v4143 = vrot.slane %v4123, 4
        %v4144 = vrot.slane %v4125, 4
        %v4145 = vrot.slane %v4127, 4
        %v4146 = vrot.slane %v4129, 4
        %v4147 = vrot.slane %v4131, 4
        %v4148 = vrot.slane %v4133, 4
        %v4149 = vrot.slane %v4135, 4
        %v4150 = vrot.slane %v4137, 4
        %v4151 = vrot.slane %v4139, 4
        %v4152 = vsel %vm532, %v4140, %v4141
        %v4153 = vsel %vm810, %v4117, %v4152
        %v4154 = vsel %vm532, %v4141, %v4142
        %v4155 = vsel %vm810, %v4119, %v4154
        %v4156 = vsel %vm532, %v4143, %v4144
        %v4157 = vsel %vm810, %v4123, %v4156
        %v4158 = vsel %vm532, %v4144, %v4145
        %v4159 = vsel %vm810, %v4125, %v4158
        %v4160 = vsel %vm532, %v4146, %v4147
        %v4161 = vsel %vm810, %v4129, %v4160
        %v4162 = vsel %vm532, %v4147, %v4148
        %v4163 = vsel %vm810, %v4131, %v4162
        %v4164 = vsel %vm532, %v4149, %v4150
        %v4165 = vsel %vm810, %v4135, %v4164
        %v4166 = vsel %vm532, %v4150, %v4151
        %v4167 = vsel %vm810, %v4137, %v4166
        %4176 = vst [vmem:[#allocation3 + $0xc0] sm:$0xff] %v4153
        %4177 = vst [vmem:[#allocation3 + $0xc8] sm:$0xff] %v4155
        %4178 = vst [vmem:[#allocation3 + $0xd0] sm:$0xff] %v4157
        %4179 = vst [vmem:[#allocation3 + $0xd8] sm:$0xff] %v4159
        %4180 = vst [vmem:[#allocation3 + $0xe0] sm:$0xff] %v4161
        %4181 = vst [vmem:[#allocation3 + $0xe8] sm:$0xff] %v4163
        %4182 = vst [vmem:[#allocation3 + $0xf0] sm:$0xff] %v4165
        %4183 = vst [vmem:[#allocation3 + $0xf8] sm:$0xff] %v4167
        %v4184 = vld [vmem:[#allocation2] sm:$0xff]
        %v4185 = vld [vmem:[#allocation2 + $0x8] sm:$0xff]
        %v4186 = vld [vmem:[#allocation2 + $0x10] sm:$0xff]
        %v4187 = vld [vmem:[#allocation2 + $0x18] sm:$0xff]
        %v4188 = vld [vmem:[#allocation2 + $0x20] sm:$0xff]
        %v4189 = vld [vmem:[#allocation2 + $0x30] sm:$0xff]
        %v4190 = vld [vmem:[#allocation2 + $0x38] sm:$0xff]
        %v4191 = vld [vmem:[#allocation2 + $0x40] sm:$0xff]
        %v4192 = vld [vmem:[#allocation2 + $0x48] sm:$0xff]
        %v4193 = vld [vmem:[#allocation2 + $0x50] sm:$0xff]
        %v4194 = vld [vmem:[#allocation2 + $0x60] sm:$0xff]
        %v4195 = vld [vmem:[#allocation2 + $0x68] sm:$0xff]
        %v4196 = vld [vmem:[#allocation2 + $0x70] sm:$0xff]
        %v4197 = vld [vmem:[#allocation2 + $0x78] sm:$0xff]
        %v4198 = vld [vmem:[#allocation2 + $0x80] sm:$0xff]
        %v4199 = vld [vmem:[#allocation2 + $0x90] sm:$0xff]
        %v4200 = vld [vmem:[#allocation2 + $0x98] sm:$0xff]
        %v4201 = vld [vmem:[#allocation2 + $0xa0] sm:$0xff]
        %v4202 = vld [vmem:[#allocation2 + $0xa8] sm:$0xff]
        %v4203 = vld [vmem:[#allocation2 + $0xb0] sm:$0xff]
        %v4204 = vpack.c.bf16 %v4185, %v4184
        %v4205 = vpack.c.bf16 %v4187, %v4186
        %v4206 = vpack.c.bf16 %v4188, %v4188
        %v4207 = vpack.c.bf16 %v4190, %v4189
        %v4208 = vpack.c.bf16 %v4192, %v4191
        %v4209 = vpack.c.bf16 %v4193, %v4193
        %v4210 = vpack.c.bf16 %v4195, %v4194
        %v4211 = vpack.c.bf16 %v4197, %v4196
        %v4212 = vpack.c.bf16 %v4198, %v4198
        %v4213 = vpack.c.bf16 %v4200, %v4199
        %v4214 = vpack.c.bf16 %v4202, %v4201
        %v4215 = vpack.c.bf16 %v4203, %v4203
        %4228 = vrot.lane.b32.xlu0 %v4204, 64
        %v4229 = vpop.permute.xlu0 %4228
        %4230 = vrot.lane.b32.xlu0 %v4205, 64
        %v4231 = vpop.permute.xlu0 %4230
        %4232 = vrot.lane.b32.xlu0 %v4206, 64
        %v4233 = vpop.permute.xlu0 %4232
        %4234 = vrot.lane.b32.xlu0 %v4207, 64
        %v4235 = vpop.permute.xlu0 %4234
        %4236 = vrot.lane.b32.xlu0 %v4208, 64
        %v4237 = vpop.permute.xlu0 %4236
        %4238 = vrot.lane.b32.xlu0 %v4209, 64
        %v4239 = vpop.permute.xlu0 %4238
        %4240 = vrot.lane.b32.xlu0 %v4210, 64
        %v4241 = vpop.permute.xlu0 %4240
        %4242 = vrot.lane.b32.xlu0 %v4211, 64
        %v4243 = vpop.permute.xlu0 %4242
        %4244 = vrot.lane.b32.xlu0 %v4212, 64
        %v4245 = vpop.permute.xlu0 %4244
        %4246 = vrot.lane.b32.xlu0 %v4213, 64
        %v4247 = vpop.permute.xlu0 %4246
        %4248 = vrot.lane.b32.xlu0 %v4214, 64
        %v4249 = vpop.permute.xlu0 %4248
        %4250 = vrot.lane.b32.xlu0 %v4215, 64
        %v4251 = vpop.permute.xlu0 %4250
        %v4252 = vrot.slane %v4229, 4
        %v4253 = vrot.slane %v4231, 4
        %v4254 = vrot.slane %v4233, 4
        %v4255 = vrot.slane %v4235, 4
        %v4256 = vrot.slane %v4237, 4
        %v4257 = vrot.slane %v4239, 4
        %v4258 = vrot.slane %v4241, 4
        %v4259 = vrot.slane %v4243, 4
        %v4260 = vrot.slane %v4245, 4
        %v4261 = vrot.slane %v4247, 4
        %v4262 = vrot.slane %v4249, 4
        %v4263 = vrot.slane %v4251, 4
        %v4264 = vsel %vm532, %v4252, %v4253
        %v4265 = vsel %vm867, %v4229, %v4264
        %v4266 = vsel %vm532, %v4253, %v4254
        %v4267 = vsel %vm867, %v4231, %v4266
        %v4268 = vsel %vm532, %v4255, %v4256
        %v4269 = vsel %vm867, %v4235, %v4268
        %v4270 = vsel %vm532, %v4256, %v4257
        %v4271 = vsel %vm867, %v4237, %v4270
        %v4272 = vsel %vm532, %v4258, %v4259
        %v4273 = vsel %vm867, %v4241, %v4272
        %v4274 = vsel %vm532, %v4259, %v4260
        %v4275 = vsel %vm867, %v4243, %v4274
        %v4276 = vsel %vm532, %v4261, %v4262
        %v4277 = vsel %vm867, %v4247, %v4276
        %v4278 = vsel %vm532, %v4262, %v4263
        %v4279 = vsel %vm867, %v4249, %v4278
        %4288 = vst [vmem:[#allocation3 + $0x100] sm:$0xff] %v4265
        %4289 = vst [vmem:[#allocation3 + $0x108] sm:$0xff] %v4267
        %4290 = vst [vmem:[#allocation3 + $0x110] sm:$0xff] %v4269
        %4291 = vst [vmem:[#allocation3 + $0x118] sm:$0xff] %v4271
        %4292 = vst [vmem:[#allocation3 + $0x120] sm:$0xff] %v4273
        %4293 = vst [vmem:[#allocation3 + $0x128] sm:$0xff] %v4275
        %4294 = vst [vmem:[#allocation3 + $0x130] sm:$0xff] %v4277
        %4295 = vst [vmem:[#allocation3 + $0x138] sm:$0xff] %v4279
        %v4296 = vld [vmem:[#allocation2] sm:$0xff]
        %v4297 = vld [vmem:[#allocation2 + $0x8] sm:$0xff]
        %v4298 = vld [vmem:[#allocation2 + $0x10] sm:$0xff]
        %v4299 = vld [vmem:[#allocation2 + $0x18] sm:$0xff]
        %v4300 = vld [vmem:[#allocation2 + $0x20] sm:$0xff]
        %v4301 = vld [vmem:[#allocation2 + $0x30] sm:$0xff]
        %v4302 = vld [vmem:[#allocation2 + $0x38] sm:$0xff]
        %v4303 = vld [vmem:[#allocation2 + $0x40] sm:$0xff]
        %v4304 = vld [vmem:[#allocation2 + $0x48] sm:$0xff]
        %v4305 = vld [vmem:[#allocation2 + $0x50] sm:$0xff]
        %v4306 = vld [vmem:[#allocation2 + $0x60] sm:$0xff]
        %v4307 = vld [vmem:[#allocation2 + $0x68] sm:$0xff]
        %v4308 = vld [vmem:[#allocation2 + $0x70] sm:$0xff]
        %v4309 = vld [vmem:[#allocation2 + $0x78] sm:$0xff]
        %v4310 = vld [vmem:[#allocation2 + $0x80] sm:$0xff]
        %v4311 = vld [vmem:[#allocation2 + $0x90] sm:$0xff]
        %v4312 = vld [vmem:[#allocation2 + $0x98] sm:$0xff]
        %v4313 = vld [vmem:[#allocation2 + $0xa0] sm:$0xff]
        %v4314 = vld [vmem:[#allocation2 + $0xa8] sm:$0xff]
        %v4315 = vld [vmem:[#allocation2 + $0xb0] sm:$0xff]
        %v4316 = vmul.f32 %v4296, %v902
        %v4317 = vmul.f32 %v4297, %v910
        %v4318 = vmul.f32 %v4298, %v911
        %v4319 = vmul.f32 %v4299, %v912
        %v4320 = vmul.f32 %v4300, %v908
        %v4321 = vmul.f32 %v4301, %v902
        %v4322 = vmul.f32 %v4302, %v910
        %v4323 = vmul.f32 %v4303, %v911
        %v4324 = vmul.f32 %v4304, %v912
        %v4325 = vmul.f32 %v4305, %v908
        %v4326 = vmul.f32 %v4306, %v902
        %v4327 = vmul.f32 %v4307, %v910
        %v4328 = vmul.f32 %v4308, %v911
        %v4329 = vmul.f32 %v4309, %v912
        %v4330 = vmul.f32 %v4310, %v908
        %v4331 = vmul.f32 %v4311, %v902
        %v4332 = vmul.f32 %v4312, %v910
        %v4333 = vmul.f32 %v4313, %v911
        %v4334 = vmul.f32 %v4314, %v912
        %v4335 = vmul.f32 %v4315, %v908
        %v4336 = vpack.c.bf16 %v4317, %v4316
        %v4337 = vpack.c.bf16 %v4319, %v4318
        %v4338 = vpack.c.bf16 %v4320, %v4320
        %v4339 = vpack.c.bf16 %v4322, %v4321
        %v4340 = vpack.c.bf16 %v4324, %v4323
        %v4341 = vpack.c.bf16 %v4325, %v4325
        %v4342 = vpack.c.bf16 %v4327, %v4326
        %v4343 = vpack.c.bf16 %v4329, %v4328
        %v4344 = vpack.c.bf16 %v4330, %v4330
        %v4345 = vpack.c.bf16 %v4332, %v4331
        %v4346 = vpack.c.bf16 %v4334, %v4333
        %v4347 = vpack.c.bf16 %v4335, %v4335
        %4360 = vrot.lane.b32.xlu0 %v4336, 63
        %v4361 = vpop.permute.xlu0 %4360
        %4362 = vrot.lane.b32.xlu0 %v4337, 63
        %v4363 = vpop.permute.xlu0 %4362
        %4364 = vrot.lane.b32.xlu0 %v4338, 63
        %v4365 = vpop.permute.xlu0 %4364
        %4366 = vrot.lane.b32.xlu0 %v4339, 63
        %v4367 = vpop.permute.xlu0 %4366
        %4368 = vrot.lane.b32.xlu0 %v4340, 63
        %v4369 = vpop.permute.xlu0 %4368
        %4370 = vrot.lane.b32.xlu0 %v4341, 63
        %v4371 = vpop.permute.xlu0 %4370
        %4372 = vrot.lane.b32.xlu0 %v4342, 63
        %v4373 = vpop.permute.xlu0 %4372
        %4374 = vrot.lane.b32.xlu0 %v4343, 63
        %v4375 = vpop.permute.xlu0 %4374
        %4376 = vrot.lane.b32.xlu0 %v4344, 63
        %v4377 = vpop.permute.xlu0 %4376
        %4378 = vrot.lane.b32.xlu0 %v4345, 63
        %v4379 = vpop.permute.xlu0 %4378
        %4380 = vrot.lane.b32.xlu0 %v4346, 63
        %v4381 = vpop.permute.xlu0 %4380
        %4382 = vrot.lane.b32.xlu0 %v4347, 63
        %v4383 = vpop.permute.xlu0 %4382
        %v4384 = vrot.slane %v4361, 4
        %v4385 = vrot.slane %v4363, 4
        %v4386 = vrot.slane %v4365, 4
        %v4387 = vrot.slane %v4367, 4
        %v4388 = vrot.slane %v4369, 4
        %v4389 = vrot.slane %v4371, 4
        %v4390 = vrot.slane %v4373, 4
        %v4391 = vrot.slane %v4375, 4
        %v4392 = vrot.slane %v4377, 4
        %v4393 = vrot.slane %v4379, 4
        %v4394 = vrot.slane %v4381, 4
        %v4395 = vrot.slane %v4383, 4
        %v4396 = vsel %vm532, %v4384, %v4385
        %v4397 = vsel %vm959, %v4361, %v4396
        %v4398 = vsel %vm532, %v4385, %v4386
        %v4399 = vsel %vm959, %v4363, %v4398
        %v4400 = vsel %vm532, %v4387, %v4388
        %v4401 = vsel %vm959, %v4367, %v4400
        %v4402 = vsel %vm532, %v4388, %v4389
        %v4403 = vsel %vm959, %v4369, %v4402
        %v4404 = vsel %vm532, %v4390, %v4391
        %v4405 = vsel %vm959, %v4373, %v4404
        %v4406 = vsel %vm532, %v4391, %v4392
        %v4407 = vsel %vm959, %v4375, %v4406
        %v4408 = vsel %vm532, %v4393, %v4394
        %v4409 = vsel %vm959, %v4379, %v4408
        %v4410 = vsel %vm532, %v4394, %v4395
        %v4411 = vsel %vm959, %v4381, %v4410
        %4420 = vst [vmem:[#allocation3 + $0x140] sm:$0xff] %v4397
        %4421 = vst [vmem:[#allocation3 + $0x148] sm:$0xff] %v4399
        %4422 = vst [vmem:[#allocation3 + $0x150] sm:$0xff] %v4401
        %4423 = vst [vmem:[#allocation3 + $0x158] sm:$0xff] %v4403
        %4424 = vst [vmem:[#allocation3 + $0x160] sm:$0xff] %v4405
        %4425 = vst [vmem:[#allocation3 + $0x168] sm:$0xff] %v4407
        %4426 = vst [vmem:[#allocation3 + $0x170] sm:$0xff] %v4409
        %4427 = vst [vmem:[#allocation3 + $0x178] sm:$0xff] %v4411
        %v4428 = vld [vmem:[#allocation2] sm:$0xff]
        %v4429 = vld [vmem:[#allocation2 + $0x8] sm:$0xff]
        %v4430 = vld [vmem:[#allocation2 + $0x10] sm:$0xff]
        %v4431 = vld [vmem:[#allocation2 + $0x18] sm:$0xff]
        %v4432 = vld [vmem:[#allocation2 + $0x20] sm:$0xff]
        %v4433 = vld [vmem:[#allocation2 + $0x30] sm:$0xff]
        %v4434 = vld [vmem:[#allocation2 + $0x38] sm:$0xff]
        %v4435 = vld [vmem:[#allocation2 + $0x40] sm:$0xff]
        %v4436 = vld [vmem:[#allocation2 + $0x48] sm:$0xff]
        %v4437 = vld [vmem:[#allocation2 + $0x50] sm:$0xff]
        %v4438 = vld [vmem:[#allocation2 + $0x60] sm:$0xff]
        %v4439 = vld [vmem:[#allocation2 + $0x68] sm:$0xff]
        %v4440 = vld [vmem:[#allocation2 + $0x70] sm:$0xff]
        %v4441 = vld [vmem:[#allocation2 + $0x78] sm:$0xff]
        %v4442 = vld [vmem:[#allocation2 + $0x80] sm:$0xff]
        %v4443 = vld [vmem:[#allocation2 + $0x90] sm:$0xff]
        %v4444 = vld [vmem:[#allocation2 + $0x98] sm:$0xff]
        %v4445 = vld [vmem:[#allocation2 + $0xa0] sm:$0xff]
        %v4446 = vld [vmem:[#allocation2 + $0xa8] sm:$0xff]
        %v4447 = vld [vmem:[#allocation2 + $0xb0] sm:$0xff]
        %v4448 = vmul.f32 %v4428, %v994
        %v4449 = vmul.f32 %v4429, %v1002
        %v4450 = vmul.f32 %v4430, %v1003
        %v4451 = vmul.f32 %v4431, %v1004
        %v4452 = vmul.f32 %v4432, %v1000
        %v4453 = vmul.f32 %v4433, %v994
        %v4454 = vmul.f32 %v4434, %v1002
        %v4455 = vmul.f32 %v4435, %v1003
        %v4456 = vmul.f32 %v4436, %v1004
        %v4457 = vmul.f32 %v4437, %v1000
        %v4458 = vmul.f32 %v4438, %v994
        %v4459 = vmul.f32 %v4439, %v1002
        %v4460 = vmul.f32 %v4440, %v1003
        %v4461 = vmul.f32 %v4441, %v1004
        %v4462 = vmul.f32 %v4442, %v1000
        %v4463 = vmul.f32 %v4443, %v994
        %v4464 = vmul.f32 %v4444, %v1002
        %v4465 = vmul.f32 %v4445, %v1003
        %v4466 = vmul.f32 %v4446, %v1004
        %v4467 = vmul.f32 %v4447, %v1000
        %v4468 = vpack.c.bf16 %v4449, %v4448
        %v4469 = vpack.c.bf16 %v4451, %v4450
        %v4470 = vpack.c.bf16 %v4452, %v4452
        %v4471 = vpack.c.bf16 %v4454, %v4453
        %v4472 = vpack.c.bf16 %v4456, %v4455
        %v4473 = vpack.c.bf16 %v4457, %v4457
        %v4474 = vpack.c.bf16 %v4459, %v4458
        %v4475 = vpack.c.bf16 %v4461, %v4460
        %v4476 = vpack.c.bf16 %v4462, %v4462
        %v4477 = vpack.c.bf16 %v4464, %v4463
        %v4478 = vpack.c.bf16 %v4466, %v4465
        %v4479 = vpack.c.bf16 %v4467, %v4467
        %4492 = vrot.lane.b32.xlu0 %v4468, 57
        %v4493 = vpop.permute.xlu0 %4492
        %4494 = vrot.lane.b32.xlu0 %v4469, 57
        %v4495 = vpop.permute.xlu0 %4494
        %4496 = vrot.lane.b32.xlu0 %v4470, 57
        %v4497 = vpop.permute.xlu0 %4496
        %4498 = vrot.lane.b32.xlu0 %v4471, 57
        %v4499 = vpop.permute.xlu0 %4498
        %4500 = vrot.lane.b32.xlu0 %v4472, 57
        %v4501 = vpop.permute.xlu0 %4500
        %4502 = vrot.lane.b32.xlu0 %v4473, 57
        %v4503 = vpop.permute.xlu0 %4502
        %4504 = vrot.lane.b32.xlu0 %v4474, 57
        %v4505 = vpop.permute.xlu0 %4504
        %4506 = vrot.lane.b32.xlu0 %v4475, 57
        %v4507 = vpop.permute.xlu0 %4506
        %4508 = vrot.lane.b32.xlu0 %v4476, 57
        %v4509 = vpop.permute.xlu0 %4508
        %4510 = vrot.lane.b32.xlu0 %v4477, 57
        %v4511 = vpop.permute.xlu0 %4510
        %4512 = vrot.lane.b32.xlu0 %v4478, 57
        %v4513 = vpop.permute.xlu0 %4512
        %4514 = vrot.lane.b32.xlu0 %v4479, 57
        %v4515 = vpop.permute.xlu0 %4514
        %v4516 = vrot.slane %v4493, 4
        %v4517 = vrot.slane %v4495, 4
        %v4518 = vrot.slane %v4497, 4
        %v4519 = vrot.slane %v4499, 4
        %v4520 = vrot.slane %v4501, 4
        %v4521 = vrot.slane %v4503, 4
        %v4522 = vrot.slane %v4505, 4
        %v4523 = vrot.slane %v4507, 4
        %v4524 = vrot.slane %v4509, 4
        %v4525 = vrot.slane %v4511, 4
        %v4526 = vrot.slane %v4513, 4
        %v4527 = vrot.slane %v4515, 4
        %v4528 = vsel %vm532, %v4516, %v4517
        %v4529 = vsel %vm1051, %v4493, %v4528
        %v4530 = vsel %vm532, %v4517, %v4518
        %v4531 = vsel %vm1051, %v4495, %v4530
        %v4532 = vsel %vm532, %v4519, %v4520
        %v4533 = vsel %vm1051, %v4499, %v4532
        %v4534 = vsel %vm532, %v4520, %v4521
        %v4535 = vsel %vm1051, %v4501, %v4534
        %v4536 = vsel %vm532, %v4522, %v4523
        %v4537 = vsel %vm1051, %v4505, %v4536
        %v4538 = vsel %vm532, %v4523, %v4524
        %v4539 = vsel %vm1051, %v4507, %v4538
        %v4540 = vsel %vm532, %v4525, %v4526
        %v4541 = vsel %vm1051, %v4511, %v4540
        %v4542 = vsel %vm532, %v4526, %v4527
        %v4543 = vsel %vm1051, %v4513, %v4542
        %4552 = vst [vmem:[#allocation3 + $0x180] sm:$0xff] %v4529
        %4553 = vst [vmem:[#allocation3 + $0x188] sm:$0xff] %v4531
        %4554 = vst [vmem:[#allocation3 + $0x190] sm:$0xff] %v4533
        %4555 = vst [vmem:[#allocation3 + $0x198] sm:$0xff] %v4535
        %4556 = vst [vmem:[#allocation3 + $0x1a0] sm:$0xff] %v4537
        %4557 = vst [vmem:[#allocation3 + $0x1a8] sm:$0xff] %v4539
        %4558 = vst [vmem:[#allocation3 + $0x1b0] sm:$0xff] %v4541
        %4559 = vst [vmem:[#allocation3 + $0x1b8] sm:$0xff] %v4543
        %v4560 = vld [vmem:[#allocation2] sm:$0xff]
        %v4561 = vld [vmem:[#allocation2 + $0x8] sm:$0xff]
        %v4562 = vld [vmem:[#allocation2 + $0x10] sm:$0xff]
        %v4563 = vld [vmem:[#allocation2 + $0x18] sm:$0xff]
        %v4564 = vld [vmem:[#allocation2 + $0x20] sm:$0xff]
        %v4565 = vld [vmem:[#allocation2 + $0x30] sm:$0xff]
        %v4566 = vld [vmem:[#allocation2 + $0x38] sm:$0xff]
        %v4567 = vld [vmem:[#allocation2 + $0x40] sm:$0xff]
        %v4568 = vld [vmem:[#allocation2 + $0x48] sm:$0xff]
        %v4569 = vld [vmem:[#allocation2 + $0x50] sm:$0xff]
        %v4570 = vld [vmem:[#allocation2 + $0x60] sm:$0xff]
        %v4571 = vld [vmem:[#allocation2 + $0x68] sm:$0xff]
        %v4572 = vld [vmem:[#allocation2 + $0x70] sm:$0xff]
        %v4573 = vld [vmem:[#allocation2 + $0x78] sm:$0xff]
        %v4574 = vld [vmem:[#allocation2 + $0x80] sm:$0xff]
        %v4575 = vld [vmem:[#allocation2 + $0x90] sm:$0xff]
        %v4576 = vld [vmem:[#allocation2 + $0x98] sm:$0xff]
        %v4577 = vld [vmem:[#allocation2 + $0xa0] sm:$0xff]
        %v4578 = vld [vmem:[#allocation2 + $0xa8] sm:$0xff]
        %v4579 = vld [vmem:[#allocation2 + $0xb0] sm:$0xff]
        %v4580 = vmul.f32 %v4560, %v1086
        %v4581 = vmul.f32 %v4561, %v1094
        %v4582 = vmul.f32 %v4562, %v1095
        %v4583 = vmul.f32 %v4563, %v1096
        %v4584 = vmul.f32 %v4564, %v1092
        %v4585 = vmul.f32 %v4565, %v1086
        %v4586 = vmul.f32 %v4566, %v1094
        %v4587 = vmul.f32 %v4567, %v1095
        %v4588 = vmul.f32 %v4568, %v1096
        %v4589 = vmul.f32 %v4569, %v1092
        %v4590 = vmul.f32 %v4570, %v1086
        %v4591 = vmul.f32 %v4571, %v1094
        %v4592 = vmul.f32 %v4572, %v1095
        %v4593 = vmul.f32 %v4573, %v1096
        %v4594 = vmul.f32 %v4574, %v1092
        %v4595 = vmul.f32 %v4575, %v1086
        %v4596 = vmul.f32 %v4576, %v1094
        %v4597 = vmul.f32 %v4577, %v1095
        %v4598 = vmul.f32 %v4578, %v1096
        %v4599 = vmul.f32 %v4579, %v1092
        %v4600 = vpack.c.bf16 %v4581, %v4580
        %v4601 = vpack.c.bf16 %v4583, %v4582
        %v4602 = vpack.c.bf16 %v4584, %v4584
        %v4603 = vpack.c.bf16 %v4586, %v4585
        %v4604 = vpack.c.bf16 %v4588, %v4587
        %v4605 = vpack.c.bf16 %v4589, %v4589
        %v4606 = vpack.c.bf16 %v4591, %v4590
        %v4607 = vpack.c.bf16 %v4593, %v4592
        %v4608 = vpack.c.bf16 %v4594, %v4594
        %v4609 = vpack.c.bf16 %v4596, %v4595
        %v4610 = vpack.c.bf16 %v4598, %v4597
        %v4611 = vpack.c.bf16 %v4599, %v4599
        %4624 = vrot.lane.b32.xlu0 %v4600, 56
        %v4625 = vpop.permute.xlu0 %4624
        %4626 = vrot.lane.b32.xlu0 %v4601, 56
        %v4627 = vpop.permute.xlu0 %4626
        %4628 = vrot.lane.b32.xlu0 %v4602, 56
        %v4629 = vpop.permute.xlu0 %4628
        %4630 = vrot.lane.b32.xlu0 %v4603, 56
        %v4631 = vpop.permute.xlu0 %4630
        %4632 = vrot.lane.b32.xlu0 %v4604, 56
        %v4633 = vpop.permute.xlu0 %4632
        %4634 = vrot.lane.b32.xlu0 %v4605, 56
        %v4635 = vpop.permute.xlu0 %4634
        %4636 = vrot.lane.b32.xlu0 %v4606, 56
        %v4637 = vpop.permute.xlu0 %4636
        %4638 = vrot.lane.b32.xlu0 %v4607, 56
        %v4639 = vpop.permute.xlu0 %4638
        %4640 = vrot.lane.b32.xlu0 %v4608, 56
        %v4641 = vpop.permute.xlu0 %4640
        %4642 = vrot.lane.b32.xlu0 %v4609, 56
        %v4643 = vpop.permute.xlu0 %4642
        %4644 = vrot.lane.b32.xlu0 %v4610, 56
        %v4645 = vpop.permute.xlu0 %4644
        %4646 = vrot.lane.b32.xlu0 %v4611, 56
        %v4647 = vpop.permute.xlu0 %4646
        %v4648 = vrot.slane %v4625, 4
        %v4649 = vrot.slane %v4627, 4
        %v4650 = vrot.slane %v4629, 4
        %v4651 = vrot.slane %v4631, 4
        %v4652 = vrot.slane %v4633, 4
        %v4653 = vrot.slane %v4635, 4
        %v4654 = vrot.slane %v4637, 4
        %v4655 = vrot.slane %v4639, 4
        %v4656 = vrot.slane %v4641, 4
        %v4657 = vrot.slane %v4643, 4
        %v4658 = vrot.slane %v4645, 4
        %v4659 = vrot.slane %v4647, 4
        %v4660 = vsel %vm532, %v4648, %v4649
        %v4661 = vsel %vm1143, %v4625, %v4660
        %v4662 = vsel %vm532, %v4649, %v4650
        %v4663 = vsel %vm1143, %v4627, %v4662
        %v4664 = vsel %vm532, %v4651, %v4652
        %v4665 = vsel %vm1143, %v4631, %v4664
        %v4666 = vsel %vm532, %v4652, %v4653
        %v4667 = vsel %vm1143, %v4633, %v4666
        %v4668 = vsel %vm532, %v4654, %v4655
        %v4669 = vsel %vm1143, %v4637, %v4668
        %v4670 = vsel %vm532, %v4655, %v4656
        %v4671 = vsel %vm1143, %v4639, %v4670
        %v4672 = vsel %vm532, %v4657, %v4658
        %v4673 = vsel %vm1143, %v4643, %v4672
        %v4674 = vsel %vm532, %v4658, %v4659
        %v4675 = vsel %vm1143, %v4645, %v4674
        %4684 = vst [vmem:[#allocation3 + $0x1c0] sm:$0xff] %v4661
        %4685 = vst [vmem:[#allocation3 + $0x1c8] sm:$0xff] %v4663
        %4686 = vst [vmem:[#allocation3 + $0x1d0] sm:$0xff] %v4665
        %4687 = vst [vmem:[#allocation3 + $0x1d8] sm:$0xff] %v4667
        %4688 = vst [vmem:[#allocation3 + $0x1e0] sm:$0xff] %v4669
        %4689 = vst [vmem:[#allocation3 + $0x1e8] sm:$0xff] %v4671
        %4690 = vst [vmem:[#allocation3 + $0x1f0] sm:$0xff] %v4673
        %4691 = vst [vmem:[#allocation3 + $0x1f8] sm:$0xff] %v4675
        %v4692 = vld [vmem:[#allocation2] sm:$0xff]
        %v4693 = vld [vmem:[#allocation2 + $0x8] sm:$0xff]
        %v4694 = vld [vmem:[#allocation2 + $0x10] sm:$0xff]
        %v4695 = vld [vmem:[#allocation2 + $0x18] sm:$0xff]
        %v4696 = vld [vmem:[#allocation2 + $0x20] sm:$0xff]
        %v4697 = vld [vmem:[#allocation2 + $0x30] sm:$0xff]
        %v4698 = vld [vmem:[#allocation2 + $0x38] sm:$0xff]
        %v4699 = vld [vmem:[#allocation2 + $0x40] sm:$0xff]
        %v4700 = vld [vmem:[#allocation2 + $0x48] sm:$0xff]
        %v4701 = vld [vmem:[#allocation2 + $0x50] sm:$0xff]
        %v4702 = vld [vmem:[#allocation2 + $0x60] sm:$0xff]
        %v4703 = vld [vmem:[#allocation2 + $0x68] sm:$0xff]
        %v4704 = vld [vmem:[#allocation2 + $0x70] sm:$0xff]
        %v4705 = vld [vmem:[#allocation2 + $0x78] sm:$0xff]
        %v4706 = vld [vmem:[#allocation2 + $0x80] sm:$0xff]
        %v4707 = vld [vmem:[#allocation2 + $0x90] sm:$0xff]
        %v4708 = vld [vmem:[#allocation2 + $0x98] sm:$0xff]
        %v4709 = vld [vmem:[#allocation2 + $0xa0] sm:$0xff]
        %v4710 = vld [vmem:[#allocation2 + $0xa8] sm:$0xff]
        %v4711 = vld [vmem:[#allocation2 + $0xb0] sm:$0xff]
        %v4712 = vmul.f32 %v4692, %v1178
        %v4713 = vmul.f32 %v4693, %v1186
        %v4714 = vmul.f32 %v4694, %v1187
        %v4715 = vmul.f32 %v4695, %v1188
        %v4716 = vmul.f32 %v4696, %v1184
        %v4717 = vmul.f32 %v4697, %v1178
        %v4718 = vmul.f32 %v4698, %v1186
        %v4719 = vmul.f32 %v4699, %v1187
        %v4720 = vmul.f32 %v4700, %v1188
        %v4721 = vmul.f32 %v4701, %v1184
        %v4722 = vmul.f32 %v4702, %v1178
        %v4723 = vmul.f32 %v4703, %v1186
        %v4724 = vmul.f32 %v4704, %v1187
        %v4725 = vmul.f32 %v4705, %v1188
        %v4726 = vmul.f32 %v4706, %v1184
        %v4727 = vmul.f32 %v4707, %v1178
        %v4728 = vmul.f32 %v4708, %v1186
        %v4729 = vmul.f32 %v4709, %v1187
        %v4730 = vmul.f32 %v4710, %v1188
        %v4731 = vmul.f32 %v4711, %v1184
        %v4732 = vpack.c.bf16 %v4713, %v4712
        %v4733 = vpack.c.bf16 %v4715, %v4714
        %v4734 = vpack.c.bf16 %v4716, %v4716
        %v4735 = vpack.c.bf16 %v4718, %v4717
        %v4736 = vpack.c.bf16 %v4720, %v4719
        %v4737 = vpack.c.bf16 %v4721, %v4721
        %v4738 = vpack.c.bf16 %v4723, %v4722
        %v4739 = vpack.c.bf16 %v4725, %v4724
        %v4740 = vpack.c.bf16 %v4726, %v4726
        %v4741 = vpack.c.bf16 %v4728, %v4727
        %v4742 = vpack.c.bf16 %v4730, %v4729
        %v4743 = vpack.c.bf16 %v4731, %v4731
        %4756 = vrot.lane.b32.xlu0 %v4732, 55
        %v4757 = vpop.permute.xlu0 %4756
        %4758 = vrot.lane.b32.xlu0 %v4733, 55
        %v4759 = vpop.permute.xlu0 %4758
        %4760 = vrot.lane.b32.xlu0 %v4734, 55
        %v4761 = vpop.permute.xlu0 %4760
        %4762 = vrot.lane.b32.xlu0 %v4735, 55
        %v4763 = vpop.permute.xlu0 %4762
        %4764 = vrot.lane.b32.xlu0 %v4736, 55
        %v4765 = vpop.permute.xlu0 %4764
        %4766 = vrot.lane.b32.xlu0 %v4737, 55
        %v4767 = vpop.permute.xlu0 %4766
        %4768 = vrot.lane.b32.xlu0 %v4738, 55
        %v4769 = vpop.permute.xlu0 %4768
        %4770 = vrot.lane.b32.xlu0 %v4739, 55
        %v4771 = vpop.permute.xlu0 %4770
        %4772 = vrot.lane.b32.xlu0 %v4740, 55
        %v4773 = vpop.permute.xlu0 %4772
        %4774 = vrot.lane.b32.xlu0 %v4741, 55
        %v4775 = vpop.permute.xlu0 %4774
        %4776 = vrot.lane.b32.xlu0 %v4742, 55
        %v4777 = vpop.permute.xlu0 %4776
        %4778 = vrot.lane.b32.xlu0 %v4743, 55
        %v4779 = vpop.permute.xlu0 %4778
        %v4780 = vrot.slane %v4757, 4
        %v4781 = vrot.slane %v4759, 4
        %v4782 = vrot.slane %v4761, 4
        %v4783 = vrot.slane %v4763, 4
        %v4784 = vrot.slane %v4765, 4
        %v4785 = vrot.slane %v4767, 4
        %v4786 = vrot.slane %v4769, 4
        %v4787 = vrot.slane %v4771, 4
        %v4788 = vrot.slane %v4773, 4
        %v4789 = vrot.slane %v4775, 4
        %v4790 = vrot.slane %v4777, 4
        %v4791 = vrot.slane %v4779, 4
        %v4792 = vsel %vm532, %v4780, %v4781
        %v4793 = vsel %vm1235, %v4757, %v4792
        %v4794 = vsel %vm532, %v4781, %v4782
        %v4795 = vsel %vm1235, %v4759, %v4794
        %v4796 = vsel %vm532, %v4783, %v4784
        %v4797 = vsel %vm1235, %v4763, %v4796
        %v4798 = vsel %vm532, %v4784, %v4785
        %v4799 = vsel %vm1235, %v4765, %v4798
        %v4800 = vsel %vm532, %v4786, %v4787
        %v4801 = vsel %vm1235, %v4769, %v4800
        %v4802 = vsel %vm532, %v4787, %v4788
        %v4803 = vsel %vm1235, %v4771, %v4802
        %v4804 = vsel %vm532, %v4789, %v4790
        %v4805 = vsel %vm1235, %v4775, %v4804
        %v4806 = vsel %vm532, %v4790, %v4791
        %v4807 = vsel %vm1235, %v4777, %v4806
        %4816 = vst [vmem:[#allocation3 + $0x200] sm:$0xff] %v4793
        %4817 = vst [vmem:[#allocation3 + $0x208] sm:$0xff] %v4795
        %4818 = vst [vmem:[#allocation3 + $0x210] sm:$0xff] %v4797
        %4819 = vst [vmem:[#allocation3 + $0x218] sm:$0xff] %v4799
        %4820 = vst [vmem:[#allocation3 + $0x220] sm:$0xff] %v4801
        %4821 = vst [vmem:[#allocation3 + $0x228] sm:$0xff] %v4803
        %4822 = vst [vmem:[#allocation3 + $0x230] sm:$0xff] %v4805
        %4823 = vst [vmem:[#allocation3 + $0x238] sm:$0xff] %v4807
        %v4824 = vld [vmem:[#allocation2] sm:$0xff]
        %v4825 = vld [vmem:[#allocation2 + $0x8] sm:$0xff]
        %v4826 = vld [vmem:[#allocation2 + $0x10] sm:$0xff]
        %v4827 = vld [vmem:[#allocation2 + $0x18] sm:$0xff]
        %v4828 = vld [vmem:[#allocation2 + $0x20] sm:$0xff]
        %v4829 = vld [vmem:[#allocation2 + $0x30] sm:$0xff]
        %v4830 = vld [vmem:[#allocation2 + $0x38] sm:$0xff]
        %v4831 = vld [vmem:[#allocation2 + $0x40] sm:$0xff]
        %v4832 = vld [vmem:[#allocation2 + $0x48] sm:$0xff]
        %v4833 = vld [vmem:[#allocation2 + $0x50] sm:$0xff]
        %v4834 = vld [vmem:[#allocation2 + $0x60] sm:$0xff]
        %v4835 = vld [vmem:[#allocation2 + $0x68] sm:$0xff]
        %v4836 = vld [vmem:[#allocation2 + $0x70] sm:$0xff]
        %v4837 = vld [vmem:[#allocation2 + $0x78] sm:$0xff]
        %v4838 = vld [vmem:[#allocation2 + $0x80] sm:$0xff]
        %v4839 = vld [vmem:[#allocation2 + $0x90] sm:$0xff]
        %v4840 = vld [vmem:[#allocation2 + $0x98] sm:$0xff]
        %v4841 = vld [vmem:[#allocation2 + $0xa0] sm:$0xff]
        %v4842 = vld [vmem:[#allocation2 + $0xa8] sm:$0xff]
        %v4843 = vld [vmem:[#allocation2 + $0xb0] sm:$0xff]
        %v4844 = vmul.f32 %v4824, %v1262
        %v4845 = vmul.f32 %v4825, %v1270
        %v4846 = vmul.f32 %v4826, %v1271
        %v4847 = vmul.f32 %v4827, %v1272
        %v4848 = vmul.f32 %v4828, %v1268
        %v4849 = vmul.f32 %v4829, %v1262
        %v4850 = vmul.f32 %v4830, %v1270
        %v4851 = vmul.f32 %v4831, %v1271
        %v4852 = vmul.f32 %v4832, %v1272
        %v4853 = vmul.f32 %v4833, %v1268
        %v4854 = vmul.f32 %v4834, %v1262
        %v4855 = vmul.f32 %v4835, %v1270
        %v4856 = vmul.f32 %v4836, %v1271
        %v4857 = vmul.f32 %v4837, %v1272
        %v4858 = vmul.f32 %v4838, %v1268
        %v4859 = vmul.f32 %v4839, %v1262
        %v4860 = vmul.f32 %v4840, %v1270
        %v4861 = vmul.f32 %v4841, %v1271
        %v4862 = vmul.f32 %v4842, %v1272
        %v4863 = vmul.f32 %v4843, %v1268
        %v4864 = vpack.c.bf16 %v4845, %v4844
        %v4865 = vpack.c.bf16 %v4847, %v4846
        %v4866 = vpack.c.bf16 %v4848, %v4848
        %v4867 = vpack.c.bf16 %v4850, %v4849
        %v4868 = vpack.c.bf16 %v4852, %v4851
        %v4869 = vpack.c.bf16 %v4853, %v4853
        %v4870 = vpack.c.bf16 %v4855, %v4854
        %v4871 = vpack.c.bf16 %v4857, %v4856
        %v4872 = vpack.c.bf16 %v4858, %v4858
        %v4873 = vpack.c.bf16 %v4860, %v4859
        %v4874 = vpack.c.bf16 %v4862, %v4861
        %v4875 = vpack.c.bf16 %v4863, %v4863
        %4888 = vrot.lane.b32.xlu0 %v4864, 9
        %v4889 = vpop.permute.xlu0 %4888
        %4890 = vrot.lane.b32.xlu0 %v4865, 9
        %v4891 = vpop.permute.xlu0 %4890
        %4892 = vrot.lane.b32.xlu0 %v4866, 9
        %v4893 = vpop.permute.xlu0 %4892
        %4894 = vrot.lane.b32.xlu0 %v4867, 9
        %v4895 = vpop.permute.xlu0 %4894
        %4896 = vrot.lane.b32.xlu0 %v4868, 9
        %v4897 = vpop.permute.xlu0 %4896
        %4898 = vrot.lane.b32.xlu0 %v4869, 9
        %v4899 = vpop.permute.xlu0 %4898
        %4900 = vrot.lane.b32.xlu0 %v4870, 9
        %v4901 = vpop.permute.xlu0 %4900
        %4902 = vrot.lane.b32.xlu0 %v4871, 9
        %v4903 = vpop.permute.xlu0 %4902
        %4904 = vrot.lane.b32.xlu0 %v4872, 9
        %v4905 = vpop.permute.xlu0 %4904
        %4906 = vrot.lane.b32.xlu0 %v4873, 9
        %v4907 = vpop.permute.xlu0 %4906
        %4908 = vrot.lane.b32.xlu0 %v4874, 9
        %v4909 = vpop.permute.xlu0 %4908
        %4910 = vrot.lane.b32.xlu0 %v4875, 9
        %v4911 = vpop.permute.xlu0 %4910
        %v4912 = vrot.slane %v4889, 4
        %v4913 = vrot.slane %v4891, 4
        %v4914 = vrot.slane %v4893, 4
        %v4915 = vrot.slane %v4895, 4
        %v4916 = vrot.slane %v4897, 4
        %v4917 = vrot.slane %v4899, 4
        %v4918 = vrot.slane %v4901, 4
        %v4919 = vrot.slane %v4903, 4
        %v4920 = vrot.slane %v4905, 4
        %v4921 = vrot.slane %v4907, 4
        %v4922 = vrot.slane %v4909, 4
        %v4923 = vrot.slane %v4911, 4
        %v4924 = vsel %vm532, %v4912, %v4913
        %v4925 = vsel %vm1319, %v4889, %v4924
        %v4926 = vsel %vm532, %v4913, %v4914
        %v4927 = vsel %vm1319, %v4891, %v4926
        %v4928 = vsel %vm532, %v4915, %v4916
        %v4929 = vsel %vm1319, %v4895, %v4928
        %v4930 = vsel %vm532, %v4916, %v4917
        %v4931 = vsel %vm1319, %v4897, %v4930
        %v4932 = vsel %vm532, %v4918, %v4919
        %v4933 = vsel %vm1319, %v4901, %v4932
        %v4934 = vsel %vm532, %v4919, %v4920
        %v4935 = vsel %vm1319, %v4903, %v4934
        %v4936 = vsel %vm532, %v4921, %v4922
        %v4937 = vsel %vm1319, %v4907, %v4936
        %v4938 = vsel %vm532, %v4922, %v4923
        %v4939 = vsel %vm1319, %v4909, %v4938
        %4948 = vst [vmem:[#allocation3 + $0x240] sm:$0xff] %v4925
        %4949 = vst [vmem:[#allocation3 + $0x248] sm:$0xff] %v4927
        %4950 = vst [vmem:[#allocation3 + $0x250] sm:$0xff] %v4929
        %4951 = vst [vmem:[#allocation3 + $0x258] sm:$0xff] %v4931
        %4952 = vst [vmem:[#allocation3 + $0x260] sm:$0xff] %v4933
        %4953 = vst [vmem:[#allocation3 + $0x268] sm:$0xff] %v4935
        %4954 = vst [vmem:[#allocation3 + $0x270] sm:$0xff] %v4937
        %4955 = vst [vmem:[#allocation3 + $0x278] sm:$0xff] %v4939
        %v4956 = vld [vmem:[#allocation2] sm:$0xff]
        %v4957 = vld [vmem:[#allocation2 + $0x8] sm:$0xff]
        %v4958 = vld [vmem:[#allocation2 + $0x10] sm:$0xff]
        %v4959 = vld [vmem:[#allocation2 + $0x18] sm:$0xff]
        %v4960 = vld [vmem:[#allocation2 + $0x20] sm:$0xff]
        %v4961 = vld [vmem:[#allocation2 + $0x30] sm:$0xff]
        %v4962 = vld [vmem:[#allocation2 + $0x38] sm:$0xff]
        %v4963 = vld [vmem:[#allocation2 + $0x40] sm:$0xff]
        %v4964 = vld [vmem:[#allocation2 + $0x48] sm:$0xff]
        %v4965 = vld [vmem:[#allocation2 + $0x50] sm:$0xff]
        %v4966 = vld [vmem:[#allocation2 + $0x60] sm:$0xff]
        %v4967 = vld [vmem:[#allocation2 + $0x68] sm:$0xff]
        %v4968 = vld [vmem:[#allocation2 + $0x70] sm:$0xff]
        %v4969 = vld [vmem:[#allocation2 + $0x78] sm:$0xff]
        %v4970 = vld [vmem:[#allocation2 + $0x80] sm:$0xff]
        %v4971 = vld [vmem:[#allocation2 + $0x90] sm:$0xff]
        %v4972 = vld [vmem:[#allocation2 + $0x98] sm:$0xff]
        %v4973 = vld [vmem:[#allocation2 + $0xa0] sm:$0xff]
        %v4974 = vld [vmem:[#allocation2 + $0xa8] sm:$0xff]
        %v4975 = vld [vmem:[#allocation2 + $0xb0] sm:$0xff]
        %v4976 = vmul.f32 %v4956, %v1346
        %v4977 = vmul.f32 %v4957, %v1354
        %v4978 = vmul.f32 %v4958, %v1355
        %v4979 = vmul.f32 %v4959, %v1356
        %v4980 = vmul.f32 %v4960, %v1352
        %v4981 = vmul.f32 %v4961, %v1346
        %v4982 = vmul.f32 %v4962, %v1354
        %v4983 = vmul.f32 %v4963, %v1355
        %v4984 = vmul.f32 %v4964, %v1356
        %v4985 = vmul.f32 %v4965, %v1352
        %v4986 = vmul.f32 %v4966, %v1346
        %v4987 = vmul.f32 %v4967, %v1354
        %v4988 = vmul.f32 %v4968, %v1355
        %v4989 = vmul.f32 %v4969, %v1356
        %v4990 = vmul.f32 %v4970, %v1352
        %v4991 = vmul.f32 %v4971, %v1346
        %v4992 = vmul.f32 %v4972, %v1354
        %v4993 = vmul.f32 %v4973, %v1355
        %v4994 = vmul.f32 %v4974, %v1356
        %v4995 = vmul.f32 %v4975, %v1352
        %v4996 = vpack.c.bf16 %v4977, %v4976
        %v4997 = vpack.c.bf16 %v4979, %v4978
        %v4998 = vpack.c.bf16 %v4980, %v4980
        %v4999 = vpack.c.bf16 %v4982, %v4981
        %v5000 = vpack.c.bf16 %v4984, %v4983
        %v5001 = vpack.c.bf16 %v4985, %v4985
        %v5002 = vpack.c.bf16 %v4987, %v4986
        %v5003 = vpack.c.bf16 %v4989, %v4988
        %v5004 = vpack.c.bf16 %v4990, %v4990
        %v5005 = vpack.c.bf16 %v4992, %v4991
        %v5006 = vpack.c.bf16 %v4994, %v4993
        %v5007 = vpack.c.bf16 %v4995, %v4995
        %5020 = vrot.lane.b32.xlu0 %v4996, 8
        %v5021 = vpop.permute.xlu0 %5020
        %5022 = vrot.lane.b32.xlu0 %v4997, 8
        %v5023 = vpop.permute.xlu0 %5022
        %5024 = vrot.lane.b32.xlu0 %v4998, 8
        %v5025 = vpop.permute.xlu0 %5024
        %5026 = vrot.lane.b32.xlu0 %v4999, 8
        %v5027 = vpop.permute.xlu0 %5026
        %5028 = vrot.lane.b32.xlu0 %v5000, 8
        %v5029 = vpop.permute.xlu0 %5028
        %5030 = vrot.lane.b32.xlu0 %v5001, 8
        %v5031 = vpop.permute.xlu0 %5030
        %5032 = vrot.lane.b32.xlu0 %v5002, 8
        %v5033 = vpop.permute.xlu0 %5032
        %5034 = vrot.lane.b32.xlu0 %v5003, 8
        %v5035 = vpop.permute.xlu0 %5034
        %5036 = vrot.lane.b32.xlu0 %v5004, 8
        %v5037 = vpop.permute.xlu0 %5036
        %5038 = vrot.lane.b32.xlu0 %v5005, 8
        %v5039 = vpop.permute.xlu0 %5038
        %5040 = vrot.lane.b32.xlu0 %v5006, 8
        %v5041 = vpop.permute.xlu0 %5040
        %5042 = vrot.lane.b32.xlu0 %v5007, 8
        %v5043 = vpop.permute.xlu0 %5042
        %v5044 = vrot.slane %v5021, 4
        %v5045 = vrot.slane %v5023, 4
        %v5046 = vrot.slane %v5025, 4
        %v5047 = vrot.slane %v5027, 4
        %v5048 = vrot.slane %v5029, 4
        %v5049 = vrot.slane %v5031, 4
        %v5050 = vrot.slane %v5033, 4
        %v5051 = vrot.slane %v5035, 4
        %v5052 = vrot.slane %v5037, 4
        %v5053 = vrot.slane %v5039, 4
        %v5054 = vrot.slane %v5041, 4
        %v5055 = vrot.slane %v5043, 4
        %v5056 = vsel %vm532, %v5044, %v5045
        %v5057 = vsel %vm1403, %v5021, %v5056
        %v5058 = vsel %vm532, %v5045, %v5046
        %v5059 = vsel %vm1403, %v5023, %v5058
        %v5060 = vsel %vm532, %v5047, %v5048
        %v5061 = vsel %vm1403, %v5027, %v5060
        %v5062 = vsel %vm532, %v5048, %v5049
        %v5063 = vsel %vm1403, %v5029, %v5062
        %v5064 = vsel %vm532, %v5050, %v5051
        %v5065 = vsel %vm1403, %v5033, %v5064
        %v5066 = vsel %vm532, %v5051, %v5052
        %v5067 = vsel %vm1403, %v5035, %v5066
        %v5068 = vsel %vm532, %v5053, %v5054
        %v5069 = vsel %vm1403, %v5039, %v5068
        %v5070 = vsel %vm532, %v5054, %v5055
        %v5071 = vsel %vm1403, %v5041, %v5070
        %5080 = vst [vmem:[#allocation3 + $0x280] sm:$0xff] %v5057
        %5081 = vst [vmem:[#allocation3 + $0x288] sm:$0xff] %v5059
        %5082 = vst [vmem:[#allocation3 + $0x290] sm:$0xff] %v5061
        %5083 = vst [vmem:[#allocation3 + $0x298] sm:$0xff] %v5063
        %5084 = vst [vmem:[#allocation3 + $0x2a0] sm:$0xff] %v5065
        %5085 = vst [vmem:[#allocation3 + $0x2a8] sm:$0xff] %v5067
        %5086 = vst [vmem:[#allocation3 + $0x2b0] sm:$0xff] %v5069
        %5087 = vst [vmem:[#allocation3 + $0x2b8] sm:$0xff] %v5071
        %v5088 = vld [vmem:[#allocation2] sm:$0xff]
        %v5089 = vld [vmem:[#allocation2 + $0x8] sm:$0xff]
        %v5090 = vld [vmem:[#allocation2 + $0x10] sm:$0xff]
        %v5091 = vld [vmem:[#allocation2 + $0x18] sm:$0xff]
        %v5092 = vld [vmem:[#allocation2 + $0x20] sm:$0xff]
        %v5093 = vld [vmem:[#allocation2 + $0x30] sm:$0xff]
        %v5094 = vld [vmem:[#allocation2 + $0x38] sm:$0xff]
        %v5095 = vld [vmem:[#allocation2 + $0x40] sm:$0xff]
        %v5096 = vld [vmem:[#allocation2 + $0x48] sm:$0xff]
        %v5097 = vld [vmem:[#allocation2 + $0x50] sm:$0xff]
        %v5098 = vld [vmem:[#allocation2 + $0x60] sm:$0xff]
        %v5099 = vld [vmem:[#allocation2 + $0x68] sm:$0xff]
        %v5100 = vld [vmem:[#allocation2 + $0x70] sm:$0xff]
        %v5101 = vld [vmem:[#allocation2 + $0x78] sm:$0xff]
        %v5102 = vld [vmem:[#allocation2 + $0x80] sm:$0xff]
        %v5103 = vld [vmem:[#allocation2 + $0x90] sm:$0xff]
        %v5104 = vld [vmem:[#allocation2 + $0x98] sm:$0xff]
        %v5105 = vld [vmem:[#allocation2 + $0xa0] sm:$0xff]
        %v5106 = vld [vmem:[#allocation2 + $0xa8] sm:$0xff]
        %v5107 = vld [vmem:[#allocation2 + $0xb0] sm:$0xff]
        %v5108 = vmul.f32 %v5088, %v1430
        %v5109 = vmul.f32 %v5089, %v1438
        %v5110 = vmul.f32 %v5090, %v1439
        %v5111 = vmul.f32 %v5091, %v1440
        %v5112 = vmul.f32 %v5092, %v1436
        %v5113 = vmul.f32 %v5093, %v1430
        %v5114 = vmul.f32 %v5094, %v1438
        %v5115 = vmul.f32 %v5095, %v1439
        %v5116 = vmul.f32 %v5096, %v1440
        %v5117 = vmul.f32 %v5097, %v1436
        %v5118 = vmul.f32 %v5098, %v1430
        %v5119 = vmul.f32 %v5099, %v1438
        %v5120 = vmul.f32 %v5100, %v1439
        %v5121 = vmul.f32 %v5101, %v1440
        %v5122 = vmul.f32 %v5102, %v1436
        %v5123 = vmul.f32 %v5103, %v1430
        %v5124 = vmul.f32 %v5104, %v1438
        %v5125 = vmul.f32 %v5105, %v1439
        %v5126 = vmul.f32 %v5106, %v1440
        %v5127 = vmul.f32 %v5107, %v1436
        %v5128 = vpack.c.bf16 %v5109, %v5108
        %v5129 = vpack.c.bf16 %v5111, %v5110
        %v5130 = vpack.c.bf16 %v5112, %v5112
        %v5131 = vpack.c.bf16 %v5114, %v5113
        %v5132 = vpack.c.bf16 %v5116, %v5115
        %v5133 = vpack.c.bf16 %v5117, %v5117
        %v5134 = vpack.c.bf16 %v5119, %v5118
        %v5135 = vpack.c.bf16 %v5121, %v5120
        %v5136 = vpack.c.bf16 %v5122, %v5122
        %v5137 = vpack.c.bf16 %v5124, %v5123
        %v5138 = vpack.c.bf16 %v5126, %v5125
        %v5139 = vpack.c.bf16 %v5127, %v5127
        %5152 = vrot.lane.b32.xlu0 %v5128, 7
        %v5153 = vpop.permute.xlu0 %5152
        %5154 = vrot.lane.b32.xlu0 %v5129, 7
        %v5155 = vpop.permute.xlu0 %5154
        %5156 = vrot.lane.b32.xlu0 %v5130, 7
        %v5157 = vpop.permute.xlu0 %5156
        %5158 = vrot.lane.b32.xlu0 %v5131, 7
        %v5159 = vpop.permute.xlu0 %5158
        %5160 = vrot.lane.b32.xlu0 %v5132, 7
        %v5161 = vpop.permute.xlu0 %5160
        %5162 = vrot.lane.b32.xlu0 %v5133, 7
        %v5163 = vpop.permute.xlu0 %5162
        %5164 = vrot.lane.b32.xlu0 %v5134, 7
        %v5165 = vpop.permute.xlu0 %5164
        %5166 = vrot.lane.b32.xlu0 %v5135, 7
        %v5167 = vpop.permute.xlu0 %5166
        %5168 = vrot.lane.b32.xlu0 %v5136, 7
        %v5169 = vpop.permute.xlu0 %5168
        %5170 = vrot.lane.b32.xlu0 %v5137, 7
        %v5171 = vpop.permute.xlu0 %5170
        %5172 = vrot.lane.b32.xlu0 %v5138, 7
        %v5173 = vpop.permute.xlu0 %5172
        %5174 = vrot.lane.b32.xlu0 %v5139, 7
        %v5175 = vpop.permute.xlu0 %5174
        %v5176 = vrot.slane %v5153, 4
        %v5177 = vrot.slane %v5155, 4
        %v5178 = vrot.slane %v5157, 4
        %v5179 = vrot.slane %v5159, 4
        %v5180 = vrot.slane %v5161, 4
        %v5181 = vrot.slane %v5163, 4
        %v5182 = vrot.slane %v5165, 4
        %v5183 = vrot.slane %v5167, 4
        %v5184 = vrot.slane %v5169, 4
        %v5185 = vrot.slane %v5171, 4
        %v5186 = vrot.slane %v5173, 4
        %v5187 = vrot.slane %v5175, 4
        %v5188 = vsel %vm532, %v5176, %v5177
        %v5189 = vsel %vm1487, %v5153, %v5188
        %v5190 = vsel %vm532, %v5177, %v5178
        %v5191 = vsel %vm1487, %v5155, %v5190
        %v5192 = vsel %vm532, %v5179, %v5180
        %v5193 = vsel %vm1487, %v5159, %v5192
        %v5194 = vsel %vm532, %v5180, %v5181
        %v5195 = vsel %vm1487, %v5161, %v5194
        %v5196 = vsel %vm532, %v5182, %v5183
        %v5197 = vsel %vm1487, %v5165, %v5196
        %v5198 = vsel %vm532, %v5183, %v5184
        %v5199 = vsel %vm1487, %v5167, %v5198
        %v5200 = vsel %vm532, %v5185, %v5186
        %v5201 = vsel %vm1487, %v5171, %v5200
        %v5202 = vsel %vm532, %v5186, %v5187
        %v5203 = vsel %vm1487, %v5173, %v5202
        %5212 = vst [vmem:[#allocation3 + $0x2c0] sm:$0xff] %v5189
        %5213 = vst [vmem:[#allocation3 + $0x2c8] sm:$0xff] %v5191
        %5214 = vst [vmem:[#allocation3 + $0x2d0] sm:$0xff] %v5193
        %5215 = vst [vmem:[#allocation3 + $0x2d8] sm:$0xff] %v5195
        %5216 = vst [vmem:[#allocation3 + $0x2e0] sm:$0xff] %v5197
        %5217 = vst [vmem:[#allocation3 + $0x2e8] sm:$0xff] %v5199
        %5218 = vst [vmem:[#allocation3 + $0x2f0] sm:$0xff] %v5201
        %5219 = vst [vmem:[#allocation3 + $0x2f8] sm:$0xff] %v5203
        %v5220 = vld [vmem:[#allocation2] sm:$0xff]
        %v5221 = vld [vmem:[#allocation2 + $0x8] sm:$0xff]
        %v5222 = vld [vmem:[#allocation2 + $0x10] sm:$0xff]
        %v5223 = vld [vmem:[#allocation2 + $0x18] sm:$0xff]
        %v5224 = vld [vmem:[#allocation2 + $0x20] sm:$0xff]
        %v5225 = vld [vmem:[#allocation2 + $0x30] sm:$0xff]
        %v5226 = vld [vmem:[#allocation2 + $0x38] sm:$0xff]
        %v5227 = vld [vmem:[#allocation2 + $0x40] sm:$0xff]
        %v5228 = vld [vmem:[#allocation2 + $0x48] sm:$0xff]
        %v5229 = vld [vmem:[#allocation2 + $0x50] sm:$0xff]
        %v5230 = vld [vmem:[#allocation2 + $0x60] sm:$0xff]
        %v5231 = vld [vmem:[#allocation2 + $0x68] sm:$0xff]
        %v5232 = vld [vmem:[#allocation2 + $0x70] sm:$0xff]
        %v5233 = vld [vmem:[#allocation2 + $0x78] sm:$0xff]
        %v5234 = vld [vmem:[#allocation2 + $0x80] sm:$0xff]
        %v5235 = vld [vmem:[#allocation2 + $0x90] sm:$0xff]
        %v5236 = vld [vmem:[#allocation2 + $0x98] sm:$0xff]
        %v5237 = vld [vmem:[#allocation2 + $0xa0] sm:$0xff]
        %v5238 = vld [vmem:[#allocation2 + $0xa8] sm:$0xff]
        %v5239 = vld [vmem:[#allocation2 + $0xb0] sm:$0xff]
        %v5240 = vmul.f32 %v5220, %v1514
        %v5241 = vmul.f32 %v5221, %v1522
        %v5242 = vmul.f32 %v5222, %v1523
        %v5243 = vmul.f32 %v5223, %v1524
        %v5244 = vmul.f32 %v5224, %v1520
        %v5245 = vmul.f32 %v5225, %v1514
        %v5246 = vmul.f32 %v5226, %v1522
        %v5247 = vmul.f32 %v5227, %v1523
        %v5248 = vmul.f32 %v5228, %v1524
        %v5249 = vmul.f32 %v5229, %v1520
        %v5250 = vmul.f32 %v5230, %v1514
        %v5251 = vmul.f32 %v5231, %v1522
        %v5252 = vmul.f32 %v5232, %v1523
        %v5253 = vmul.f32 %v5233, %v1524
        %v5254 = vmul.f32 %v5234, %v1520
        %v5255 = vmul.f32 %v5235, %v1514
        %v5256 = vmul.f32 %v5236, %v1522
        %v5257 = vmul.f32 %v5237, %v1523
        %v5258 = vmul.f32 %v5238, %v1524
        %v5259 = vmul.f32 %v5239, %v1520
        %v5260 = vpack.c.bf16 %v5241, %v5240
        %v5261 = vpack.c.bf16 %v5243, %v5242
        %v5262 = vpack.c.bf16 %v5244, %v5244
        %v5263 = vpack.c.bf16 %v5246, %v5245
        %v5264 = vpack.c.bf16 %v5248, %v5247
        %v5265 = vpack.c.bf16 %v5249, %v5249
        %v5266 = vpack.c.bf16 %v5251, %v5250
        %v5267 = vpack.c.bf16 %v5253, %v5252
        %v5268 = vpack.c.bf16 %v5254, %v5254
        %v5269 = vpack.c.bf16 %v5256, %v5255
        %v5270 = vpack.c.bf16 %v5258, %v5257
        %v5271 = vpack.c.bf16 %v5259, %v5259
        %5284 = vrot.lane.b32.xlu0 %v5260, 1
        %v5285 = vpop.permute.xlu0 %5284
        %5286 = vrot.lane.b32.xlu0 %v5261, 1
        %v5287 = vpop.permute.xlu0 %5286
        %5288 = vrot.lane.b32.xlu0 %v5262, 1
        %v5289 = vpop.permute.xlu0 %5288
        %5290 = vrot.lane.b32.xlu0 %v5263, 1
        %v5291 = vpop.permute.xlu0 %5290
        %5292 = vrot.lane.b32.xlu0 %v5264, 1
        %v5293 = vpop.permute.xlu0 %5292
        %5294 = vrot.lane.b32.xlu0 %v5265, 1
        %v5295 = vpop.permute.xlu0 %5294
        %5296 = vrot.lane.b32.xlu0 %v5266, 1
        %v5297 = vpop.permute.xlu0 %5296
        %5298 = vrot.lane.b32.xlu0 %v5267, 1
        %v5299 = vpop.permute.xlu0 %5298
        %5300 = vrot.lane.b32.xlu0 %v5268, 1
        %v5301 = vpop.permute.xlu0 %5300
        %5302 = vrot.lane.b32.xlu0 %v5269, 1
        %v5303 = vpop.permute.xlu0 %5302
        %5304 = vrot.lane.b32.xlu0 %v5270, 1
        %v5305 = vpop.permute.xlu0 %5304
        %5306 = vrot.lane.b32.xlu0 %v5271, 1
        %v5307 = vpop.permute.xlu0 %5306
        %v5308 = vrot.slane %v5285, 4
        %v5309 = vrot.slane %v5287, 4
        %v5310 = vrot.slane %v5289, 4
        %v5311 = vrot.slane %v5291, 4
        %v5312 = vrot.slane %v5293, 4
        %v5313 = vrot.slane %v5295, 4
        %v5314 = vrot.slane %v5297, 4
        %v5315 = vrot.slane %v5299, 4
        %v5316 = vrot.slane %v5301, 4
        %v5317 = vrot.slane %v5303, 4
        %v5318 = vrot.slane %v5305, 4
        %v5319 = vrot.slane %v5307, 4
        %v5320 = vsel %vm532, %v5308, %v5309
        %v5321 = vsel %vm1571, %v5285, %v5320
        %v5322 = vsel %vm532, %v5309, %v5310
        %v5323 = vsel %vm1571, %v5287, %v5322
        %v5324 = vsel %vm532, %v5311, %v5312
        %v5325 = vsel %vm1571, %v5291, %v5324
        %v5326 = vsel %vm532, %v5312, %v5313
        %v5327 = vsel %vm1571, %v5293, %v5326
        %v5328 = vsel %vm532, %v5314, %v5315
        %v5329 = vsel %vm1571, %v5297, %v5328
        %v5330 = vsel %vm532, %v5315, %v5316
        %v5331 = vsel %vm1571, %v5299, %v5330
        %v5332 = vsel %vm532, %v5317, %v5318
        %v5333 = vsel %vm1571, %v5303, %v5332
        %v5334 = vsel %vm532, %v5318, %v5319
        %v5335 = vsel %vm1571, %v5305, %v5334
        %5344 = vst [vmem:[#allocation3 + $0x300] sm:$0xff] %v5321
        %5345 = vst [vmem:[#allocation3 + $0x308] sm:$0xff] %v5323
        %5346 = vst [vmem:[#allocation3 + $0x310] sm:$0xff] %v5325
        %5347 = vst [vmem:[#allocation3 + $0x318] sm:$0xff] %v5327
        %5348 = vst [vmem:[#allocation3 + $0x320] sm:$0xff] %v5329
        %5349 = vst [vmem:[#allocation3 + $0x328] sm:$0xff] %v5331
        %5350 = vst [vmem:[#allocation3 + $0x330] sm:$0xff] %v5333
        %5351 = vst [vmem:[#allocation3 + $0x338] sm:$0xff] %v5335
        %v5352 = vld [vmem:[#allocation2 + $0x8] sm:$0xff]
        %v5353 = vld [vmem:[#allocation2 + $0x10] sm:$0xff]
        %v5354 = vld [vmem:[#allocation2 + $0x18] sm:$0xff]
        %v5355 = vld [vmem:[#allocation2 + $0x20] sm:$0xff]
        %v5356 = vld [vmem:[#allocation2 + $0x38] sm:$0xff]
        %v5357 = vld [vmem:[#allocation2 + $0x40] sm:$0xff]
        %v5358 = vld [vmem:[#allocation2 + $0x48] sm:$0xff]
        %v5359 = vld [vmem:[#allocation2 + $0x50] sm:$0xff]
        %v5360 = vld [vmem:[#allocation2 + $0x68] sm:$0xff]
        %v5361 = vld [vmem:[#allocation2 + $0x70] sm:$0xff]
        %v5362 = vld [vmem:[#allocation2 + $0x78] sm:$0xff]
        %v5363 = vld [vmem:[#allocation2 + $0x80] sm:$0xff]
        %v5364 = vld [vmem:[#allocation2 + $0x98] sm:$0xff]
        %v5365 = vld [vmem:[#allocation2 + $0xa0] sm:$0xff]
        %v5366 = vld [vmem:[#allocation2 + $0xa8] sm:$0xff]
        %v5367 = vld [vmem:[#allocation2 + $0xb0] sm:$0xff]
        %v5368 = vpack.c.bf16 %v5353, %v5352
        %v5369 = vpack.c.bf16 %v5355, %v5354
        %v5370 = vpack.c.bf16 %v5357, %v5356
        %v5371 = vpack.c.bf16 %v5359, %v5358
        %v5372 = vpack.c.bf16 %v5361, %v5360
        %v5373 = vpack.c.bf16 %v5363, %v5362
        %v5374 = vpack.c.bf16 %v5365, %v5364
        %v5375 = vpack.c.bf16 %v5367, %v5366
        %5376 = vst [vmem:[#allocation3 + $0x340] sm:$0xff] %v5368
        %5377 = vst [vmem:[#allocation3 + $0x348] sm:$0xff] %v5369
        %5378 = vst [vmem:[#allocation3 + $0x350] sm:$0xff] %v5370
        %5379 = vst [vmem:[#allocation3 + $0x358] sm:$0xff] %v5371
        %5380 = vst [vmem:[#allocation3 + $0x360] sm:$0xff] %v5372
        %5381 = vst [vmem:[#allocation3 + $0x368] sm:$0xff] %v5373
        %5382 = vst [vmem:[#allocation3 + $0x370] sm:$0xff] %v5374
        %5383 = vst [vmem:[#allocation3 + $0x378] sm:$0xff] %v5375
        %v5384 = vld [vmem:[#allocation2 + $0x8] sm:$0xff]
        %v5385 = vld [vmem:[#allocation2 + $0x10] sm:$0xff]
        %v5386 = vld [vmem:[#allocation2 + $0x18] sm:$0xff]
        %v5387 = vld [vmem:[#allocation2 + $0x20] sm:$0xff]
        %v5388 = vld [vmem:[#allocation2 + $0x28] sm:$0xff]
        %v5389 = vld [vmem:[#allocation2 + $0x38] sm:$0xff]
        %v5390 = vld [vmem:[#allocation2 + $0x40] sm:$0xff]
        %v5391 = vld [vmem:[#allocation2 + $0x48] sm:$0xff]
        %v5392 = vld [vmem:[#allocation2 + $0x50] sm:$0xff]
        %v5393 = vld [vmem:[#allocation2 + $0x58] sm:$0xff]
        %v5394 = vld [vmem:[#allocation2 + $0x68] sm:$0xff]
        %v5395 = vld [vmem:[#allocation2 + $0x70] sm:$0xff]
        %v5396 = vld [vmem:[#allocation2 + $0x78] sm:$0xff]
        %v5397 = vld [vmem:[#allocation2 + $0x80] sm:$0xff]
        %v5398 = vld [vmem:[#allocation2 + $0x88] sm:$0xff]
        %v5399 = vld [vmem:[#allocation2 + $0x98] sm:$0xff]
        %v5400 = vld [vmem:[#allocation2 + $0xa0] sm:$0xff]
        %v5401 = vld [vmem:[#allocation2 + $0xa8] sm:$0xff]
        %v5402 = vld [vmem:[#allocation2 + $0xb0] sm:$0xff]
        %v5403 = vld [vmem:[#allocation2 + $0xb8] sm:$0xff]
        %v5404 = vmul.f32 %v5384, %v1614
        %v5405 = vmul.f32 %v5385, %v1622
        %v5406 = vmul.f32 %v5386, %v1623
        %v5407 = vmul.f32 %v5387, %v1624
        %v5408 = vmul.f32 %v5388, %v1620
        %v5409 = vmul.f32 %v5389, %v1614
        %v5410 = vmul.f32 %v5390, %v1622
        %v5411 = vmul.f32 %v5391, %v1623
        %v5412 = vmul.f32 %v5392, %v1624
        %v5413 = vmul.f32 %v5393, %v1620
        %v5414 = vmul.f32 %v5394, %v1614
        %v5415 = vmul.f32 %v5395, %v1622
        %v5416 = vmul.f32 %v5396, %v1623
        %v5417 = vmul.f32 %v5397, %v1624
        %v5418 = vmul.f32 %v5398, %v1620
        %v5419 = vmul.f32 %v5399, %v1614
        %v5420 = vmul.f32 %v5400, %v1622
        %v5421 = vmul.f32 %v5401, %v1623
        %v5422 = vmul.f32 %v5402, %v1624
        %v5423 = vmul.f32 %v5403, %v1620
        %v5424 = vpack.c.bf16 %v5405, %v5404
        %v5425 = vpack.c.bf16 %v5407, %v5406
        %v5426 = vpack.c.bf16 %v5408, %v5408
        %v5427 = vpack.c.bf16 %v5410, %v5409
        %v5428 = vpack.c.bf16 %v5412, %v5411
        %v5429 = vpack.c.bf16 %v5413, %v5413
        %v5430 = vpack.c.bf16 %v5415, %v5414
        %v5431 = vpack.c.bf16 %v5417, %v5416
        %v5432 = vpack.c.bf16 %v5418, %v5418
        %v5433 = vpack.c.bf16 %v5420, %v5419
        %v5434 = vpack.c.bf16 %v5422, %v5421
        %v5435 = vpack.c.bf16 %v5423, %v5423
        %5448 = vrot.lane.b32.xlu0 %v5424, 127
        %v5449 = vpop.permute.xlu0 %5448
        %5450 = vrot.lane.b32.xlu0 %v5425, 127
        %v5451 = vpop.permute.xlu0 %5450
        %5452 = vrot.lane.b32.xlu0 %v5426, 127
        %v5453 = vpop.permute.xlu0 %5452
        %5454 = vrot.lane.b32.xlu0 %v5427, 127
        %v5455 = vpop.permute.xlu0 %5454
        %5456 = vrot.lane.b32.xlu0 %v5428, 127
        %v5457 = vpop.permute.xlu0 %5456
        %5458 = vrot.lane.b32.xlu0 %v5429, 127
        %v5459 = vpop.permute.xlu0 %5458
        %5460 = vrot.lane.b32.xlu0 %v5430, 127
        %v5461 = vpop.permute.xlu0 %5460
        %5462 = vrot.lane.b32.xlu0 %v5431, 127
        %v5463 = vpop.permute.xlu0 %5462
        %5464 = vrot.lane.b32.xlu0 %v5432, 127
        %v5465 = vpop.permute.xlu0 %5464
        %5466 = vrot.lane.b32.xlu0 %v5433, 127
        %v5467 = vpop.permute.xlu0 %5466
        %5468 = vrot.lane.b32.xlu0 %v5434, 127
        %v5469 = vpop.permute.xlu0 %5468
        %5470 = vrot.lane.b32.xlu0 %v5435, 127
        %v5471 = vpop.permute.xlu0 %5470
        %v5472 = vrot.slane %v5449, 4
        %v5473 = vrot.slane %v5451, 4
        %v5474 = vrot.slane %v5453, 4
        %v5475 = vrot.slane %v5455, 4
        %v5476 = vrot.slane %v5457, 4
        %v5477 = vrot.slane %v5459, 4
        %v5478 = vrot.slane %v5461, 4
        %v5479 = vrot.slane %v5463, 4
        %v5480 = vrot.slane %v5465, 4
        %v5481 = vrot.slane %v5467, 4
        %v5482 = vrot.slane %v5469, 4
        %v5483 = vrot.slane %v5471, 4
        %v5484 = vsel %vm532, %v5472, %v5473
        %v5485 = vsel %vm1671, %v5449, %v5484
        %v5486 = vsel %vm532, %v5473, %v5474
        %v5487 = vsel %vm1671, %v5451, %v5486
        %v5488 = vsel %vm532, %v5475, %v5476
        %v5489 = vsel %vm1671, %v5455, %v5488
        %v5490 = vsel %vm532, %v5476, %v5477
        %v5491 = vsel %vm1671, %v5457, %v5490
        %v5492 = vsel %vm532, %v5478, %v5479
        %v5493 = vsel %vm1671, %v5461, %v5492
        %v5494 = vsel %vm532, %v5479, %v5480
        %v5495 = vsel %vm1671, %v5463, %v5494
        %v5496 = vsel %vm532, %v5481, %v5482
        %v5497 = vsel %vm1671, %v5467, %v5496
        %v5498 = vsel %vm532, %v5482, %v5483
        %v5499 = vsel %vm1671, %v5469, %v5498
        %5508 = vst [vmem:[#allocation3 + $0x380] sm:$0xff] %v5485
        %5509 = vst [vmem:[#allocation3 + $0x388] sm:$0xff] %v5487
        %5510 = vst [vmem:[#allocation3 + $0x390] sm:$0xff] %v5489
        %5511 = vst [vmem:[#allocation3 + $0x398] sm:$0xff] %v5491
        %5512 = vst [vmem:[#allocation3 + $0x3a0] sm:$0xff] %v5493
        %5513 = vst [vmem:[#allocation3 + $0x3a8] sm:$0xff] %v5495
        %5514 = vst [vmem:[#allocation3 + $0x3b0] sm:$0xff] %v5497
        %5515 = vst [vmem:[#allocation3 + $0x3b8] sm:$0xff] %v5499
        %v5516 = vld [vmem:[#allocation2 + $0x8] sm:$0xff]
        %v5517 = vld [vmem:[#allocation2 + $0x10] sm:$0xff]
        %v5518 = vld [vmem:[#allocation2 + $0x18] sm:$0xff]
        %v5519 = vld [vmem:[#allocation2 + $0x20] sm:$0xff]
        %v5520 = vld [vmem:[#allocation2 + $0x28] sm:$0xff]
        %v5521 = vld [vmem:[#allocation2 + $0x38] sm:$0xff]
        %v5522 = vld [vmem:[#allocation2 + $0x40] sm:$0xff]
        %v5523 = vld [vmem:[#allocation2 + $0x48] sm:$0xff]
        %v5524 = vld [vmem:[#allocation2 + $0x50] sm:$0xff]
        %v5525 = vld [vmem:[#allocation2 + $0x58] sm:$0xff]
        %v5526 = vld [vmem:[#allocation2 + $0x68] sm:$0xff]
        %v5527 = vld [vmem:[#allocation2 + $0x70] sm:$0xff]
        %v5528 = vld [vmem:[#allocation2 + $0x78] sm:$0xff]
        %v5529 = vld [vmem:[#allocation2 + $0x80] sm:$0xff]
        %v5530 = vld [vmem:[#allocation2 + $0x88] sm:$0xff]
        %v5531 = vld [vmem:[#allocation2 + $0x98] sm:$0xff]
        %v5532 = vld [vmem:[#allocation2 + $0xa0] sm:$0xff]
        %v5533 = vld [vmem:[#allocation2 + $0xa8] sm:$0xff]
        %v5534 = vld [vmem:[#allocation2 + $0xb0] sm:$0xff]
        %v5535 = vld [vmem:[#allocation2 + $0xb8] sm:$0xff]
        %v5536 = vmul.f32 %v5516, %v1698
        %v5537 = vmul.f32 %v5517, %v1706
        %v5538 = vmul.f32 %v5518, %v1707
        %v5539 = vmul.f32 %v5519, %v1708
        %v5540 = vmul.f32 %v5520, %v1704
        %v5541 = vmul.f32 %v5521, %v1698
        %v5542 = vmul.f32 %v5522, %v1706
        %v5543 = vmul.f32 %v5523, %v1707
        %v5544 = vmul.f32 %v5524, %v1708
        %v5545 = vmul.f32 %v5525, %v1704
        %v5546 = vmul.f32 %v5526, %v1698
        %v5547 = vmul.f32 %v5527, %v1706
        %v5548 = vmul.f32 %v5528, %v1707
        %v5549 = vmul.f32 %v5529, %v1708
        %v5550 = vmul.f32 %v5530, %v1704
        %v5551 = vmul.f32 %v5531, %v1698
        %v5552 = vmul.f32 %v5532, %v1706
        %v5553 = vmul.f32 %v5533, %v1707
        %v5554 = vmul.f32 %v5534, %v1708
        %v5555 = vmul.f32 %v5535, %v1704
        %v5556 = vpack.c.bf16 %v5537, %v5536
        %v5557 = vpack.c.bf16 %v5539, %v5538
        %v5558 = vpack.c.bf16 %v5540, %v5540
        %v5559 = vpack.c.bf16 %v5542, %v5541
        %v5560 = vpack.c.bf16 %v5544, %v5543
        %v5561 = vpack.c.bf16 %v5545, %v5545
        %v5562 = vpack.c.bf16 %v5547, %v5546
        %v5563 = vpack.c.bf16 %v5549, %v5548
        %v5564 = vpack.c.bf16 %v5550, %v5550
        %v5565 = vpack.c.bf16 %v5552, %v5551
        %v5566 = vpack.c.bf16 %v5554, %v5553
        %v5567 = vpack.c.bf16 %v5555, %v5555
        %5580 = vrot.lane.b32.xlu0 %v5556, 121
        %v5581 = vpop.permute.xlu0 %5580
        %5582 = vrot.lane.b32.xlu0 %v5557, 121
        %v5583 = vpop.permute.xlu0 %5582
        %5584 = vrot.lane.b32.xlu0 %v5558, 121
        %v5585 = vpop.permute.xlu0 %5584
        %5586 = vrot.lane.b32.xlu0 %v5559, 121
        %v5587 = vpop.permute.xlu0 %5586
        %5588 = vrot.lane.b32.xlu0 %v5560, 121
        %v5589 = vpop.permute.xlu0 %5588
        %5590 = vrot.lane.b32.xlu0 %v5561, 121
        %v5591 = vpop.permute.xlu0 %5590
        %5592 = vrot.lane.b32.xlu0 %v5562, 121
        %v5593 = vpop.permute.xlu0 %5592
        %5594 = vrot.lane.b32.xlu0 %v5563, 121
        %v5595 = vpop.permute.xlu0 %5594
        %5596 = vrot.lane.b32.xlu0 %v5564, 121
        %v5597 = vpop.permute.xlu0 %5596
        %5598 = vrot.lane.b32.xlu0 %v5565, 121
        %v5599 = vpop.permute.xlu0 %5598
        %5600 = vrot.lane.b32.xlu0 %v5566, 121
        %v5601 = vpop.permute.xlu0 %5600
        %5602 = vrot.lane.b32.xlu0 %v5567, 121
        %v5603 = vpop.permute.xlu0 %5602
        %v5604 = vrot.slane %v5581, 4
        %v5605 = vrot.slane %v5583, 4
        %v5606 = vrot.slane %v5585, 4
        %v5607 = vrot.slane %v5587, 4
        %v5608 = vrot.slane %v5589, 4
        %v5609 = vrot.slane %v5591, 4
        %v5610 = vrot.slane %v5593, 4
        %v5611 = vrot.slane %v5595, 4
        %v5612 = vrot.slane %v5597, 4
        %v5613 = vrot.slane %v5599, 4
        %v5614 = vrot.slane %v5601, 4
        %v5615 = vrot.slane %v5603, 4
        %v5616 = vsel %vm532, %v5604, %v5605
        %v5617 = vsel %vm1755, %v5581, %v5616
        %v5618 = vsel %vm532, %v5605, %v5606
        %v5619 = vsel %vm1755, %v5583, %v5618
        %v5620 = vsel %vm532, %v5607, %v5608
        %v5621 = vsel %vm1755, %v5587, %v5620
        %v5622 = vsel %vm532, %v5608, %v5609
        %v5623 = vsel %vm1755, %v5589, %v5622
        %v5624 = vsel %vm532, %v5610, %v5611
        %v5625 = vsel %vm1755, %v5593, %v5624
        %v5626 = vsel %vm532, %v5611, %v5612
        %v5627 = vsel %vm1755, %v5595, %v5626
        %v5628 = vsel %vm532, %v5613, %v5614
        %v5629 = vsel %vm1755, %v5599, %v5628
        %v5630 = vsel %vm532, %v5614, %v5615
        %v5631 = vsel %vm1755, %v5601, %v5630
        %5640 = vst [vmem:[#allocation3 + $0x3c0] sm:$0xff] %v5617
        %5641 = vst [vmem:[#allocation3 + $0x3c8] sm:$0xff] %v5619
        %5642 = vst [vmem:[#allocation3 + $0x3d0] sm:$0xff] %v5621
        %5643 = vst [vmem:[#allocation3 + $0x3d8] sm:$0xff] %v5623
        %5644 = vst [vmem:[#allocation3 + $0x3e0] sm:$0xff] %v5625
        %5645 = vst [vmem:[#allocation3 + $0x3e8] sm:$0xff] %v5627
        %5646 = vst [vmem:[#allocation3 + $0x3f0] sm:$0xff] %v5629
        %5647 = vst [vmem:[#allocation3 + $0x3f8] sm:$0xff] %v5631
        %v5648 = vld [vmem:[#allocation2 + $0x8] sm:$0xff]
        %v5649 = vld [vmem:[#allocation2 + $0x10] sm:$0xff]
        %v5650 = vld [vmem:[#allocation2 + $0x18] sm:$0xff]
        %v5651 = vld [vmem:[#allocation2 + $0x20] sm:$0xff]
        %v5652 = vld [vmem:[#allocation2 + $0x28] sm:$0xff]
        %v5653 = vld [vmem:[#allocation2 + $0x38] sm:$0xff]
        %v5654 = vld [vmem:[#allocation2 + $0x40] sm:$0xff]
        %v5655 = vld [vmem:[#allocation2 + $0x48] sm:$0xff]
        %v5656 = vld [vmem:[#allocation2 + $0x50] sm:$0xff]
        %v5657 = vld [vmem:[#allocation2 + $0x58] sm:$0xff]
        %v5658 = vld [vmem:[#allocation2 + $0x68] sm:$0xff]
        %v5659 = vld [vmem:[#allocation2 + $0x70] sm:$0xff]
        %v5660 = vld [vmem:[#allocation2 + $0x78] sm:$0xff]
        %v5661 = vld [vmem:[#allocation2 + $0x80] sm:$0xff]
        %v5662 = vld [vmem:[#allocation2 + $0x88] sm:$0xff]
        %v5663 = vld [vmem:[#allocation2 + $0x98] sm:$0xff]
        %v5664 = vld [vmem:[#allocation2 + $0xa0] sm:$0xff]
        %v5665 = vld [vmem:[#allocation2 + $0xa8] sm:$0xff]
        %v5666 = vld [vmem:[#allocation2 + $0xb0] sm:$0xff]
        %v5667 = vld [vmem:[#allocation2 + $0xb8] sm:$0xff]
        %v5668 = vmul.f32 %v5648, %v1782
        %v5669 = vmul.f32 %v5649, %v1790
        %v5670 = vmul.f32 %v5650, %v1791
        %v5671 = vmul.f32 %v5651, %v1792
        %v5672 = vmul.f32 %v5652, %v1788
        %v5673 = vmul.f32 %v5653, %v1782
        %v5674 = vmul.f32 %v5654, %v1790
        %v5675 = vmul.f32 %v5655, %v1791
        %v5676 = vmul.f32 %v5656, %v1792
        %v5677 = vmul.f32 %v5657, %v1788
        %v5678 = vmul.f32 %v5658, %v1782
        %v5679 = vmul.f32 %v5659, %v1790
        %v5680 = vmul.f32 %v5660, %v1791
        %v5681 = vmul.f32 %v5661, %v1792
        %v5682 = vmul.f32 %v5662, %v1788
        %v5683 = vmul.f32 %v5663, %v1782
        %v5684 = vmul.f32 %v5664, %v1790
        %v5685 = vmul.f32 %v5665, %v1791
        %v5686 = vmul.f32 %v5666, %v1792
        %v5687 = vmul.f32 %v5667, %v1788
        %v5688 = vpack.c.bf16 %v5669, %v5668
        %v5689 = vpack.c.bf16 %v5671, %v5670
        %v5690 = vpack.c.bf16 %v5672, %v5672
        %v5691 = vpack.c.bf16 %v5674, %v5673
        %v5692 = vpack.c.bf16 %v5676, %v5675
        %v5693 = vpack.c.bf16 %v5677, %v5677
        %v5694 = vpack.c.bf16 %v5679, %v5678
        %v5695 = vpack.c.bf16 %v5681, %v5680
        %v5696 = vpack.c.bf16 %v5682, %v5682
        %v5697 = vpack.c.bf16 %v5684, %v5683
        %v5698 = vpack.c.bf16 %v5686, %v5685
        %v5699 = vpack.c.bf16 %v5687, %v5687
        %5712 = vrot.lane.b32.xlu0 %v5688, 120
        %v5713 = vpop.permute.xlu0 %5712
        %5714 = vrot.lane.b32.xlu0 %v5689, 120
        %v5715 = vpop.permute.xlu0 %5714
        %5716 = vrot.lane.b32.xlu0 %v5690, 120
        %v5717 = vpop.permute.xlu0 %5716
        %5718 = vrot.lane.b32.xlu0 %v5691, 120
        %v5719 = vpop.permute.xlu0 %5718
        %5720 = vrot.lane.b32.xlu0 %v5692, 120
        %v5721 = vpop.permute.xlu0 %5720
        %5722 = vrot.lane.b32.xlu0 %v5693, 120
        %v5723 = vpop.permute.xlu0 %5722
        %5724 = vrot.lane.b32.xlu0 %v5694, 120
        %v5725 = vpop.permute.xlu0 %5724
        %5726 = vrot.lane.b32.xlu0 %v5695, 120
        %v5727 = vpop.permute.xlu0 %5726
        %5728 = vrot.lane.b32.xlu0 %v5696, 120
        %v5729 = vpop.permute.xlu0 %5728
        %5730 = vrot.lane.b32.xlu0 %v5697, 120
        %v5731 = vpop.permute.xlu0 %5730
        %5732 = vrot.lane.b32.xlu0 %v5698, 120
        %v5733 = vpop.permute.xlu0 %5732
        %5734 = vrot.lane.b32.xlu0 %v5699, 120
        %v5735 = vpop.permute.xlu0 %5734
        %v5736 = vrot.slane %v5713, 4
        %v5737 = vrot.slane %v5715, 4
        %v5738 = vrot.slane %v5717, 4
        %v5739 = vrot.slane %v5719, 4
        %v5740 = vrot.slane %v5721, 4
        %v5741 = vrot.slane %v5723, 4
        %v5742 = vrot.slane %v5725, 4
        %v5743 = vrot.slane %v5727, 4
        %v5744 = vrot.slane %v5729, 4
        %v5745 = vrot.slane %v5731, 4
        %v5746 = vrot.slane %v5733, 4
        %v5747 = vrot.slane %v5735, 4
        %v5748 = vsel %vm532, %v5736, %v5737
        %v5749 = vsel %vm1839, %v5713, %v5748
        %v5750 = vsel %vm532, %v5737, %v5738
        %v5751 = vsel %vm1839, %v5715, %v5750
        %v5752 = vsel %vm532, %v5739, %v5740
        %v5753 = vsel %vm1839, %v5719, %v5752
        %v5754 = vsel %vm532, %v5740, %v5741
        %v5755 = vsel %vm1839, %v5721, %v5754
        %v5756 = vsel %vm532, %v5742, %v5743
        %v5757 = vsel %vm1839, %v5725, %v5756
        %v5758 = vsel %vm532, %v5743, %v5744
        %v5759 = vsel %vm1839, %v5727, %v5758
        %v5760 = vsel %vm532, %v5745, %v5746
        %v5761 = vsel %vm1839, %v5731, %v5760
        %v5762 = vsel %vm532, %v5746, %v5747
        %v5763 = vsel %vm1839, %v5733, %v5762
        %5772 = vst [vmem:[#allocation3 + $0x400] sm:$0xff] %v5749
        %5773 = vst [vmem:[#allocation3 + $0x408] sm:$0xff] %v5751
        %5774 = vst [vmem:[#allocation3 + $0x410] sm:$0xff] %v5753
        %5775 = vst [vmem:[#allocation3 + $0x418] sm:$0xff] %v5755
        %5776 = vst [vmem:[#allocation3 + $0x420] sm:$0xff] %v5757
        %5777 = vst [vmem:[#allocation3 + $0x428] sm:$0xff] %v5759
        %5778 = vst [vmem:[#allocation3 + $0x430] sm:$0xff] %v5761
        %5779 = vst [vmem:[#allocation3 + $0x438] sm:$0xff] %v5763
        %v5780 = vld [vmem:[#allocation2 + $0x8] sm:$0xff]
        %v5781 = vld [vmem:[#allocation2 + $0x10] sm:$0xff]
        %v5782 = vld [vmem:[#allocation2 + $0x18] sm:$0xff]
        %v5783 = vld [vmem:[#allocation2 + $0x20] sm:$0xff]
        %v5784 = vld [vmem:[#allocation2 + $0x28] sm:$0xff]
        %v5785 = vld [vmem:[#allocation2 + $0x38] sm:$0xff]
        %v5786 = vld [vmem:[#allocation2 + $0x40] sm:$0xff]
        %v5787 = vld [vmem:[#allocation2 + $0x48] sm:$0xff]
        %v5788 = vld [vmem:[#allocation2 + $0x50] sm:$0xff]
        %v5789 = vld [vmem:[#allocation2 + $0x58] sm:$0xff]
        %v5790 = vld [vmem:[#allocation2 + $0x68] sm:$0xff]
        %v5791 = vld [vmem:[#allocation2 + $0x70] sm:$0xff]
        %v5792 = vld [vmem:[#allocation2 + $0x78] sm:$0xff]
        %v5793 = vld [vmem:[#allocation2 + $0x80] sm:$0xff]
        %v5794 = vld [vmem:[#allocation2 + $0x88] sm:$0xff]
        %v5795 = vld [vmem:[#allocation2 + $0x98] sm:$0xff]
        %v5796 = vld [vmem:[#allocation2 + $0xa0] sm:$0xff]
        %v5797 = vld [vmem:[#allocation2 + $0xa8] sm:$0xff]
        %v5798 = vld [vmem:[#allocation2 + $0xb0] sm:$0xff]
        %v5799 = vld [vmem:[#allocation2 + $0xb8] sm:$0xff]
        %v5800 = vmul.f32 %v5780, %v1866
        %v5801 = vmul.f32 %v5781, %v1874
        %v5802 = vmul.f32 %v5782, %v1875
        %v5803 = vmul.f32 %v5783, %v1876
        %v5804 = vmul.f32 %v5784, %v1872
        %v5805 = vmul.f32 %v5785, %v1866
        %v5806 = vmul.f32 %v5786, %v1874
        %v5807 = vmul.f32 %v5787, %v1875
        %v5808 = vmul.f32 %v5788, %v1876
        %v5809 = vmul.f32 %v5789, %v1872
        %v5810 = vmul.f32 %v5790, %v1866
        %v5811 = vmul.f32 %v5791, %v1874
        %v5812 = vmul.f32 %v5792, %v1875
        %v5813 = vmul.f32 %v5793, %v1876
        %v5814 = vmul.f32 %v5794, %v1872
        %v5815 = vmul.f32 %v5795, %v1866
        %v5816 = vmul.f32 %v5796, %v1874
        %v5817 = vmul.f32 %v5797, %v1875
        %v5818 = vmul.f32 %v5798, %v1876
        %v5819 = vmul.f32 %v5799, %v1872
        %v5820 = vpack.c.bf16 %v5801, %v5800
        %v5821 = vpack.c.bf16 %v5803, %v5802
        %v5822 = vpack.c.bf16 %v5804, %v5804
        %v5823 = vpack.c.bf16 %v5806, %v5805
        %v5824 = vpack.c.bf16 %v5808, %v5807
        %v5825 = vpack.c.bf16 %v5809, %v5809
        %v5826 = vpack.c.bf16 %v5811, %v5810
        %v5827 = vpack.c.bf16 %v5813, %v5812
        %v5828 = vpack.c.bf16 %v5814, %v5814
        %v5829 = vpack.c.bf16 %v5816, %v5815
        %v5830 = vpack.c.bf16 %v5818, %v5817
        %v5831 = vpack.c.bf16 %v5819, %v5819
        %5844 = vrot.lane.b32.xlu0 %v5820, 119
        %v5845 = vpop.permute.xlu0 %5844
        %5846 = vrot.lane.b32.xlu0 %v5821, 119
        %v5847 = vpop.permute.xlu0 %5846
        %5848 = vrot.lane.b32.xlu0 %v5822, 119
        %v5849 = vpop.permute.xlu0 %5848
        %5850 = vrot.lane.b32.xlu0 %v5823, 119
        %v5851 = vpop.permute.xlu0 %5850
        %5852 = vrot.lane.b32.xlu0 %v5824, 119
        %v5853 = vpop.permute.xlu0 %5852
        %5854 = vrot.lane.b32.xlu0 %v5825, 119
        %v5855 = vpop.permute.xlu0 %5854
        %5856 = vrot.lane.b32.xlu0 %v5826, 119
        %v5857 = vpop.permute.xlu0 %5856
        %5858 = vrot.lane.b32.xlu0 %v5827, 119
        %v5859 = vpop.permute.xlu0 %5858
        %5860 = vrot.lane.b32.xlu0 %v5828, 119
        %v5861 = vpop.permute.xlu0 %5860
        %5862 = vrot.lane.b32.xlu0 %v5829, 119
        %v5863 = vpop.permute.xlu0 %5862
        %5864 = vrot.lane.b32.xlu0 %v5830, 119
        %v5865 = vpop.permute.xlu0 %5864
        %5866 = vrot.lane.b32.xlu0 %v5831, 119
        %v5867 = vpop.permute.xlu0 %5866
        %v5868 = vrot.slane %v5845, 4
        %v5869 = vrot.slane %v5847, 4
        %v5870 = vrot.slane %v5849, 4
        %v5871 = vrot.slane %v5851, 4
        %v5872 = vrot.slane %v5853, 4
        %v5873 = vrot.slane %v5855, 4
        %v5874 = vrot.slane %v5857, 4
        %v5875 = vrot.slane %v5859, 4
        %v5876 = vrot.slane %v5861, 4
        %v5877 = vrot.slane %v5863, 4
        %v5878 = vrot.slane %v5865, 4
        %v5879 = vrot.slane %v5867, 4
        %v5880 = vsel %vm532, %v5868, %v5869
        %v5881 = vsel %vm1923, %v5845, %v5880
        %v5882 = vsel %vm532, %v5869, %v5870
        %v5883 = vsel %vm1923, %v5847, %v5882
        %v5884 = vsel %vm532, %v5871, %v5872
        %v5885 = vsel %vm1923, %v5851, %v5884
        %v5886 = vsel %vm532, %v5872, %v5873
        %v5887 = vsel %vm1923, %v5853, %v5886
        %v5888 = vsel %vm532, %v5874, %v5875
        %v5889 = vsel %vm1923, %v5857, %v5888
        %v5890 = vsel %vm532, %v5875, %v5876
        %v5891 = vsel %vm1923, %v5859, %v5890
        %v5892 = vsel %vm532, %v5877, %v5878
        %v5893 = vsel %vm1923, %v5863, %v5892
        %v5894 = vsel %vm532, %v5878, %v5879
        %v5895 = vsel %vm1923, %v5865, %v5894
        %5904 = vst [vmem:[#allocation3 + $0x440] sm:$0xff] %v5881
        %5905 = vst [vmem:[#allocation3 + $0x448] sm:$0xff] %v5883
        %5906 = vst [vmem:[#allocation3 + $0x450] sm:$0xff] %v5885
        %5907 = vst [vmem:[#allocation3 + $0x458] sm:$0xff] %v5887
        %5908 = vst [vmem:[#allocation3 + $0x460] sm:$0xff] %v5889
        %5909 = vst [vmem:[#allocation3 + $0x468] sm:$0xff] %v5891
        %5910 = vst [vmem:[#allocation3 + $0x470] sm:$0xff] %v5893
        %5911 = vst [vmem:[#allocation3 + $0x478] sm:$0xff] %v5895
        %v5912 = vld [vmem:[#allocation2 + $0x8] sm:$0xff]
        %v5913 = vld [vmem:[#allocation2 + $0x10] sm:$0xff]
        %v5914 = vld [vmem:[#allocation2 + $0x18] sm:$0xff]
        %v5915 = vld [vmem:[#allocation2 + $0x20] sm:$0xff]
        %v5916 = vld [vmem:[#allocation2 + $0x28] sm:$0xff]
        %v5917 = vld [vmem:[#allocation2 + $0x38] sm:$0xff]
        %v5918 = vld [vmem:[#allocation2 + $0x40] sm:$0xff]
        %v5919 = vld [vmem:[#allocation2 + $0x48] sm:$0xff]
        %v5920 = vld [vmem:[#allocation2 + $0x50] sm:$0xff]
        %v5921 = vld [vmem:[#allocation2 + $0x58] sm:$0xff]
        %v5922 = vld [vmem:[#allocation2 + $0x68] sm:$0xff]
        %v5923 = vld [vmem:[#allocation2 + $0x70] sm:$0xff]
        %v5924 = vld [vmem:[#allocation2 + $0x78] sm:$0xff]
        %v5925 = vld [vmem:[#allocation2 + $0x80] sm:$0xff]
        %v5926 = vld [vmem:[#allocation2 + $0x88] sm:$0xff]
        %v5927 = vld [vmem:[#allocation2 + $0x98] sm:$0xff]
        %v5928 = vld [vmem:[#allocation2 + $0xa0] sm:$0xff]
        %v5929 = vld [vmem:[#allocation2 + $0xa8] sm:$0xff]
        %v5930 = vld [vmem:[#allocation2 + $0xb0] sm:$0xff]
        %v5931 = vld [vmem:[#allocation2 + $0xb8] sm:$0xff]
        %v5932 = vmul.f32 %v5912, %v476
        %v5933 = vmul.f32 %v5913, %v484
        %v5934 = vmul.f32 %v5914, %v485
        %v5935 = vmul.f32 %v5915, %v486
        %v5936 = vmul.f32 %v5916, %v482
        %v5937 = vmul.f32 %v5917, %v476
        %v5938 = vmul.f32 %v5918, %v484
        %v5939 = vmul.f32 %v5919, %v485
        %v5940 = vmul.f32 %v5920, %v486
        %v5941 = vmul.f32 %v5921, %v482
        %v5942 = vmul.f32 %v5922, %v476
        %v5943 = vmul.f32 %v5923, %v484
        %v5944 = vmul.f32 %v5924, %v485
        %v5945 = vmul.f32 %v5925, %v486
        %v5946 = vmul.f32 %v5926, %v482
        %v5947 = vmul.f32 %v5927, %v476
        %v5948 = vmul.f32 %v5928, %v484
        %v5949 = vmul.f32 %v5929, %v485
        %v5950 = vmul.f32 %v5930, %v486
        %v5951 = vmul.f32 %v5931, %v482
        %v5952 = vpack.c.bf16 %v5933, %v5932
        %v5953 = vpack.c.bf16 %v5935, %v5934
        %v5954 = vpack.c.bf16 %v5936, %v5936
        %v5955 = vpack.c.bf16 %v5938, %v5937
        %v5956 = vpack.c.bf16 %v5940, %v5939
        %v5957 = vpack.c.bf16 %v5941, %v5941
        %v5958 = vpack.c.bf16 %v5943, %v5942
        %v5959 = vpack.c.bf16 %v5945, %v5944
        %v5960 = vpack.c.bf16 %v5946, %v5946
        %v5961 = vpack.c.bf16 %v5948, %v5947
        %v5962 = vpack.c.bf16 %v5950, %v5949
        %v5963 = vpack.c.bf16 %v5951, %v5951
        %5976 = vrot.lane.b32.xlu0 %v5952, 73
        %v5977 = vpop.permute.xlu0 %5976
        %5978 = vrot.lane.b32.xlu0 %v5953, 73
        %v5979 = vpop.permute.xlu0 %5978
        %5980 = vrot.lane.b32.xlu0 %v5954, 73
        %v5981 = vpop.permute.xlu0 %5980
        %5982 = vrot.lane.b32.xlu0 %v5955, 73
        %v5983 = vpop.permute.xlu0 %5982
        %5984 = vrot.lane.b32.xlu0 %v5956, 73
        %v5985 = vpop.permute.xlu0 %5984
        %5986 = vrot.lane.b32.xlu0 %v5957, 73
        %v5987 = vpop.permute.xlu0 %5986
        %5988 = vrot.lane.b32.xlu0 %v5958, 73
        %v5989 = vpop.permute.xlu0 %5988
        %5990 = vrot.lane.b32.xlu0 %v5959, 73
        %v5991 = vpop.permute.xlu0 %5990
        %5992 = vrot.lane.b32.xlu0 %v5960, 73
        %v5993 = vpop.permute.xlu0 %5992
        %5994 = vrot.lane.b32.xlu0 %v5961, 73
        %v5995 = vpop.permute.xlu0 %5994
        %5996 = vrot.lane.b32.xlu0 %v5962, 73
        %v5997 = vpop.permute.xlu0 %5996
        %5998 = vrot.lane.b32.xlu0 %v5963, 73
        %v5999 = vpop.permute.xlu0 %5998
        %v6000 = vrot.slane %v5977, 4
        %v6001 = vrot.slane %v5979, 4
        %v6002 = vrot.slane %v5981, 4
        %v6003 = vrot.slane %v5983, 4
        %v6004 = vrot.slane %v5985, 4
        %v6005 = vrot.slane %v5987, 4
        %v6006 = vrot.slane %v5989, 4
        %v6007 = vrot.slane %v5991, 4
        %v6008 = vrot.slane %v5993, 4
        %v6009 = vrot.slane %v5995, 4
        %v6010 = vrot.slane %v5997, 4
        %v6011 = vrot.slane %v5999, 4
        %v6012 = vsel %vm532, %v6000, %v6001
        %v6013 = vsel %vm534, %v5977, %v6012
        %v6014 = vsel %vm532, %v6001, %v6002
        %v6015 = vsel %vm534, %v5979, %v6014
        %v6016 = vsel %vm532, %v6003, %v6004
        %v6017 = vsel %vm534, %v5983, %v6016
        %v6018 = vsel %vm532, %v6004, %v6005
        %v6019 = vsel %vm534, %v5985, %v6018
        %v6020 = vsel %vm532, %v6006, %v6007
        %v6021 = vsel %vm534, %v5989, %v6020
        %v6022 = vsel %vm532, %v6007, %v6008
        %v6023 = vsel %vm534, %v5991, %v6022
        %v6024 = vsel %vm532, %v6009, %v6010
        %v6025 = vsel %vm534, %v5995, %v6024
        %v6026 = vsel %vm532, %v6010, %v6011
        %v6027 = vsel %vm534, %v5997, %v6026
        %6036 = vst [vmem:[#allocation3 + $0x480] sm:$0xff] %v6013
        %6037 = vst [vmem:[#allocation3 + $0x488] sm:$0xff] %v6015
        %6038 = vst [vmem:[#allocation3 + $0x490] sm:$0xff] %v6017
        %6039 = vst [vmem:[#allocation3 + $0x498] sm:$0xff] %v6019
        %6040 = vst [vmem:[#allocation3 + $0x4a0] sm:$0xff] %v6021
        %6041 = vst [vmem:[#allocation3 + $0x4a8] sm:$0xff] %v6023
        %6042 = vst [vmem:[#allocation3 + $0x4b0] sm:$0xff] %v6025
        %6043 = vst [vmem:[#allocation3 + $0x4b8] sm:$0xff] %v6027
        %v6044 = vld [vmem:[#allocation2 + $0x8] sm:$0xff]
        %v6045 = vld [vmem:[#allocation2 + $0x10] sm:$0xff]
        %v6046 = vld [vmem:[#allocation2 + $0x18] sm:$0xff]
        %v6047 = vld [vmem:[#allocation2 + $0x20] sm:$0xff]
        %v6048 = vld [vmem:[#allocation2 + $0x28] sm:$0xff]
        %v6049 = vld [vmem:[#allocation2 + $0x38] sm:$0xff]
        %v6050 = vld [vmem:[#allocation2 + $0x40] sm:$0xff]
        %v6051 = vld [vmem:[#allocation2 + $0x48] sm:$0xff]
        %v6052 = vld [vmem:[#allocation2 + $0x50] sm:$0xff]
        %v6053 = vld [vmem:[#allocation2 + $0x58] sm:$0xff]
        %v6054 = vld [vmem:[#allocation2 + $0x68] sm:$0xff]
        %v6055 = vld [vmem:[#allocation2 + $0x70] sm:$0xff]
        %v6056 = vld [vmem:[#allocation2 + $0x78] sm:$0xff]
        %v6057 = vld [vmem:[#allocation2 + $0x80] sm:$0xff]
        %v6058 = vld [vmem:[#allocation2 + $0x88] sm:$0xff]
        %v6059 = vld [vmem:[#allocation2 + $0x98] sm:$0xff]
        %v6060 = vld [vmem:[#allocation2 + $0xa0] sm:$0xff]
        %v6061 = vld [vmem:[#allocation2 + $0xa8] sm:$0xff]
        %v6062 = vld [vmem:[#allocation2 + $0xb0] sm:$0xff]
        %v6063 = vld [vmem:[#allocation2 + $0xb8] sm:$0xff]
        %v6064 = vmul.f32 %v6044, %v569
        %v6065 = vmul.f32 %v6045, %v577
        %v6066 = vmul.f32 %v6046, %v578
        %v6067 = vmul.f32 %v6047, %v579
        %v6068 = vmul.f32 %v6048, %v575
        %v6069 = vmul.f32 %v6049, %v569
        %v6070 = vmul.f32 %v6050, %v577
        %v6071 = vmul.f32 %v6051, %v578
        %v6072 = vmul.f32 %v6052, %v579
        %v6073 = vmul.f32 %v6053, %v575
        %v6074 = vmul.f32 %v6054, %v569
        %v6075 = vmul.f32 %v6055, %v577
        %v6076 = vmul.f32 %v6056, %v578
        %v6077 = vmul.f32 %v6057, %v579
        %v6078 = vmul.f32 %v6058, %v575
        %v6079 = vmul.f32 %v6059, %v569
        %v6080 = vmul.f32 %v6060, %v577
        %v6081 = vmul.f32 %v6061, %v578
        %v6082 = vmul.f32 %v6062, %v579
        %v6083 = vmul.f32 %v6063, %v575
        %v6084 = vpack.c.bf16 %v6065, %v6064
        %v6085 = vpack.c.bf16 %v6067, %v6066
        %v6086 = vpack.c.bf16 %v6068, %v6068
        %v6087 = vpack.c.bf16 %v6070, %v6069
        %v6088 = vpack.c.bf16 %v6072, %v6071
        %v6089 = vpack.c.bf16 %v6073, %v6073
        %v6090 = vpack.c.bf16 %v6075, %v6074
        %v6091 = vpack.c.bf16 %v6077, %v6076
        %v6092 = vpack.c.bf16 %v6078, %v6078
        %v6093 = vpack.c.bf16 %v6080, %v6079
        %v6094 = vpack.c.bf16 %v6082, %v6081
        %v6095 = vpack.c.bf16 %v6083, %v6083
        %6108 = vrot.lane.b32.xlu0 %v6084, 72
        %v6109 = vpop.permute.xlu0 %6108
        %6110 = vrot.lane.b32.xlu0 %v6085, 72
        %v6111 = vpop.permute.xlu0 %6110
        %6112 = vrot.lane.b32.xlu0 %v6086, 72
        %v6113 = vpop.permute.xlu0 %6112
        %6114 = vrot.lane.b32.xlu0 %v6087, 72
        %v6115 = vpop.permute.xlu0 %6114
        %6116 = vrot.lane.b32.xlu0 %v6088, 72
        %v6117 = vpop.permute.xlu0 %6116
        %6118 = vrot.lane.b32.xlu0 %v6089, 72
        %v6119 = vpop.permute.xlu0 %6118
        %6120 = vrot.lane.b32.xlu0 %v6090, 72
        %v6121 = vpop.permute.xlu0 %6120
        %6122 = vrot.lane.b32.xlu0 %v6091, 72
        %v6123 = vpop.permute.xlu0 %6122
        %6124 = vrot.lane.b32.xlu0 %v6092, 72
        %v6125 = vpop.permute.xlu0 %6124
        %6126 = vrot.lane.b32.xlu0 %v6093, 72
        %v6127 = vpop.permute.xlu0 %6126
        %6128 = vrot.lane.b32.xlu0 %v6094, 72
        %v6129 = vpop.permute.xlu0 %6128
        %6130 = vrot.lane.b32.xlu0 %v6095, 72
        %v6131 = vpop.permute.xlu0 %6130
        %v6132 = vrot.slane %v6109, 4
        %v6133 = vrot.slane %v6111, 4
        %v6134 = vrot.slane %v6113, 4
        %v6135 = vrot.slane %v6115, 4
        %v6136 = vrot.slane %v6117, 4
        %v6137 = vrot.slane %v6119, 4
        %v6138 = vrot.slane %v6121, 4
        %v6139 = vrot.slane %v6123, 4
        %v6140 = vrot.slane %v6125, 4
        %v6141 = vrot.slane %v6127, 4
        %v6142 = vrot.slane %v6129, 4
        %v6143 = vrot.slane %v6131, 4
        %v6144 = vsel %vm532, %v6132, %v6133
        %v6145 = vsel %vm626, %v6109, %v6144
        %v6146 = vsel %vm532, %v6133, %v6134
        %v6147 = vsel %vm626, %v6111, %v6146
        %v6148 = vsel %vm532, %v6135, %v6136
        %v6149 = vsel %vm626, %v6115, %v6148
        %v6150 = vsel %vm532, %v6136, %v6137
        %v6151 = vsel %vm626, %v6117, %v6150
        %v6152 = vsel %vm532, %v6138, %v6139
        %v6153 = vsel %vm626, %v6121, %v6152
        %v6154 = vsel %vm532, %v6139, %v6140
        %v6155 = vsel %vm626, %v6123, %v6154
        %v6156 = vsel %vm532, %v6141, %v6142
        %v6157 = vsel %vm626, %v6127, %v6156
        %v6158 = vsel %vm532, %v6142, %v6143
        %v6159 = vsel %vm626, %v6129, %v6158
        %6168 = vst [vmem:[#allocation3 + $0x4c0] sm:$0xff] %v6145
        %6169 = vst [vmem:[#allocation3 + $0x4c8] sm:$0xff] %v6147
        %6170 = vst [vmem:[#allocation3 + $0x4d0] sm:$0xff] %v6149
        %6171 = vst [vmem:[#allocation3 + $0x4d8] sm:$0xff] %v6151
        %6172 = vst [vmem:[#allocation3 + $0x4e0] sm:$0xff] %v6153
        %6173 = vst [vmem:[#allocation3 + $0x4e8] sm:$0xff] %v6155
        %6174 = vst [vmem:[#allocation3 + $0x4f0] sm:$0xff] %v6157
        %6175 = vst [vmem:[#allocation3 + $0x4f8] sm:$0xff] %v6159
        %v6176 = vld [vmem:[#allocation2 + $0x8] sm:$0xff]
        %v6177 = vld [vmem:[#allocation2 + $0x10] sm:$0xff]
        %v6178 = vld [vmem:[#allocation2 + $0x18] sm:$0xff]
        %v6179 = vld [vmem:[#allocation2 + $0x20] sm:$0xff]
        %v6180 = vld [vmem:[#allocation2 + $0x28] sm:$0xff]
        %v6181 = vld [vmem:[#allocation2 + $0x38] sm:$0xff]
        %v6182 = vld [vmem:[#allocation2 + $0x40] sm:$0xff]
        %v6183 = vld [vmem:[#allocation2 + $0x48] sm:$0xff]
        %v6184 = vld [vmem:[#allocation2 + $0x50] sm:$0xff]
        %v6185 = vld [vmem:[#allocation2 + $0x58] sm:$0xff]
        %v6186 = vld [vmem:[#allocation2 + $0x68] sm:$0xff]
        %v6187 = vld [vmem:[#allocation2 + $0x70] sm:$0xff]
        %v6188 = vld [vmem:[#allocation2 + $0x78] sm:$0xff]
        %v6189 = vld [vmem:[#allocation2 + $0x80] sm:$0xff]
        %v6190 = vld [vmem:[#allocation2 + $0x88] sm:$0xff]
        %v6191 = vld [vmem:[#allocation2 + $0x98] sm:$0xff]
        %v6192 = vld [vmem:[#allocation2 + $0xa0] sm:$0xff]
        %v6193 = vld [vmem:[#allocation2 + $0xa8] sm:$0xff]
        %v6194 = vld [vmem:[#allocation2 + $0xb0] sm:$0xff]
        %v6195 = vld [vmem:[#allocation2 + $0xb8] sm:$0xff]
        %v6196 = vmul.f32 %v6176, %v661
        %v6197 = vmul.f32 %v6177, %v669
        %v6198 = vmul.f32 %v6178, %v670
        %v6199 = vmul.f32 %v6179, %v671
        %v6200 = vmul.f32 %v6180, %v667
        %v6201 = vmul.f32 %v6181, %v661
        %v6202 = vmul.f32 %v6182, %v669
        %v6203 = vmul.f32 %v6183, %v670
        %v6204 = vmul.f32 %v6184, %v671
        %v6205 = vmul.f32 %v6185, %v667
        %v6206 = vmul.f32 %v6186, %v661
        %v6207 = vmul.f32 %v6187, %v669
        %v6208 = vmul.f32 %v6188, %v670
        %v6209 = vmul.f32 %v6189, %v671
        %v6210 = vmul.f32 %v6190, %v667
        %v6211 = vmul.f32 %v6191, %v661
        %v6212 = vmul.f32 %v6192, %v669
        %v6213 = vmul.f32 %v6193, %v670
        %v6214 = vmul.f32 %v6194, %v671
        %v6215 = vmul.f32 %v6195, %v667
        %v6216 = vpack.c.bf16 %v6197, %v6196
        %v6217 = vpack.c.bf16 %v6199, %v6198
        %v6218 = vpack.c.bf16 %v6200, %v6200
        %v6219 = vpack.c.bf16 %v6202, %v6201
        %v6220 = vpack.c.bf16 %v6204, %v6203
        %v6221 = vpack.c.bf16 %v6205, %v6205
        %v6222 = vpack.c.bf16 %v6207, %v6206
        %v6223 = vpack.c.bf16 %v6209, %v6208
        %v6224 = vpack.c.bf16 %v6210, %v6210
        %v6225 = vpack.c.bf16 %v6212, %v6211
        %v6226 = vpack.c.bf16 %v6214, %v6213
        %v6227 = vpack.c.bf16 %v6215, %v6215
        %6240 = vrot.lane.b32.xlu0 %v6216, 71
        %v6241 = vpop.permute.xlu0 %6240
        %6242 = vrot.lane.b32.xlu0 %v6217, 71
        %v6243 = vpop.permute.xlu0 %6242
        %6244 = vrot.lane.b32.xlu0 %v6218, 71
        %v6245 = vpop.permute.xlu0 %6244
        %6246 = vrot.lane.b32.xlu0 %v6219, 71
        %v6247 = vpop.permute.xlu0 %6246
        %6248 = vrot.lane.b32.xlu0 %v6220, 71
        %v6249 = vpop.permute.xlu0 %6248
        %6250 = vrot.lane.b32.xlu0 %v6221, 71
        %v6251 = vpop.permute.xlu0 %6250
        %6252 = vrot.lane.b32.xlu0 %v6222, 71
        %v6253 = vpop.permute.xlu0 %6252
        %6254 = vrot.lane.b32.xlu0 %v6223, 71
        %v6255 = vpop.permute.xlu0 %6254
        %6256 = vrot.lane.b32.xlu0 %v6224, 71
        %v6257 = vpop.permute.xlu0 %6256
        %6258 = vrot.lane.b32.xlu0 %v6225, 71
        %v6259 = vpop.permute.xlu0 %6258
        %6260 = vrot.lane.b32.xlu0 %v6226, 71
        %v6261 = vpop.permute.xlu0 %6260
        %6262 = vrot.lane.b32.xlu0 %v6227, 71
        %v6263 = vpop.permute.xlu0 %6262
        %v6264 = vrot.slane %v6241, 4
        %v6265 = vrot.slane %v6243, 4
        %v6266 = vrot.slane %v6245, 4
        %v6267 = vrot.slane %v6247, 4
        %v6268 = vrot.slane %v6249, 4
        %v6269 = vrot.slane %v6251, 4
        %v6270 = vrot.slane %v6253, 4
        %v6271 = vrot.slane %v6255, 4
        %v6272 = vrot.slane %v6257, 4
        %v6273 = vrot.slane %v6259, 4
        %v6274 = vrot.slane %v6261, 4
        %v6275 = vrot.slane %v6263, 4
        %v6276 = vsel %vm532, %v6264, %v6265
        %v6277 = vsel %vm718, %v6241, %v6276
        %v6278 = vsel %vm532, %v6265, %v6266
        %v6279 = vsel %vm718, %v6243, %v6278
        %v6280 = vsel %vm532, %v6267, %v6268
        %v6281 = vsel %vm718, %v6247, %v6280
        %v6282 = vsel %vm532, %v6268, %v6269
        %v6283 = vsel %vm718, %v6249, %v6282
        %v6284 = vsel %vm532, %v6270, %v6271
        %v6285 = vsel %vm718, %v6253, %v6284
        %v6286 = vsel %vm532, %v6271, %v6272
        %v6287 = vsel %vm718, %v6255, %v6286
        %v6288 = vsel %vm532, %v6273, %v6274
        %v6289 = vsel %vm718, %v6259, %v6288
        %v6290 = vsel %vm532, %v6274, %v6275
        %v6291 = vsel %vm718, %v6261, %v6290
        %6300 = vst [vmem:[#allocation3 + $0x500] sm:$0xff] %v6277
        %6301 = vst [vmem:[#allocation3 + $0x508] sm:$0xff] %v6279
        %6302 = vst [vmem:[#allocation3 + $0x510] sm:$0xff] %v6281
        %6303 = vst [vmem:[#allocation3 + $0x518] sm:$0xff] %v6283
        %6304 = vst [vmem:[#allocation3 + $0x520] sm:$0xff] %v6285
        %6305 = vst [vmem:[#allocation3 + $0x528] sm:$0xff] %v6287
        %6306 = vst [vmem:[#allocation3 + $0x530] sm:$0xff] %v6289
        %6307 = vst [vmem:[#allocation3 + $0x538] sm:$0xff] %v6291
        %v6308 = vld [vmem:[#allocation2 + $0x8] sm:$0xff]
        %v6309 = vld [vmem:[#allocation2 + $0x10] sm:$0xff]
        %v6310 = vld [vmem:[#allocation2 + $0x18] sm:$0xff]
        %v6311 = vld [vmem:[#allocation2 + $0x20] sm:$0xff]
        %v6312 = vld [vmem:[#allocation2 + $0x28] sm:$0xff]
        %v6313 = vld [vmem:[#allocation2 + $0x38] sm:$0xff]
        %v6314 = vld [vmem:[#allocation2 + $0x40] sm:$0xff]
        %v6315 = vld [vmem:[#allocation2 + $0x48] sm:$0xff]
        %v6316 = vld [vmem:[#allocation2 + $0x50] sm:$0xff]
        %v6317 = vld [vmem:[#allocation2 + $0x58] sm:$0xff]
        %v6318 = vld [vmem:[#allocation2 + $0x68] sm:$0xff]
        %v6319 = vld [vmem:[#allocation2 + $0x70] sm:$0xff]
        %v6320 = vld [vmem:[#allocation2 + $0x78] sm:$0xff]
        %v6321 = vld [vmem:[#allocation2 + $0x80] sm:$0xff]
        %v6322 = vld [vmem:[#allocation2 + $0x88] sm:$0xff]
        %v6323 = vld [vmem:[#allocation2 + $0x98] sm:$0xff]
        %v6324 = vld [vmem:[#allocation2 + $0xa0] sm:$0xff]
        %v6325 = vld [vmem:[#allocation2 + $0xa8] sm:$0xff]
        %v6326 = vld [vmem:[#allocation2 + $0xb0] sm:$0xff]
        %v6327 = vld [vmem:[#allocation2 + $0xb8] sm:$0xff]
        %v6328 = vmul.f32 %v6308, %v753
        %v6329 = vmul.f32 %v6309, %v761
        %v6330 = vmul.f32 %v6310, %v762
        %v6331 = vmul.f32 %v6311, %v763
        %v6332 = vmul.f32 %v6312, %v759
        %v6333 = vmul.f32 %v6313, %v753
        %v6334 = vmul.f32 %v6314, %v761
        %v6335 = vmul.f32 %v6315, %v762
        %v6336 = vmul.f32 %v6316, %v763
        %v6337 = vmul.f32 %v6317, %v759
        %v6338 = vmul.f32 %v6318, %v753
        %v6339 = vmul.f32 %v6319, %v761
        %v6340 = vmul.f32 %v6320, %v762
        %v6341 = vmul.f32 %v6321, %v763
        %v6342 = vmul.f32 %v6322, %v759
        %v6343 = vmul.f32 %v6323, %v753
        %v6344 = vmul.f32 %v6324, %v761
        %v6345 = vmul.f32 %v6325, %v762
        %v6346 = vmul.f32 %v6326, %v763
        %v6347 = vmul.f32 %v6327, %v759
        %v6348 = vpack.c.bf16 %v6329, %v6328
        %v6349 = vpack.c.bf16 %v6331, %v6330
        %v6350 = vpack.c.bf16 %v6332, %v6332
        %v6351 = vpack.c.bf16 %v6334, %v6333
        %v6352 = vpack.c.bf16 %v6336, %v6335
        %v6353 = vpack.c.bf16 %v6337, %v6337
        %v6354 = vpack.c.bf16 %v6339, %v6338
        %v6355 = vpack.c.bf16 %v6341, %v6340
        %v6356 = vpack.c.bf16 %v6342, %v6342
        %v6357 = vpack.c.bf16 %v6344, %v6343
        %v6358 = vpack.c.bf16 %v6346, %v6345
        %v6359 = vpack.c.bf16 %v6347, %v6347
        %6372 = vrot.lane.b32.xlu0 %v6348, 65
        %v6373 = vpop.permute.xlu0 %6372
        %6374 = vrot.lane.b32.xlu0 %v6349, 65
        %v6375 = vpop.permute.xlu0 %6374
        %6376 = vrot.lane.b32.xlu0 %v6350, 65
        %v6377 = vpop.permute.xlu0 %6376
        %6378 = vrot.lane.b32.xlu0 %v6351, 65
        %v6379 = vpop.permute.xlu0 %6378
        %6380 = vrot.lane.b32.xlu0 %v6352, 65
        %v6381 = vpop.permute.xlu0 %6380
        %6382 = vrot.lane.b32.xlu0 %v6353, 65
        %v6383 = vpop.permute.xlu0 %6382
        %6384 = vrot.lane.b32.xlu0 %v6354, 65
        %v6385 = vpop.permute.xlu0 %6384
        %6386 = vrot.lane.b32.xlu0 %v6355, 65
        %v6387 = vpop.permute.xlu0 %6386
        %6388 = vrot.lane.b32.xlu0 %v6356, 65
        %v6389 = vpop.permute.xlu0 %6388
        %6390 = vrot.lane.b32.xlu0 %v6357, 65
        %v6391 = vpop.permute.xlu0 %6390
        %6392 = vrot.lane.b32.xlu0 %v6358, 65
        %v6393 = vpop.permute.xlu0 %6392
        %6394 = vrot.lane.b32.xlu0 %v6359, 65
        %v6395 = vpop.permute.xlu0 %6394
        %v6396 = vrot.slane %v6373, 4
        %v6397 = vrot.slane %v6375, 4
        %v6398 = vrot.slane %v6377, 4
        %v6399 = vrot.slane %v6379, 4
        %v6400 = vrot.slane %v6381, 4
        %v6401 = vrot.slane %v6383, 4
        %v6402 = vrot.slane %v6385, 4
        %v6403 = vrot.slane %v6387, 4
        %v6404 = vrot.slane %v6389, 4
        %v6405 = vrot.slane %v6391, 4
        %v6406 = vrot.slane %v6393, 4
        %v6407 = vrot.slane %v6395, 4
        %v6408 = vsel %vm532, %v6396, %v6397
        %v6409 = vsel %vm810, %v6373, %v6408
        %v6410 = vsel %vm532, %v6397, %v6398
        %v6411 = vsel %vm810, %v6375, %v6410
        %v6412 = vsel %vm532, %v6399, %v6400
        %v6413 = vsel %vm810, %v6379, %v6412
        %v6414 = vsel %vm532, %v6400, %v6401
        %v6415 = vsel %vm810, %v6381, %v6414
        %v6416 = vsel %vm532, %v6402, %v6403
        %v6417 = vsel %vm810, %v6385, %v6416
        %v6418 = vsel %vm532, %v6403, %v6404
        %v6419 = vsel %vm810, %v6387, %v6418
        %v6420 = vsel %vm532, %v6405, %v6406
        %v6421 = vsel %vm810, %v6391, %v6420
        %v6422 = vsel %vm532, %v6406, %v6407
        %v6423 = vsel %vm810, %v6393, %v6422
        %6432 = vst [vmem:[#allocation3 + $0x540] sm:$0xff] %v6409
        %6433 = vst [vmem:[#allocation3 + $0x548] sm:$0xff] %v6411
        %6434 = vst [vmem:[#allocation3 + $0x550] sm:$0xff] %v6413
        %6435 = vst [vmem:[#allocation3 + $0x558] sm:$0xff] %v6415
        %6436 = vst [vmem:[#allocation3 + $0x560] sm:$0xff] %v6417
        %6437 = vst [vmem:[#allocation3 + $0x568] sm:$0xff] %v6419
        %6438 = vst [vmem:[#allocation3 + $0x570] sm:$0xff] %v6421
        %6439 = vst [vmem:[#allocation3 + $0x578] sm:$0xff] %v6423
        %v6440 = vld [vmem:[#allocation2 + $0x8] sm:$0xff]
        %v6441 = vld [vmem:[#allocation2 + $0x10] sm:$0xff]
        %v6442 = vld [vmem:[#allocation2 + $0x18] sm:$0xff]
        %v6443 = vld [vmem:[#allocation2 + $0x20] sm:$0xff]
        %v6444 = vld [vmem:[#allocation2 + $0x28] sm:$0xff]
        %v6445 = vld [vmem:[#allocation2 + $0x38] sm:$0xff]
        %v6446 = vld [vmem:[#allocation2 + $0x40] sm:$0xff]
        %v6447 = vld [vmem:[#allocation2 + $0x48] sm:$0xff]
        %v6448 = vld [vmem:[#allocation2 + $0x50] sm:$0xff]
        %v6449 = vld [vmem:[#allocation2 + $0x58] sm:$0xff]
        %v6450 = vld [vmem:[#allocation2 + $0x68] sm:$0xff]
        %v6451 = vld [vmem:[#allocation2 + $0x70] sm:$0xff]
        %v6452 = vld [vmem:[#allocation2 + $0x78] sm:$0xff]
        %v6453 = vld [vmem:[#allocation2 + $0x80] sm:$0xff]
        %v6454 = vld [vmem:[#allocation2 + $0x88] sm:$0xff]
        %v6455 = vld [vmem:[#allocation2 + $0x98] sm:$0xff]
        %v6456 = vld [vmem:[#allocation2 + $0xa0] sm:$0xff]
        %v6457 = vld [vmem:[#allocation2 + $0xa8] sm:$0xff]
        %v6458 = vld [vmem:[#allocation2 + $0xb0] sm:$0xff]
        %v6459 = vld [vmem:[#allocation2 + $0xb8] sm:$0xff]
        %v6460 = vpack.c.bf16 %v6441, %v6440
        %v6461 = vpack.c.bf16 %v6443, %v6442
        %v6462 = vpack.c.bf16 %v6444, %v6444
        %v6463 = vpack.c.bf16 %v6446, %v6445
        %v6464 = vpack.c.bf16 %v6448, %v6447
        %v6465 = vpack.c.bf16 %v6449, %v6449
        %v6466 = vpack.c.bf16 %v6451, %v6450
        %v6467 = vpack.c.bf16 %v6453, %v6452
        %v6468 = vpack.c.bf16 %v6454, %v6454
        %v6469 = vpack.c.bf16 %v6456, %v6455
        %v6470 = vpack.c.bf16 %v6458, %v6457
        %v6471 = vpack.c.bf16 %v6459, %v6459
        %6484 = vrot.lane.b32.xlu0 %v6460, 64
        %v6485 = vpop.permute.xlu0 %6484
        %6486 = vrot.lane.b32.xlu0 %v6461, 64
        %v6487 = vpop.permute.xlu0 %6486
        %6488 = vrot.lane.b32.xlu0 %v6462, 64
        %v6489 = vpop.permute.xlu0 %6488
        %6490 = vrot.lane.b32.xlu0 %v6463, 64
        %v6491 = vpop.permute.xlu0 %6490
        %6492 = vrot.lane.b32.xlu0 %v6464, 64
        %v6493 = vpop.permute.xlu0 %6492
        %6494 = vrot.lane.b32.xlu0 %v6465, 64
        %v6495 = vpop.permute.xlu0 %6494
        %6496 = vrot.lane.b32.xlu0 %v6466, 64
        %v6497 = vpop.permute.xlu0 %6496
        %6498 = vrot.lane.b32.xlu0 %v6467, 64
        %v6499 = vpop.permute.xlu0 %6498
        %6500 = vrot.lane.b32.xlu0 %v6468, 64
        %v6501 = vpop.permute.xlu0 %6500
        %6502 = vrot.lane.b32.xlu0 %v6469, 64
        %v6503 = vpop.permute.xlu0 %6502
        %6504 = vrot.lane.b32.xlu0 %v6470, 64
        %v6505 = vpop.permute.xlu0 %6504
        %6506 = vrot.lane.b32.xlu0 %v6471, 64
        %v6507 = vpop.permute.xlu0 %6506
        %v6508 = vrot.slane %v6485, 4
        %v6509 = vrot.slane %v6487, 4
        %v6510 = vrot.slane %v6489, 4
        %v6511 = vrot.slane %v6491, 4
        %v6512 = vrot.slane %v6493, 4
        %v6513 = vrot.slane %v6495, 4
        %v6514 = vrot.slane %v6497, 4
        %v6515 = vrot.slane %v6499, 4
        %v6516 = vrot.slane %v6501, 4
        %v6517 = vrot.slane %v6503, 4
        %v6518 = vrot.slane %v6505, 4
        %v6519 = vrot.slane %v6507, 4
        %v6520 = vsel %vm532, %v6508, %v6509
        %v6521 = vsel %vm867, %v6485, %v6520
        %v6522 = vsel %vm532, %v6509, %v6510
        %v6523 = vsel %vm867, %v6487, %v6522
        %v6524 = vsel %vm532, %v6511, %v6512
        %v6525 = vsel %vm867, %v6491, %v6524
        %v6526 = vsel %vm532, %v6512, %v6513
        %v6527 = vsel %vm867, %v6493, %v6526
        %v6528 = vsel %vm532, %v6514, %v6515
        %v6529 = vsel %vm867, %v6497, %v6528
        %v6530 = vsel %vm532, %v6515, %v6516
        %v6531 = vsel %vm867, %v6499, %v6530
        %v6532 = vsel %vm532, %v6517, %v6518
        %v6533 = vsel %vm867, %v6503, %v6532
        %v6534 = vsel %vm532, %v6518, %v6519
        %v6535 = vsel %vm867, %v6505, %v6534
        %6544 = vst [vmem:[#allocation3 + $0x580] sm:$0xff] %v6521
        %6545 = vst [vmem:[#allocation3 + $0x588] sm:$0xff] %v6523
        %6546 = vst [vmem:[#allocation3 + $0x590] sm:$0xff] %v6525
        %6547 = vst [vmem:[#allocation3 + $0x598] sm:$0xff] %v6527
        %6548 = vst [vmem:[#allocation3 + $0x5a0] sm:$0xff] %v6529
        %6549 = vst [vmem:[#allocation3 + $0x5a8] sm:$0xff] %v6531
        %6550 = vst [vmem:[#allocation3 + $0x5b0] sm:$0xff] %v6533
        %6551 = vst [vmem:[#allocation3 + $0x5b8] sm:$0xff] %v6535
        %v6552 = vld [vmem:[#allocation2 + $0x8] sm:$0xff]
        %v6553 = vld [vmem:[#allocation2 + $0x10] sm:$0xff]
        %v6554 = vld [vmem:[#allocation2 + $0x18] sm:$0xff]
        %v6555 = vld [vmem:[#allocation2 + $0x20] sm:$0xff]
        %v6556 = vld [vmem:[#allocation2 + $0x28] sm:$0xff]
        %v6557 = vld [vmem:[#allocation2 + $0x38] sm:$0xff]
        %v6558 = vld [vmem:[#allocation2 + $0x40] sm:$0xff]
        %v6559 = vld [vmem:[#allocation2 + $0x48] sm:$0xff]
        %v6560 = vld [vmem:[#allocation2 + $0x50] sm:$0xff]
        %v6561 = vld [vmem:[#allocation2 + $0x58] sm:$0xff]
        %v6562 = vld [vmem:[#allocation2 + $0x68] sm:$0xff]
        %v6563 = vld [vmem:[#allocation2 + $0x70] sm:$0xff]
        %v6564 = vld [vmem:[#allocation2 + $0x78] sm:$0xff]
        %v6565 = vld [vmem:[#allocation2 + $0x80] sm:$0xff]
        %v6566 = vld [vmem:[#allocation2 + $0x88] sm:$0xff]
        %v6567 = vld [vmem:[#allocation2 + $0x98] sm:$0xff]
        %v6568 = vld [vmem:[#allocation2 + $0xa0] sm:$0xff]
        %v6569 = vld [vmem:[#allocation2 + $0xa8] sm:$0xff]
        %v6570 = vld [vmem:[#allocation2 + $0xb0] sm:$0xff]
        %v6571 = vld [vmem:[#allocation2 + $0xb8] sm:$0xff]
        %v6572 = vmul.f32 %v6552, %v902
        %v6573 = vmul.f32 %v6553, %v910
        %v6574 = vmul.f32 %v6554, %v911
        %v6575 = vmul.f32 %v6555, %v912
        %v6576 = vmul.f32 %v6556, %v908
        %v6577 = vmul.f32 %v6557, %v902
        %v6578 = vmul.f32 %v6558, %v910
        %v6579 = vmul.f32 %v6559, %v911
        %v6580 = vmul.f32 %v6560, %v912
        %v6581 = vmul.f32 %v6561, %v908
        %v6582 = vmul.f32 %v6562, %v902
        %v6583 = vmul.f32 %v6563, %v910
        %v6584 = vmul.f32 %v6564, %v911
        %v6585 = vmul.f32 %v6565, %v912
        %v6586 = vmul.f32 %v6566, %v908
        %v6587 = vmul.f32 %v6567, %v902
        %v6588 = vmul.f32 %v6568, %v910
        %v6589 = vmul.f32 %v6569, %v911
        %v6590 = vmul.f32 %v6570, %v912
        %v6591 = vmul.f32 %v6571, %v908
        %v6592 = vpack.c.bf16 %v6573, %v6572
        %v6593 = vpack.c.bf16 %v6575, %v6574
        %v6594 = vpack.c.bf16 %v6576, %v6576
        %v6595 = vpack.c.bf16 %v6578, %v6577
        %v6596 = vpack.c.bf16 %v6580, %v6579
        %v6597 = vpack.c.bf16 %v6581, %v6581
        %v6598 = vpack.c.bf16 %v6583, %v6582
        %v6599 = vpack.c.bf16 %v6585, %v6584
        %v6600 = vpack.c.bf16 %v6586, %v6586
        %v6601 = vpack.c.bf16 %v6588, %v6587
        %v6602 = vpack.c.bf16 %v6590, %v6589
        %v6603 = vpack.c.bf16 %v6591, %v6591
        %6616 = vrot.lane.b32.xlu0 %v6592, 63
        %v6617 = vpop.permute.xlu0 %6616
        %6618 = vrot.lane.b32.xlu0 %v6593, 63
        %v6619 = vpop.permute.xlu0 %6618
        %6620 = vrot.lane.b32.xlu0 %v6594, 63
        %v6621 = vpop.permute.xlu0 %6620
        %6622 = vrot.lane.b32.xlu0 %v6595, 63
        %v6623 = vpop.permute.xlu0 %6622
        %6624 = vrot.lane.b32.xlu0 %v6596, 63
        %v6625 = vpop.permute.xlu0 %6624
        %6626 = vrot.lane.b32.xlu0 %v6597, 63
        %v6627 = vpop.permute.xlu0 %6626
        %6628 = vrot.lane.b32.xlu0 %v6598, 63
        %v6629 = vpop.permute.xlu0 %6628
        %6630 = vrot.lane.b32.xlu0 %v6599, 63
        %v6631 = vpop.permute.xlu0 %6630
        %6632 = vrot.lane.b32.xlu0 %v6600, 63
        %v6633 = vpop.permute.xlu0 %6632
        %6634 = vrot.lane.b32.xlu0 %v6601, 63
        %v6635 = vpop.permute.xlu0 %6634
        %6636 = vrot.lane.b32.xlu0 %v6602, 63
        %v6637 = vpop.permute.xlu0 %6636
        %6638 = vrot.lane.b32.xlu0 %v6603, 63
        %v6639 = vpop.permute.xlu0 %6638
        %v6640 = vrot.slane %v6617, 4
        %v6641 = vrot.slane %v6619, 4
        %v6642 = vrot.slane %v6621, 4
        %v6643 = vrot.slane %v6623, 4
        %v6644 = vrot.slane %v6625, 4
        %v6645 = vrot.slane %v6627, 4
        %v6646 = vrot.slane %v6629, 4
        %v6647 = vrot.slane %v6631, 4
        %v6648 = vrot.slane %v6633, 4
        %v6649 = vrot.slane %v6635, 4
        %v6650 = vrot.slane %v6637, 4
        %v6651 = vrot.slane %v6639, 4
        %v6652 = vsel %vm532, %v6640, %v6641
        %v6653 = vsel %vm959, %v6617, %v6652
        %v6654 = vsel %vm532, %v6641, %v6642
        %v6655 = vsel %vm959, %v6619, %v6654
        %v6656 = vsel %vm532, %v6643, %v6644
        %v6657 = vsel %vm959, %v6623, %v6656
        %v6658 = vsel %vm532, %v6644, %v6645
        %v6659 = vsel %vm959, %v6625, %v6658
        %v6660 = vsel %vm532, %v6646, %v6647
        %v6661 = vsel %vm959, %v6629, %v6660
        %v6662 = vsel %vm532, %v6647, %v6648
        %v6663 = vsel %vm959, %v6631, %v6662
        %v6664 = vsel %vm532, %v6649, %v6650
        %v6665 = vsel %vm959, %v6635, %v6664
        %v6666 = vsel %vm532, %v6650, %v6651
        %v6667 = vsel %vm959, %v6637, %v6666
        %6676 = vst [vmem:[#allocation3 + $0x5c0] sm:$0xff] %v6653
        %6677 = vst [vmem:[#allocation3 + $0x5c8] sm:$0xff] %v6655
        %6678 = vst [vmem:[#allocation3 + $0x5d0] sm:$0xff] %v6657
        %6679 = vst [vmem:[#allocation3 + $0x5d8] sm:$0xff] %v6659
        %6680 = vst [vmem:[#allocation3 + $0x5e0] sm:$0xff] %v6661
        %6681 = vst [vmem:[#allocation3 + $0x5e8] sm:$0xff] %v6663
        %6682 = vst [vmem:[#allocation3 + $0x5f0] sm:$0xff] %v6665
        %6683 = vst [vmem:[#allocation3 + $0x5f8] sm:$0xff] %v6667
        %v6684 = vld [vmem:[#allocation2 + $0x8] sm:$0xff]
        %v6685 = vld [vmem:[#allocation2 + $0x10] sm:$0xff]
        %v6686 = vld [vmem:[#allocation2 + $0x18] sm:$0xff]
        %v6687 = vld [vmem:[#allocation2 + $0x20] sm:$0xff]
        %v6688 = vld [vmem:[#allocation2 + $0x28] sm:$0xff]
        %v6689 = vld [vmem:[#allocation2 + $0x38] sm:$0xff]
        %v6690 = vld [vmem:[#allocation2 + $0x40] sm:$0xff]
        %v6691 = vld [vmem:[#allocation2 + $0x48] sm:$0xff]
        %v6692 = vld [vmem:[#allocation2 + $0x50] sm:$0xff]
        %v6693 = vld [vmem:[#allocation2 + $0x58] sm:$0xff]
        %v6694 = vld [vmem:[#allocation2 + $0x68] sm:$0xff]
        %v6695 = vld [vmem:[#allocation2 + $0x70] sm:$0xff]
        %v6696 = vld [vmem:[#allocation2 + $0x78] sm:$0xff]
        %v6697 = vld [vmem:[#allocation2 + $0x80] sm:$0xff]
        %v6698 = vld [vmem:[#allocation2 + $0x88] sm:$0xff]
        %v6699 = vld [vmem:[#allocation2 + $0x98] sm:$0xff]
        %v6700 = vld [vmem:[#allocation2 + $0xa0] sm:$0xff]
        %v6701 = vld [vmem:[#allocation2 + $0xa8] sm:$0xff]
        %v6702 = vld [vmem:[#allocation2 + $0xb0] sm:$0xff]
        %v6703 = vld [vmem:[#allocation2 + $0xb8] sm:$0xff]
        %v6704 = vmul.f32 %v6684, %v994
        %v6705 = vmul.f32 %v6685, %v1002
        %v6706 = vmul.f32 %v6686, %v1003
        %v6707 = vmul.f32 %v6687, %v1004
        %v6708 = vmul.f32 %v6688, %v1000
        %v6709 = vmul.f32 %v6689, %v994
        %v6710 = vmul.f32 %v6690, %v1002
        %v6711 = vmul.f32 %v6691, %v1003
        %v6712 = vmul.f32 %v6692, %v1004
        %v6713 = vmul.f32 %v6693, %v1000
        %v6714 = vmul.f32 %v6694, %v994
        %v6715 = vmul.f32 %v6695, %v1002
        %v6716 = vmul.f32 %v6696, %v1003
        %v6717 = vmul.f32 %v6697, %v1004
        %v6718 = vmul.f32 %v6698, %v1000
        %v6719 = vmul.f32 %v6699, %v994
        %v6720 = vmul.f32 %v6700, %v1002
        %v6721 = vmul.f32 %v6701, %v1003
        %v6722 = vmul.f32 %v6702, %v1004
        %v6723 = vmul.f32 %v6703, %v1000
        %v6724 = vpack.c.bf16 %v6705, %v6704
        %v6725 = vpack.c.bf16 %v6707, %v6706
        %v6726 = vpack.c.bf16 %v6708, %v6708
        %v6727 = vpack.c.bf16 %v6710, %v6709
        %v6728 = vpack.c.bf16 %v6712, %v6711
        %v6729 = vpack.c.bf16 %v6713, %v6713
        %v6730 = vpack.c.bf16 %v6715, %v6714
        %v6731 = vpack.c.bf16 %v6717, %v6716
        %v6732 = vpack.c.bf16 %v6718, %v6718
        %v6733 = vpack.c.bf16 %v6720, %v6719
        %v6734 = vpack.c.bf16 %v6722, %v6721
        %v6735 = vpack.c.bf16 %v6723, %v6723
        %6748 = vrot.lane.b32.xlu0 %v6724, 57
        %v6749 = vpop.permute.xlu0 %6748
        %6750 = vrot.lane.b32.xlu0 %v6725, 57
        %v6751 = vpop.permute.xlu0 %6750
        %6752 = vrot.lane.b32.xlu0 %v6726, 57
        %v6753 = vpop.permute.xlu0 %6752
        %6754 = vrot.lane.b32.xlu0 %v6727, 57
        %v6755 = vpop.permute.xlu0 %6754
        %6756 = vrot.lane.b32.xlu0 %v6728, 57
        %v6757 = vpop.permute.xlu0 %6756
        %6758 = vrot.lane.b32.xlu0 %v6729, 57
        %v6759 = vpop.permute.xlu0 %6758
        %6760 = vrot.lane.b32.xlu0 %v6730, 57
        %v6761 = vpop.permute.xlu0 %6760
        %6762 = vrot.lane.b32.xlu0 %v6731, 57
        %v6763 = vpop.permute.xlu0 %6762
        %6764 = vrot.lane.b32.xlu0 %v6732, 57
        %v6765 = vpop.permute.xlu0 %6764
        %6766 = vrot.lane.b32.xlu0 %v6733, 57
        %v6767 = vpop.permute.xlu0 %6766
        %6768 = vrot.lane.b32.xlu0 %v6734, 57
        %v6769 = vpop.permute.xlu0 %6768
        %6770 = vrot.lane.b32.xlu0 %v6735, 57
        %v6771 = vpop.permute.xlu0 %6770
        %v6772 = vrot.slane %v6749, 4
        %v6773 = vrot.slane %v6751, 4
        %v6774 = vrot.slane %v6753, 4
        %v6775 = vrot.slane %v6755, 4
        %v6776 = vrot.slane %v6757, 4
        %v6777 = vrot.slane %v6759, 4
        %v6778 = vrot.slane %v6761, 4
        %v6779 = vrot.slane %v6763, 4
        %v6780 = vrot.slane %v6765, 4
        %v6781 = vrot.slane %v6767, 4
        %v6782 = vrot.slane %v6769, 4
        %v6783 = vrot.slane %v6771, 4
        %v6784 = vsel %vm532, %v6772, %v6773
        %v6785 = vsel %vm1051, %v6749, %v6784
        %v6786 = vsel %vm532, %v6773, %v6774
        %v6787 = vsel %vm1051, %v6751, %v6786
        %v6788 = vsel %vm532, %v6775, %v6776
        %v6789 = vsel %vm1051, %v6755, %v6788
        %v6790 = vsel %vm532, %v6776, %v6777
        %v6791 = vsel %vm1051, %v6757, %v6790
        %v6792 = vsel %vm532, %v6778, %v6779
        %v6793 = vsel %vm1051, %v6761, %v6792
        %v6794 = vsel %vm532, %v6779, %v6780
        %v6795 = vsel %vm1051, %v6763, %v6794
        %v6796 = vsel %vm532, %v6781, %v6782
        %v6797 = vsel %vm1051, %v6767, %v6796
        %v6798 = vsel %vm532, %v6782, %v6783
        %v6799 = vsel %vm1051, %v6769, %v6798
        %6808 = vst [vmem:[#allocation3 + $0x600] sm:$0xff] %v6785
        %6809 = vst [vmem:[#allocation3 + $0x608] sm:$0xff] %v6787
        %6810 = vst [vmem:[#allocation3 + $0x610] sm:$0xff] %v6789
        %6811 = vst [vmem:[#allocation3 + $0x618] sm:$0xff] %v6791
        %6812 = vst [vmem:[#allocation3 + $0x620] sm:$0xff] %v6793
        %6813 = vst [vmem:[#allocation3 + $0x628] sm:$0xff] %v6795
        %6814 = vst [vmem:[#allocation3 + $0x630] sm:$0xff] %v6797
        %6815 = vst [vmem:[#allocation3 + $0x638] sm:$0xff] %v6799
        %v6816 = vld [vmem:[#allocation2 + $0x8] sm:$0xff]
        %v6817 = vld [vmem:[#allocation2 + $0x10] sm:$0xff]
        %v6818 = vld [vmem:[#allocation2 + $0x18] sm:$0xff]
        %v6819 = vld [vmem:[#allocation2 + $0x20] sm:$0xff]
        %v6820 = vld [vmem:[#allocation2 + $0x28] sm:$0xff]
        %v6821 = vld [vmem:[#allocation2 + $0x38] sm:$0xff]
        %v6822 = vld [vmem:[#allocation2 + $0x40] sm:$0xff]
        %v6823 = vld [vmem:[#allocation2 + $0x48] sm:$0xff]
        %v6824 = vld [vmem:[#allocation2 + $0x50] sm:$0xff]
        %v6825 = vld [vmem:[#allocation2 + $0x58] sm:$0xff]
        %v6826 = vld [vmem:[#allocation2 + $0x68] sm:$0xff]
        %v6827 = vld [vmem:[#allocation2 + $0x70] sm:$0xff]
        %v6828 = vld [vmem:[#allocation2 + $0x78] sm:$0xff]
        %v6829 = vld [vmem:[#allocation2 + $0x80] sm:$0xff]
        %v6830 = vld [vmem:[#allocation2 + $0x88] sm:$0xff]
        %v6831 = vld [vmem:[#allocation2 + $0x98] sm:$0xff]
        %v6832 = vld [vmem:[#allocation2 + $0xa0] sm:$0xff]
        %v6833 = vld [vmem:[#allocation2 + $0xa8] sm:$0xff]
        %v6834 = vld [vmem:[#allocation2 + $0xb0] sm:$0xff]
        %v6835 = vld [vmem:[#allocation2 + $0xb8] sm:$0xff]
        %v6836 = vmul.f32 %v6816, %v1086
        %v6837 = vmul.f32 %v6817, %v1094
        %v6838 = vmul.f32 %v6818, %v1095
        %v6839 = vmul.f32 %v6819, %v1096
        %v6840 = vmul.f32 %v6820, %v1092
        %v6841 = vmul.f32 %v6821, %v1086
        %v6842 = vmul.f32 %v6822, %v1094
        %v6843 = vmul.f32 %v6823, %v1095
        %v6844 = vmul.f32 %v6824, %v1096
        %v6845 = vmul.f32 %v6825, %v1092
        %v6846 = vmul.f32 %v6826, %v1086
        %v6847 = vmul.f32 %v6827, %v1094
        %v6848 = vmul.f32 %v6828, %v1095
        %v6849 = vmul.f32 %v6829, %v1096
        %v6850 = vmul.f32 %v6830, %v1092
        %v6851 = vmul.f32 %v6831, %v1086
        %v6852 = vmul.f32 %v6832, %v1094
        %v6853 = vmul.f32 %v6833, %v1095
        %v6854 = vmul.f32 %v6834, %v1096
        %v6855 = vmul.f32 %v6835, %v1092
        %v6856 = vpack.c.bf16 %v6837, %v6836
        %v6857 = vpack.c.bf16 %v6839, %v6838
        %v6858 = vpack.c.bf16 %v6840, %v6840
        %v6859 = vpack.c.bf16 %v6842, %v6841
        %v6860 = vpack.c.bf16 %v6844, %v6843
        %v6861 = vpack.c.bf16 %v6845, %v6845
        %v6862 = vpack.c.bf16 %v6847, %v6846
        %v6863 = vpack.c.bf16 %v6849, %v6848
        %v6864 = vpack.c.bf16 %v6850, %v6850
        %v6865 = vpack.c.bf16 %v6852, %v6851
        %v6866 = vpack.c.bf16 %v6854, %v6853
        %v6867 = vpack.c.bf16 %v6855, %v6855
        %6880 = vrot.lane.b32.xlu0 %v6856, 56
        %v6881 = vpop.permute.xlu0 %6880
        %6882 = vrot.lane.b32.xlu0 %v6857, 56
        %v6883 = vpop.permute.xlu0 %6882
        %6884 = vrot.lane.b32.xlu0 %v6858, 56
        %v6885 = vpop.permute.xlu0 %6884
        %6886 = vrot.lane.b32.xlu0 %v6859, 56
        %v6887 = vpop.permute.xlu0 %6886
        %6888 = vrot.lane.b32.xlu0 %v6860, 56
        %v6889 = vpop.permute.xlu0 %6888
        %6890 = vrot.lane.b32.xlu0 %v6861, 56
        %v6891 = vpop.permute.xlu0 %6890
        %6892 = vrot.lane.b32.xlu0 %v6862, 56
        %v6893 = vpop.permute.xlu0 %6892
        %6894 = vrot.lane.b32.xlu0 %v6863, 56
        %v6895 = vpop.permute.xlu0 %6894
        %6896 = vrot.lane.b32.xlu0 %v6864, 56
        %v6897 = vpop.permute.xlu0 %6896
        %6898 = vrot.lane.b32.xlu0 %v6865, 56
        %v6899 = vpop.permute.xlu0 %6898
        %6900 = vrot.lane.b32.xlu0 %v6866, 56
        %v6901 = vpop.permute.xlu0 %6900
        %6902 = vrot.lane.b32.xlu0 %v6867, 56
        %v6903 = vpop.permute.xlu0 %6902
        %v6904 = vrot.slane %v6881, 4
        %v6905 = vrot.slane %v6883, 4
        %v6906 = vrot.slane %v6885, 4
        %v6907 = vrot.slane %v6887, 4
        %v6908 = vrot.slane %v6889, 4
        %v6909 = vrot.slane %v6891, 4
        %v6910 = vrot.slane %v6893, 4
        %v6911 = vrot.slane %v6895, 4
        %v6912 = vrot.slane %v6897, 4
        %v6913 = vrot.slane %v6899, 4
        %v6914 = vrot.slane %v6901, 4
        %v6915 = vrot.slane %v6903, 4
        %v6916 = vsel %vm532, %v6904, %v6905
        %v6917 = vsel %vm1143, %v6881, %v6916
        %v6918 = vsel %vm532, %v6905, %v6906
        %v6919 = vsel %vm1143, %v6883, %v6918
        %v6920 = vsel %vm532, %v6907, %v6908
        %v6921 = vsel %vm1143, %v6887, %v6920
        %v6922 = vsel %vm532, %v6908, %v6909
        %v6923 = vsel %vm1143, %v6889, %v6922
        %v6924 = vsel %vm532, %v6910, %v6911
        %v6925 = vsel %vm1143, %v6893, %v6924
        %v6926 = vsel %vm532, %v6911, %v6912
        %v6927 = vsel %vm1143, %v6895, %v6926
        %v6928 = vsel %vm532, %v6913, %v6914
        %v6929 = vsel %vm1143, %v6899, %v6928
        %v6930 = vsel %vm532, %v6914, %v6915
        %v6931 = vsel %vm1143, %v6901, %v6930
        %6940 = vst [vmem:[#allocation3 + $0x640] sm:$0xff] %v6917
        %6941 = vst [vmem:[#allocation3 + $0x648] sm:$0xff] %v6919
        %6942 = vst [vmem:[#allocation3 + $0x650] sm:$0xff] %v6921
        %6943 = vst [vmem:[#allocation3 + $0x658] sm:$0xff] %v6923
        %6944 = vst [vmem:[#allocation3 + $0x660] sm:$0xff] %v6925
        %6945 = vst [vmem:[#allocation3 + $0x668] sm:$0xff] %v6927
        %6946 = vst [vmem:[#allocation3 + $0x670] sm:$0xff] %v6929
        %6947 = vst [vmem:[#allocation3 + $0x678] sm:$0xff] %v6931
        %v6948 = vld [vmem:[#allocation2 + $0x8] sm:$0xff]
        %v6949 = vld [vmem:[#allocation2 + $0x10] sm:$0xff]
        %v6950 = vld [vmem:[#allocation2 + $0x18] sm:$0xff]
        %v6951 = vld [vmem:[#allocation2 + $0x20] sm:$0xff]
        %v6952 = vld [vmem:[#allocation2 + $0x28] sm:$0xff]
        %v6953 = vld [vmem:[#allocation2 + $0x38] sm:$0xff]
        %v6954 = vld [vmem:[#allocation2 + $0x40] sm:$0xff]
        %v6955 = vld [vmem:[#allocation2 + $0x48] sm:$0xff]
        %v6956 = vld [vmem:[#allocation2 + $0x50] sm:$0xff]
        %v6957 = vld [vmem:[#allocation2 + $0x58] sm:$0xff]
        %v6958 = vld [vmem:[#allocation2 + $0x68] sm:$0xff]
        %v6959 = vld [vmem:[#allocation2 + $0x70] sm:$0xff]
        %v6960 = vld [vmem:[#allocation2 + $0x78] sm:$0xff]
        %v6961 = vld [vmem:[#allocation2 + $0x80] sm:$0xff]
        %v6962 = vld [vmem:[#allocation2 + $0x88] sm:$0xff]
        %v6963 = vld [vmem:[#allocation2 + $0x98] sm:$0xff]
        %v6964 = vld [vmem:[#allocation2 + $0xa0] sm:$0xff]
        %v6965 = vld [vmem:[#allocation2 + $0xa8] sm:$0xff]
        %v6966 = vld [vmem:[#allocation2 + $0xb0] sm:$0xff]
        %v6967 = vld [vmem:[#allocation2 + $0xb8] sm:$0xff]
        %v6968 = vmul.f32 %v6948, %v1178
        %v6969 = vmul.f32 %v6949, %v1186
        %v6970 = vmul.f32 %v6950, %v1187
        %v6971 = vmul.f32 %v6951, %v1188
        %v6972 = vmul.f32 %v6952, %v1184
        %v6973 = vmul.f32 %v6953, %v1178
        %v6974 = vmul.f32 %v6954, %v1186
        %v6975 = vmul.f32 %v6955, %v1187
        %v6976 = vmul.f32 %v6956, %v1188
        %v6977 = vmul.f32 %v6957, %v1184
        %v6978 = vmul.f32 %v6958, %v1178
        %v6979 = vmul.f32 %v6959, %v1186
        %v6980 = vmul.f32 %v6960, %v1187
        %v6981 = vmul.f32 %v6961, %v1188
        %v6982 = vmul.f32 %v6962, %v1184
        %v6983 = vmul.f32 %v6963, %v1178
        %v6984 = vmul.f32 %v6964, %v1186
        %v6985 = vmul.f32 %v6965, %v1187
        %v6986 = vmul.f32 %v6966, %v1188
        %v6987 = vmul.f32 %v6967, %v1184
        %v6988 = vpack.c.bf16 %v6969, %v6968
        %v6989 = vpack.c.bf16 %v6971, %v6970
        %v6990 = vpack.c.bf16 %v6972, %v6972
        %v6991 = vpack.c.bf16 %v6974, %v6973
        %v6992 = vpack.c.bf16 %v6976, %v6975
        %v6993 = vpack.c.bf16 %v6977, %v6977
        %v6994 = vpack.c.bf16 %v6979, %v6978
        %v6995 = vpack.c.bf16 %v6981, %v6980
        %v6996 = vpack.c.bf16 %v6982, %v6982
        %v6997 = vpack.c.bf16 %v6984, %v6983
        %v6998 = vpack.c.bf16 %v6986, %v6985
        %v6999 = vpack.c.bf16 %v6987, %v6987
        %7012 = vrot.lane.b32.xlu0 %v6988, 55
        %v7013 = vpop.permute.xlu0 %7012
        %7014 = vrot.lane.b32.xlu0 %v6989, 55
        %v7015 = vpop.permute.xlu0 %7014
        %7016 = vrot.lane.b32.xlu0 %v6990, 55
        %v7017 = vpop.permute.xlu0 %7016
        %7018 = vrot.lane.b32.xlu0 %v6991, 55
        %v7019 = vpop.permute.xlu0 %7018
        %7020 = vrot.lane.b32.xlu0 %v6992, 55
        %v7021 = vpop.permute.xlu0 %7020
        %7022 = vrot.lane.b32.xlu0 %v6993, 55
        %v7023 = vpop.permute.xlu0 %7022
        %7024 = vrot.lane.b32.xlu0 %v6994, 55
        %v7025 = vpop.permute.xlu0 %7024
        %7026 = vrot.lane.b32.xlu0 %v6995, 55
        %v7027 = vpop.permute.xlu0 %7026
        %7028 = vrot.lane.b32.xlu0 %v6996, 55
        %v7029 = vpop.permute.xlu0 %7028
        %7030 = vrot.lane.b32.xlu0 %v6997, 55
        %v7031 = vpop.permute.xlu0 %7030
        %7032 = vrot.lane.b32.xlu0 %v6998, 55
        %v7033 = vpop.permute.xlu0 %7032
        %7034 = vrot.lane.b32.xlu0 %v6999, 55
        %v7035 = vpop.permute.xlu0 %7034
        %v7036 = vrot.slane %v7013, 4
        %v7037 = vrot.slane %v7015, 4
        %v7038 = vrot.slane %v7017, 4
        %v7039 = vrot.slane %v7019, 4
        %v7040 = vrot.slane %v7021, 4
        %v7041 = vrot.slane %v7023, 4
        %v7042 = vrot.slane %v7025, 4
        %v7043 = vrot.slane %v7027, 4
        %v7044 = vrot.slane %v7029, 4
        %v7045 = vrot.slane %v7031, 4
        %v7046 = vrot.slane %v7033, 4
        %v7047 = vrot.slane %v7035, 4
        %v7048 = vsel %vm532, %v7036, %v7037
        %v7049 = vsel %vm1235, %v7013, %v7048
        %v7050 = vsel %vm532, %v7037, %v7038
        %v7051 = vsel %vm1235, %v7015, %v7050
        %v7052 = vsel %vm532, %v7039, %v7040
        %v7053 = vsel %vm1235, %v7019, %v7052
        %v7054 = vsel %vm532, %v7040, %v7041
        %v7055 = vsel %vm1235, %v7021, %v7054
        %v7056 = vsel %vm532, %v7042, %v7043
        %v7057 = vsel %vm1235, %v7025, %v7056
        %v7058 = vsel %vm532, %v7043, %v7044
        %v7059 = vsel %vm1235, %v7027, %v7058
        %v7060 = vsel %vm532, %v7045, %v7046
        %v7061 = vsel %vm1235, %v7031, %v7060
        %v7062 = vsel %vm532, %v7046, %v7047
        %v7063 = vsel %vm1235, %v7033, %v7062
        %7072 = vst [vmem:[#allocation3 + $0x680] sm:$0xff] %v7049
        %7073 = vst [vmem:[#allocation3 + $0x688] sm:$0xff] %v7051
        %7074 = vst [vmem:[#allocation3 + $0x690] sm:$0xff] %v7053
        %7075 = vst [vmem:[#allocation3 + $0x698] sm:$0xff] %v7055
        %7076 = vst [vmem:[#allocation3 + $0x6a0] sm:$0xff] %v7057
        %7077 = vst [vmem:[#allocation3 + $0x6a8] sm:$0xff] %v7059
        %7078 = vst [vmem:[#allocation3 + $0x6b0] sm:$0xff] %v7061
        %7079 = vst [vmem:[#allocation3 + $0x6b8] sm:$0xff] %v7063
        %v7080 = vld [vmem:[#allocation4] sm:$0xff]
        %v7081 = vld [vmem:[#allocation4 + $0x8] sm:$0xff]
        %v7082 = vld [vmem:[#allocation4 + $0x10] sm:$0xff]
        %v7083 = vld [vmem:[#allocation4 + $0x18] sm:$0xf]
        %v7084 = vld [vmem:[#allocation4 + $0x1c] sm:$0xff]
        %v7085 = vld [vmem:[#allocation4 + $0x24] sm:$0xff]
        %v7086 = vld [vmem:[#allocation4 + $0x2c] sm:$0xff]
        %v7087 = vld [vmem:[#allocation4 + $0x34] sm:$0xf]
        %v7088 = vld [vmem:[#allocation4 + $0x38] sm:$0xff]
        %v7089 = vld [vmem:[#allocation4 + $0x40] sm:$0xff]
        %v7090 = vld [vmem:[#allocation4 + $0x48] sm:$0xff]
        %v7091 = vld [vmem:[#allocation4 + $0x50] sm:$0xf]
        %v7092 = vld [vmem:[#allocation4 + $0x54] sm:$0xff]
        %v7093 = vld [vmem:[#allocation4 + $0x5c] sm:$0xff]
        %v7094 = vld [vmem:[#allocation4 + $0x64] sm:$0xff]
        %v7095 = vld [vmem:[#allocation4 + $0x6c] sm:$0xf]
        %v7096 = vld [vmem:[#allocation3] sm:$0xff]
        %v7097 = vld [vmem:[#allocation3 + $0x8] sm:$0xff]
        %v7098 = vld [vmem:[#allocation3 + $0x10] sm:$0xff]
        %v7099 = vld [vmem:[#allocation3 + $0x18] sm:$0xff]
        %v7100 = vld [vmem:[#allocation3 + $0x20] sm:$0xff]
        %v7101 = vld [vmem:[#allocation3 + $0x28] sm:$0xff]
        %v7102 = vld [vmem:[#allocation3 + $0x30] sm:$0xff]
        %v7103 = vld [vmem:[#allocation3 + $0x38] sm:$0xff]
        %v7104 = vld [vmem:[#allocation3 + $0x40] sm:$0xff]
        %v7105 = vld [vmem:[#allocation3 + $0x48] sm:$0xff]
        %v7106 = vld [vmem:[#allocation3 + $0x50] sm:$0xff]
        %v7107 = vld [vmem:[#allocation3 + $0x58] sm:$0xff]
        %v7108 = vld [vmem:[#allocation3 + $0x60] sm:$0xff]
        %v7109 = vld [vmem:[#allocation3 + $0x68] sm:$0xff]
        %v7110 = vld [vmem:[#allocation3 + $0x70] sm:$0xff]
        %v7111 = vld [vmem:[#allocation3 + $0x78] sm:$0xff]
        %v7112 = vld [vmem:[#allocation3 + $0x80] sm:$0xff]
        %v7113 = vld [vmem:[#allocation3 + $0x88] sm:$0xff]
        %v7114 = vld [vmem:[#allocation3 + $0x90] sm:$0xff]
        %v7115 = vld [vmem:[#allocation3 + $0x98] sm:$0xff]
        %v7116 = vld [vmem:[#allocation3 + $0xa0] sm:$0xff]
        %v7117 = vld [vmem:[#allocation3 + $0xa8] sm:$0xff]
        %v7118 = vld [vmem:[#allocation3 + $0xb0] sm:$0xff]
        %v7119 = vld [vmem:[#allocation3 + $0xb8] sm:$0xff]
        %v7120 = vld [vmem:[#allocation3 + $0xc0] sm:$0xff]
        %v7121 = vld [vmem:[#allocation3 + $0xc8] sm:$0xff]
        %v7122 = vld [vmem:[#allocation3 + $0xd0] sm:$0xff]
        %v7123 = vld [vmem:[#allocation3 + $0xd8] sm:$0xff]
        %v7124 = vld [vmem:[#allocation3 + $0xe0] sm:$0xff]
        %v7125 = vld [vmem:[#allocation3 + $0xe8] sm:$0xff]
        %v7126 = vld [vmem:[#allocation3 + $0xf0] sm:$0xff]
        %v7127 = vld [vmem:[#allocation3 + $0xf8] sm:$0xff]
        %v7128 = vld [vmem:[#allocation3 + $0x100] sm:$0xff]
        %v7129 = vld [vmem:[#allocation3 + $0x108] sm:$0xff]
        %v7130 = vld [vmem:[#allocation3 + $0x110] sm:$0xff]
        %v7131 = vld [vmem:[#allocation3 + $0x118] sm:$0xff]
        %v7132 = vld [vmem:[#allocation3 + $0x120] sm:$0xff]
        %v7133 = vld [vmem:[#allocation3 + $0x128] sm:$0xff]
        %v7134 = vld [vmem:[#allocation3 + $0x130] sm:$0xff]
        %v7135 = vld [vmem:[#allocation3 + $0x138] sm:$0xff]
        %v7136 = vld [vmem:[#allocation3 + $0x140] sm:$0xff]
        %v7137 = vld [vmem:[#allocation3 + $0x148] sm:$0xff]
        %v7138 = vld [vmem:[#allocation3 + $0x150] sm:$0xff]
        %v7139 = vld [vmem:[#allocation3 + $0x158] sm:$0xff]
        %v7140 = vld [vmem:[#allocation3 + $0x160] sm:$0xff]
        %v7141 = vld [vmem:[#allocation3 + $0x168] sm:$0xff]
        %v7142 = vld [vmem:[#allocation3 + $0x170] sm:$0xff]
        %v7143 = vld [vmem:[#allocation3 + $0x178] sm:$0xff]
        %v7144 = vld [vmem:[#allocation3 + $0x180] sm:$0xff]
        %v7145 = vld [vmem:[#allocation3 + $0x188] sm:$0xff]
        %v7146 = vld [vmem:[#allocation3 + $0x190] sm:$0xff]
        %v7147 = vld [vmem:[#allocation3 + $0x198] sm:$0xff]
        %v7148 = vld [vmem:[#allocation3 + $0x1a0] sm:$0xff]
        %v7149 = vld [vmem:[#allocation3 + $0x1a8] sm:$0xff]
        %v7150 = vld [vmem:[#allocation3 + $0x1b0] sm:$0xff]
        %v7151 = vld [vmem:[#allocation3 + $0x1b8] sm:$0xff]
        %v7152 = vld [vmem:[#allocation3 + $0x1c0] sm:$0xff]
        %v7153 = vld [vmem:[#allocation3 + $0x1c8] sm:$0xff]
        %v7154 = vld [vmem:[#allocation3 + $0x1d0] sm:$0xff]
        %v7155 = vld [vmem:[#allocation3 + $0x1d8] sm:$0xff]
        %v7156 = vld [vmem:[#allocation3 + $0x1e0] sm:$0xff]
        %v7157 = vld [vmem:[#allocation3 + $0x1e8] sm:$0xff]
        %v7158 = vld [vmem:[#allocation3 + $0x1f0] sm:$0xff]
        %v7159 = vld [vmem:[#allocation3 + $0x1f8] sm:$0xff]
        %v7160 = vld [vmem:[#allocation3 + $0x200] sm:$0xff]
        %v7161 = vld [vmem:[#allocation3 + $0x208] sm:$0xff]
        %v7162 = vld [vmem:[#allocation3 + $0x210] sm:$0xff]
        %v7163 = vld [vmem:[#allocation3 + $0x218] sm:$0xff]
        %v7164 = vld [vmem:[#allocation3 + $0x220] sm:$0xff]
        %v7165 = vld [vmem:[#allocation3 + $0x228] sm:$0xff]
        %v7166 = vld [vmem:[#allocation3 + $0x230] sm:$0xff]
        %v7167 = vld [vmem:[#allocation3 + $0x238] sm:$0xff]
        %v7168 = vld [vmem:[#allocation3 + $0x240] sm:$0xff]
        %v7169 = vld [vmem:[#allocation3 + $0x248] sm:$0xff]
        %v7170 = vld [vmem:[#allocation3 + $0x250] sm:$0xff]
        %v7171 = vld [vmem:[#allocation3 + $0x258] sm:$0xff]
        %v7172 = vld [vmem:[#allocation3 + $0x260] sm:$0xff]
        %v7173 = vld [vmem:[#allocation3 + $0x268] sm:$0xff]
        %v7174 = vld [vmem:[#allocation3 + $0x270] sm:$0xff]
        %v7175 = vld [vmem:[#allocation3 + $0x278] sm:$0xff]
        %v7176 = vld [vmem:[#allocation3 + $0x280] sm:$0xff]
        %v7177 = vld [vmem:[#allocation3 + $0x288] sm:$0xff]
        %v7178 = vld [vmem:[#allocation3 + $0x290] sm:$0xff]
        %v7179 = vld [vmem:[#allocation3 + $0x298] sm:$0xff]
        %v7180 = vld [vmem:[#allocation3 + $0x2a0] sm:$0xff]
        %v7181 = vld [vmem:[#allocation3 + $0x2a8] sm:$0xff]
        %v7182 = vld [vmem:[#allocation3 + $0x2b0] sm:$0xff]
        %v7183 = vld [vmem:[#allocation3 + $0x2b8] sm:$0xff]
        %v7184 = vld [vmem:[#allocation3 + $0x2c0] sm:$0xff]
        %v7185 = vld [vmem:[#allocation3 + $0x2c8] sm:$0xff]
        %v7186 = vld [vmem:[#allocation3 + $0x2d0] sm:$0xff]
        %v7187 = vld [vmem:[#allocation3 + $0x2d8] sm:$0xff]
        %v7188 = vld [vmem:[#allocation3 + $0x2e0] sm:$0xff]
        %v7189 = vld [vmem:[#allocation3 + $0x2e8] sm:$0xff]
        %v7190 = vld [vmem:[#allocation3 + $0x2f0] sm:$0xff]
        %v7191 = vld [vmem:[#allocation3 + $0x2f8] sm:$0xff]
        %v7192 = vld [vmem:[#allocation3 + $0x300] sm:$0xff]
        %v7193 = vld [vmem:[#allocation3 + $0x308] sm:$0xff]
        %v7194 = vld [vmem:[#allocation3 + $0x310] sm:$0xff]
        %v7195 = vld [vmem:[#allocation3 + $0x318] sm:$0xff]
        %v7196 = vld [vmem:[#allocation3 + $0x320] sm:$0xff]
        %v7197 = vld [vmem:[#allocation3 + $0x328] sm:$0xff]
        %v7198 = vld [vmem:[#allocation3 + $0x330] sm:$0xff]
        %v7199 = vld [vmem:[#allocation3 + $0x338] sm:$0xff]
        %v7200 = vld [vmem:[#allocation3 + $0x340] sm:$0xff]
        %v7201 = vld [vmem:[#allocation3 + $0x348] sm:$0xff]
        %v7202 = vld [vmem:[#allocation3 + $0x350] sm:$0xff]
        %v7203 = vld [vmem:[#allocation3 + $0x358] sm:$0xff]
        %v7204 = vld [vmem:[#allocation3 + $0x360] sm:$0xff]
        %v7205 = vld [vmem:[#allocation3 + $0x368] sm:$0xff]
        %v7206 = vld [vmem:[#allocation3 + $0x370] sm:$0xff]
        %v7207 = vld [vmem:[#allocation3 + $0x378] sm:$0xff]
        %v7208 = vld [vmem:[#allocation3 + $0x380] sm:$0xff]
        %v7209 = vld [vmem:[#allocation3 + $0x388] sm:$0xff]
        %v7210 = vld [vmem:[#allocation3 + $0x390] sm:$0xff]
        %v7211 = vld [vmem:[#allocation3 + $0x398] sm:$0xff]
        %v7212 = vld [vmem:[#allocation3 + $0x3a0] sm:$0xff]
        %v7213 = vld [vmem:[#allocation3 + $0x3a8] sm:$0xff]
        %v7214 = vld [vmem:[#allocation3 + $0x3b0] sm:$0xff]
        %v7215 = vld [vmem:[#allocation3 + $0x3b8] sm:$0xff]
        %v7216 = vld [vmem:[#allocation3 + $0x3c0] sm:$0xff]
        %v7217 = vld [vmem:[#allocation3 + $0x3c8] sm:$0xff]
        %v7218 = vld [vmem:[#allocation3 + $0x3d0] sm:$0xff]
        %v7219 = vld [vmem:[#allocation3 + $0x3d8] sm:$0xff]
        %v7220 = vld [vmem:[#allocation3 + $0x3e0] sm:$0xff]
        %v7221 = vld [vmem:[#allocation3 + $0x3e8] sm:$0xff]
        %v7222 = vld [vmem:[#allocation3 + $0x3f0] sm:$0xff]
        %v7223 = vld [vmem:[#allocation3 + $0x3f8] sm:$0xff]
        %v7224 = vld [vmem:[#allocation3 + $0x400] sm:$0xff]
        %v7225 = vld [vmem:[#allocation3 + $0x408] sm:$0xff]
        %v7226 = vld [vmem:[#allocation3 + $0x410] sm:$0xff]
        %v7227 = vld [vmem:[#allocation3 + $0x418] sm:$0xff]
        %v7228 = vld [vmem:[#allocation3 + $0x420] sm:$0xff]
        %v7229 = vld [vmem:[#allocation3 + $0x428] sm:$0xff]
        %v7230 = vld [vmem:[#allocation3 + $0x430] sm:$0xff]
        %v7231 = vld [vmem:[#allocation3 + $0x438] sm:$0xff]
        %v7232 = vld [vmem:[#allocation3 + $0x440] sm:$0xff]
        %v7233 = vld [vmem:[#allocation3 + $0x448] sm:$0xff]
        %v7234 = vld [vmem:[#allocation3 + $0x450] sm:$0xff]
        %v7235 = vld [vmem:[#allocation3 + $0x458] sm:$0xff]
        %v7236 = vld [vmem:[#allocation3 + $0x460] sm:$0xff]
        %v7237 = vld [vmem:[#allocation3 + $0x468] sm:$0xff]
        %v7238 = vld [vmem:[#allocation3 + $0x470] sm:$0xff]
        %v7239 = vld [vmem:[#allocation3 + $0x478] sm:$0xff]
        %v7240 = vld [vmem:[#allocation3 + $0x480] sm:$0xff]
        %v7241 = vld [vmem:[#allocation3 + $0x488] sm:$0xff]
        %v7242 = vld [vmem:[#allocation3 + $0x490] sm:$0xff]
        %v7243 = vld [vmem:[#allocation3 + $0x498] sm:$0xff]
        %v7244 = vld [vmem:[#allocation3 + $0x4a0] sm:$0xff]
        %v7245 = vld [vmem:[#allocation3 + $0x4a8] sm:$0xff]
        %v7246 = vld [vmem:[#allocation3 + $0x4b0] sm:$0xff]
        %v7247 = vld [vmem:[#allocation3 + $0x4b8] sm:$0xff]
        %v7248 = vld [vmem:[#allocation3 + $0x4c0] sm:$0xff]
        %v7249 = vld [vmem:[#allocation3 + $0x4c8] sm:$0xff]
        %v7250 = vld [vmem:[#allocation3 + $0x4d0] sm:$0xff]
        %v7251 = vld [vmem:[#allocation3 + $0x4d8] sm:$0xff]
        %v7252 = vld [vmem:[#allocation3 + $0x4e0] sm:$0xff]
        %v7253 = vld [vmem:[#allocation3 + $0x4e8] sm:$0xff]
        %v7254 = vld [vmem:[#allocation3 + $0x4f0] sm:$0xff]
        %v7255 = vld [vmem:[#allocation3 + $0x4f8] sm:$0xff]
        %v7256 = vld [vmem:[#allocation3 + $0x500] sm:$0xff]
        %v7257 = vld [vmem:[#allocation3 + $0x508] sm:$0xff]
        %v7258 = vld [vmem:[#allocation3 + $0x510] sm:$0xff]
        %v7259 = vld [vmem:[#allocation3 + $0x518] sm:$0xff]
        %v7260 = vld [vmem:[#allocation3 + $0x520] sm:$0xff]
        %v7261 = vld [vmem:[#allocation3 + $0x528] sm:$0xff]
        %v7262 = vld [vmem:[#allocation3 + $0x530] sm:$0xff]
        %v7263 = vld [vmem:[#allocation3 + $0x538] sm:$0xff]
        %v7264 = vld [vmem:[#allocation3 + $0x540] sm:$0xff]
        %v7265 = vld [vmem:[#allocation3 + $0x548] sm:$0xff]
        %v7266 = vld [vmem:[#allocation3 + $0x550] sm:$0xff]
        %v7267 = vld [vmem:[#allocation3 + $0x558] sm:$0xff]
        %v7268 = vld [vmem:[#allocation3 + $0x560] sm:$0xff]
        %v7269 = vld [vmem:[#allocation3 + $0x568] sm:$0xff]
        %v7270 = vld [vmem:[#allocation3 + $0x570] sm:$0xff]
        %v7271 = vld [vmem:[#allocation3 + $0x578] sm:$0xff]
        %v7272 = vld [vmem:[#allocation3 + $0x580] sm:$0xff]
        %v7273 = vld [vmem:[#allocation3 + $0x588] sm:$0xff]
        %v7274 = vld [vmem:[#allocation3 + $0x590] sm:$0xff]
        %v7275 = vld [vmem:[#allocation3 + $0x598] sm:$0xff]
        %v7276 = vld [vmem:[#allocation3 + $0x5a0] sm:$0xff]
        %v7277 = vld [vmem:[#allocation3 + $0x5a8] sm:$0xff]
        %v7278 = vld [vmem:[#allocation3 + $0x5b0] sm:$0xff]
        %v7279 = vld [vmem:[#allocation3 + $0x5b8] sm:$0xff]
        %v7280 = vld [vmem:[#allocation3 + $0x5c0] sm:$0xff]
        %v7281 = vld [vmem:[#allocation3 + $0x5c8] sm:$0xff]
        %v7282 = vld [vmem:[#allocation3 + $0x5d0] sm:$0xff]
        %v7283 = vld [vmem:[#allocation3 + $0x5d8] sm:$0xff]
        %v7284 = vld [vmem:[#allocation3 + $0x5e0] sm:$0xff]
        %v7285 = vld [vmem:[#allocation3 + $0x5e8] sm:$0xff]
        %v7286 = vld [vmem:[#allocation3 + $0x5f0] sm:$0xff]
        %v7287 = vld [vmem:[#allocation3 + $0x5f8] sm:$0xff]
        %v7288 = vld [vmem:[#allocation3 + $0x600] sm:$0xff]
        %v7289 = vld [vmem:[#allocation3 + $0x608] sm:$0xff]
        %v7290 = vld [vmem:[#allocation3 + $0x610] sm:$0xff]
        %v7291 = vld [vmem:[#allocation3 + $0x618] sm:$0xff]
        %v7292 = vld [vmem:[#allocation3 + $0x620] sm:$0xff]
        %v7293 = vld [vmem:[#allocation3 + $0x628] sm:$0xff]
        %v7294 = vld [vmem:[#allocation3 + $0x630] sm:$0xff]
        %v7295 = vld [vmem:[#allocation3 + $0x638] sm:$0xff]
        %v7296 = vld [vmem:[#allocation3 + $0x640] sm:$0xff]
        %v7297 = vld [vmem:[#allocation3 + $0x648] sm:$0xff]
        %v7298 = vld [vmem:[#allocation3 + $0x650] sm:$0xff]
        %v7299 = vld [vmem:[#allocation3 + $0x658] sm:$0xff]
        %v7300 = vld [vmem:[#allocation3 + $0x660] sm:$0xff]
        %v7301 = vld [vmem:[#allocation3 + $0x668] sm:$0xff]
        %v7302 = vld [vmem:[#allocation3 + $0x670] sm:$0xff]
        %v7303 = vld [vmem:[#allocation3 + $0x678] sm:$0xff]
        %v7304 = vld [vmem:[#allocation3 + $0x680] sm:$0xff]
        %v7305 = vld [vmem:[#allocation3 + $0x688] sm:$0xff]
        %v7306 = vld [vmem:[#allocation3 + $0x690] sm:$0xff]
        %v7307 = vld [vmem:[#allocation3 + $0x698] sm:$0xff]
        %v7308 = vld [vmem:[#allocation3 + $0x6a0] sm:$0xff]
        %v7309 = vld [vmem:[#allocation3 + $0x6a8] sm:$0xff]
        %v7310 = vld [vmem:[#allocation3 + $0x6b0] sm:$0xff]
        %v7311 = vld [vmem:[#allocation3 + $0x6b8] sm:$0xff]
        %v7312 = vld [vmem:[%s5] sm:$0xff]
        %v7313 = vld [vmem:[%s5 + $0x8] sm:$0xff]
        %v7314 = vld [vmem:[%s5 + $0x10] sm:$0xff]
        %v7315 = vld [vmem:[%s5 + $0x18] sm:$0xff]
        %7317 = vset.pattern.permute.xlu0 0
        %7318 = vperm.xlu0 %7317, %v7312
        %v7319 = vpop.permute.xlu0 %7318
        %7322 = vset.pattern.permute.xlu0 0
        %7323 = vperm.xlu0 %7322, %v7313
        %v7324 = vpop.permute.xlu0 %7323
        %7327 = vset.pattern.permute.xlu0 0
        %7328 = vperm.xlu0 %7327, %v7314
        %v7329 = vpop.permute.xlu0 %7328
        %7332 = vset.pattern.permute.xlu0 0
        %7333 = vperm.xlu0 %7332, %v7315
        %v7334 = vpop.permute.xlu0 %7333
        %v7352 = vunpack.c.l.b16 %v7080
        %v7353 = vunpack.c.h.b16 %v7080
        %v7354 = vunpack.c.l.b16 %v7081
        %v7355 = vunpack.c.h.b16 %v7081
        %v7356 = vunpack.c.l.b16 %v7082
        %v7357 = vunpack.c.h.b16 %v7082
        %v7358 = vunpack.c.l.b16 %v7083
        %v7359 = vunpack.c.l.b16 %v7084
        %v7360 = vunpack.c.h.b16 %v7084
        %v7361 = vunpack.c.l.b16 %v7085
        %v7362 = vunpack.c.h.b16 %v7085
        %v7363 = vunpack.c.l.b16 %v7086
        %v7364 = vunpack.c.h.b16 %v7086
        %v7365 = vunpack.c.l.b16 %v7087
        %v7366 = vunpack.c.l.b16 %v7088
        %v7367 = vunpack.c.h.b16 %v7088
        %v7368 = vunpack.c.l.b16 %v7089
        %v7369 = vunpack.c.h.b16 %v7089
        %v7370 = vunpack.c.l.b16 %v7090
        %v7371 = vunpack.c.h.b16 %v7090
        %v7372 = vunpack.c.l.b16 %v7091
        %v7373 = vunpack.c.l.b16 %v7092
        %v7374 = vunpack.c.h.b16 %v7092
        %v7375 = vunpack.c.l.b16 %v7093
        %v7376 = vunpack.c.h.b16 %v7093
        %v7377 = vunpack.c.l.b16 %v7094
        %v7378 = vunpack.c.h.b16 %v7094
        %v7379 = vunpack.c.l.b16 %v7095
        %v7380 = vpack.c.b16 %v7359, %v7352
        %v7381 = vpack.c.b16 %v7360, %v7353
        %v7382 = vpack.c.b16 %v7361, %v7354
        %v7383 = vpack.c.b16 %v7362, %v7355
        %v7384 = vpack.c.b16 %v7363, %v7356
        %v7385 = vpack.c.b16 %v7364, %v7357
        %v7386 = vpack.c.b16 %v7365, %v7358
        %v7387 = vpack.c.b16 %v7373, %v7366
        %v7388 = vpack.c.b16 %v7374, %v7367
        %v7389 = vpack.c.b16 %v7375, %v7368
        %v7390 = vpack.c.b16 %v7376, %v7369
        %v7391 = vpack.c.b16 %v7377, %v7370
        %v7392 = vpack.c.b16 %v7378, %v7371
        %v7393 = vpack.c.b16 %v7379, %v7372
        %v7622 = vunpack.c.l.b16 %v7096
        %v7623 = vunpack.c.h.b16 %v7096
        %v7624 = vunpack.c.l.b16 %v7097
        %v7625 = vunpack.c.h.b16 %v7097
        %v7626 = vunpack.c.l.b16 %v7098
        %v7627 = vunpack.c.h.b16 %v7098
        %v7628 = vunpack.c.l.b16 %v7099
        %v7629 = vunpack.c.h.b16 %v7099
        %v7630 = vunpack.c.l.b16 %v7100
        %v7631 = vunpack.c.h.b16 %v7100
        %v7632 = vunpack.c.l.b16 %v7101
        %v7633 = vunpack.c.h.b16 %v7101
        %v7634 = vunpack.c.l.b16 %v7102
        %v7635 = vunpack.c.h.b16 %v7102
        %v7636 = vunpack.c.l.b16 %v7103
        %v7637 = vunpack.c.h.b16 %v7103
        %v7638 = vunpack.c.l.b16 %v7104
        %v7639 = vunpack.c.h.b16 %v7104
        %v7640 = vunpack.c.l.b16 %v7105
        %v7641 = vunpack.c.h.b16 %v7105
        %v7642 = vunpack.c.l.b16 %v7106
        %v7643 = vunpack.c.h.b16 %v7106
        %v7644 = vunpack.c.l.b16 %v7107
        %v7645 = vunpack.c.h.b16 %v7107
        %v7646 = vunpack.c.l.b16 %v7108
        %v7647 = vunpack.c.h.b16 %v7108
        %v7648 = vunpack.c.l.b16 %v7109
        %v7649 = vunpack.c.h.b16 %v7109
        %v7650 = vunpack.c.l.b16 %v7110
        %v7651 = vunpack.c.h.b16 %v7110
        %v7652 = vunpack.c.l.b16 %v7111
        %v7653 = vunpack.c.h.b16 %v7111
        %v7654 = vunpack.c.l.b16 %v7112
        %v7655 = vunpack.c.h.b16 %v7112
        %v7656 = vunpack.c.l.b16 %v7113
        %v7657 = vunpack.c.h.b16 %v7113
        %v7658 = vunpack.c.l.b16 %v7114
        %v7659 = vunpack.c.h.b16 %v7114
        %v7660 = vunpack.c.l.b16 %v7115
        %v7661 = vunpack.c.h.b16 %v7115
        %v7662 = vunpack.c.l.b16 %v7116
        %v7663 = vunpack.c.h.b16 %v7116
        %v7664 = vunpack.c.l.b16 %v7117
        %v7665 = vunpack.c.h.b16 %v7117
        %v7666 = vunpack.c.l.b16 %v7118
        %v7667 = vunpack.c.h.b16 %v7118
        %v7668 = vunpack.c.l.b16 %v7119
        %v7669 = vunpack.c.h.b16 %v7119
        %v7670 = vunpack.c.l.b16 %v7120
        %v7671 = vunpack.c.h.b16 %v7120
        %v7672 = vunpack.c.l.b16 %v7121
        %v7673 = vunpack.c.h.b16 %v7121
        %v7674 = vunpack.c.l.b16 %v7122
        %v7675 = vunpack.c.h.b16 %v7122
        %v7676 = vunpack.c.l.b16 %v7123
        %v7677 = vunpack.c.h.b16 %v7123
        %v7678 = vunpack.c.l.b16 %v7124
        %v7679 = vunpack.c.h.b16 %v7124
        %v7680 = vunpack.c.l.b16 %v7125
        %v7681 = vunpack.c.h.b16 %v7125
        %v7682 = vunpack.c.l.b16 %v7126
        %v7683 = vunpack.c.h.b16 %v7126
        %v7684 = vunpack.c.l.b16 %v7127
        %v7685 = vunpack.c.h.b16 %v7127
        %v7686 = vunpack.c.l.b16 %v7128
        %v7687 = vunpack.c.h.b16 %v7128
        %v7688 = vunpack.c.l.b16 %v7129
        %v7689 = vunpack.c.h.b16 %v7129
        %v7690 = vunpack.c.l.b16 %v7130
        %v7691 = vunpack.c.h.b16 %v7130
        %v7692 = vunpack.c.l.b16 %v7131
        %v7693 = vunpack.c.h.b16 %v7131
        %v7694 = vunpack.c.l.b16 %v7132
        %v7695 = vunpack.c.h.b16 %v7132
        %v7696 = vunpack.c.l.b16 %v7133
        %v7697 = vunpack.c.h.b16 %v7133
        %v7698 = vunpack.c.l.b16 %v7134
        %v7699 = vunpack.c.h.b16 %v7134
        %v7700 = vunpack.c.l.b16 %v7135
        %v7701 = vunpack.c.h.b16 %v7135
        %v7702 = vunpack.c.l.b16 %v7136
        %v7703 = vunpack.c.h.b16 %v7136
        %v7704 = vunpack.c.l.b16 %v7137
        %v7705 = vunpack.c.h.b16 %v7137
        %v7706 = vunpack.c.l.b16 %v7138
        %v7707 = vunpack.c.h.b16 %v7138
        %v7708 = vunpack.c.l.b16 %v7139
        %v7709 = vunpack.c.h.b16 %v7139
        %v7710 = vunpack.c.l.b16 %v7140
        %v7711 = vunpack.c.h.b16 %v7140
        %v7712 = vunpack.c.l.b16 %v7141
        %v7713 = vunpack.c.h.b16 %v7141
        %v7714 = vunpack.c.l.b16 %v7142
        %v7715 = vunpack.c.h.b16 %v7142
        %v7716 = vunpack.c.l.b16 %v7143
        %v7717 = vunpack.c.h.b16 %v7143
        %v7718 = vunpack.c.l.b16 %v7144
        %v7719 = vunpack.c.h.b16 %v7144
        %v7720 = vunpack.c.l.b16 %v7145
        %v7721 = vunpack.c.h.b16 %v7145
        %v7722 = vunpack.c.l.b16 %v7146
        %v7723 = vunpack.c.h.b16 %v7146
        %v7724 = vunpack.c.l.b16 %v7147
        %v7725 = vunpack.c.h.b16 %v7147
        %v7726 = vunpack.c.l.b16 %v7148
        %v7727 = vunpack.c.h.b16 %v7148
        %v7728 = vunpack.c.l.b16 %v7149
        %v7729 = vunpack.c.h.b16 %v7149
        %v7730 = vunpack.c.l.b16 %v7150
        %v7731 = vunpack.c.h.b16 %v7150
        %v7732 = vunpack.c.l.b16 %v7151
        %v7733 = vunpack.c.h.b16 %v7151
        %v7734 = vunpack.c.l.b16 %v7152
        %v7735 = vunpack.c.h.b16 %v7152
        %v7736 = vunpack.c.l.b16 %v7153
        %v7737 = vunpack.c.h.b16 %v7153
        %v7738 = vunpack.c.l.b16 %v7154
        %v7739 = vunpack.c.h.b16 %v7154
        %v7740 = vunpack.c.l.b16 %v7155
        %v7741 = vunpack.c.h.b16 %v7155
        %v7742 = vunpack.c.l.b16 %v7156
        %v7743 = vunpack.c.h.b16 %v7156
        %v7744 = vunpack.c.l.b16 %v7157
        %v7745 = vunpack.c.h.b16 %v7157
        %v7746 = vunpack.c.l.b16 %v7158
        %v7747 = vunpack.c.h.b16 %v7158
        %v7748 = vunpack.c.l.b16 %v7159
        %v7749 = vunpack.c.h.b16 %v7159
        %v7750 = vunpack.c.l.b16 %v7160
        %v7751 = vunpack.c.h.b16 %v7160
        %v7752 = vunpack.c.l.b16 %v7161
        %v7753 = vunpack.c.h.b16 %v7161
        %v7754 = vunpack.c.l.b16 %v7162
        %v7755 = vunpack.c.h.b16 %v7162
        %v7756 = vunpack.c.l.b16 %v7163
        %v7757 = vunpack.c.h.b16 %v7163
        %v7758 = vunpack.c.l.b16 %v7164
        %v7759 = vunpack.c.h.b16 %v7164
        %v7760 = vunpack.c.l.b16 %v7165
        %v7761 = vunpack.c.h.b16 %v7165
        %v7762 = vunpack.c.l.b16 %v7166
        %v7763 = vunpack.c.h.b16 %v7166
        %v7764 = vunpack.c.l.b16 %v7167
        %v7765 = vunpack.c.h.b16 %v7167
        %v7766 = vunpack.c.l.b16 %v7168
        %v7767 = vunpack.c.h.b16 %v7168
        %v7768 = vunpack.c.l.b16 %v7169
        %v7769 = vunpack.c.h.b16 %v7169
        %v7770 = vunpack.c.l.b16 %v7170
        %v7771 = vunpack.c.h.b16 %v7170
        %v7772 = vunpack.c.l.b16 %v7171
        %v7773 = vunpack.c.h.b16 %v7171
        %v7774 = vunpack.c.l.b16 %v7172
        %v7775 = vunpack.c.h.b16 %v7172
        %v7776 = vunpack.c.l.b16 %v7173
        %v7777 = vunpack.c.h.b16 %v7173
        %v7778 = vunpack.c.l.b16 %v7174
        %v7779 = vunpack.c.h.b16 %v7174
        %v7780 = vunpack.c.l.b16 %v7175
        %v7781 = vunpack.c.h.b16 %v7175
        %v7782 = vunpack.c.l.b16 %v7176
        %v7783 = vunpack.c.h.b16 %v7176
        %v7784 = vunpack.c.l.b16 %v7177
        %v7785 = vunpack.c.h.b16 %v7177
        %v7786 = vunpack.c.l.b16 %v7178
        %v7787 = vunpack.c.h.b16 %v7178
        %v7788 = vunpack.c.l.b16 %v7179
        %v7789 = vunpack.c.h.b16 %v7179
        %v7790 = vunpack.c.l.b16 %v7180
        %v7791 = vunpack.c.h.b16 %v7180
        %v7792 = vunpack.c.l.b16 %v7181
        %v7793 = vunpack.c.h.b16 %v7181
        %v7794 = vunpack.c.l.b16 %v7182
        %v7795 = vunpack.c.h.b16 %v7182
        %v7796 = vunpack.c.l.b16 %v7183
        %v7797 = vunpack.c.h.b16 %v7183
        %v7798 = vunpack.c.l.b16 %v7184
        %v7799 = vunpack.c.h.b16 %v7184
        %v7800 = vunpack.c.l.b16 %v7185
        %v7801 = vunpack.c.h.b16 %v7185
        %v7802 = vunpack.c.l.b16 %v7186
        %v7803 = vunpack.c.h.b16 %v7186
        %v7804 = vunpack.c.l.b16 %v7187
        %v7805 = vunpack.c.h.b16 %v7187
        %v7806 = vunpack.c.l.b16 %v7188
        %v7807 = vunpack.c.h.b16 %v7188
        %v7808 = vunpack.c.l.b16 %v7189
        %v7809 = vunpack.c.h.b16 %v7189
        %v7810 = vunpack.c.l.b16 %v7190
        %v7811 = vunpack.c.h.b16 %v7190
        %v7812 = vunpack.c.l.b16 %v7191
        %v7813 = vunpack.c.h.b16 %v7191
        %v7814 = vunpack.c.l.b16 %v7192
        %v7815 = vunpack.c.h.b16 %v7192
        %v7816 = vunpack.c.l.b16 %v7193
        %v7817 = vunpack.c.h.b16 %v7193
        %v7818 = vunpack.c.l.b16 %v7194
        %v7819 = vunpack.c.h.b16 %v7194
        %v7820 = vunpack.c.l.b16 %v7195
        %v7821 = vunpack.c.h.b16 %v7195
        %v7822 = vunpack.c.l.b16 %v7196
        %v7823 = vunpack.c.h.b16 %v7196
        %v7824 = vunpack.c.l.b16 %v7197
        %v7825 = vunpack.c.h.b16 %v7197
        %v7826 = vunpack.c.l.b16 %v7198
        %v7827 = vunpack.c.h.b16 %v7198
        %v7828 = vunpack.c.l.b16 %v7199
        %v7829 = vunpack.c.h.b16 %v7199
        %v7830 = vunpack.c.l.b16 %v7200
        %v7831 = vunpack.c.h.b16 %v7200
        %v7832 = vunpack.c.l.b16 %v7201
        %v7833 = vunpack.c.h.b16 %v7201
        %v7834 = vunpack.c.l.b16 %v7202
        %v7835 = vunpack.c.h.b16 %v7202
        %v7836 = vunpack.c.l.b16 %v7203
        %v7837 = vunpack.c.h.b16 %v7203
        %v7838 = vunpack.c.l.b16 %v7204
        %v7839 = vunpack.c.h.b16 %v7204
        %v7840 = vunpack.c.l.b16 %v7205
        %v7841 = vunpack.c.h.b16 %v7205
        %v7842 = vunpack.c.l.b16 %v7206
        %v7843 = vunpack.c.h.b16 %v7206
        %v7844 = vunpack.c.l.b16 %v7207
        %v7845 = vunpack.c.h.b16 %v7207
        %v7846 = vunpack.c.l.b16 %v7208
        %v7847 = vunpack.c.h.b16 %v7208
        %v7848 = vunpack.c.l.b16 %v7209
        %v7849 = vunpack.c.h.b16 %v7209
        %v7850 = vunpack.c.l.b16 %v7210
        %v7851 = vunpack.c.h.b16 %v7210
        %v7852 = vunpack.c.l.b16 %v7211
        %v7853 = vunpack.c.h.b16 %v7211
        %v7854 = vunpack.c.l.b16 %v7212
        %v7855 = vunpack.c.h.b16 %v7212
        %v7856 = vunpack.c.l.b16 %v7213
        %v7857 = vunpack.c.h.b16 %v7213
        %v7858 = vunpack.c.l.b16 %v7214
        %v7859 = vunpack.c.h.b16 %v7214
        %v7860 = vunpack.c.l.b16 %v7215
        %v7861 = vunpack.c.h.b16 %v7215
        %v7862 = vunpack.c.l.b16 %v7216
        %v7863 = vunpack.c.h.b16 %v7216
        %v7864 = vunpack.c.l.b16 %v7217
        %v7865 = vunpack.c.h.b16 %v7217
        %v7866 = vunpack.c.l.b16 %v7218
        %v7867 = vunpack.c.h.b16 %v7218
        %v7868 = vunpack.c.l.b16 %v7219
        %v7869 = vunpack.c.h.b16 %v7219
        %v7870 = vunpack.c.l.b16 %v7220
        %v7871 = vunpack.c.h.b16 %v7220
        %v7872 = vunpack.c.l.b16 %v7221
        %v7873 = vunpack.c.h.b16 %v7221
        %v7874 = vunpack.c.l.b16 %v7222
        %v7875 = vunpack.c.h.b16 %v7222
        %v7876 = vunpack.c.l.b16 %v7223
        %v7877 = vunpack.c.h.b16 %v7223
        %v7878 = vunpack.c.l.b16 %v7224
        %v7879 = vunpack.c.h.b16 %v7224
        %v7880 = vunpack.c.l.b16 %v7225
        %v7881 = vunpack.c.h.b16 %v7225
        %v7882 = vunpack.c.l.b16 %v7226
        %v7883 = vunpack.c.h.b16 %v7226
        %v7884 = vunpack.c.l.b16 %v7227
        %v7885 = vunpack.c.h.b16 %v7227
        %v7886 = vunpack.c.l.b16 %v7228
        %v7887 = vunpack.c.h.b16 %v7228
        %v7888 = vunpack.c.l.b16 %v7229
        %v7889 = vunpack.c.h.b16 %v7229
        %v7890 = vunpack.c.l.b16 %v7230
        %v7891 = vunpack.c.h.b16 %v7230
        %v7892 = vunpack.c.l.b16 %v7231
        %v7893 = vunpack.c.h.b16 %v7231
        %v7894 = vunpack.c.l.b16 %v7232
        %v7895 = vunpack.c.h.b16 %v7232
        %v7896 = vunpack.c.l.b16 %v7233
        %v7897 = vunpack.c.h.b16 %v7233
        %v7898 = vunpack.c.l.b16 %v7234
        %v7899 = vunpack.c.h.b16 %v7234
        %v7900 = vunpack.c.l.b16 %v7235
        %v7901 = vunpack.c.h.b16 %v7235
        %v7902 = vunpack.c.l.b16 %v7236
        %v7903 = vunpack.c.h.b16 %v7236
        %v7904 = vunpack.c.l.b16 %v7237
        %v7905 = vunpack.c.h.b16 %v7237
        %v7906 = vunpack.c.l.b16 %v7238
        %v7907 = vunpack.c.h.b16 %v7238
        %v7908 = vunpack.c.l.b16 %v7239
        %v7909 = vunpack.c.h.b16 %v7239
        %v7910 = vunpack.c.l.b16 %v7240
        %v7911 = vunpack.c.h.b16 %v7240
        %v7912 = vunpack.c.l.b16 %v7241
        %v7913 = vunpack.c.h.b16 %v7241
        %v7914 = vunpack.c.l.b16 %v7242
        %v7915 = vunpack.c.h.b16 %v7242
        %v7916 = vunpack.c.l.b16 %v7243
        %v7917 = vunpack.c.h.b16 %v7243
        %v7918 = vunpack.c.l.b16 %v7244
        %v7919 = vunpack.c.h.b16 %v7244
        %v7920 = vunpack.c.l.b16 %v7245
        %v7921 = vunpack.c.h.b16 %v7245
        %v7922 = vunpack.c.l.b16 %v7246
        %v7923 = vunpack.c.h.b16 %v7246
        %v7924 = vunpack.c.l.b16 %v7247
        %v7925 = vunpack.c.h.b16 %v7247
        %v7926 = vunpack.c.l.b16 %v7248
        %v7927 = vunpack.c.h.b16 %v7248
        %v7928 = vunpack.c.l.b16 %v7249
        %v7929 = vunpack.c.h.b16 %v7249
        %v7930 = vunpack.c.l.b16 %v7250
        %v7931 = vunpack.c.h.b16 %v7250
        %v7932 = vunpack.c.l.b16 %v7251
        %v7933 = vunpack.c.h.b16 %v7251
        %v7934 = vunpack.c.l.b16 %v7252
        %v7935 = vunpack.c.h.b16 %v7252
        %v7936 = vunpack.c.l.b16 %v7253
        %v7937 = vunpack.c.h.b16 %v7253
        %v7938 = vunpack.c.l.b16 %v7254
        %v7939 = vunpack.c.h.b16 %v7254
        %v7940 = vunpack.c.l.b16 %v7255
        %v7941 = vunpack.c.h.b16 %v7255
        %v7942 = vunpack.c.l.b16 %v7256
        %v7943 = vunpack.c.h.b16 %v7256
        %v7944 = vunpack.c.l.b16 %v7257
        %v7945 = vunpack.c.h.b16 %v7257
        %v7946 = vunpack.c.l.b16 %v7258
        %v7947 = vunpack.c.h.b16 %v7258
        %v7948 = vunpack.c.l.b16 %v7259
        %v7949 = vunpack.c.h.b16 %v7259
        %v7950 = vunpack.c.l.b16 %v7260
        %v7951 = vunpack.c.h.b16 %v7260
        %v7952 = vunpack.c.l.b16 %v7261
        %v7953 = vunpack.c.h.b16 %v7261
        %v7954 = vunpack.c.l.b16 %v7262
        %v7955 = vunpack.c.h.b16 %v7262
        %v7956 = vunpack.c.l.b16 %v7263
        %v7957 = vunpack.c.h.b16 %v7263
        %v7958 = vunpack.c.l.b16 %v7264
        %v7959 = vunpack.c.h.b16 %v7264
        %v7960 = vunpack.c.l.b16 %v7265
        %v7961 = vunpack.c.h.b16 %v7265
        %v7962 = vunpack.c.l.b16 %v7266
        %v7963 = vunpack.c.h.b16 %v7266
        %v7964 = vunpack.c.l.b16 %v7267
        %v7965 = vunpack.c.h.b16 %v7267
        %v7966 = vunpack.c.l.b16 %v7268
        %v7967 = vunpack.c.h.b16 %v7268
        %v7968 = vunpack.c.l.b16 %v7269
        %v7969 = vunpack.c.h.b16 %v7269
        %v7970 = vunpack.c.l.b16 %v7270
        %v7971 = vunpack.c.h.b16 %v7270
        %v7972 = vunpack.c.l.b16 %v7271
        %v7973 = vunpack.c.h.b16 %v7271
        %v7974 = vunpack.c.l.b16 %v7272
        %v7975 = vunpack.c.h.b16 %v7272
        %v7976 = vunpack.c.l.b16 %v7273
        %v7977 = vunpack.c.h.b16 %v7273
        %v7978 = vunpack.c.l.b16 %v7274
        %v7979 = vunpack.c.h.b16 %v7274
        %v7980 = vunpack.c.l.b16 %v7275
        %v7981 = vunpack.c.h.b16 %v7275
        %v7982 = vunpack.c.l.b16 %v7276
        %v7983 = vunpack.c.h.b16 %v7276
        %v7984 = vunpack.c.l.b16 %v7277
        %v7985 = vunpack.c.h.b16 %v7277
        %v7986 = vunpack.c.l.b16 %v7278
        %v7987 = vunpack.c.h.b16 %v7278
        %v7988 = vunpack.c.l.b16 %v7279
        %v7989 = vunpack.c.h.b16 %v7279
        %v7990 = vunpack.c.l.b16 %v7280
        %v7991 = vunpack.c.h.b16 %v7280
        %v7992 = vunpack.c.l.b16 %v7281
        %v7993 = vunpack.c.h.b16 %v7281
        %v7994 = vunpack.c.l.b16 %v7282
        %v7995 = vunpack.c.h.b16 %v7282
        %v7996 = vunpack.c.l.b16 %v7283
        %v7997 = vunpack.c.h.b16 %v7283
        %v7998 = vunpack.c.l.b16 %v7284
        %v7999 = vunpack.c.h.b16 %v7284
        %v8000 = vunpack.c.l.b16 %v7285
        %v8001 = vunpack.c.h.b16 %v7285
        %v8002 = vunpack.c.l.b16 %v7286
        %v8003 = vunpack.c.h.b16 %v7286
        %v8004 = vunpack.c.l.b16 %v7287
        %v8005 = vunpack.c.h.b16 %v7287
        %v8006 = vunpack.c.l.b16 %v7288
        %v8007 = vunpack.c.h.b16 %v7288
        %v8008 = vunpack.c.l.b16 %v7289
        %v8009 = vunpack.c.h.b16 %v7289
        %v8010 = vunpack.c.l.b16 %v7290
        %v8011 = vunpack.c.h.b16 %v7290
        %v8012 = vunpack.c.l.b16 %v7291
        %v8013 = vunpack.c.h.b16 %v7291
        %v8014 = vunpack.c.l.b16 %v7292
        %v8015 = vunpack.c.h.b16 %v7292
        %v8016 = vunpack.c.l.b16 %v7293
        %v8017 = vunpack.c.h.b16 %v7293
        %v8018 = vunpack.c.l.b16 %v7294
        %v8019 = vunpack.c.h.b16 %v7294
        %v8020 = vunpack.c.l.b16 %v7295
        %v8021 = vunpack.c.h.b16 %v7295
        %v8022 = vunpack.c.l.b16 %v7296
        %v8023 = vunpack.c.h.b16 %v7296
        %v8024 = vunpack.c.l.b16 %v7297
        %v8025 = vunpack.c.h.b16 %v7297
        %v8026 = vunpack.c.l.b16 %v7298
        %v8027 = vunpack.c.h.b16 %v7298
        %v8028 = vunpack.c.l.b16 %v7299
        %v8029 = vunpack.c.h.b16 %v7299
        %v8030 = vunpack.c.l.b16 %v7300
        %v8031 = vunpack.c.h.b16 %v7300
        %v8032 = vunpack.c.l.b16 %v7301
        %v8033 = vunpack.c.h.b16 %v7301
        %v8034 = vunpack.c.l.b16 %v7302
        %v8035 = vunpack.c.h.b16 %v7302
        %v8036 = vunpack.c.l.b16 %v7303
        %v8037 = vunpack.c.h.b16 %v7303
        %v8038 = vunpack.c.l.b16 %v7304
        %v8039 = vunpack.c.h.b16 %v7304
        %v8040 = vunpack.c.l.b16 %v7305
        %v8041 = vunpack.c.h.b16 %v7305
        %v8042 = vunpack.c.l.b16 %v7306
        %v8043 = vunpack.c.h.b16 %v7306
        %v8044 = vunpack.c.l.b16 %v7307
        %v8045 = vunpack.c.h.b16 %v7307
        %v8046 = vunpack.c.l.b16 %v7308
        %v8047 = vunpack.c.h.b16 %v7308
        %v8048 = vunpack.c.l.b16 %v7309
        %v8049 = vunpack.c.h.b16 %v7309
        %v8050 = vunpack.c.l.b16 %v7310
        %v8051 = vunpack.c.h.b16 %v7310
        %v8052 = vunpack.c.l.b16 %v7311
        %v8053 = vunpack.c.h.b16 %v7311
        %v8054 = vpack.c.b16 %v7626, %v7622
        %v8055 = vpack.c.b16 %v7627, %v7623
        %v8056 = vpack.c.b16 %v7628, %v7624
        %v8057 = vpack.c.b16 %v7629, %v7625
        %v8058 = vpack.c.b16 %v7634, %v7630
        %v8059 = vpack.c.b16 %v7635, %v7631
        %v8060 = vpack.c.b16 %v7636, %v7632
        %v8061 = vpack.c.b16 %v7637, %v7633
        %v8062 = vpack.c.b16 %v7642, %v7638
        %v8063 = vpack.c.b16 %v7643, %v7639
        %v8064 = vpack.c.b16 %v7644, %v7640
        %v8065 = vpack.c.b16 %v7645, %v7641
        %v8066 = vpack.c.b16 %v7650, %v7646
        %v8067 = vpack.c.b16 %v7651, %v7647
        %v8068 = vpack.c.b16 %v7652, %v7648
        %v8069 = vpack.c.b16 %v7653, %v7649
        %v8070 = vpack.c.b16 %v7658, %v7654
        %v8071 = vpack.c.b16 %v7659, %v7655
        %v8072 = vpack.c.b16 %v7660, %v7656
        %v8073 = vpack.c.b16 %v7661, %v7657
        %v8074 = vpack.c.b16 %v7666, %v7662
        %v8075 = vpack.c.b16 %v7667, %v7663
        %v8076 = vpack.c.b16 %v7668, %v7664
        %v8077 = vpack.c.b16 %v7669, %v7665
        %v8078 = vpack.c.b16 %v7674, %v7670
        %v8079 = vpack.c.b16 %v7675, %v7671
        %v8080 = vpack.c.b16 %v7676, %v7672
        %v8081 = vpack.c.b16 %v7677, %v7673
        %v8082 = vpack.c.b16 %v7682, %v7678
        %v8083 = vpack.c.b16 %v7683, %v7679
        %v8084 = vpack.c.b16 %v7684, %v7680
        %v8085 = vpack.c.b16 %v7685, %v7681
        %v8086 = vpack.c.b16 %v7690, %v7686
        %v8087 = vpack.c.b16 %v7691, %v7687
        %v8088 = vpack.c.b16 %v7692, %v7688
        %v8089 = vpack.c.b16 %v7693, %v7689
        %v8090 = vpack.c.b16 %v7698, %v7694
        %v8091 = vpack.c.b16 %v7699, %v7695
        %v8092 = vpack.c.b16 %v7700, %v7696
        %v8093 = vpack.c.b16 %v7701, %v7697
        %v8094 = vpack.c.b16 %v7706, %v7702
        %v8095 = vpack.c.b16 %v7707, %v7703
        %v8096 = vpack.c.b16 %v7708, %v7704
        %v8097 = vpack.c.b16 %v7709, %v7705
        %v8098 = vpack.c.b16 %v7714, %v7710
        %v8099 = vpack.c.b16 %v7715, %v7711
        %v8100 = vpack.c.b16 %v7716, %v7712
        %v8101 = vpack.c.b16 %v7717, %v7713
        %v8102 = vpack.c.b16 %v7722, %v7718
        %v8103 = vpack.c.b16 %v7723, %v7719
        %v8104 = vpack.c.b16 %v7724, %v7720
        %v8105 = vpack.c.b16 %v7725, %v7721
        %v8106 = vpack.c.b16 %v7730, %v7726
        %v8107 = vpack.c.b16 %v7731, %v7727
        %v8108 = vpack.c.b16 %v7732, %v7728
        %v8109 = vpack.c.b16 %v7733, %v7729
        %v8110 = vpack.c.b16 %v7738, %v7734
        %v8111 = vpack.c.b16 %v7739, %v7735
        %v8112 = vpack.c.b16 %v7740, %v7736
        %v8113 = vpack.c.b16 %v7741, %v7737
        %v8114 = vpack.c.b16 %v7746, %v7742
        %v8115 = vpack.c.b16 %v7747, %v7743
        %v8116 = vpack.c.b16 %v7748, %v7744
        %v8117 = vpack.c.b16 %v7749, %v7745
        %v8118 = vpack.c.b16 %v7754, %v7750
        %v8119 = vpack.c.b16 %v7755, %v7751
        %v8120 = vpack.c.b16 %v7756, %v7752
        %v8121 = vpack.c.b16 %v7757, %v7753
        %v8122 = vpack.c.b16 %v7762, %v7758
        %v8123 = vpack.c.b16 %v7763, %v7759
        %v8124 = vpack.c.b16 %v7764, %v7760
        %v8125 = vpack.c.b16 %v7765, %v7761
        %v8126 = vpack.c.b16 %v7770, %v7766
        %v8127 = vpack.c.b16 %v7771, %v7767
        %v8128 = vpack.c.b16 %v7772, %v7768
        %v8129 = vpack.c.b16 %v7773, %v7769
        %v8130 = vpack.c.b16 %v7778, %v7774
        %v8131 = vpack.c.b16 %v7779, %v7775
        %v8132 = vpack.c.b16 %v7780, %v7776
        %v8133 = vpack.c.b16 %v7781, %v7777
        %v8134 = vpack.c.b16 %v7786, %v7782
        %v8135 = vpack.c.b16 %v7787, %v7783
        %v8136 = vpack.c.b16 %v7788, %v7784
        %v8137 = vpack.c.b16 %v7789, %v7785
        %v8138 = vpack.c.b16 %v7794, %v7790
        %v8139 = vpack.c.b16 %v7795, %v7791
        %v8140 = vpack.c.b16 %v7796, %v7792
        %v8141 = vpack.c.b16 %v7797, %v7793
        %v8142 = vpack.c.b16 %v7802, %v7798
        %v8143 = vpack.c.b16 %v7803, %v7799
        %v8144 = vpack.c.b16 %v7804, %v7800
        %v8145 = vpack.c.b16 %v7805, %v7801
        %v8146 = vpack.c.b16 %v7810, %v7806
        %v8147 = vpack.c.b16 %v7811, %v7807
        %v8148 = vpack.c.b16 %v7812, %v7808
        %v8149 = vpack.c.b16 %v7813, %v7809
        %v8150 = vpack.c.b16 %v7818, %v7814
        %v8151 = vpack.c.b16 %v7819, %v7815
        %v8152 = vpack.c.b16 %v7820, %v7816
        %v8153 = vpack.c.b16 %v7821, %v7817
        %v8154 = vpack.c.b16 %v7826, %v7822
        %v8155 = vpack.c.b16 %v7827, %v7823
        %v8156 = vpack.c.b16 %v7828, %v7824
        %v8157 = vpack.c.b16 %v7829, %v7825
        %v8158 = vpack.c.b16 %v7834, %v7830
        %v8159 = vpack.c.b16 %v7835, %v7831
        %v8160 = vpack.c.b16 %v7836, %v7832
        %v8161 = vpack.c.b16 %v7837, %v7833
        %v8162 = vpack.c.b16 %v7842, %v7838
        %v8163 = vpack.c.b16 %v7843, %v7839
        %v8164 = vpack.c.b16 %v7844, %v7840
        %v8165 = vpack.c.b16 %v7845, %v7841
        %v8166 = vpack.c.b16 %v7850, %v7846
        %v8167 = vpack.c.b16 %v7851, %v7847
        %v8168 = vpack.c.b16 %v7852, %v7848
        %v8169 = vpack.c.b16 %v7853, %v7849
        %v8170 = vpack.c.b16 %v7858, %v7854
        %v8171 = vpack.c.b16 %v7859, %v7855
        %v8172 = vpack.c.b16 %v7860, %v7856
        %v8173 = vpack.c.b16 %v7861, %v7857
        %v8174 = vpack.c.b16 %v7866, %v7862
        %v8175 = vpack.c.b16 %v7867, %v7863
        %v8176 = vpack.c.b16 %v7868, %v7864
        %v8177 = vpack.c.b16 %v7869, %v7865
        %v8178 = vpack.c.b16 %v7874, %v7870
        %v8179 = vpack.c.b16 %v7875, %v7871
        %v8180 = vpack.c.b16 %v7876, %v7872
        %v8181 = vpack.c.b16 %v7877, %v7873
        %v8182 = vpack.c.b16 %v7882, %v7878
        %v8183 = vpack.c.b16 %v7883, %v7879
        %v8184 = vpack.c.b16 %v7884, %v7880
        %v8185 = vpack.c.b16 %v7885, %v7881
        %v8186 = vpack.c.b16 %v7890, %v7886
        %v8187 = vpack.c.b16 %v7891, %v7887
        %v8188 = vpack.c.b16 %v7892, %v7888
        %v8189 = vpack.c.b16 %v7893, %v7889
        %v8190 = vpack.c.b16 %v7898, %v7894
        %v8191 = vpack.c.b16 %v7899, %v7895
        %v8192 = vpack.c.b16 %v7900, %v7896
        %v8193 = vpack.c.b16 %v7901, %v7897
        %v8194 = vpack.c.b16 %v7906, %v7902
        %v8195 = vpack.c.b16 %v7907, %v7903
        %v8196 = vpack.c.b16 %v7908, %v7904
        %v8197 = vpack.c.b16 %v7909, %v7905
        %v8198 = vpack.c.b16 %v7914, %v7910
        %v8199 = vpack.c.b16 %v7915, %v7911
        %v8200 = vpack.c.b16 %v7916, %v7912
        %v8201 = vpack.c.b16 %v7917, %v7913
        %v8202 = vpack.c.b16 %v7922, %v7918
        %v8203 = vpack.c.b16 %v7923, %v7919
        %v8204 = vpack.c.b16 %v7924, %v7920
        %v8205 = vpack.c.b16 %v7925, %v7921
        %v8206 = vpack.c.b16 %v7930, %v7926
        %v8207 = vpack.c.b16 %v7931, %v7927
        %v8208 = vpack.c.b16 %v7932, %v7928
        %v8209 = vpack.c.b16 %v7933, %v7929
        %v8210 = vpack.c.b16 %v7938, %v7934
        %v8211 = vpack.c.b16 %v7939, %v7935
        %v8212 = vpack.c.b16 %v7940, %v7936
        %v8213 = vpack.c.b16 %v7941, %v7937
        %v8214 = vpack.c.b16 %v7946, %v7942
        %v8215 = vpack.c.b16 %v7947, %v7943
        %v8216 = vpack.c.b16 %v7948, %v7944
        %v8217 = vpack.c.b16 %v7949, %v7945
        %v8218 = vpack.c.b16 %v7954, %v7950
        %v8219 = vpack.c.b16 %v7955, %v7951
        %v8220 = vpack.c.b16 %v7956, %v7952
        %v8221 = vpack.c.b16 %v7957, %v7953
        %v8222 = vpack.c.b16 %v7962, %v7958
        %v8223 = vpack.c.b16 %v7963, %v7959
        %v8224 = vpack.c.b16 %v7964, %v7960
        %v8225 = vpack.c.b16 %v7965, %v7961
        %v8226 = vpack.c.b16 %v7970, %v7966
        %v8227 = vpack.c.b16 %v7971, %v7967
        %v8228 = vpack.c.b16 %v7972, %v7968
        %v8229 = vpack.c.b16 %v7973, %v7969
        %v8230 = vpack.c.b16 %v7978, %v7974
        %v8231 = vpack.c.b16 %v7979, %v7975
        %v8232 = vpack.c.b16 %v7980, %v7976
        %v8233 = vpack.c.b16 %v7981, %v7977
        %v8234 = vpack.c.b16 %v7986, %v7982
        %v8235 = vpack.c.b16 %v7987, %v7983
        %v8236 = vpack.c.b16 %v7988, %v7984
        %v8237 = vpack.c.b16 %v7989, %v7985
        %v8238 = vpack.c.b16 %v7994, %v7990
        %v8239 = vpack.c.b16 %v7995, %v7991
        %v8240 = vpack.c.b16 %v7996, %v7992
        %v8241 = vpack.c.b16 %v7997, %v7993
        %v8242 = vpack.c.b16 %v8002, %v7998
        %v8243 = vpack.c.b16 %v8003, %v7999
        %v8244 = vpack.c.b16 %v8004, %v8000
        %v8245 = vpack.c.b16 %v8005, %v8001
        %v8246 = vpack.c.b16 %v8010, %v8006
        %v8247 = vpack.c.b16 %v8011, %v8007
        %v8248 = vpack.c.b16 %v8012, %v8008
        %v8249 = vpack.c.b16 %v8013, %v8009
        %v8250 = vpack.c.b16 %v8018, %v8014
        %v8251 = vpack.c.b16 %v8019, %v8015
        %v8252 = vpack.c.b16 %v8020, %v8016
        %v8253 = vpack.c.b16 %v8021, %v8017
        %v8254 = vpack.c.b16 %v8026, %v8022
        %v8255 = vpack.c.b16 %v8027, %v8023
        %v8256 = vpack.c.b16 %v8028, %v8024
        %v8257 = vpack.c.b16 %v8029, %v8025
        %v8258 = vpack.c.b16 %v8034, %v8030
        %v8259 = vpack.c.b16 %v8035, %v8031
        %v8260 = vpack.c.b16 %v8036, %v8032
        %v8261 = vpack.c.b16 %v8037, %v8033
        %v8262 = vpack.c.b16 %v8042, %v8038
        %v8263 = vpack.c.b16 %v8043, %v8039
        %v8264 = vpack.c.b16 %v8044, %v8040
        %v8265 = vpack.c.b16 %v8045, %v8041
        %v8266 = vpack.c.b16 %v8050, %v8046
        %v8267 = vpack.c.b16 %v8051, %v8047
        %v8268 = vpack.c.b16 %v8052, %v8048
        %v8269 = vpack.c.b16 %v8053, %v8049
        %vm8486 = vcmask 785408
        %v8488 = vsel %vm8486, %v7386, 0
        %v8491 = vsel %vm8486, %v7393, 0
        %8493 = vmatpush.bf16.msra.mxu0 %v8082
        %8494 = vmatpush.bf16.msra.mxu0 %v8078
        %8495 = vmatpush.bf16.msra.mxu0 %v8074
        %8496 = vmatpush.bf16.msra.mxu0 %v8070
        %8497 = vmatpush.bf16.msra.mxu0 %v8066
        %8498 = vmatpush.bf16.msra.mxu0 %v8062
        %8499 = vmatpush.bf16.msra.mxu0 %v8058
        %8500 = vmatpush.bf16.msra.mxu0 %v8054
        %8501 = vmatmul.bf16.gmra.mxu0 %v7380
        %v8502 = vpop.f32.mrf.mxu0
        %v8503 = vadd.f32 %v7319, %v8502
        %v8504 = vpop.f32.mrf.mxu0
        %v8505 = vadd.f32 %v7324, %v8504
        %8506 = vmatmul.bf16.gmra.mxu0 %v7387
        %v8507 = vpop.f32.mrf.mxu0
        %v8508 = vadd.f32 %v7329, %v8507
        %v8509 = vpop.f32.mrf.mxu0
        %v8510 = vadd.f32 %v7334, %v8509
        %8511 = vdwg.mxu0
        %8512 = vmatpush.bf16.msra.mxu0 %v8114
        %8513 = vmatpush.bf16.msra.mxu0 %v8110
        %8514 = vmatpush.bf16.msra.mxu0 %v8106
        %8515 = vmatpush.bf16.msra.mxu0 %v8102
        %8516 = vmatpush.bf16.msra.mxu0 %v8098
        %8517 = vmatpush.bf16.msra.mxu0 %v8094
        %8518 = vmatpush.bf16.msra.mxu0 %v8090
        %8519 = vmatpush.bf16.msra.mxu0 %v8086
        %8520 = vmatmul.bf16.gmra.mxu0 %v7381
        %v8521 = vpop.f32.mrf.mxu0
        %v8522 = vadd.f32 %v8503, %v8521
        %v8523 = vpop.f32.mrf.mxu0
        %v8524 = vadd.f32 %v8505, %v8523
        %8525 = vmatmul.bf16.gmra.mxu0 %v7388
        %v8526 = vpop.f32.mrf.mxu0
        %v8527 = vadd.f32 %v8508, %v8526
        %v8528 = vpop.f32.mrf.mxu0
        %v8529 = vadd.f32 %v8510, %v8528
        %8530 = vdwg.mxu0
        %8531 = vmatpush.bf16.msra.mxu0 %v8146
        %8532 = vmatpush.bf16.msra.mxu0 %v8142
        %8533 = vmatpush.bf16.msra.mxu0 %v8138
        %8534 = vmatpush.bf16.msra.mxu0 %v8134
        %8535 = vmatpush.bf16.msra.mxu0 %v8130
        %8536 = vmatpush.bf16.msra.mxu0 %v8126
        %8537 = vmatpush.bf16.msra.mxu0 %v8122
        %8538 = vmatpush.bf16.msra.mxu0 %v8118
        %8539 = vmatmul.bf16.gmra.mxu0 %v7382
        %v8540 = vpop.f32.mrf.mxu0
        %v8541 = vadd.f32 %v8522, %v8540
        %v8542 = vpop.f32.mrf.mxu0
        %v8543 = vadd.f32 %v8524, %v8542
        %8544 = vmatmul.bf16.gmra.mxu0 %v7389
        %v8545 = vpop.f32.mrf.mxu0
        %v8546 = vadd.f32 %v8527, %v8545
        %v8547 = vpop.f32.mrf.mxu0
        %v8548 = vadd.f32 %v8529, %v8547
        %8549 = vdwg.mxu0
        %8550 = vmatpush.bf16.msra.mxu0 %v8178
        %8551 = vmatpush.bf16.msra.mxu0 %v8174
        %8552 = vmatpush.bf16.msra.mxu0 %v8170
        %8553 = vmatpush.bf16.msra.mxu0 %v8166
        %8554 = vmatpush.bf16.msra.mxu0 %v8162
        %8555 = vmatpush.bf16.msra.mxu0 %v8158
        %8556 = vmatpush.bf16.msra.mxu0 %v8154
        %8557 = vmatpush.bf16.msra.mxu0 %v8150
        %8558 = vmatmul.bf16.gmra.mxu0 %v7383
        %v8559 = vpop.f32.mrf.mxu0
        %v8560 = vadd.f32 %v8541, %v8559
        %v8561 = vpop.f32.mrf.mxu0
        %v8562 = vadd.f32 %v8543, %v8561
        %8563 = vmatmul.bf16.gmra.mxu0 %v7390
        %v8564 = vpop.f32.mrf.mxu0
        %v8565 = vadd.f32 %v8546, %v8564
        %v8566 = vpop.f32.mrf.mxu0
        %v8567 = vadd.f32 %v8548, %v8566
        %8568 = vdwg.mxu0
        %8569 = vmatpush.bf16.msra.mxu0 %v8210
        %8570 = vmatpush.bf16.msra.mxu0 %v8206
        %8571 = vmatpush.bf16.msra.mxu0 %v8202
        %8572 = vmatpush.bf16.msra.mxu0 %v8198
        %8573 = vmatpush.bf16.msra.mxu0 %v8194
        %8574 = vmatpush.bf16.msra.mxu0 %v8190
        %8575 = vmatpush.bf16.msra.mxu0 %v8186
        %8576 = vmatpush.bf16.msra.mxu0 %v8182
        %8577 = vmatmul.bf16.gmra.mxu0 %v7384
        %v8578 = vpop.f32.mrf.mxu0
        %v8579 = vadd.f32 %v8560, %v8578
        %v8580 = vpop.f32.mrf.mxu0
        %v8581 = vadd.f32 %v8562, %v8580
        %8582 = vmatmul.bf16.gmra.mxu0 %v7391
        %v8583 = vpop.f32.mrf.mxu0
        %v8584 = vadd.f32 %v8565, %v8583
        %v8585 = vpop.f32.mrf.mxu0
        %v8586 = vadd.f32 %v8567, %v8585
        %8587 = vdwg.mxu0
        %8588 = vmatpush.bf16.msra.mxu0 %v8242
        %8589 = vmatpush.bf16.msra.mxu0 %v8238
        %8590 = vmatpush.bf16.msra.mxu0 %v8234
        %8591 = vmatpush.bf16.msra.mxu0 %v8230
        %8592 = vmatpush.bf16.msra.mxu0 %v8226
        %8593 = vmatpush.bf16.msra.mxu0 %v8222
        %8594 = vmatpush.bf16.msra.mxu0 %v8218
        %8595 = vmatpush.bf16.msra.mxu0 %v8214
        %8596 = vmatmul.bf16.gmra.mxu0 %v7385
        %v8597 = vpop.f32.mrf.mxu0
        %v8598 = vadd.f32 %v8579, %v8597
        %v8599 = vpop.f32.mrf.mxu0
        %v8600 = vadd.f32 %v8581, %v8599
        %8601 = vmatmul.bf16.gmra.mxu0 %v7392
        %v8602 = vpop.f32.mrf.mxu0
        %v8603 = vadd.f32 %v8584, %v8602
        %v8604 = vpop.f32.mrf.mxu0
        %v8605 = vadd.f32 %v8586, %v8604
        %8606 = vdwg.mxu0
        %8607 = vmatpush.bf16.msra.mxu0 0
        %8608 = vmatpush.bf16.msra.mxu0 0
        %8609 = vmatpush.bf16.msra.mxu0 %v8266
        %8610 = vmatpush.bf16.msra.mxu0 %v8262
        %8611 = vmatpush.bf16.msra.mxu0 %v8258
        %8612 = vmatpush.bf16.msra.mxu0 %v8254
        %8613 = vmatpush.bf16.msra.mxu0 %v8250
        %8614 = vmatpush.bf16.msra.mxu0 %v8246
        %8615 = vmatmul.bf16.gmra.mxu0 %v8488
        %v8616 = vpop.f32.mrf.mxu0
        %v8617 = vadd.f32 %v8598, %v8616
        %v8618 = vpop.f32.mrf.mxu0
        %v8619 = vadd.f32 %v8600, %v8618
        %8620 = vmatmul.bf16.gmra.mxu0 %v8491
        %v8621 = vpop.f32.mrf.mxu0
        %v8622 = vadd.f32 %v8603, %v8621
        %v8623 = vpop.f32.mrf.mxu0
        %v8624 = vadd.f32 %v8605, %v8623
        %8625 = vdwg.mxu0
        %8626 = vmatpush.bf16.msra.mxu0 %v8083
        %8627 = vmatpush.bf16.msra.mxu0 %v8079
        %8628 = vmatpush.bf16.msra.mxu0 %v8075
        %8629 = vmatpush.bf16.msra.mxu0 %v8071
        %8630 = vmatpush.bf16.msra.mxu0 %v8067
        %8631 = vmatpush.bf16.msra.mxu0 %v8063
        %8632 = vmatpush.bf16.msra.mxu0 %v8059
        %8633 = vmatpush.bf16.msra.mxu0 %v8055
        %8634 = vmatmul.bf16.gmra.mxu0 %v7380
        %v8635 = vpop.f32.mrf.mxu0
        %v8636 = vadd.f32 %v7319, %v8635
        %v8637 = vpop.f32.mrf.mxu0
        %v8638 = vadd.f32 %v7324, %v8637
        %8639 = vmatmul.bf16.gmra.mxu0 %v7387
        %v8640 = vpop.f32.mrf.mxu0
        %v8641 = vadd.f32 %v7329, %v8640
        %v8642 = vpop.f32.mrf.mxu0
        %v8643 = vadd.f32 %v7334, %v8642
        %8644 = vdwg.mxu0
        %8645 = vmatpush.bf16.msra.mxu0 %v8115
        %8646 = vmatpush.bf16.msra.mxu0 %v8111
        %8647 = vmatpush.bf16.msra.mxu0 %v8107
        %8648 = vmatpush.bf16.msra.mxu0 %v8103
        %8649 = vmatpush.bf16.msra.mxu0 %v8099
        %8650 = vmatpush.bf16.msra.mxu0 %v8095
        %8651 = vmatpush.bf16.msra.mxu0 %v8091
        %8652 = vmatpush.bf16.msra.mxu0 %v8087
        %8653 = vmatmul.bf16.gmra.mxu0 %v7381
        %v8654 = vpop.f32.mrf.mxu0
        %v8655 = vadd.f32 %v8636, %v8654
        %v8656 = vpop.f32.mrf.mxu0
        %v8657 = vadd.f32 %v8638, %v8656
        %8658 = vmatmul.bf16.gmra.mxu0 %v7388
        %v8659 = vpop.f32.mrf.mxu0
        %v8660 = vadd.f32 %v8641, %v8659
        %v8661 = vpop.f32.mrf.mxu0
        %v8662 = vadd.f32 %v8643, %v8661
        %8663 = vdwg.mxu0
        %8664 = vmatpush.bf16.msra.mxu0 %v8147
        %8665 = vmatpush.bf16.msra.mxu0 %v8143
        %8666 = vmatpush.bf16.msra.mxu0 %v8139
        %8667 = vmatpush.bf16.msra.mxu0 %v8135
        %8668 = vmatpush.bf16.msra.mxu0 %v8131
        %8669 = vmatpush.bf16.msra.mxu0 %v8127
        %8670 = vmatpush.bf16.msra.mxu0 %v8123
        %8671 = vmatpush.bf16.msra.mxu0 %v8119
        %8672 = vmatmul.bf16.gmra.mxu0 %v7382
        %v8673 = vpop.f32.mrf.mxu0
        %v8674 = vadd.f32 %v8655, %v8673
        %v8675 = vpop.f32.mrf.mxu0
        %v8676 = vadd.f32 %v8657, %v8675
        %8677 = vmatmul.bf16.gmra.mxu0 %v7389
        %v8678 = vpop.f32.mrf.mxu0
        %v8679 = vadd.f32 %v8660, %v8678
        %v8680 = vpop.f32.mrf.mxu0
        %v8681 = vadd.f32 %v8662, %v8680
        %8682 = vdwg.mxu0
        %8683 = vmatpush.bf16.msra.mxu0 %v8179
        %8684 = vmatpush.bf16.msra.mxu0 %v8175
        %8685 = vmatpush.bf16.msra.mxu0 %v8171
        %8686 = vmatpush.bf16.msra.mxu0 %v8167
        %8687 = vmatpush.bf16.msra.mxu0 %v8163
        %8688 = vmatpush.bf16.msra.mxu0 %v8159
        %8689 = vmatpush.bf16.msra.mxu0 %v8155
        %8690 = vmatpush.bf16.msra.mxu0 %v8151
        %8691 = vmatmul.bf16.gmra.mxu0 %v7383
        %v8692 = vpop.f32.mrf.mxu0
        %v8693 = vadd.f32 %v8674, %v8692
        %v8694 = vpop.f32.mrf.mxu0
        %v8695 = vadd.f32 %v8676, %v8694
        %8696 = vmatmul.bf16.gmra.mxu0 %v7390
        %v8697 = vpop.f32.mrf.mxu0
        %v8698 = vadd.f32 %v8679, %v8697
        %v8699 = vpop.f32.mrf.mxu0
        %v8700 = vadd.f32 %v8681, %v8699
        %8701 = vdwg.mxu0
        %8702 = vmatpush.bf16.msra.mxu0 %v8211
        %8703 = vmatpush.bf16.msra.mxu0 %v8207
        %8704 = vmatpush.bf16.msra.mxu0 %v8203
        %8705 = vmatpush.bf16.msra.mxu0 %v8199
        %8706 = vmatpush.bf16.msra.mxu0 %v8195
        %8707 = vmatpush.bf16.msra.mxu0 %v8191
        %8708 = vmatpush.bf16.msra.mxu0 %v8187
        %8709 = vmatpush.bf16.msra.mxu0 %v8183
        %8710 = vmatmul.bf16.gmra.mxu0 %v7384
        %v8711 = vpop.f32.mrf.mxu0
        %v8712 = vadd.f32 %v8693, %v8711
        %v8713 = vpop.f32.mrf.mxu0
        %v8714 = vadd.f32 %v8695, %v8713
        %8715 = vmatmul.bf16.gmra.mxu0 %v7391
        %v8716 = vpop.f32.mrf.mxu0
        %v8717 = vadd.f32 %v8698, %v8716
        %v8718 = vpop.f32.mrf.mxu0
        %v8719 = vadd.f32 %v8700, %v8718
        %8720 = vdwg.mxu0
        %8721 = vmatpush.bf16.msra.mxu0 %v8243
        %8722 = vmatpush.bf16.msra.mxu0 %v8239
        %8723 = vmatpush.bf16.msra.mxu0 %v8235
        %8724 = vmatpush.bf16.msra.mxu0 %v8231
        %8725 = vmatpush.bf16.msra.mxu0 %v8227
        %8726 = vmatpush.bf16.msra.mxu0 %v8223
        %8727 = vmatpush.bf16.msra.mxu0 %v8219
        %8728 = vmatpush.bf16.msra.mxu0 %v8215
        %8729 = vmatmul.bf16.gmra.mxu0 %v7385
        %v8730 = vpop.f32.mrf.mxu0
        %v8731 = vadd.f32 %v8712, %v8730
        %v8732 = vpop.f32.mrf.mxu0
        %v8733 = vadd.f32 %v8714, %v8732
        %8734 = vmatmul.bf16.gmra.mxu0 %v7392
        %v8735 = vpop.f32.mrf.mxu0
        %v8736 = vadd.f32 %v8717, %v8735
        %v8737 = vpop.f32.mrf.mxu0
        %v8738 = vadd.f32 %v8719, %v8737
        %8739 = vdwg.mxu0
        %8740 = vmatpush.bf16.msra.mxu0 0
        %8741 = vmatpush.bf16.msra.mxu0 0
        %8742 = vmatpush.bf16.msra.mxu0 %v8267
        %8743 = vmatpush.bf16.msra.mxu0 %v8263
        %8744 = vmatpush.bf16.msra.mxu0 %v8259
        %8745 = vmatpush.bf16.msra.mxu0 %v8255
        %8746 = vmatpush.bf16.msra.mxu0 %v8251
        %8747 = vmatpush.bf16.msra.mxu0 %v8247
        %8748 = vmatmul.bf16.gmra.mxu0 %v8488
        %v8749 = vpop.f32.mrf.mxu0
        %v8750 = vadd.f32 %v8731, %v8749
        %v8751 = vpop.f32.mrf.mxu0
        %v8752 = vadd.f32 %v8733, %v8751
        %8753 = vmatmul.bf16.gmra.mxu0 %v8491
        %v8754 = vpop.f32.mrf.mxu0
        %v8755 = vadd.f32 %v8736, %v8754
        %v8756 = vpop.f32.mrf.mxu0
        %v8757 = vadd.f32 %v8738, %v8756
        %8758 = vdwg.mxu0
        %8759 = vmatpush.bf16.msra.mxu0 %v8084
        %8760 = vmatpush.bf16.msra.mxu0 %v8080
        %8761 = vmatpush.bf16.msra.mxu0 %v8076
        %8762 = vmatpush.bf16.msra.mxu0 %v8072
        %8763 = vmatpush.bf16.msra.mxu0 %v8068
        %8764 = vmatpush.bf16.msra.mxu0 %v8064
        %8765 = vmatpush.bf16.msra.mxu0 %v8060
        %8766 = vmatpush.bf16.msra.mxu0 %v8056
        %8767 = vmatmul.bf16.gmra.mxu0 %v7380
        %v8768 = vpop.f32.mrf.mxu0
        %v8769 = vadd.f32 %v7319, %v8768
        %v8770 = vpop.f32.mrf.mxu0
        %v8771 = vadd.f32 %v7324, %v8770
        %8772 = vmatmul.bf16.gmra.mxu0 %v7387
        %v8773 = vpop.f32.mrf.mxu0
        %v8774 = vadd.f32 %v7329, %v8773
        %v8775 = vpop.f32.mrf.mxu0
        %v8776 = vadd.f32 %v7334, %v8775
        %8777 = vdwg.mxu0
        %8778 = vmatpush.bf16.msra.mxu0 %v8116
        %8779 = vmatpush.bf16.msra.mxu0 %v8112
        %8780 = vmatpush.bf16.msra.mxu0 %v8108
        %8781 = vmatpush.bf16.msra.mxu0 %v8104
        %8782 = vmatpush.bf16.msra.mxu0 %v8100
        %8783 = vmatpush.bf16.msra.mxu0 %v8096
        %8784 = vmatpush.bf16.msra.mxu0 %v8092
        %8785 = vmatpush.bf16.msra.mxu0 %v8088
        %8786 = vmatmul.bf16.gmra.mxu0 %v7381
        %v8787 = vpop.f32.mrf.mxu0
        %v8788 = vadd.f32 %v8769, %v8787
        %v8789 = vpop.f32.mrf.mxu0
        %v8790 = vadd.f32 %v8771, %v8789
        %8791 = vmatmul.bf16.gmra.mxu0 %v7388
        %v8792 = vpop.f32.mrf.mxu0
        %v8793 = vadd.f32 %v8774, %v8792
        %v8794 = vpop.f32.mrf.mxu0
        %v8795 = vadd.f32 %v8776, %v8794
        %8796 = vdwg.mxu0
        %8797 = vmatpush.bf16.msra.mxu0 %v8148
        %8798 = vmatpush.bf16.msra.mxu0 %v8144
        %8799 = vmatpush.bf16.msra.mxu0 %v8140
        %8800 = vmatpush.bf16.msra.mxu0 %v8136
        %8801 = vmatpush.bf16.msra.mxu0 %v8132
        %8802 = vmatpush.bf16.msra.mxu0 %v8128
        %8803 = vmatpush.bf16.msra.mxu0 %v8124
        %8804 = vmatpush.bf16.msra.mxu0 %v8120
        %8805 = vmatmul.bf16.gmra.mxu0 %v7382
        %v8806 = vpop.f32.mrf.mxu0
        %v8807 = vadd.f32 %v8788, %v8806
        %v8808 = vpop.f32.mrf.mxu0
        %v8809 = vadd.f32 %v8790, %v8808
        %8810 = vmatmul.bf16.gmra.mxu0 %v7389
        %v8811 = vpop.f32.mrf.mxu0
        %v8812 = vadd.f32 %v8793, %v8811
        %v8813 = vpop.f32.mrf.mxu0
        %v8814 = vadd.f32 %v8795, %v8813
        %8815 = vdwg.mxu0
        %8816 = vmatpush.bf16.msra.mxu0 %v8180
        %8817 = vmatpush.bf16.msra.mxu0 %v8176
        %8818 = vmatpush.bf16.msra.mxu0 %v8172
        %8819 = vmatpush.bf16.msra.mxu0 %v8168
        %8820 = vmatpush.bf16.msra.mxu0 %v8164
        %8821 = vmatpush.bf16.msra.mxu0 %v8160
        %8822 = vmatpush.bf16.msra.mxu0 %v8156
        %8823 = vmatpush.bf16.msra.mxu0 %v8152
        %8824 = vmatmul.bf16.gmra.mxu0 %v7383
        %v8825 = vpop.f32.mrf.mxu0
        %v8826 = vadd.f32 %v8807, %v8825
        %v8827 = vpop.f32.mrf.mxu0
        %v8828 = vadd.f32 %v8809, %v8827
        %8829 = vmatmul.bf16.gmra.mxu0 %v7390
        %v8830 = vpop.f32.mrf.mxu0
        %v8831 = vadd.f32 %v8812, %v8830
        %v8832 = vpop.f32.mrf.mxu0
        %v8833 = vadd.f32 %v8814, %v8832
        %8834 = vdwg.mxu0
        %8835 = vmatpush.bf16.msra.mxu0 %v8212
        %8836 = vmatpush.bf16.msra.mxu0 %v8208
        %8837 = vmatpush.bf16.msra.mxu0 %v8204
        %8838 = vmatpush.bf16.msra.mxu0 %v8200
        %8839 = vmatpush.bf16.msra.mxu0 %v8196
        %8840 = vmatpush.bf16.msra.mxu0 %v8192
        %8841 = vmatpush.bf16.msra.mxu0 %v8188
        %8842 = vmatpush.bf16.msra.mxu0 %v8184
        %8843 = vmatmul.bf16.gmra.mxu0 %v7384
        %v8844 = vpop.f32.mrf.mxu0
        %v8845 = vadd.f32 %v8826, %v8844
        %v8846 = vpop.f32.mrf.mxu0
        %v8847 = vadd.f32 %v8828, %v8846
        %8848 = vmatmul.bf16.gmra.mxu0 %v7391
        %v8849 = vpop.f32.mrf.mxu0
        %v8850 = vadd.f32 %v8831, %v8849
        %v8851 = vpop.f32.mrf.mxu0
        %v8852 = vadd.f32 %v8833, %v8851
        %8853 = vdwg.mxu0
        %8854 = vmatpush.bf16.msra.mxu0 %v8244
        %8855 = vmatpush.bf16.msra.mxu0 %v8240
        %8856 = vmatpush.bf16.msra.mxu0 %v8236
        %8857 = vmatpush.bf16.msra.mxu0 %v8232
        %8858 = vmatpush.bf16.msra.mxu0 %v8228
        %8859 = vmatpush.bf16.msra.mxu0 %v8224
        %8860 = vmatpush.bf16.msra.mxu0 %v8220
        %8861 = vmatpush.bf16.msra.mxu0 %v8216
        %8862 = vmatmul.bf16.gmra.mxu0 %v7385
        %v8863 = vpop.f32.mrf.mxu0
        %v8864 = vadd.f32 %v8845, %v8863
        %v8865 = vpop.f32.mrf.mxu0
        %v8866 = vadd.f32 %v8847, %v8865
        %8867 = vmatmul.bf16.gmra.mxu0 %v7392
        %v8868 = vpop.f32.mrf.mxu0
        %v8869 = vadd.f32 %v8850, %v8868
        %v8870 = vpop.f32.mrf.mxu0
        %v8871 = vadd.f32 %v8852, %v8870
        %8872 = vdwg.mxu0
        %8873 = vmatpush.bf16.msra.mxu0 0
        %8874 = vmatpush.bf16.msra.mxu0 0
        %8875 = vmatpush.bf16.msra.mxu0 %v8268
        %8876 = vmatpush.bf16.msra.mxu0 %v8264
        %8877 = vmatpush.bf16.msra.mxu0 %v8260
        %8878 = vmatpush.bf16.msra.mxu0 %v8256
        %8879 = vmatpush.bf16.msra.mxu0 %v8252
        %8880 = vmatpush.bf16.msra.mxu0 %v8248
        %8881 = vmatmul.bf16.gmra.mxu0 %v8488
        %v8882 = vpop.f32.mrf.mxu0
        %v8883 = vadd.f32 %v8864, %v8882
        %v8884 = vpop.f32.mrf.mxu0
        %v8885 = vadd.f32 %v8866, %v8884
        %8886 = vmatmul.bf16.gmra.mxu0 %v8491
        %v8887 = vpop.f32.mrf.mxu0
        %v8888 = vadd.f32 %v8869, %v8887
        %v8889 = vpop.f32.mrf.mxu0
        %v8890 = vadd.f32 %v8871, %v8889
        %8891 = vdwg.mxu0
        %8892 = vmatpush.bf16.msra.mxu0 %v8085
        %8893 = vmatpush.bf16.msra.mxu0 %v8081
        %8894 = vmatpush.bf16.msra.mxu0 %v8077
        %8895 = vmatpush.bf16.msra.mxu0 %v8073
        %8896 = vmatpush.bf16.msra.mxu0 %v8069
        %8897 = vmatpush.bf16.msra.mxu0 %v8065
        %8898 = vmatpush.bf16.msra.mxu0 %v8061
        %8899 = vmatpush.bf16.msra.mxu0 %v8057
        %8900 = vmatmul.bf16.gmra.mxu0 %v7380
        %v8901 = vpop.f32.mrf.mxu0
        %v8902 = vadd.f32 %v7319, %v8901
        %v8903 = vpop.f32.mrf.mxu0
        %v8904 = vadd.f32 %v7324, %v8903
        %8905 = vmatmul.bf16.gmra.mxu0 %v7387
        %v8906 = vpop.f32.mrf.mxu0
        %v8907 = vadd.f32 %v7329, %v8906
        %v8908 = vpop.f32.mrf.mxu0
        %v8909 = vadd.f32 %v7334, %v8908
        %8910 = vdwg.mxu0
        %8911 = vmatpush.bf16.msra.mxu0 %v8117
        %8912 = vmatpush.bf16.msra.mxu0 %v8113
        %8913 = vmatpush.bf16.msra.mxu0 %v8109
        %8914 = vmatpush.bf16.msra.mxu0 %v8105
        %8915 = vmatpush.bf16.msra.mxu0 %v8101
        %8916 = vmatpush.bf16.msra.mxu0 %v8097
        %8917 = vmatpush.bf16.msra.mxu0 %v8093
        %8918 = vmatpush.bf16.msra.mxu0 %v8089
        %8919 = vmatmul.bf16.gmra.mxu0 %v7381
        %v8920 = vpop.f32.mrf.mxu0
        %v8921 = vadd.f32 %v8902, %v8920
        %v8922 = vpop.f32.mrf.mxu0
        %v8923 = vadd.f32 %v8904, %v8922
        %8924 = vmatmul.bf16.gmra.mxu0 %v7388
        %v8925 = vpop.f32.mrf.mxu0
        %v8926 = vadd.f32 %v8907, %v8925
        %v8927 = vpop.f32.mrf.mxu0
        %v8928 = vadd.f32 %v8909, %v8927
        %8929 = vdwg.mxu0
        %8930 = vmatpush.bf16.msra.mxu0 %v8149
        %8931 = vmatpush.bf16.msra.mxu0 %v8145
        %8932 = vmatpush.bf16.msra.mxu0 %v8141
        %8933 = vmatpush.bf16.msra.mxu0 %v8137
        %8934 = vmatpush.bf16.msra.mxu0 %v8133
        %8935 = vmatpush.bf16.msra.mxu0 %v8129
        %8936 = vmatpush.bf16.msra.mxu0 %v8125
        %8937 = vmatpush.bf16.msra.mxu0 %v8121
        %8938 = vmatmul.bf16.gmra.mxu0 %v7382
        %v8939 = vpop.f32.mrf.mxu0
        %v8940 = vadd.f32 %v8921, %v8939
        %v8941 = vpop.f32.mrf.mxu0
        %v8942 = vadd.f32 %v8923, %v8941
        %8943 = vmatmul.bf16.gmra.mxu0 %v7389
        %v8944 = vpop.f32.mrf.mxu0
        %v8945 = vadd.f32 %v8926, %v8944
        %v8946 = vpop.f32.mrf.mxu0
        %v8947 = vadd.f32 %v8928, %v8946
        %8948 = vdwg.mxu0
        %8949 = vmatpush.bf16.msra.mxu0 %v8181
        %8950 = vmatpush.bf16.msra.mxu0 %v8177
        %8951 = vmatpush.bf16.msra.mxu0 %v8173
        %8952 = vmatpush.bf16.msra.mxu0 %v8169
        %8953 = vmatpush.bf16.msra.mxu0 %v8165
        %8954 = vmatpush.bf16.msra.mxu0 %v8161
        %8955 = vmatpush.bf16.msra.mxu0 %v8157
        %8956 = vmatpush.bf16.msra.mxu0 %v8153
        %8957 = vmatmul.bf16.gmra.mxu0 %v7383
        %v8958 = vpop.f32.mrf.mxu0
        %v8959 = vadd.f32 %v8940, %v8958
        %v8960 = vpop.f32.mrf.mxu0
        %v8961 = vadd.f32 %v8942, %v8960
        %8962 = vmatmul.bf16.gmra.mxu0 %v7390
        %v8963 = vpop.f32.mrf.mxu0
        %v8964 = vadd.f32 %v8945, %v8963
        %v8965 = vpop.f32.mrf.mxu0
        %v8966 = vadd.f32 %v8947, %v8965
        %8967 = vdwg.mxu0
        %8968 = vmatpush.bf16.msra.mxu0 %v8213
        %8969 = vmatpush.bf16.msra.mxu0 %v8209
        %8970 = vmatpush.bf16.msra.mxu0 %v8205
        %8971 = vmatpush.bf16.msra.mxu0 %v8201
        %8972 = vmatpush.bf16.msra.mxu0 %v8197
        %8973 = vmatpush.bf16.msra.mxu0 %v8193
        %8974 = vmatpush.bf16.msra.mxu0 %v8189
        %8975 = vmatpush.bf16.msra.mxu0 %v8185
        %8976 = vmatmul.bf16.gmra.mxu0 %v7384
        %v8977 = vpop.f32.mrf.mxu0
        %v8978 = vadd.f32 %v8959, %v8977
        %v8979 = vpop.f32.mrf.mxu0
        %v8980 = vadd.f32 %v8961, %v8979
        %8981 = vmatmul.bf16.gmra.mxu0 %v7391
        %v8982 = vpop.f32.mrf.mxu0
        %v8983 = vadd.f32 %v8964, %v8982
        %v8984 = vpop.f32.mrf.mxu0
        %v8985 = vadd.f32 %v8966, %v8984
        %8986 = vdwg.mxu0
        %8987 = vmatpush.bf16.msra.mxu0 %v8245
        %8988 = vmatpush.bf16.msra.mxu0 %v8241
        %8989 = vmatpush.bf16.msra.mxu0 %v8237
        %8990 = vmatpush.bf16.msra.mxu0 %v8233
        %8991 = vmatpush.bf16.msra.mxu0 %v8229
        %8992 = vmatpush.bf16.msra.mxu0 %v8225
        %8993 = vmatpush.bf16.msra.mxu0 %v8221
        %8994 = vmatpush.bf16.msra.mxu0 %v8217
        %8995 = vmatmul.bf16.gmra.mxu0 %v7385
        %v8996 = vpop.f32.mrf.mxu0
        %v8997 = vadd.f32 %v8978, %v8996
        %v8998 = vpop.f32.mrf.mxu0
        %v8999 = vadd.f32 %v8980, %v8998
        %9000 = vmatmul.bf16.gmra.mxu0 %v7392
        %v9001 = vpop.f32.mrf.mxu0
        %v9002 = vadd.f32 %v8983, %v9001
        %v9003 = vpop.f32.mrf.mxu0
        %v9004 = vadd.f32 %v8985, %v9003
        %9005 = vdwg.mxu0
        %9006 = vmatpush.bf16.msra.mxu0 0
        %9007 = vmatpush.bf16.msra.mxu0 0
        %9008 = vmatpush.bf16.msra.mxu0 %v8269
        %9009 = vmatpush.bf16.msra.mxu0 %v8265
        %9010 = vmatpush.bf16.msra.mxu0 %v8261
        %9011 = vmatpush.bf16.msra.mxu0 %v8257
        %9012 = vmatpush.bf16.msra.mxu0 %v8253
        %9013 = vmatpush.bf16.msra.mxu0 %v8249
        %9014 = vmatmul.bf16.gmra.mxu0 %v8488
        %v9015 = vpop.f32.mrf.mxu0
        %v9016 = vadd.f32 %v8997, %v9015
        %v9017 = vpop.f32.mrf.mxu0
        %v9018 = vadd.f32 %v8999, %v9017
        %9019 = vmatmul.bf16.gmra.mxu0 %v8491
        %v9020 = vpop.f32.mrf.mxu0
        %v9021 = vadd.f32 %v9002, %v9020
        %v9022 = vpop.f32.mrf.mxu0
        %v9023 = vadd.f32 %v9004, %v9022
        %9024 = vdwg.mxu0
        %v9025 = vld [vmem:[%s6] sm:$0xf]
        %v9026 = vld [vmem:[%s6 + $0x4] sm:$0xf]
        %v9027 = vld [vmem:[%s6 + $0x8] sm:$0xf]
        %v9028 = vld [vmem:[%s6 + $0xc] sm:$0xf]
        %v9029 = vpack.c.bf16 %v381, %v377
        %v9030 = vpack.c.bf16 %v382, %v378
        %v9031 = vpack.c.bf16 %v383, %v379
        %v9032 = vpack.c.bf16 %v384, %v380
        %v9033 = vld [vmem:[%s7] sm:$0xff]
        %v9034 = vld [vmem:[%s7 + $0x8] sm:$0xff]
        %v9035 = vld [vmem:[%s7 + $0x10] sm:$0xff]
        %v9036 = vld [vmem:[%s7 + $0x18] sm:$0xff]
        %9038 = vset.pattern.permute.xlu0 0
        %9039 = vperm.xlu0 %9038, %v9033
        %v9040 = vpop.permute.xlu0 %9039
        %9043 = vset.pattern.permute.xlu0 0
        %9044 = vperm.xlu0 %9043, %v9034
        %v9045 = vpop.permute.xlu0 %9044
        %9048 = vset.pattern.permute.xlu0 0
        %9049 = vperm.xlu0 %9048, %v9035
        %v9050 = vpop.permute.xlu0 %9049
        %9053 = vset.pattern.permute.xlu0 0
        %9054 = vperm.xlu0 %9053, %v9036
        %v9055 = vpop.permute.xlu0 %9054
        %v9061 = vunpack.c.l.b16 %v9025
        %v9062 = vunpack.c.l.b16 %v9026
        %v9063 = vunpack.c.l.b16 %v9027
        %v9064 = vunpack.c.l.b16 %v9028
        %v9065 = vpack.c.b16 %v9062, %v9061
        %v9066 = vpack.c.b16 %v9064, %v9063
        %vm9067 = vcmask 130048
        %v9069 = vsel %vm9067, %v9065, 0
        %v9072 = vsel %vm9067, %v9066, 0
        %9074 = vmatpush.bf16.msra.mxu0 0
        %9075 = vmatpush.bf16.msra.mxu0 0
        %9076 = vmatpush.bf16.msra.mxu0 0
        %9077 = vmatpush.bf16.msra.mxu0 0
        %9078 = vmatpush.bf16.msra.mxu0 0
        %9079 = vmatpush.bf16.msra.mxu0 0
        %9080 = vmatpush.bf16.msra.mxu0 0
        %9081 = vmatpush.bf16.msra.mxu0 %v9029
        %9082 = vmatmul.bf16.gmra.mxu0 %v9069
        %v9083 = vpop.f32.mrf.mxu0
        %v9084 = vadd.f32 %v9040, %v9083
        %v9085 = vpop.f32.mrf.mxu0
        %v9086 = vadd.f32 %v9045, %v9085
        %9087 = vmatmul.bf16.gmra.mxu0 %v9072
        %v9088 = vpop.f32.mrf.mxu0
        %v9089 = vadd.f32 %v9050, %v9088
        %v9090 = vpop.f32.mrf.mxu0
        %v9091 = vadd.f32 %v9055, %v9090
        %9092 = vdwg.mxu0
        %9093 = vmatpush.bf16.msra.mxu0 0
        %9094 = vmatpush.bf16.msra.mxu0 0
        %9095 = vmatpush.bf16.msra.mxu0 0
        %9096 = vmatpush.bf16.msra.mxu0 0
        %9097 = vmatpush.bf16.msra.mxu0 0
        %9098 = vmatpush.bf16.msra.mxu0 0
        %9099 = vmatpush.bf16.msra.mxu0 0
        %9100 = vmatpush.bf16.msra.mxu0 %v9030
        %9101 = vmatmul.bf16.gmra.mxu0 %v9069
        %v9102 = vpop.f32.mrf.mxu0
        %v9103 = vadd.f32 %v9040, %v9102
        %v9104 = vpop.f32.mrf.mxu0
        %v9105 = vadd.f32 %v9045, %v9104
        %9106 = vmatmul.bf16.gmra.mxu0 %v9072
        %v9107 = vpop.f32.mrf.mxu0
        %v9108 = vadd.f32 %v9050, %v9107
        %v9109 = vpop.f32.mrf.mxu0
        %v9110 = vadd.f32 %v9055, %v9109
        %9111 = vdwg.mxu0
        %9112 = vmatpush.bf16.msra.mxu0 0
        %9113 = vmatpush.bf16.msra.mxu0 0
        %9114 = vmatpush.bf16.msra.mxu0 0
        %9115 = vmatpush.bf16.msra.mxu0 0
        %9116 = vmatpush.bf16.msra.mxu0 0
        %9117 = vmatpush.bf16.msra.mxu0 0
        %9118 = vmatpush.bf16.msra.mxu0 0
        %9119 = vmatpush.bf16.msra.mxu0 %v9031
        %9120 = vmatmul.bf16.gmra.mxu0 %v9069
        %v9121 = vpop.f32.mrf.mxu0
        %v9122 = vadd.f32 %v9040, %v9121
        %v9123 = vpop.f32.mrf.mxu0
        %v9124 = vadd.f32 %v9045, %v9123
        %9125 = vmatmul.bf16.gmra.mxu0 %v9072
        %v9126 = vpop.f32.mrf.mxu0
        %v9127 = vadd.f32 %v9050, %v9126
        %v9128 = vpop.f32.mrf.mxu0
        %v9129 = vadd.f32 %v9055, %v9128
        %9130 = vdwg.mxu0
        %9131 = vmatpush.bf16.msra.mxu0 0
        %9132 = vmatpush.bf16.msra.mxu0 0
        %9133 = vmatpush.bf16.msra.mxu0 0
        %9134 = vmatpush.bf16.msra.mxu0 0
        %9135 = vmatpush.bf16.msra.mxu0 0
        %9136 = vmatpush.bf16.msra.mxu0 0
        %9137 = vmatpush.bf16.msra.mxu0 0
        %9138 = vmatpush.bf16.msra.mxu0 %v9032
        %9139 = vmatmul.bf16.gmra.mxu0 %v9069
        %v9140 = vpop.f32.mrf.mxu0
        %v9141 = vadd.f32 %v9040, %v9140
        %v9142 = vpop.f32.mrf.mxu0
        %v9143 = vadd.f32 %v9045, %v9142
        %9144 = vmatmul.bf16.gmra.mxu0 %v9072
        %v9145 = vpop.f32.mrf.mxu0
        %v9146 = vadd.f32 %v9050, %v9145
        %v9147 = vpop.f32.mrf.mxu0
        %v9148 = vadd.f32 %v9055, %v9147
        %9149 = vdwg.mxu0
        %v9150 = vadd.f32 %v8617, %v9084
        %v9151 = vadd.f32 %v8750, %v9103
        %v9152 = vadd.f32 %v8883, %v9122
        %v9153 = vadd.f32 %v9016, %v9141
        %v9154 = vadd.f32 %v8619, %v9086
        %v9155 = vadd.f32 %v8752, %v9105
        %v9156 = vadd.f32 %v8885, %v9124
        %v9157 = vadd.f32 %v9018, %v9143
        %v9158 = vadd.f32 %v8622, %v9089
        %v9159 = vadd.f32 %v8755, %v9108
        %v9160 = vadd.f32 %v8888, %v9127
        %v9161 = vadd.f32 %v9021, %v9146
        %v9162 = vadd.f32 %v8624, %v9091
        %v9163 = vadd.f32 %v8757, %v9110
        %v9164 = vadd.f32 %v8890, %v9129
        %v9165 = vadd.f32 %v9023, %v9148
        %9166 = vst [vmem:[%s357] sm:$0xff] %v9150
        %9167 = vst [vmem:[%s357 + $0x8] sm:$0xff] %v9151
        %9168 = vst [vmem:[%s357 + $0x10] sm:$0xff] %v9152
        %9169 = vst [vmem:[%s357 + $0x18] sm:$0xff] %v9153
        %9170 = vst [vmem:[%s357 + $0x20] sm:$0xff] %v9154
        %9171 = vst [vmem:[%s357 + $0x28] sm:$0xff] %v9155
        %9172 = vst [vmem:[%s357 + $0x30] sm:$0xff] %v9156
        %9173 = vst [vmem:[%s357 + $0x38] sm:$0xff] %v9157
        %9174 = vst [vmem:[%s357 + $0x40] sm:$0xff] %v9158
        %9175 = vst [vmem:[%s357 + $0x48] sm:$0xff] %v9159
        %9176 = vst [vmem:[%s357 + $0x50] sm:$0xff] %v9160
        %9177 = vst [vmem:[%s357 + $0x58] sm:$0xff] %v9161
        %9178 = vst [vmem:[%s357 + $0x60] sm:$0xff] %v9162
        %9179 = vst [vmem:[%s357 + $0x68] sm:$0xff] %v9163
        %9180 = vst [vmem:[%s357 + $0x70] sm:$0xff] %v9164
        %9181 = vst [vmem:[%s357 + $0x78] sm:$0xff] %v9165
        %s9182 = sand.u32 %s231, 1
        %s9183 = scalar_lea.sflag [#allocation6], %s9182
        %s9184 = sand.u32 %s231, 1
        %s9185 = smul.addr %s9184, 128
        %s9186 = scalar_lea.vmem [#allocation7], %s9185
        // Predicated region
        $region61: #{tpu_custom_call.1} parent=55 // pred_check
          %p9187 = pneg %p241
        $region62: #{tpu_custom_call.1} parent=55 // pred_check_branch
          %9189 = sbr.rel (%p9187) target = $region64
        $region63: #{tpu_custom_call.1} parent=55 // pred_region
          %9191 = vsyncadd %s9183, 0
          %s9192 = smul.addr %s24, 16
          %s9193 = smul.addr %s9192, 8
          %s9194 = scalar_lea.hbm %s9, %s9193
          %s9195 = sshll.u32 %s9186, 4
          %s9196 = int_to_ptr.vmem [resolvable:$true] %s9195
          %s9197 = sshll.u32 %s9194, 4
          %s9198 = int_to_ptr.hbm [resolvable:$true] %s9197
          %9203 = dma.vmem_to_hbm [thread:$0]  %s9196, 2048, %s9198, %s9183, 512, 512, 32
        $region64: #{tpu_custom_call.1} parent=55 // pred_fallthru
          _
      $region56: #{tpu_custom_call.1} parent=5 // pred_fallthru
        _
      %p9204 = scmp.le.s32.totalorder 2, %s19
      // Predicated region
      $region65: #{tpu_custom_call.1} parent=5 // pred_check
        %p9205 = pneg %p9204
      $region66: #{tpu_custom_call.1} parent=5 // pred_check_branch
        %9207 = sbr.rel (%p9205) target = $region68
      $region67: #{tpu_custom_call.1} parent=5 // pred_region
        %s9208 = ssub.s32 %s19, 2
        // Predicated region
        $region69: #{tpu_custom_call.1} parent=67 // pred_check
          %p9209 = pneg %p247
        $region70: #{tpu_custom_call.1} parent=67 // pred_check_branch
          %9211 = sbr.rel (%p9209) target = $region72
        $region71: #{tpu_custom_call.1} parent=67 // pred_region
          %s9212 = sand.u32 %s232, 1
          %s9213 = scalar_lea.sflag [#allocation6], %s9212
          %s9214 = sand.u32 %s232, 1
          %s9215 = smul.addr %s9214, 128
          %s9216 = scalar_lea.vmem [#allocation7], %s9215
          %9218 = dma.done %s9213, 2048
        $region72: #{tpu_custom_call.1} parent=67 // pred_fallthru
          _
      $region68: #{tpu_custom_call.1} parent=5 // pred_fallthru
        _
    $region6: #{tpu_custom_call.1} parent=1 // loop_footer
      %s23 = sadd.s32 1, %s19
    $region7: #{tpu_custom_call.1} parent=1 // loop_footer_branch
      %18 = sbr.rel target = $region3
    $region8: #{tpu_custom_call.1} parent=1 // loop_exit
      _
    %9219 = vsyncpa [#allocation5], 1
    %s9220 = scalar_lea.sflag [#allocation5], 1
    %9221 = vsyncpa %s9220, 1
    %9222 = vsyncpa [#allocation6], 1
    %s9223 = scalar_lea.sflag [#allocation6], 1
    %9224 = vsyncpa %s9223, 1

</llo_original>
